<compile_context>
chip_gen: v7x
topology: tpu7x:2x2x1
jax: 0.10.0
libtpu: 0.0.40
codegen_flags: <defaults>
</compile_context>

<pallas_src>
import jax
import jax.numpy as jnp
from jax.experimental import pallas as pl
from jax.experimental.pallas import tpu as pltpu

# --------------------------- static network geometry ------------------------------
K = 5                     # conv kernel size
H0, C0 = 32, 3            # input spatial size / channels
C1, C2 = 32, 64           # conv1 / conv2 output channels
H1 = H0 - K + 1           # 28  conv1 output spatial
HP1 = H1 // 2             # 14  after pool1
H2 = HP1 - K + 1          # 10  conv2 output spatial
HP2 = H2 // 2             # 5   after pool2
NPHASE = 4                # W phase-split factor of the conv1 patch layout
N_IN = 17                 # padded within-phase width of the input (>= N1 + 1)
N1 = 16                   # within-phase width through conv1/pool1 (multiple of 8)
N2 = 8                    # within-phase width through conv2/pool2 (multiple of 8)
KKC0 = K * K * C0         # 75
FC1_IN = C2 * HP2 * HP2   # 1600
FC1_OUT, FC2_OUT = 256, 10


# ------------------------------- fused Pallas kernel ------------------------------

def _cnn_fused_kernel(p1_ref, w1_ref, b1_ref, w2_ref, b2_ref,
                      wf1_ref, bf1_ref, wf2_ref, bf2_ref, out_ref):
    Bb = p1_ref.shape[0]

    # ---- conv1: host-built bf16 patches -> single MXU matmul ----------------------
    # p1_ref[b, r, h, m, :] holds the 75-wide patch for conv1 output column 4m+r.
    p1 = p1_ref[...].reshape(Bb * NPHASE * H1 * N1, KKC0)
    o1 = jnp.dot(p1, w1_ref[...], preferred_element_type=jnp.float32) + b1_ref[...]
    o1 = o1.reshape(Bb, NPHASE, H1, N1, C1)

    # ---- pool1 (2x2 max) + relu, stored in bf16 (conv2 MXU operand dtype) ---------
    def _pool_h(t, h_out):
        # 2x max-pool along H (a leading dim): pure major-dim reshape + elementwise max.
        t5 = t.reshape(Bb, h_out, 2, t.shape[-2], t.shape[-1])
        return jnp.maximum(t5[:, :, 0], t5[:, :, 1])

    pw_even = jnp.maximum(o1[:, 0], o1[:, 1])     # pooled-W columns 2m
    pw_odd = jnp.maximum(o1[:, 2], o1[:, 3])      # pooled-W columns 2m+1
    p_even = jnp.maximum(_pool_h(pw_even, HP1), 0.0).astype(jnp.bfloat16)  # (Bb,14,16,32)
    p_odd = jnp.maximum(_pool_h(pw_odd, HP1), 0.0).astype(jnp.bfloat16)    # (Bb,14,16,32)
    p_phases = (p_even, p_odd)   # p_phases[t][b, i, m, :] = pooled1[b, i, 2m+t, :]

    # ---- conv2: 25 accumulated tap matmuls (no 800-lane patch buffer) --------------
    # For each (dy,dx), both output W-phases are stacked along M -> one MXU call/tap.
    acc2 = jnp.zeros((2 * Bb * H2 * N2, C2), jnp.float32)
    for dy in range(K):
        for dx in range(K):
            taps = []
            for u in range(2):                       # output W phase
                s, q = (u + dx) % 2, (u + dx) // 2   # input phase / within-phase shift
                taps.append(p_phases[s][:, dy:dy + H2, q:q + N2, :])  # (Bb,10,8,32) bf16
            tap = jnp.stack(taps, axis=0).reshape(2 * Bb * H2 * N2, C1)
            acc2 = acc2 + jnp.dot(tap, w2_ref[dy * K + dx],
                                  preferred_element_type=jnp.float32)
    o2 = (acc2 + b2_ref[...]).reshape(2, Bb, H2, N2, C2)

    # ---- pool2 (2x2 max) + relu -----------------------------------------------------
    pfw = jnp.maximum(o2[0], o2[1])[:, :, 0:HP2, :]            # (Bb, 10, 5, 64)
    feat = jnp.maximum(_pool_h(pfw, HP2), 0.0).astype(jnp.bfloat16)   # (Bb, 5, 5, 64)

    # ---- fc1 as 25 accumulated (Bb,64)x(64,256) matmuls (no 1600-lane flatten) ------
    acc_fc1 = jnp.zeros((Bb, FC1_OUT), jnp.float32)
    for h in range(HP2):
        row = feat[:, h]                                        # (Bb, 5, 64)
        for w in range(HP2):
            acc_fc1 = acc_fc1 + jnp.dot(row[:, w, :], wf1_ref[h * HP2 + w],
                                        preferred_element_type=jnp.float32)
    h1 = jnp.maximum(acc_fc1 + bf1_ref[...], 0.0)

    # ---- fc2 -------------------------------------------------------------------------
    logits = jnp.dot(h1.astype(jnp.bfloat16), wf2_ref[...],
                     preferred_element_type=jnp.float32) + bf2_ref[...]
    out_ref[...] = logits.reshape(Bb, 1, FC2_OUT).astype(out_ref.dtype)


# ------------------------------- host-side wrappers -------------------------------

def prepare_params(params):
    """One-time conversion of PyTorch-layout parameters into the kernel layout."""
    # conv1 weight -> (dy, dx, cin, cout) flattened rows matching the host-built patches
    w1 = jnp.transpose(params["w1"], (2, 3, 1, 0)).reshape(KKC0, C1)
    # conv2 weight pre-split per (dy, dx) tap: (25, 32, 64)
    w2 = jnp.transpose(params["w2"], (2, 3, 1, 0)).reshape(K * K, C1, C2)
    # fc1 weight: PyTorch rows are flattened in (c, h, w); re-layout to (h*5+w, c, out)
    # so fc1 can be accumulated tap-by-tap over the NHWC feature map (no flatten).
    wf1 = (params["wfc1"].reshape(FC1_OUT, C2, HP2, HP2)
           .transpose(2, 3, 1, 0).reshape(HP2 * HP2, C2, FC1_OUT))
    wf2 = params["wfc2"].T
    return {
        "w1": w1.astype(jnp.bfloat16), "b1": params["b1"].reshape(1, C1),
        "w2": w2.astype(jnp.bfloat16), "b2": params["b2"].reshape(1, C2),
        "wf1": wf1.astype(jnp.bfloat16), "bf1": params["bfc1"].reshape(1, FC1_OUT),
        "wf2": wf2.astype(jnp.bfloat16), "bf2": params["bfc2"].reshape(1, FC2_OUT),
    }


def _build_conv1_patches(x_nchw):
    """Host/XLA-side im2col for conv1 in the W-phase-split layout, bf16.

    patches[b, r, h, m, (dy*5+dx)*3 + c] = x_nhwc[b, h+dy, 4*(m)+r+dx, c]
    (columns beyond the valid conv output read zero-padded input, and are dropped
    after pool2 inside the kernel — keep the zero-pad invariant.)
    """
    x = jnp.transpose(x_nchw, (0, 2, 3, 1))                              # NHWC
    x = jnp.pad(x, ((0, 0), (0, 0), (0, NPHASE * N_IN - H0), (0, 0)))    # W -> 68
    xp = jnp.stack([x[:, :, s::NPHASE, :] for s in range(NPHASE)], axis=1)  # (B,4,32,17,3)
    phases = []
    for r in range(NPHASE):
        taps = []
        for dy in range(K):
            for dx in range(K):
                s, q = (r + dx) % NPHASE, (r + dx) // NPHASE
                taps.append(xp[:, s, dy:dy + H1, q:q + N1, :])           # (B,28,16,3)
        phases.append(jnp.concatenate(taps, axis=-1))                    # (B,28,16,75)
    return jnp.stack(phases, axis=1).astype(jnp.bfloat16)                # (B,4,28,16,75)


@jax.jit
def cnn_forward(x_nchw, kp):
    B, C, H, W = x_nchw.shape
    assert (C, H, W) == (C0, H0, H0)
    patches1 = _build_conv1_patches(x_nchw)

    # Batch block: >=2 grid steps so both v7x TensorCores get work; <=16 samples/step
    # per the v7x 64 MiB VMEM guidance.  (On v6e/v5e, raise toward 32-48 for throughput.)
    if B >= 2:
        bb = min(16, max(1, B // 2))
        while B % bb:
            bb -= 1
    else:
        bb = B

    out = pl.pallas_call(
        _cnn_fused_kernel,
        out_shape=jax.ShapeDtypeStruct((B, 1, FC2_OUT), jnp.float32),
        grid=(B // bb,),
        in_specs=[
            pl.BlockSpec((bb, NPHASE, H1, N1, KKC0), lambda b: (b, 0, 0, 0, 0)),
            pl.BlockSpec((KKC0, C1), lambda b: (0, 0)),
            pl.BlockSpec((1, C1), lambda b: (0, 0)),
            pl.BlockSpec((K * K, C1, C2), lambda b: (0, 0, 0)),
            pl.BlockSpec((1, C2), lambda b: (0, 0)),
            pl.BlockSpec((HP2 * HP2, C2, FC1_OUT), lambda b: (0, 0, 0)),
            pl.BlockSpec((1, FC1_OUT), lambda b: (0, 0)),
            pl.BlockSpec((FC1_OUT, FC2_OUT), lambda b: (0, 0)),
            pl.BlockSpec((1, FC2_OUT), lambda b: (0, 0)),
        ],
        out_specs=pl.BlockSpec((bb, 1, FC2_OUT), lambda b: (b, 0, 0)),
        compiler_params=pltpu.CompilerParams(dimension_semantics=("parallel",)),
    )(patches1, kp["w1"], kp["b1"], kp["w2"], kp["b2"],
      kp["wf1"], kp["bf1"], kp["wf2"], kp["bf2"])
    return out.reshape(B, FC2_OUT)


# -------------------- deterministic synthetic parameters --------------------------

def init_params(key):
    ks = jax.random.split(key, 8)

    def nrm(k, shape, scale):
        return scale * jax.random.normal(k, shape, dtype=jnp.float32)

    return {
        "w1": nrm(ks[0], (C1, C0, K, K), 0.05),        # Conv2d(3, 32, 5) weight (OIHW)
        "b1": nrm(ks[1], (C1,), 0.05),
        "w2": nrm(ks[2], (C2, C1, K, K), 0.02),        # Conv2d(32, 64, 5) weight (OIHW)
        "b2": nrm(ks[3], (C2,), 0.02),
        "wfc1": nrm(ks[4], (FC1_OUT, FC1_IN), 0.02),   # Linear(1600, 256) weight (out, in)
        "bfc1": nrm(ks[5], (FC1_OUT,), 0.02),
        "wfc2": nrm(ks[6], (FC2_OUT, FC1_OUT), 0.05),  # Linear(256, 10) weight (out, in)
        "bfc2": nrm(ks[7], (FC2_OUT,), 0.05),
    }


# ---------------------- pure-JAX reference (NCHW, like torch) ----------------------

def cnn_forward_ref(x_nchw, params):
    def conv(x, w, b):
        y = jax.lax.conv_general_dilated(
            x, w, window_strides=(1, 1), padding="VALID",
            dimension_numbers=("NCHW", "OIHW", "NCHW"))
        return y + b[None, :, None, None]

    def pool_relu(x):
        y = jax.lax.reduce_window(x, -jnp.inf, jax.lax.max,
                                  (1, 1, 2, 2), (1, 1, 2, 2), "VALID")
        return jnp.maximum(y, 0.0)

    x = pool_relu(conv(x_nchw, params["w1"], params["b1"]))
    x = pool_relu(conv(x, params["w2"], params["b2"]))
    x = x.reshape(x.shape[0], -1)
    x = jnp.maximum(x @ params["wfc1"].T + params["bfc1"], 0.0)
    x = x @ params["wfc2"].T + params["bfc2"]
    return x


# ------------------------------------- main ----------------------------------------

if __name__ == "__main__":
    key = jax.random.PRNGKey(0)
    k_x, k_p = jax.random.split(key)

    # Input consistent with the module: 3 channels, 32x32 spatial (=> 64*5*5 flatten).
    x = jax.random.normal(k_x, (2, 3, 32, 32), dtype=jnp.float32)
    params = init_params(k_p)
    kp = prepare_params(params)

    out = jax.block_until_ready(cnn_forward(x, kp))
    assert out.shape == (2, 10) and out.dtype == jnp.float32

    ref = jax.block_until_ready(cnn_forward_ref(x, params))
    max_err = float(jnp.max(jnp.abs(out - ref)))
    # bf16 MXU operands vs fp32 torch-style reference -> ~1e-2 tolerance.
    assert jnp.allclose(out, ref, rtol=1e-2, atol=1e-2), f"mismatch: max abs err {max_err}"

    print("KERNEL_OK")
</pallas_src>

<mosaic_0001>
module attributes {stable_mosaic.version = 11 : i64} {
  func.func @_cnn_fused_kernel(%arg0: i32, %arg1: memref<1x4x28x16x75xbf16, #tpu.memory_space<vmem>>, %arg2: memref<75x32xbf16, #tpu.memory_space<vmem>>, %arg3: memref<1x32xf32, #tpu.memory_space<vmem>>, %arg4: memref<25x32x64xbf16, #tpu.memory_space<vmem>>, %arg5: memref<1x64xf32, #tpu.memory_space<vmem>>, %arg6: memref<25x64x256xbf16, #tpu.memory_space<vmem>>, %arg7: memref<1x256xf32, #tpu.memory_space<vmem>>, %arg8: memref<256x10xbf16, #tpu.memory_space<vmem>>, %arg9: memref<1x10xf32, #tpu.memory_space<vmem>>, %arg10: memref<1x1x10xf32, #tpu.memory_space<vmem>>) attributes {dimension_semantics = [#tpu.dimension_semantics<parallel>], iteration_bounds = array<i64: 2>, scalar_prefetch = 0 : i64, scratch_operands = 0 : i64, tpu.core_type = #tpu.core_type<tc>, window_params = [{transform_indices = @transform_0, window_bounds = array<i64: 1, 4, 28, 16, 75>}, {pipeline_mode = #tpu.pipeline_mode<synchronous>, transform_indices = @transform_1, window_bounds = array<i64: 75, 32>}, {pipeline_mode = #tpu.pipeline_mode<synchronous>, transform_indices = @transform_2, window_bounds = array<i64: 1, 32>}, {pipeline_mode = #tpu.pipeline_mode<synchronous>, transform_indices = @transform_3, window_bounds = array<i64: 25, 32, 64>}, {pipeline_mode = #tpu.pipeline_mode<synchronous>, transform_indices = @transform_4, window_bounds = array<i64: 1, 64>}, {pipeline_mode = #tpu.pipeline_mode<synchronous>, transform_indices = @transform_5, window_bounds = array<i64: 25, 64, 256>}, {pipeline_mode = #tpu.pipeline_mode<synchronous>, transform_indices = @transform_6, window_bounds = array<i64: 1, 256>}, {pipeline_mode = #tpu.pipeline_mode<synchronous>, transform_indices = @transform_7, window_bounds = array<i64: 256, 10>}, {pipeline_mode = #tpu.pipeline_mode<synchronous>, transform_indices = @transform_8, window_bounds = array<i64: 1, 10>}, {transform_indices = @transform_9, window_bounds = array<i64: 1, 1, 10>}]} {
    %c0 = arith.constant 0 : index
    %c0_0 = arith.constant 0 : index
    %c0_1 = arith.constant 0 : index
    %c0_2 = arith.constant 0 : index
    %c0_3 = arith.constant 0 : index
    %0 = vector.load %arg1[%c0, %c0_0, %c0_1, %c0_2, %c0_3] : memref<1x4x28x16x75xbf16, #tpu.memory_space<vmem>>, vector<1x4x28x16x75xbf16>
    %1 = vector.shape_cast %0 : vector<1x4x28x16x75xbf16> to vector<1792x75xbf16>
    %c0_4 = arith.constant 0 : index
    %c0_5 = arith.constant 0 : index
    %2 = vector.load %arg2[%c0_4, %c0_5] : memref<75x32xbf16, #tpu.memory_space<vmem>>, vector<75x32xbf16>
    %cst = arith.constant dense<0.000000e+00> : vector<1792x32xf32>
    %3 = tpu.matmul %1, %2, %cst {dimension_numbers = #tpu.dot_dimension_numbers<[1], [0], [0], [1], [0, 0, 1, 1], [], []>} : vector<1792x75xbf16>, vector<75x32xbf16>, vector<1792x32xf32> -> vector<1792x32xf32>
    %c0_6 = arith.constant 0 : index
    %c0_7 = arith.constant 0 : index
    %4 = vector.load %arg3[%c0_6, %c0_7] : memref<1x32xf32, #tpu.memory_space<vmem>>, vector<1x32xf32>
    %5 = vector.broadcast %4 : vector<1x32xf32> to vector<1792x32xf32>
    %6 = arith.addf %3, %5 : vector<1792x32xf32>
    %7 = vector.shape_cast %6 : vector<1792x32xf32> to vector<1x4x28x16x32xf32>
    %8 = vector.extract_strided_slice %7 {offsets = [0, 0, 0, 0, 0], sizes = [1, 1, 28, 16, 32], strides = [1, 1, 1, 1, 1]} : vector<1x4x28x16x32xf32> to vector<1x1x28x16x32xf32>
    %9 = vector.shape_cast %8 : vector<1x1x28x16x32xf32> to vector<1x28x16x32xf32>
    %10 = vector.extract_strided_slice %7 {offsets = [0, 1, 0, 0, 0], sizes = [1, 1, 28, 16, 32], strides = [1, 1, 1, 1, 1]} : vector<1x4x28x16x32xf32> to vector<1x1x28x16x32xf32>
    %11 = vector.shape_cast %10 : vector<1x1x28x16x32xf32> to vector<1x28x16x32xf32>
    %12 = arith.maximumf %9, %11 : vector<1x28x16x32xf32>
    %13 = vector.extract_strided_slice %7 {offsets = [0, 2, 0, 0, 0], sizes = [1, 1, 28, 16, 32], strides = [1, 1, 1, 1, 1]} : vector<1x4x28x16x32xf32> to vector<1x1x28x16x32xf32>
    %14 = vector.shape_cast %13 : vector<1x1x28x16x32xf32> to vector<1x28x16x32xf32>
    %15 = vector.extract_strided_slice %7 {offsets = [0, 3, 0, 0, 0], sizes = [1, 1, 28, 16, 32], strides = [1, 1, 1, 1, 1]} : vector<1x4x28x16x32xf32> to vector<1x1x28x16x32xf32>
    %16 = vector.shape_cast %15 : vector<1x1x28x16x32xf32> to vector<1x28x16x32xf32>
    %17 = arith.maximumf %14, %16 : vector<1x28x16x32xf32>
    %18 = vector.shape_cast %12 : vector<1x28x16x32xf32> to vector<1x14x2x16x32xf32>
    %19 = vector.extract_strided_slice %18 {offsets = [0, 0, 0, 0, 0], sizes = [1, 14, 1, 16, 32], strides = [1, 1, 1, 1, 1]} : vector<1x14x2x16x32xf32> to vector<1x14x1x16x32xf32>
    %20 = vector.shape_cast %19 : vector<1x14x1x16x32xf32> to vector<1x14x16x32xf32>
    %21 = vector.extract_strided_slice %18 {offsets = [0, 0, 1, 0, 0], sizes = [1, 14, 1, 16, 32], strides = [1, 1, 1, 1, 1]} : vector<1x14x2x16x32xf32> to vector<1x14x1x16x32xf32>
    %22 = vector.shape_cast %21 : vector<1x14x1x16x32xf32> to vector<1x14x16x32xf32>
    %23 = arith.maximumf %20, %22 : vector<1x14x16x32xf32>
    %cst_8 = arith.constant 0.000000e+00 : f32
    %24 = vector.broadcast %cst_8 : f32 to vector<1x14x16x32xf32>
    %25 = arith.maximumf %23, %24 : vector<1x14x16x32xf32>
    %26 = arith.truncf %25 : vector<1x14x16x32xf32> to vector<1x14x16x32xbf16>
    %27 = vector.shape_cast %17 : vector<1x28x16x32xf32> to vector<1x14x2x16x32xf32>
    %28 = vector.extract_strided_slice %27 {offsets = [0, 0, 0, 0, 0], sizes = [1, 14, 1, 16, 32], strides = [1, 1, 1, 1, 1]} : vector<1x14x2x16x32xf32> to vector<1x14x1x16x32xf32>
    %29 = vector.shape_cast %28 : vector<1x14x1x16x32xf32> to vector<1x14x16x32xf32>
    %30 = vector.extract_strided_slice %27 {offsets = [0, 0, 1, 0, 0], sizes = [1, 14, 1, 16, 32], strides = [1, 1, 1, 1, 1]} : vector<1x14x2x16x32xf32> to vector<1x14x1x16x32xf32>
    %31 = vector.shape_cast %30 : vector<1x14x1x16x32xf32> to vector<1x14x16x32xf32>
    %32 = arith.maximumf %29, %31 : vector<1x14x16x32xf32>
    %cst_9 = arith.constant 0.000000e+00 : f32
    %33 = vector.broadcast %cst_9 : f32 to vector<1x14x16x32xf32>
    %34 = arith.maximumf %32, %33 : vector<1x14x16x32xf32>
    %35 = arith.truncf %34 : vector<1x14x16x32xf32> to vector<1x14x16x32xbf16>
    %cst_10 = arith.constant 0.000000e+00 : f32
    %36 = vector.broadcast %cst_10 : f32 to vector<160x64xf32>
    %37 = vector.extract_strided_slice %26 {offsets = [0, 0, 0, 0], sizes = [1, 10, 8, 32], strides = [1, 1, 1, 1]} : vector<1x14x16x32xbf16> to vector<1x10x8x32xbf16>
    %38 = vector.extract_strided_slice %35 {offsets = [0, 0, 0, 0], sizes = [1, 10, 8, 32], strides = [1, 1, 1, 1]} : vector<1x14x16x32xbf16> to vector<1x10x8x32xbf16>
    %39 = vector.shape_cast %37 : vector<1x10x8x32xbf16> to vector<1x1x10x8x32xbf16>
    %40 = vector.shape_cast %38 : vector<1x10x8x32xbf16> to vector<1x1x10x8x32xbf16>
    %41 = tpu.concatenate %39, %40 in 0 : vector<1x1x10x8x32xbf16>, vector<1x1x10x8x32xbf16> -> vector<2x1x10x8x32xbf16>
    %42 = vector.shape_cast %41 : vector<2x1x10x8x32xbf16> to vector<160x32xbf16>
    %c0_11 = arith.constant 0 : index
    %c0_12 = arith.constant 0 : index
    %c0_13 = arith.constant 0 : index
    %43 = vector.load %arg4[%c0_11, %c0_12, %c0_13] : memref<25x32x64xbf16, #tpu.memory_space<vmem>>, vector<1x32x64xbf16>
    %44 = vector.shape_cast %43 : vector<1x32x64xbf16> to vector<32x64xbf16>
    %cst_14 = arith.constant dense<0.000000e+00> : vector<160x64xf32>
    %45 = tpu.matmul %42, %44, %cst_14 {dimension_numbers = #tpu.dot_dimension_numbers<[1], [0], [0], [1], [0, 0, 1, 1], [], []>} : vector<160x32xbf16>, vector<32x64xbf16>, vector<160x64xf32> -> vector<160x64xf32>
    %46 = arith.addf %36, %45 : vector<160x64xf32>
    %47 = vector.extract_strided_slice %35 {offsets = [0, 0, 0, 0], sizes = [1, 10, 8, 32], strides = [1, 1, 1, 1]} : vector<1x14x16x32xbf16> to vector<1x10x8x32xbf16>
    %48 = vector.extract_strided_slice %26 {offsets = [0, 0, 1, 0], sizes = [1, 10, 8, 32], strides = [1, 1, 1, 1]} : vector<1x14x16x32xbf16> to vector<1x10x8x32xbf16>
    %49 = vector.shape_cast %47 : vector<1x10x8x32xbf16> to vector<1x1x10x8x32xbf16>
    %50 = vector.shape_cast %48 : vector<1x10x8x32xbf16> to vector<1x1x10x8x32xbf16>
    %51 = tpu.concatenate %49, %50 in 0 : vector<1x1x10x8x32xbf16>, vector<1x1x10x8x32xbf16> -> vector<2x1x10x8x32xbf16>
    %52 = vector.shape_cast %51 : vector<2x1x10x8x32xbf16> to vector<160x32xbf16>
    %c1 = arith.constant 1 : index
    %c0_15 = arith.constant 0 : index
    %c0_16 = arith.constant 0 : index
    %53 = vector.load %arg4[%c1, %c0_15, %c0_16] : memref<25x32x64xbf16, #tpu.memory_space<vmem>>, vector<1x32x64xbf16>
    %54 = vector.shape_cast %53 : vector<1x32x64xbf16> to vector<32x64xbf16>
    %cst_17 = arith.constant dense<0.000000e+00> : vector<160x64xf32>
    %55 = tpu.matmul %52, %54, %cst_17 {dimension_numbers = #tpu.dot_dimension_numbers<[1], [0], [0], [1], [0, 0, 1, 1], [], []>} : vector<160x32xbf16>, vector<32x64xbf16>, vector<160x64xf32> -> vector<160x64xf32>
    %56 = arith.addf %46, %55 : vector<160x64xf32>
    %57 = vector.extract_strided_slice %26 {offsets = [0, 0, 1, 0], sizes = [1, 10, 8, 32], strides = [1, 1, 1, 1]} : vector<1x14x16x32xbf16> to vector<1x10x8x32xbf16>
    %58 = vector.extract_strided_slice %35 {offsets = [0, 0, 1, 0], sizes = [1, 10, 8, 32], strides = [1, 1, 1, 1]} : vector<1x14x16x32xbf16> to vector<1x10x8x32xbf16>
    %59 = vector.shape_cast %57 : vector<1x10x8x32xbf16> to vector<1x1x10x8x32xbf16>
    %60 = vector.shape_cast %58 : vector<1x10x8x32xbf16> to vector<1x1x10x8x32xbf16>
    %61 = tpu.concatenate %59, %60 in 0 : vector<1x1x10x8x32xbf16>, vector<1x1x10x8x32xbf16> -> vector<2x1x10x8x32xbf16>
    %62 = vector.shape_cast %61 : vector<2x1x10x8x32xbf16> to vector<160x32xbf16>
    %c2 = arith.constant 2 : index
    %c0_18 = arith.constant 0 : index
    %c0_19 = arith.constant 0 : index
    %63 = vector.load %arg4[%c2, %c0_18, %c0_19] : memref<25x32x64xbf16, #tpu.memory_space<vmem>>, vector<1x32x64xbf16>
    %64 = vector.shape_cast %63 : vector<1x32x64xbf16> to vector<32x64xbf16>
    %cst_20 = arith.constant dense<0.000000e+00> : vector<160x64xf32>
    %65 = tpu.matmul %62, %64, %cst_20 {dimension_numbers = #tpu.dot_dimension_numbers<[1], [0], [0], [1], [0, 0, 1, 1], [], []>} : vector<160x32xbf16>, vector<32x64xbf16>, vector<160x64xf32> -> vector<160x64xf32>
    %66 = arith.addf %56, %65 : vector<160x64xf32>
    %67 = vector.extract_strided_slice %35 {offsets = [0, 0, 1, 0], sizes = [1, 10, 8, 32], strides = [1, 1, 1, 1]} : vector<1x14x16x32xbf16> to vector<1x10x8x32xbf16>
    %68 = vector.extract_strided_slice %26 {offsets = [0, 0, 2, 0], sizes = [1, 10, 8, 32], strides = [1, 1, 1, 1]} : vector<1x14x16x32xbf16> to vector<1x10x8x32xbf16>
    %69 = vector.shape_cast %67 : vector<1x10x8x32xbf16> to vector<1x1x10x8x32xbf16>
    %70 = vector.shape_cast %68 : vector<1x10x8x32xbf16> to vector<1x1x10x8x32xbf16>
    %71 = tpu.concatenate %69, %70 in 0 : vector<1x1x10x8x32xbf16>, vector<1x1x10x8x32xbf16> -> vector<2x1x10x8x32xbf16>
    %72 = vector.shape_cast %71 : vector<2x1x10x8x32xbf16> to vector<160x32xbf16>
    %c3 = arith.constant 3 : index
    %c0_21 = arith.constant 0 : index
    %c0_22 = arith.constant 0 : index
    %73 = vector.load %arg4[%c3, %c0_21, %c0_22] : memref<25x32x64xbf16, #tpu.memory_space<vmem>>, vector<1x32x64xbf16>
    %74 = vector.shape_cast %73 : vector<1x32x64xbf16> to vector<32x64xbf16>
    %cst_23 = arith.constant dense<0.000000e+00> : vector<160x64xf32>
    %75 = tpu.matmul %72, %74, %cst_23 {dimension_numbers = #tpu.dot_dimension_numbers<[1], [0], [0], [1], [0, 0, 1, 1], [], []>} : vector<160x32xbf16>, vector<32x64xbf16>, vector<160x64xf32> -> vector<160x64xf32>
    %76 = arith.addf %66, %75 : vector<160x64xf32>
    %77 = vector.extract_strided_slice %26 {offsets = [0, 0, 2, 0], sizes = [1, 10, 8, 32], strides = [1, 1, 1, 1]} : vector<1x14x16x32xbf16> to vector<1x10x8x32xbf16>
    %78 = vector.extract_strided_slice %35 {offsets = [0, 0, 2, 0], sizes = [1, 10, 8, 32], strides = [1, 1, 1, 1]} : vector<1x14x16x32xbf16> to vector<1x10x8x32xbf16>
    %79 = vector.shape_cast %77 : vector<1x10x8x32xbf16> to vector<1x1x10x8x32xbf16>
    %80 = vector.shape_cast %78 : vector<1x10x8x32xbf16> to vector<1x1x10x8x32xbf16>
    %81 = tpu.concatenate %79, %80 in 0 : vector<1x1x10x8x32xbf16>, vector<1x1x10x8x32xbf16> -> vector<2x1x10x8x32xbf16>
    %82 = vector.shape_cast %81 : vector<2x1x10x8x32xbf16> to vector<160x32xbf16>
    %c4 = arith.constant 4 : index
    %c0_24 = arith.constant 0 : index
    %c0_25 = arith.constant 0 : index
    %83 = vector.load %arg4[%c4, %c0_24, %c0_25] : memref<25x32x64xbf16, #tpu.memory_space<vmem>>, vector<1x32x64xbf16>
    %84 = vector.shape_cast %83 : vector<1x32x64xbf16> to vector<32x64xbf16>
    %cst_26 = arith.constant dense<0.000000e+00> : vector<160x64xf32>
    %85 = tpu.matmul %82, %84, %cst_26 {dimension_numbers = #tpu.dot_dimension_numbers<[1], [0], [0], [1], [0, 0, 1, 1], [], []>} : vector<160x32xbf16>, vector<32x64xbf16>, vector<160x64xf32> -> vector<160x64xf32>
    %86 = arith.addf %76, %85 : vector<160x64xf32>
    %87 = vector.extract_strided_slice %26 {offsets = [0, 1, 0, 0], sizes = [1, 10, 8, 32], strides = [1, 1, 1, 1]} : vector<1x14x16x32xbf16> to vector<1x10x8x32xbf16>
    %88 = vector.extract_strided_slice %35 {offsets = [0, 1, 0, 0], sizes = [1, 10, 8, 32], strides = [1, 1, 1, 1]} : vector<1x14x16x32xbf16> to vector<1x10x8x32xbf16>
    %89 = vector.shape_cast %87 : vector<1x10x8x32xbf16> to vector<1x1x10x8x32xbf16>
    %90 = vector.shape_cast %88 : vector<1x10x8x32xbf16> to vector<1x1x10x8x32xbf16>
    %91 = tpu.concatenate %89, %90 in 0 : vector<1x1x10x8x32xbf16>, vector<1x1x10x8x32xbf16> -> vector<2x1x10x8x32xbf16>
    %92 = vector.shape_cast %91 : vector<2x1x10x8x32xbf16> to vector<160x32xbf16>
    %c5 = arith.constant 5 : index
    %c0_27 = arith.constant 0 : index
    %c0_28 = arith.constant 0 : index
    %93 = vector.load %arg4[%c5, %c0_27, %c0_28] : memref<25x32x64xbf16, #tpu.memory_space<vmem>>, vector<1x32x64xbf16>
    %94 = vector.shape_cast %93 : vector<1x32x64xbf16> to vector<32x64xbf16>
    %cst_29 = arith.constant dense<0.000000e+00> : vector<160x64xf32>
    %95 = tpu.matmul %92, %94, %cst_29 {dimension_numbers = #tpu.dot_dimension_numbers<[1], [0], [0], [1], [0, 0, 1, 1], [], []>} : vector<160x32xbf16>, vector<32x64xbf16>, vector<160x64xf32> -> vector<160x64xf32>
    %96 = arith.addf %86, %95 : vector<160x64xf32>
    %97 = vector.extract_strided_slice %35 {offsets = [0, 1, 0, 0], sizes = [1, 10, 8, 32], strides = [1, 1, 1, 1]} : vector<1x14x16x32xbf16> to vector<1x10x8x32xbf16>
    %98 = vector.extract_strided_slice %26 {offsets = [0, 1, 1, 0], sizes = [1, 10, 8, 32], strides = [1, 1, 1, 1]} : vector<1x14x16x32xbf16> to vector<1x10x8x32xbf16>
    %99 = vector.shape_cast %97 : vector<1x10x8x32xbf16> to vector<1x1x10x8x32xbf16>
    %100 = vector.shape_cast %98 : vector<1x10x8x32xbf16> to vector<1x1x10x8x32xbf16>
    %101 = tpu.concatenate %99, %100 in 0 : vector<1x1x10x8x32xbf16>, vector<1x1x10x8x32xbf16> -> vector<2x1x10x8x32xbf16>
    %102 = vector.shape_cast %101 : vector<2x1x10x8x32xbf16> to vector<160x32xbf16>
    %c6 = arith.constant 6 : index
    %c0_30 = arith.constant 0 : index
    %c0_31 = arith.constant 0 : index
    %103 = vector.load %arg4[%c6, %c0_30, %c0_31] : memref<25x32x64xbf16, #tpu.memory_space<vmem>>, vector<1x32x64xbf16>
    %104 = vector.shape_cast %103 : vector<1x32x64xbf16> to vector<32x64xbf16>
    %cst_32 = arith.constant dense<0.000000e+00> : vector<160x64xf32>
    %105 = tpu.matmul %102, %104, %cst_32 {dimension_numbers = #tpu.dot_dimension_numbers<[1], [0], [0], [1], [0, 0, 1, 1], [], []>} : vector<160x32xbf16>, vector<32x64xbf16>, vector<160x64xf32> -> vector<160x64xf32>
    %106 = arith.addf %96, %105 : vector<160x64xf32>
    %107 = vector.extract_strided_slice %26 {offsets = [0, 1, 1, 0], sizes = [1, 10, 8, 32], strides = [1, 1, 1, 1]} : vector<1x14x16x32xbf16> to vector<1x10x8x32xbf16>
    %108 = vector.extract_strided_slice %35 {offsets = [0, 1, 1, 0], sizes = [1, 10, 8, 32], strides = [1, 1, 1, 1]} : vector<1x14x16x32xbf16> to vector<1x10x8x32xbf16>
    %109 = vector.shape_cast %107 : vector<1x10x8x32xbf16> to vector<1x1x10x8x32xbf16>
    %110 = vector.shape_cast %108 : vector<1x10x8x32xbf16> to vector<1x1x10x8x32xbf16>
    %111 = tpu.concatenate %109, %110 in 0 : vector<1x1x10x8x32xbf16>, vector<1x1x10x8x32xbf16> -> vector<2x1x10x8x32xbf16>
    %112 = vector.shape_cast %111 : vector<2x1x10x8x32xbf16> to vector<160x32xbf16>
    %c7 = arith.constant 7 : index
    %c0_33 = arith.constant 0 : index
    %c0_34 = arith.constant 0 : index
    %113 = vector.load %arg4[%c7, %c0_33, %c0_34] : memref<25x32x64xbf16, #tpu.memory_space<vmem>>, vector<1x32x64xbf16>
    %114 = vector.shape_cast %113 : vector<1x32x64xbf16> to vector<32x64xbf16>
    %cst_35 = arith.constant dense<0.000000e+00> : vector<160x64xf32>
    %115 = tpu.matmul %112, %114, %cst_35 {dimension_numbers = #tpu.dot_dimension_numbers<[1], [0], [0], [1], [0, 0, 1, 1], [], []>} : vector<160x32xbf16>, vector<32x64xbf16>, vector<160x64xf32> -> vector<160x64xf32>
    %116 = arith.addf %106, %115 : vector<160x64xf32>
    %117 = vector.extract_strided_slice %35 {offsets = [0, 1, 1, 0], sizes = [1, 10, 8, 32], strides = [1, 1, 1, 1]} : vector<1x14x16x32xbf16> to vector<1x10x8x32xbf16>
    %118 = vector.extract_strided_slice %26 {offsets = [0, 1, 2, 0], sizes = [1, 10, 8, 32], strides = [1, 1, 1, 1]} : vector<1x14x16x32xbf16> to vector<1x10x8x32xbf16>
    %119 = vector.shape_cast %117 : vector<1x10x8x32xbf16> to vector<1x1x10x8x32xbf16>
    %120 = vector.shape_cast %118 : vector<1x10x8x32xbf16> to vector<1x1x10x8x32xbf16>
    %121 = tpu.concatenate %119, %120 in 0 : vector<1x1x10x8x32xbf16>, vector<1x1x10x8x32xbf16> -> vector<2x1x10x8x32xbf16>
    %122 = vector.shape_cast %121 : vector<2x1x10x8x32xbf16> to vector<160x32xbf16>
    %c8 = arith.constant 8 : index
    %c0_36 = arith.constant 0 : index
    %c0_37 = arith.constant 0 : index
    %123 = vector.load %arg4[%c8, %c0_36, %c0_37] : memref<25x32x64xbf16, #tpu.memory_space<vmem>>, vector<1x32x64xbf16>
    %124 = vector.shape_cast %123 : vector<1x32x64xbf16> to vector<32x64xbf16>
    %cst_38 = arith.constant dense<0.000000e+00> : vector<160x64xf32>
    %125 = tpu.matmul %122, %124, %cst_38 {dimension_numbers = #tpu.dot_dimension_numbers<[1], [0], [0], [1], [0, 0, 1, 1], [], []>} : vector<160x32xbf16>, vector<32x64xbf16>, vector<160x64xf32> -> vector<160x64xf32>
    %126 = arith.addf %116, %125 : vector<160x64xf32>
    %127 = vector.extract_strided_slice %26 {offsets = [0, 1, 2, 0], sizes = [1, 10, 8, 32], strides = [1, 1, 1, 1]} : vector<1x14x16x32xbf16> to vector<1x10x8x32xbf16>
    %128 = vector.extract_strided_slice %35 {offsets = [0, 1, 2, 0], sizes = [1, 10, 8, 32], strides = [1, 1, 1, 1]} : vector<1x14x16x32xbf16> to vector<1x10x8x32xbf16>
    %129 = vector.shape_cast %127 : vector<1x10x8x32xbf16> to vector<1x1x10x8x32xbf16>
    %130 = vector.shape_cast %128 : vector<1x10x8x32xbf16> to vector<1x1x10x8x32xbf16>
    %131 = tpu.concatenate %129, %130 in 0 : vector<1x1x10x8x32xbf16>, vector<1x1x10x8x32xbf16> -> vector<2x1x10x8x32xbf16>
    %132 = vector.shape_cast %131 : vector<2x1x10x8x32xbf16> to vector<160x32xbf16>
    %c9 = arith.constant 9 : index
    %c0_39 = arith.constant 0 : index
    %c0_40 = arith.constant 0 : index
    %133 = vector.load %arg4[%c9, %c0_39, %c0_40] : memref<25x32x64xbf16, #tpu.memory_space<vmem>>, vector<1x32x64xbf16>
    %134 = vector.shape_cast %133 : vector<1x32x64xbf16> to vector<32x64xbf16>
    %cst_41 = arith.constant dense<0.000000e+00> : vector<160x64xf32>
    %135 = tpu.matmul %132, %134, %cst_41 {dimension_numbers = #tpu.dot_dimension_numbers<[1], [0], [0], [1], [0, 0, 1, 1], [], []>} : vector<160x32xbf16>, vector<32x64xbf16>, vector<160x64xf32> -> vector<160x64xf32>
    %136 = arith.addf %126, %135 : vector<160x64xf32>
    %137 = vector.extract_strided_slice %26 {offsets = [0, 2, 0, 0], sizes = [1, 10, 8, 32], strides = [1, 1, 1, 1]} : vector<1x14x16x32xbf16> to vector<1x10x8x32xbf16>
    %138 = vector.extract_strided_slice %35 {offsets = [0, 2, 0, 0], sizes = [1, 10, 8, 32], strides = [1, 1, 1, 1]} : vector<1x14x16x32xbf16> to vector<1x10x8x32xbf16>
    %139 = vector.shape_cast %137 : vector<1x10x8x32xbf16> to vector<1x1x10x8x32xbf16>
    %140 = vector.shape_cast %138 : vector<1x10x8x32xbf16> to vector<1x1x10x8x32xbf16>
    %141 = tpu.concatenate %139, %140 in 0 : vector<1x1x10x8x32xbf16>, vector<1x1x10x8x32xbf16> -> vector<2x1x10x8x32xbf16>
    %142 = vector.shape_cast %141 : vector<2x1x10x8x32xbf16> to vector<160x32xbf16>
    %c10 = arith.constant 10 : index
    %c0_42 = arith.constant 0 : index
    %c0_43 = arith.constant 0 : index
    %143 = vector.load %arg4[%c10, %c0_42, %c0_43] : memref<25x32x64xbf16, #tpu.memory_space<vmem>>, vector<1x32x64xbf16>
    %144 = vector.shape_cast %143 : vector<1x32x64xbf16> to vector<32x64xbf16>
    %cst_44 = arith.constant dense<0.000000e+00> : vector<160x64xf32>
    %145 = tpu.matmul %142, %144, %cst_44 {dimension_numbers = #tpu.dot_dimension_numbers<[1], [0], [0], [1], [0, 0, 1, 1], [], []>} : vector<160x32xbf16>, vector<32x64xbf16>, vector<160x64xf32> -> vector<160x64xf32>
    %146 = arith.addf %136, %145 : vector<160x64xf32>
    %147 = vector.extract_strided_slice %35 {offsets = [0, 2, 0, 0], sizes = [1, 10, 8, 32], strides = [1, 1, 1, 1]} : vector<1x14x16x32xbf16> to vector<1x10x8x32xbf16>
    %148 = vector.extract_strided_slice %26 {offsets = [0, 2, 1, 0], sizes = [1, 10, 8, 32], strides = [1, 1, 1, 1]} : vector<1x14x16x32xbf16> to vector<1x10x8x32xbf16>
    %149 = vector.shape_cast %147 : vector<1x10x8x32xbf16> to vector<1x1x10x8x32xbf16>
    %150 = vector.shape_cast %148 : vector<1x10x8x32xbf16> to vector<1x1x10x8x32xbf16>
    %151 = tpu.concatenate %149, %150 in 0 : vector<1x1x10x8x32xbf16>, vector<1x1x10x8x32xbf16> -> vector<2x1x10x8x32xbf16>
    %152 = vector.shape_cast %151 : vector<2x1x10x8x32xbf16> to vector<160x32xbf16>
    %c11 = arith.constant 11 : index
    %c0_45 = arith.constant 0 : index
    %c0_46 = arith.constant 0 : index
    %153 = vector.load %arg4[%c11, %c0_45, %c0_46] : memref<25x32x64xbf16, #tpu.memory_space<vmem>>, vector<1x32x64xbf16>
    %154 = vector.shape_cast %153 : vector<1x32x64xbf16> to vector<32x64xbf16>
    %cst_47 = arith.constant dense<0.000000e+00> : vector<160x64xf32>
    %155 = tpu.matmul %152, %154, %cst_47 {dimension_numbers = #tpu.dot_dimension_numbers<[1], [0], [0], [1], [0, 0, 1, 1], [], []>} : vector<160x32xbf16>, vector<32x64xbf16>, vector<160x64xf32> -> vector<160x64xf32>
    %156 = arith.addf %146, %155 : vector<160x64xf32>
    %157 = vector.extract_strided_slice %26 {offsets = [0, 2, 1, 0], sizes = [1, 10, 8, 32], strides = [1, 1, 1, 1]} : vector<1x14x16x32xbf16> to vector<1x10x8x32xbf16>
    %158 = vector.extract_strided_slice %35 {offsets = [0, 2, 1, 0], sizes = [1, 10, 8, 32], strides = [1, 1, 1, 1]} : vector<1x14x16x32xbf16> to vector<1x10x8x32xbf16>
    %159 = vector.shape_cast %157 : vector<1x10x8x32xbf16> to vector<1x1x10x8x32xbf16>
    %160 = vector.shape_cast %158 : vector<1x10x8x32xbf16> to vector<1x1x10x8x32xbf16>
    %161 = tpu.concatenate %159, %160 in 0 : vector<1x1x10x8x32xbf16>, vector<1x1x10x8x32xbf16> -> vector<2x1x10x8x32xbf16>
    %162 = vector.shape_cast %161 : vector<2x1x10x8x32xbf16> to vector<160x32xbf16>
    %c12 = arith.constant 12 : index
    %c0_48 = arith.constant 0 : index
    %c0_49 = arith.constant 0 : index
    %163 = vector.load %arg4[%c12, %c0_48, %c0_49] : memref<25x32x64xbf16, #tpu.memory_space<vmem>>, vector<1x32x64xbf16>
    %164 = vector.shape_cast %163 : vector<1x32x64xbf16> to vector<32x64xbf16>
    %cst_50 = arith.constant dense<0.000000e+00> : vector<160x64xf32>
    %165 = tpu.matmul %162, %164, %cst_50 {dimension_numbers = #tpu.dot_dimension_numbers<[1], [0], [0], [1], [0, 0, 1, 1], [], []>} : vector<160x32xbf16>, vector<32x64xbf16>, vector<160x64xf32> -> vector<160x64xf32>
    %166 = arith.addf %156, %165 : vector<160x64xf32>
    %167 = vector.extract_strided_slice %35 {offsets = [0, 2, 1, 0], sizes = [1, 10, 8, 32], strides = [1, 1, 1, 1]} : vector<1x14x16x32xbf16> to vector<1x10x8x32xbf16>
    %168 = vector.extract_strided_slice %26 {offsets = [0, 2, 2, 0], sizes = [1, 10, 8, 32], strides = [1, 1, 1, 1]} : vector<1x14x16x32xbf16> to vector<1x10x8x32xbf16>
    %169 = vector.shape_cast %167 : vector<1x10x8x32xbf16> to vector<1x1x10x8x32xbf16>
    %170 = vector.shape_cast %168 : vector<1x10x8x32xbf16> to vector<1x1x10x8x32xbf16>
    %171 = tpu.concatenate %169, %170 in 0 : vector<1x1x10x8x32xbf16>, vector<1x1x10x8x32xbf16> -> vector<2x1x10x8x32xbf16>
    %172 = vector.shape_cast %171 : vector<2x1x10x8x32xbf16> to vector<160x32xbf16>
    %c13 = arith.constant 13 : index
    %c0_51 = arith.constant 0 : index
    %c0_52 = arith.constant 0 : index
    %173 = vector.load %arg4[%c13, %c0_51, %c0_52] : memref<25x32x64xbf16, #tpu.memory_space<vmem>>, vector<1x32x64xbf16>
    %174 = vector.shape_cast %173 : vector<1x32x64xbf16> to vector<32x64xbf16>
    %cst_53 = arith.constant dense<0.000000e+00> : vector<160x64xf32>
    %175 = tpu.matmul %172, %174, %cst_53 {dimension_numbers = #tpu.dot_dimension_numbers<[1], [0], [0], [1], [0, 0, 1, 1], [], []>} : vector<160x32xbf16>, vector<32x64xbf16>, vector<160x64xf32> -> vector<160x64xf32>
    %176 = arith.addf %166, %175 : vector<160x64xf32>
    %177 = vector.extract_strided_slice %26 {offsets = [0, 2, 2, 0], sizes = [1, 10, 8, 32], strides = [1, 1, 1, 1]} : vector<1x14x16x32xbf16> to vector<1x10x8x32xbf16>
    %178 = vector.extract_strided_slice %35 {offsets = [0, 2, 2, 0], sizes = [1, 10, 8, 32], strides = [1, 1, 1, 1]} : vector<1x14x16x32xbf16> to vector<1x10x8x32xbf16>
    %179 = vector.shape_cast %177 : vector<1x10x8x32xbf16> to vector<1x1x10x8x32xbf16>
    %180 = vector.shape_cast %178 : vector<1x10x8x32xbf16> to vector<1x1x10x8x32xbf16>
    %181 = tpu.concatenate %179, %180 in 0 : vector<1x1x10x8x32xbf16>, vector<1x1x10x8x32xbf16> -> vector<2x1x10x8x32xbf16>
    %182 = vector.shape_cast %181 : vector<2x1x10x8x32xbf16> to vector<160x32xbf16>
    %c14 = arith.constant 14 : index
    %c0_54 = arith.constant 0 : index
    %c0_55 = arith.constant 0 : index
    %183 = vector.load %arg4[%c14, %c0_54, %c0_55] : memref<25x32x64xbf16, #tpu.memory_space<vmem>>, vector<1x32x64xbf16>
    %184 = vector.shape_cast %183 : vector<1x32x64xbf16> to vector<32x64xbf16>
    %cst_56 = arith.constant dense<0.000000e+00> : vector<160x64xf32>
    %185 = tpu.matmul %182, %184, %cst_56 {dimension_numbers = #tpu.dot_dimension_numbers<[1], [0], [0], [1], [0, 0, 1, 1], [], []>} : vector<160x32xbf16>, vector<32x64xbf16>, vector<160x64xf32> -> vector<160x64xf32>
    %186 = arith.addf %176, %185 : vector<160x64xf32>
    %187 = vector.extract_strided_slice %26 {offsets = [0, 3, 0, 0], sizes = [1, 10, 8, 32], strides = [1, 1, 1, 1]} : vector<1x14x16x32xbf16> to vector<1x10x8x32xbf16>
    %188 = vector.extract_strided_slice %35 {offsets = [0, 3, 0, 0], sizes = [1, 10, 8, 32], strides = [1, 1, 1, 1]} : vector<1x14x16x32xbf16> to vector<1x10x8x32xbf16>
    %189 = vector.shape_cast %187 : vector<1x10x8x32xbf16> to vector<1x1x10x8x32xbf16>
    %190 = vector.shape_cast %188 : vector<1x10x8x32xbf16> to vector<1x1x10x8x32xbf16>
    %191 = tpu.concatenate %189, %190 in 0 : vector<1x1x10x8x32xbf16>, vector<1x1x10x8x32xbf16> -> vector<2x1x10x8x32xbf16>
    %192 = vector.shape_cast %191 : vector<2x1x10x8x32xbf16> to vector<160x32xbf16>
    %c15 = arith.constant 15 : index
    %c0_57 = arith.constant 0 : index
    %c0_58 = arith.constant 0 : index
    %193 = vector.load %arg4[%c15, %c0_57, %c0_58] : memref<25x32x64xbf16, #tpu.memory_space<vmem>>, vector<1x32x64xbf16>
    %194 = vector.shape_cast %193 : vector<1x32x64xbf16> to vector<32x64xbf16>
    %cst_59 = arith.constant dense<0.000000e+00> : vector<160x64xf32>
    %195 = tpu.matmul %192, %194, %cst_59 {dimension_numbers = #tpu.dot_dimension_numbers<[1], [0], [0], [1], [0, 0, 1, 1], [], []>} : vector<160x32xbf16>, vector<32x64xbf16>, vector<160x64xf32> -> vector<160x64xf32>
    %196 = arith.addf %186, %195 : vector<160x64xf32>
    %197 = vector.extract_strided_slice %35 {offsets = [0, 3, 0, 0], sizes = [1, 10, 8, 32], strides = [1, 1, 1, 1]} : vector<1x14x16x32xbf16> to vector<1x10x8x32xbf16>
    %198 = vector.extract_strided_slice %26 {offsets = [0, 3, 1, 0], sizes = [1, 10, 8, 32], strides = [1, 1, 1, 1]} : vector<1x14x16x32xbf16> to vector<1x10x8x32xbf16>
    %199 = vector.shape_cast %197 : vector<1x10x8x32xbf16> to vector<1x1x10x8x32xbf16>
    %200 = vector.shape_cast %198 : vector<1x10x8x32xbf16> to vector<1x1x10x8x32xbf16>
    %201 = tpu.concatenate %199, %200 in 0 : vector<1x1x10x8x32xbf16>, vector<1x1x10x8x32xbf16> -> vector<2x1x10x8x32xbf16>
    %202 = vector.shape_cast %201 : vector<2x1x10x8x32xbf16> to vector<160x32xbf16>
    %c16 = arith.constant 16 : index
    %c0_60 = arith.constant 0 : index
    %c0_61 = arith.constant 0 : index
    %203 = vector.load %arg4[%c16, %c0_60, %c0_61] : memref<25x32x64xbf16, #tpu.memory_space<vmem>>, vector<1x32x64xbf16>
    %204 = vector.shape_cast %203 : vector<1x32x64xbf16> to vector<32x64xbf16>
    %cst_62 = arith.constant dense<0.000000e+00> : vector<160x64xf32>
    %205 = tpu.matmul %202, %204, %cst_62 {dimension_numbers = #tpu.dot_dimension_numbers<[1], [0], [0], [1], [0, 0, 1, 1], [], []>} : vector<160x32xbf16>, vector<32x64xbf16>, vector<160x64xf32> -> vector<160x64xf32>
    %206 = arith.addf %196, %205 : vector<160x64xf32>
    %207 = vector.extract_strided_slice %26 {offsets = [0, 3, 1, 0], sizes = [1, 10, 8, 32], strides = [1, 1, 1, 1]} : vector<1x14x16x32xbf16> to vector<1x10x8x32xbf16>
    %208 = vector.extract_strided_slice %35 {offsets = [0, 3, 1, 0], sizes = [1, 10, 8, 32], strides = [1, 1, 1, 1]} : vector<1x14x16x32xbf16> to vector<1x10x8x32xbf16>
    %209 = vector.shape_cast %207 : vector<1x10x8x32xbf16> to vector<1x1x10x8x32xbf16>
    %210 = vector.shape_cast %208 : vector<1x10x8x32xbf16> to vector<1x1x10x8x32xbf16>
    %211 = tpu.concatenate %209, %210 in 0 : vector<1x1x10x8x32xbf16>, vector<1x1x10x8x32xbf16> -> vector<2x1x10x8x32xbf16>
    %212 = vector.shape_cast %211 : vector<2x1x10x8x32xbf16> to vector<160x32xbf16>
    %c17 = arith.constant 17 : index
    %c0_63 = arith.constant 0 : index
    %c0_64 = arith.constant 0 : index
    %213 = vector.load %arg4[%c17, %c0_63, %c0_64] : memref<25x32x64xbf16, #tpu.memory_space<vmem>>, vector<1x32x64xbf16>
    %214 = vector.shape_cast %213 : vector<1x32x64xbf16> to vector<32x64xbf16>
    %cst_65 = arith.constant dense<0.000000e+00> : vector<160x64xf32>
    %215 = tpu.matmul %212, %214, %cst_65 {dimension_numbers = #tpu.dot_dimension_numbers<[1], [0], [0], [1], [0, 0, 1, 1], [], []>} : vector<160x32xbf16>, vector<32x64xbf16>, vector<160x64xf32> -> vector<160x64xf32>
    %216 = arith.addf %206, %215 : vector<160x64xf32>
    %217 = vector.extract_strided_slice %35 {offsets = [0, 3, 1, 0], sizes = [1, 10, 8, 32], strides = [1, 1, 1, 1]} : vector<1x14x16x32xbf16> to vector<1x10x8x32xbf16>
    %218 = vector.extract_strided_slice %26 {offsets = [0, 3, 2, 0], sizes = [1, 10, 8, 32], strides = [1, 1, 1, 1]} : vector<1x14x16x32xbf16> to vector<1x10x8x32xbf16>
    %219 = vector.shape_cast %217 : vector<1x10x8x32xbf16> to vector<1x1x10x8x32xbf16>
    %220 = vector.shape_cast %218 : vector<1x10x8x32xbf16> to vector<1x1x10x8x32xbf16>
    %221 = tpu.concatenate %219, %220 in 0 : vector<1x1x10x8x32xbf16>, vector<1x1x10x8x32xbf16> -> vector<2x1x10x8x32xbf16>
    %222 = vector.shape_cast %221 : vector<2x1x10x8x32xbf16> to vector<160x32xbf16>
    %c18 = arith.constant 18 : index
    %c0_66 = arith.constant 0 : index
    %c0_67 = arith.constant 0 : index
    %223 = vector.load %arg4[%c18, %c0_66, %c0_67] : memref<25x32x64xbf16, #tpu.memory_space<vmem>>, vector<1x32x64xbf16>
    %224 = vector.shape_cast %223 : vector<1x32x64xbf16> to vector<32x64xbf16>
    %cst_68 = arith.constant dense<0.000000e+00> : vector<160x64xf32>
    %225 = tpu.matmul %222, %224, %cst_68 {dimension_numbers = #tpu.dot_dimension_numbers<[1], [0], [0], [1], [0, 0, 1, 1], [], []>} : vector<160x32xbf16>, vector<32x64xbf16>, vector<160x64xf32> -> vector<160x64xf32>
    %226 = arith.addf %216, %225 : vector<160x64xf32>
    %227 = vector.extract_strided_slice %26 {offsets = [0, 3, 2, 0], sizes = [1, 10, 8, 32], strides = [1, 1, 1, 1]} : vector<1x14x16x32xbf16> to vector<1x10x8x32xbf16>
    %228 = vector.extract_strided_slice %35 {offsets = [0, 3, 2, 0], sizes = [1, 10, 8, 32], strides = [1, 1, 1, 1]} : vector<1x14x16x32xbf16> to vector<1x10x8x32xbf16>
    %229 = vector.shape_cast %227 : vector<1x10x8x32xbf16> to vector<1x1x10x8x32xbf16>
    %230 = vector.shape_cast %228 : vector<1x10x8x32xbf16> to vector<1x1x10x8x32xbf16>
    %231 = tpu.concatenate %229, %230 in 0 : vector<1x1x10x8x32xbf16>, vector<1x1x10x8x32xbf16> -> vector<2x1x10x8x32xbf16>
    %232 = vector.shape_cast %231 : vector<2x1x10x8x32xbf16> to vector<160x32xbf16>
    %c19 = arith.constant 19 : index
    %c0_69 = arith.constant 0 : index
    %c0_70 = arith.constant 0 : index
    %233 = vector.load %arg4[%c19, %c0_69, %c0_70] : memref<25x32x64xbf16, #tpu.memory_space<vmem>>, vector<1x32x64xbf16>
    %234 = vector.shape_cast %233 : vector<1x32x64xbf16> to vector<32x64xbf16>
    %cst_71 = arith.constant dense<0.000000e+00> : vector<160x64xf32>
    %235 = tpu.matmul %232, %234, %cst_71 {dimension_numbers = #tpu.dot_dimension_numbers<[1], [0], [0], [1], [0, 0, 1, 1], [], []>} : vector<160x32xbf16>, vector<32x64xbf16>, vector<160x64xf32> -> vector<160x64xf32>
    %236 = arith.addf %226, %235 : vector<160x64xf32>
    %237 = vector.extract_strided_slice %26 {offsets = [0, 4, 0, 0], sizes = [1, 10, 8, 32], strides = [1, 1, 1, 1]} : vector<1x14x16x32xbf16> to vector<1x10x8x32xbf16>
    %238 = vector.extract_strided_slice %35 {offsets = [0, 4, 0, 0], sizes = [1, 10, 8, 32], strides = [1, 1, 1, 1]} : vector<1x14x16x32xbf16> to vector<1x10x8x32xbf16>
    %239 = vector.shape_cast %237 : vector<1x10x8x32xbf16> to vector<1x1x10x8x32xbf16>
    %240 = vector.shape_cast %238 : vector<1x10x8x32xbf16> to vector<1x1x10x8x32xbf16>
    %241 = tpu.concatenate %239, %240 in 0 : vector<1x1x10x8x32xbf16>, vector<1x1x10x8x32xbf16> -> vector<2x1x10x8x32xbf16>
    %242 = vector.shape_cast %241 : vector<2x1x10x8x32xbf16> to vector<160x32xbf16>
    %c20 = arith.constant 20 : index
    %c0_72 = arith.constant 0 : index
    %c0_73 = arith.constant 0 : index
    %243 = vector.load %arg4[%c20, %c0_72, %c0_73] : memref<25x32x64xbf16, #tpu.memory_space<vmem>>, vector<1x32x64xbf16>
    %244 = vector.shape_cast %243 : vector<1x32x64xbf16> to vector<32x64xbf16>
    %cst_74 = arith.constant dense<0.000000e+00> : vector<160x64xf32>
    %245 = tpu.matmul %242, %244, %cst_74 {dimension_numbers = #tpu.dot_dimension_numbers<[1], [0], [0], [1], [0, 0, 1, 1], [], []>} : vector<160x32xbf16>, vector<32x64xbf16>, vector<160x64xf32> -> vector<160x64xf32>
    %246 = arith.addf %236, %245 : vector<160x64xf32>
    %247 = vector.extract_strided_slice %35 {offsets = [0, 4, 0, 0], sizes = [1, 10, 8, 32], strides = [1, 1, 1, 1]} : vector<1x14x16x32xbf16> to vector<1x10x8x32xbf16>
    %248 = vector.extract_strided_slice %26 {offsets = [0, 4, 1, 0], sizes = [1, 10, 8, 32], strides = [1, 1, 1, 1]} : vector<1x14x16x32xbf16> to vector<1x10x8x32xbf16>
    %249 = vector.shape_cast %247 : vector<1x10x8x32xbf16> to vector<1x1x10x8x32xbf16>
    %250 = vector.shape_cast %248 : vector<1x10x8x32xbf16> to vector<1x1x10x8x32xbf16>
    %251 = tpu.concatenate %249, %250 in 0 : vector<1x1x10x8x32xbf16>, vector<1x1x10x8x32xbf16> -> vector<2x1x10x8x32xbf16>
    %252 = vector.shape_cast %251 : vector<2x1x10x8x32xbf16> to vector<160x32xbf16>
    %c21 = arith.constant 21 : index
    %c0_75 = arith.constant 0 : index
    %c0_76 = arith.constant 0 : index
    %253 = vector.load %arg4[%c21, %c0_75, %c0_76] : memref<25x32x64xbf16, #tpu.memory_space<vmem>>, vector<1x32x64xbf16>
    %254 = vector.shape_cast %253 : vector<1x32x64xbf16> to vector<32x64xbf16>
    %cst_77 = arith.constant dense<0.000000e+00> : vector<160x64xf32>
    %255 = tpu.matmul %252, %254, %cst_77 {dimension_numbers = #tpu.dot_dimension_numbers<[1], [0], [0], [1], [0, 0, 1, 1], [], []>} : vector<160x32xbf16>, vector<32x64xbf16>, vector<160x64xf32> -> vector<160x64xf32>
    %256 = arith.addf %246, %255 : vector<160x64xf32>
    %257 = vector.extract_strided_slice %26 {offsets = [0, 4, 1, 0], sizes = [1, 10, 8, 32], strides = [1, 1, 1, 1]} : vector<1x14x16x32xbf16> to vector<1x10x8x32xbf16>
    %258 = vector.extract_strided_slice %35 {offsets = [0, 4, 1, 0], sizes = [1, 10, 8, 32], strides = [1, 1, 1, 1]} : vector<1x14x16x32xbf16> to vector<1x10x8x32xbf16>
    %259 = vector.shape_cast %257 : vector<1x10x8x32xbf16> to vector<1x1x10x8x32xbf16>
    %260 = vector.shape_cast %258 : vector<1x10x8x32xbf16> to vector<1x1x10x8x32xbf16>
    %261 = tpu.concatenate %259, %260 in 0 : vector<1x1x10x8x32xbf16>, vector<1x1x10x8x32xbf16> -> vector<2x1x10x8x32xbf16>
    %262 = vector.shape_cast %261 : vector<2x1x10x8x32xbf16> to vector<160x32xbf16>
    %c22 = arith.constant 22 : index
    %c0_78 = arith.constant 0 : index
    %c0_79 = arith.constant 0 : index
    %263 = vector.load %arg4[%c22, %c0_78, %c0_79] : memref<25x32x64xbf16, #tpu.memory_space<vmem>>, vector<1x32x64xbf16>
    %264 = vector.shape_cast %263 : vector<1x32x64xbf16> to vector<32x64xbf16>
    %cst_80 = arith.constant dense<0.000000e+00> : vector<160x64xf32>
    %265 = tpu.matmul %262, %264, %cst_80 {dimension_numbers = #tpu.dot_dimension_numbers<[1], [0], [0], [1], [0, 0, 1, 1], [], []>} : vector<160x32xbf16>, vector<32x64xbf16>, vector<160x64xf32> -> vector<160x64xf32>
    %266 = arith.addf %256, %265 : vector<160x64xf32>
    %267 = vector.extract_strided_slice %35 {offsets = [0, 4, 1, 0], sizes = [1, 10, 8, 32], strides = [1, 1, 1, 1]} : vector<1x14x16x32xbf16> to vector<1x10x8x32xbf16>
    %268 = vector.extract_strided_slice %26 {offsets = [0, 4, 2, 0], sizes = [1, 10, 8, 32], strides = [1, 1, 1, 1]} : vector<1x14x16x32xbf16> to vector<1x10x8x32xbf16>
    %269 = vector.shape_cast %267 : vector<1x10x8x32xbf16> to vector<1x1x10x8x32xbf16>
    %270 = vector.shape_cast %268 : vector<1x10x8x32xbf16> to vector<1x1x10x8x32xbf16>
    %271 = tpu.concatenate %269, %270 in 0 : vector<1x1x10x8x32xbf16>, vector<1x1x10x8x32xbf16> -> vector<2x1x10x8x32xbf16>
    %272 = vector.shape_cast %271 : vector<2x1x10x8x32xbf16> to vector<160x32xbf16>
    %c23 = arith.constant 23 : index
    %c0_81 = arith.constant 0 : index
    %c0_82 = arith.constant 0 : index
    %273 = vector.load %arg4[%c23, %c0_81, %c0_82] : memref<25x32x64xbf16, #tpu.memory_space<vmem>>, vector<1x32x64xbf16>
    %274 = vector.shape_cast %273 : vector<1x32x64xbf16> to vector<32x64xbf16>
    %cst_83 = arith.constant dense<0.000000e+00> : vector<160x64xf32>
    %275 = tpu.matmul %272, %274, %cst_83 {dimension_numbers = #tpu.dot_dimension_numbers<[1], [0], [0], [1], [0, 0, 1, 1], [], []>} : vector<160x32xbf16>, vector<32x64xbf16>, vector<160x64xf32> -> vector<160x64xf32>
    %276 = arith.addf %266, %275 : vector<160x64xf32>
    %277 = vector.extract_strided_slice %26 {offsets = [0, 4, 2, 0], sizes = [1, 10, 8, 32], strides = [1, 1, 1, 1]} : vector<1x14x16x32xbf16> to vector<1x10x8x32xbf16>
    %278 = vector.extract_strided_slice %35 {offsets = [0, 4, 2, 0], sizes = [1, 10, 8, 32], strides = [1, 1, 1, 1]} : vector<1x14x16x32xbf16> to vector<1x10x8x32xbf16>
    %279 = vector.shape_cast %277 : vector<1x10x8x32xbf16> to vector<1x1x10x8x32xbf16>
    %280 = vector.shape_cast %278 : vector<1x10x8x32xbf16> to vector<1x1x10x8x32xbf16>
    %281 = tpu.concatenate %279, %280 in 0 : vector<1x1x10x8x32xbf16>, vector<1x1x10x8x32xbf16> -> vector<2x1x10x8x32xbf16>
    %282 = vector.shape_cast %281 : vector<2x1x10x8x32xbf16> to vector<160x32xbf16>
    %c24 = arith.constant 24 : index
    %c0_84 = arith.constant 0 : index
    %c0_85 = arith.constant 0 : index
    %283 = vector.load %arg4[%c24, %c0_84, %c0_85] : memref<25x32x64xbf16, #tpu.memory_space<vmem>>, vector<1x32x64xbf16>
    %284 = vector.shape_cast %283 : vector<1x32x64xbf16> to vector<32x64xbf16>
    %cst_86 = arith.constant dense<0.000000e+00> : vector<160x64xf32>
    %285 = tpu.matmul %282, %284, %cst_86 {dimension_numbers = #tpu.dot_dimension_numbers<[1], [0], [0], [1], [0, 0, 1, 1], [], []>} : vector<160x32xbf16>, vector<32x64xbf16>, vector<160x64xf32> -> vector<160x64xf32>
    %286 = arith.addf %276, %285 : vector<160x64xf32>
    %c0_87 = arith.constant 0 : index
    %c0_88 = arith.constant 0 : index
    %287 = vector.load %arg5[%c0_87, %c0_88] : memref<1x64xf32, #tpu.memory_space<vmem>>, vector<1x64xf32>
    %288 = vector.broadcast %287 : vector<1x64xf32> to vector<160x64xf32>
    %289 = arith.addf %286, %288 : vector<160x64xf32>
    %290 = vector.shape_cast %289 : vector<160x64xf32> to vector<2x1x10x8x64xf32>
    %291 = vector.extract_strided_slice %290 {offsets = [0, 0, 0, 0, 0], sizes = [1, 1, 10, 8, 64], strides = [1, 1, 1, 1, 1]} : vector<2x1x10x8x64xf32> to vector<1x1x10x8x64xf32>
    %292 = vector.shape_cast %291 : vector<1x1x10x8x64xf32> to vector<1x10x8x64xf32>
    %293 = vector.extract_strided_slice %290 {offsets = [1, 0, 0, 0, 0], sizes = [1, 1, 10, 8, 64], strides = [1, 1, 1, 1, 1]} : vector<2x1x10x8x64xf32> to vector<1x1x10x8x64xf32>
    %294 = vector.shape_cast %293 : vector<1x1x10x8x64xf32> to vector<1x10x8x64xf32>
    %295 = arith.maximumf %292, %294 : vector<1x10x8x64xf32>
    %296 = vector.extract_strided_slice %295 {offsets = [0, 0, 0, 0], sizes = [1, 10, 5, 64], strides = [1, 1, 1, 1]} : vector<1x10x8x64xf32> to vector<1x10x5x64xf32>
    %297 = vector.shape_cast %296 : vector<1x10x5x64xf32> to vector<1x5x2x5x64xf32>
    %298 = vector.extract_strided_slice %297 {offsets = [0, 0, 0, 0, 0], sizes = [1, 5, 1, 5, 64], strides = [1, 1, 1, 1, 1]} : vector<1x5x2x5x64xf32> to vector<1x5x1x5x64xf32>
    %299 = vector.shape_cast %298 : vector<1x5x1x5x64xf32> to vector<1x5x5x64xf32>
    %300 = vector.extract_strided_slice %297 {offsets = [0, 0, 1, 0, 0], sizes = [1, 5, 1, 5, 64], strides = [1, 1, 1, 1, 1]} : vector<1x5x2x5x64xf32> to vector<1x5x1x5x64xf32>
    %301 = vector.shape_cast %300 : vector<1x5x1x5x64xf32> to vector<1x5x5x64xf32>
    %302 = arith.maximumf %299, %301 : vector<1x5x5x64xf32>
    %cst_89 = arith.constant 0.000000e+00 : f32
    %303 = vector.broadcast %cst_89 : f32 to vector<1x5x5x64xf32>
    %304 = arith.maximumf %302, %303 : vector<1x5x5x64xf32>
    %305 = arith.truncf %304 : vector<1x5x5x64xf32> to vector<1x5x5x64xbf16>
    %cst_90 = arith.constant 0.000000e+00 : f32
    %306 = vector.broadcast %cst_90 : f32 to vector<1x256xf32>
    %307 = vector.extract_strided_slice %305 {offsets = [0, 0, 0, 0], sizes = [1, 1, 5, 64], strides = [1, 1, 1, 1]} : vector<1x5x5x64xbf16> to vector<1x1x5x64xbf16>
    %308 = vector.shape_cast %307 : vector<1x1x5x64xbf16> to vector<1x5x64xbf16>
    %309 = vector.extract_strided_slice %308 {offsets = [0, 0, 0], sizes = [1, 1, 64], strides = [1, 1, 1]} : vector<1x5x64xbf16> to vector<1x1x64xbf16>
    %310 = vector.shape_cast %309 : vector<1x1x64xbf16> to vector<1x64xbf16>
    %c0_91 = arith.constant 0 : index
    %c0_92 = arith.constant 0 : index
    %c0_93 = arith.constant 0 : index
    %311 = vector.load %arg6[%c0_91, %c0_92, %c0_93] : memref<25x64x256xbf16, #tpu.memory_space<vmem>>, vector<1x64x256xbf16>
    %312 = vector.shape_cast %311 : vector<1x64x256xbf16> to vector<64x256xbf16>
    %cst_94 = arith.constant dense<0.000000e+00> : vector<1x256xf32>
    %313 = tpu.matmul %310, %312, %cst_94 {dimension_numbers = #tpu.dot_dimension_numbers<[1], [0], [0], [1], [0, 0, 1, 1], [], []>} : vector<1x64xbf16>, vector<64x256xbf16>, vector<1x256xf32> -> vector<1x256xf32>
    %314 = arith.addf %306, %313 : vector<1x256xf32>
    %315 = vector.extract_strided_slice %308 {offsets = [0, 1, 0], sizes = [1, 1, 64], strides = [1, 1, 1]} : vector<1x5x64xbf16> to vector<1x1x64xbf16>
    %316 = vector.shape_cast %315 : vector<1x1x64xbf16> to vector<1x64xbf16>
    %c1_95 = arith.constant 1 : index
    %c0_96 = arith.constant 0 : index
    %c0_97 = arith.constant 0 : index
    %317 = vector.load %arg6[%c1_95, %c0_96, %c0_97] : memref<25x64x256xbf16, #tpu.memory_space<vmem>>, vector<1x64x256xbf16>
    %318 = vector.shape_cast %317 : vector<1x64x256xbf16> to vector<64x256xbf16>
    %cst_98 = arith.constant dense<0.000000e+00> : vector<1x256xf32>
    %319 = tpu.matmul %316, %318, %cst_98 {dimension_numbers = #tpu.dot_dimension_numbers<[1], [0], [0], [1], [0, 0, 1, 1], [], []>} : vector<1x64xbf16>, vector<64x256xbf16>, vector<1x256xf32> -> vector<1x256xf32>
    %320 = arith.addf %314, %319 : vector<1x256xf32>
    %321 = vector.extract_strided_slice %308 {offsets = [0, 2, 0], sizes = [1, 1, 64], strides = [1, 1, 1]} : vector<1x5x64xbf16> to vector<1x1x64xbf16>
    %322 = vector.shape_cast %321 : vector<1x1x64xbf16> to vector<1x64xbf16>
    %c2_99 = arith.constant 2 : index
    %c0_100 = arith.constant 0 : index
    %c0_101 = arith.constant 0 : index
    %323 = vector.load %arg6[%c2_99, %c0_100, %c0_101] : memref<25x64x256xbf16, #tpu.memory_space<vmem>>, vector<1x64x256xbf16>
    %324 = vector.shape_cast %323 : vector<1x64x256xbf16> to vector<64x256xbf16>
    %cst_102 = arith.constant dense<0.000000e+00> : vector<1x256xf32>
    %325 = tpu.matmul %322, %324, %cst_102 {dimension_numbers = #tpu.dot_dimension_numbers<[1], [0], [0], [1], [0, 0, 1, 1], [], []>} : vector<1x64xbf16>, vector<64x256xbf16>, vector<1x256xf32> -> vector<1x256xf32>
    %326 = arith.addf %320, %325 : vector<1x256xf32>
    %327 = vector.extract_strided_slice %308 {offsets = [0, 3, 0], sizes = [1, 1, 64], strides = [1, 1, 1]} : vector<1x5x64xbf16> to vector<1x1x64xbf16>
    %328 = vector.shape_cast %327 : vector<1x1x64xbf16> to vector<1x64xbf16>
    %c3_103 = arith.constant 3 : index
    %c0_104 = arith.constant 0 : index
    %c0_105 = arith.constant 0 : index
    %329 = vector.load %arg6[%c3_103, %c0_104, %c0_105] : memref<25x64x256xbf16, #tpu.memory_space<vmem>>, vector<1x64x256xbf16>
    %330 = vector.shape_cast %329 : vector<1x64x256xbf16> to vector<64x256xbf16>
    %cst_106 = arith.constant dense<0.000000e+00> : vector<1x256xf32>
    %331 = tpu.matmul %328, %330, %cst_106 {dimension_numbers = #tpu.dot_dimension_numbers<[1], [0], [0], [1], [0, 0, 1, 1], [], []>} : vector<1x64xbf16>, vector<64x256xbf16>, vector<1x256xf32> -> vector<1x256xf32>
    %332 = arith.addf %326, %331 : vector<1x256xf32>
    %333 = vector.extract_strided_slice %308 {offsets = [0, 4, 0], sizes = [1, 1, 64], strides = [1, 1, 1]} : vector<1x5x64xbf16> to vector<1x1x64xbf16>
    %334 = vector.shape_cast %333 : vector<1x1x64xbf16> to vector<1x64xbf16>
    %c4_107 = arith.constant 4 : index
    %c0_108 = arith.constant 0 : index
    %c0_109 = arith.constant 0 : index
    %335 = vector.load %arg6[%c4_107, %c0_108, %c0_109] : memref<25x64x256xbf16, #tpu.memory_space<vmem>>, vector<1x64x256xbf16>
    %336 = vector.shape_cast %335 : vector<1x64x256xbf16> to vector<64x256xbf16>
    %cst_110 = arith.constant dense<0.000000e+00> : vector<1x256xf32>
    %337 = tpu.matmul %334, %336, %cst_110 {dimension_numbers = #tpu.dot_dimension_numbers<[1], [0], [0], [1], [0, 0, 1, 1], [], []>} : vector<1x64xbf16>, vector<64x256xbf16>, vector<1x256xf32> -> vector<1x256xf32>
    %338 = arith.addf %332, %337 : vector<1x256xf32>
    %339 = vector.extract_strided_slice %305 {offsets = [0, 1, 0, 0], sizes = [1, 1, 5, 64], strides = [1, 1, 1, 1]} : vector<1x5x5x64xbf16> to vector<1x1x5x64xbf16>
    %340 = vector.shape_cast %339 : vector<1x1x5x64xbf16> to vector<1x5x64xbf16>
    %341 = vector.extract_strided_slice %340 {offsets = [0, 0, 0], sizes = [1, 1, 64], strides = [1, 1, 1]} : vector<1x5x64xbf16> to vector<1x1x64xbf16>
    %342 = vector.shape_cast %341 : vector<1x1x64xbf16> to vector<1x64xbf16>
    %c5_111 = arith.constant 5 : index
    %c0_112 = arith.constant 0 : index
    %c0_113 = arith.constant 0 : index
    %343 = vector.load %arg6[%c5_111, %c0_112, %c0_113] : memref<25x64x256xbf16, #tpu.memory_space<vmem>>, vector<1x64x256xbf16>
    %344 = vector.shape_cast %343 : vector<1x64x256xbf16> to vector<64x256xbf16>
    %cst_114 = arith.constant dense<0.000000e+00> : vector<1x256xf32>
    %345 = tpu.matmul %342, %344, %cst_114 {dimension_numbers = #tpu.dot_dimension_numbers<[1], [0], [0], [1], [0, 0, 1, 1], [], []>} : vector<1x64xbf16>, vector<64x256xbf16>, vector<1x256xf32> -> vector<1x256xf32>
    %346 = arith.addf %338, %345 : vector<1x256xf32>
    %347 = vector.extract_strided_slice %340 {offsets = [0, 1, 0], sizes = [1, 1, 64], strides = [1, 1, 1]} : vector<1x5x64xbf16> to vector<1x1x64xbf16>
    %348 = vector.shape_cast %347 : vector<1x1x64xbf16> to vector<1x64xbf16>
    %c6_115 = arith.constant 6 : index
    %c0_116 = arith.constant 0 : index
    %c0_117 = arith.constant 0 : index
    %349 = vector.load %arg6[%c6_115, %c0_116, %c0_117] : memref<25x64x256xbf16, #tpu.memory_space<vmem>>, vector<1x64x256xbf16>
    %350 = vector.shape_cast %349 : vector<1x64x256xbf16> to vector<64x256xbf16>
    %cst_118 = arith.constant dense<0.000000e+00> : vector<1x256xf32>
    %351 = tpu.matmul %348, %350, %cst_118 {dimension_numbers = #tpu.dot_dimension_numbers<[1], [0], [0], [1], [0, 0, 1, 1], [], []>} : vector<1x64xbf16>, vector<64x256xbf16>, vector<1x256xf32> -> vector<1x256xf32>
    %352 = arith.addf %346, %351 : vector<1x256xf32>
    %353 = vector.extract_strided_slice %340 {offsets = [0, 2, 0], sizes = [1, 1, 64], strides = [1, 1, 1]} : vector<1x5x64xbf16> to vector<1x1x64xbf16>
    %354 = vector.shape_cast %353 : vector<1x1x64xbf16> to vector<1x64xbf16>
    %c7_119 = arith.constant 7 : index
    %c0_120 = arith.constant 0 : index
    %c0_121 = arith.constant 0 : index
    %355 = vector.load %arg6[%c7_119, %c0_120, %c0_121] : memref<25x64x256xbf16, #tpu.memory_space<vmem>>, vector<1x64x256xbf16>
    %356 = vector.shape_cast %355 : vector<1x64x256xbf16> to vector<64x256xbf16>
    %cst_122 = arith.constant dense<0.000000e+00> : vector<1x256xf32>
    %357 = tpu.matmul %354, %356, %cst_122 {dimension_numbers = #tpu.dot_dimension_numbers<[1], [0], [0], [1], [0, 0, 1, 1], [], []>} : vector<1x64xbf16>, vector<64x256xbf16>, vector<1x256xf32> -> vector<1x256xf32>
    %358 = arith.addf %352, %357 : vector<1x256xf32>
    %359 = vector.extract_strided_slice %340 {offsets = [0, 3, 0], sizes = [1, 1, 64], strides = [1, 1, 1]} : vector<1x5x64xbf16> to vector<1x1x64xbf16>
    %360 = vector.shape_cast %359 : vector<1x1x64xbf16> to vector<1x64xbf16>
    %c8_123 = arith.constant 8 : index
    %c0_124 = arith.constant 0 : index
    %c0_125 = arith.constant 0 : index
    %361 = vector.load %arg6[%c8_123, %c0_124, %c0_125] : memref<25x64x256xbf16, #tpu.memory_space<vmem>>, vector<1x64x256xbf16>
    %362 = vector.shape_cast %361 : vector<1x64x256xbf16> to vector<64x256xbf16>
    %cst_126 = arith.constant dense<0.000000e+00> : vector<1x256xf32>
    %363 = tpu.matmul %360, %362, %cst_126 {dimension_numbers = #tpu.dot_dimension_numbers<[1], [0], [0], [1], [0, 0, 1, 1], [], []>} : vector<1x64xbf16>, vector<64x256xbf16>, vector<1x256xf32> -> vector<1x256xf32>
    %364 = arith.addf %358, %363 : vector<1x256xf32>
    %365 = vector.extract_strided_slice %340 {offsets = [0, 4, 0], sizes = [1, 1, 64], strides = [1, 1, 1]} : vector<1x5x64xbf16> to vector<1x1x64xbf16>
    %366 = vector.shape_cast %365 : vector<1x1x64xbf16> to vector<1x64xbf16>
    %c9_127 = arith.constant 9 : index
    %c0_128 = arith.constant 0 : index
    %c0_129 = arith.constant 0 : index
    %367 = vector.load %arg6[%c9_127, %c0_128, %c0_129] : memref<25x64x256xbf16, #tpu.memory_space<vmem>>, vector<1x64x256xbf16>
    %368 = vector.shape_cast %367 : vector<1x64x256xbf16> to vector<64x256xbf16>
    %cst_130 = arith.constant dense<0.000000e+00> : vector<1x256xf32>
    %369 = tpu.matmul %366, %368, %cst_130 {dimension_numbers = #tpu.dot_dimension_numbers<[1], [0], [0], [1], [0, 0, 1, 1], [], []>} : vector<1x64xbf16>, vector<64x256xbf16>, vector<1x256xf32> -> vector<1x256xf32>
    %370 = arith.addf %364, %369 : vector<1x256xf32>
    %371 = vector.extract_strided_slice %305 {offsets = [0, 2, 0, 0], sizes = [1, 1, 5, 64], strides = [1, 1, 1, 1]} : vector<1x5x5x64xbf16> to vector<1x1x5x64xbf16>
    %372 = vector.shape_cast %371 : vector<1x1x5x64xbf16> to vector<1x5x64xbf16>
    %373 = vector.extract_strided_slice %372 {offsets = [0, 0, 0], sizes = [1, 1, 64], strides = [1, 1, 1]} : vector<1x5x64xbf16> to vector<1x1x64xbf16>
    %374 = vector.shape_cast %373 : vector<1x1x64xbf16> to vector<1x64xbf16>
    %c10_131 = arith.constant 10 : index
    %c0_132 = arith.constant 0 : index
    %c0_133 = arith.constant 0 : index
    %375 = vector.load %arg6[%c10_131, %c0_132, %c0_133] : memref<25x64x256xbf16, #tpu.memory_space<vmem>>, vector<1x64x256xbf16>
    %376 = vector.shape_cast %375 : vector<1x64x256xbf16> to vector<64x256xbf16>
    %cst_134 = arith.constant dense<0.000000e+00> : vector<1x256xf32>
    %377 = tpu.matmul %374, %376, %cst_134 {dimension_numbers = #tpu.dot_dimension_numbers<[1], [0], [0], [1], [0, 0, 1, 1], [], []>} : vector<1x64xbf16>, vector<64x256xbf16>, vector<1x256xf32> -> vector<1x256xf32>
    %378 = arith.addf %370, %377 : vector<1x256xf32>
    %379 = vector.extract_strided_slice %372 {offsets = [0, 1, 0], sizes = [1, 1, 64], strides = [1, 1, 1]} : vector<1x5x64xbf16> to vector<1x1x64xbf16>
    %380 = vector.shape_cast %379 : vector<1x1x64xbf16> to vector<1x64xbf16>
    %c11_135 = arith.constant 11 : index
    %c0_136 = arith.constant 0 : index
    %c0_137 = arith.constant 0 : index
    %381 = vector.load %arg6[%c11_135, %c0_136, %c0_137] : memref<25x64x256xbf16, #tpu.memory_space<vmem>>, vector<1x64x256xbf16>
    %382 = vector.shape_cast %381 : vector<1x64x256xbf16> to vector<64x256xbf16>
    %cst_138 = arith.constant dense<0.000000e+00> : vector<1x256xf32>
    %383 = tpu.matmul %380, %382, %cst_138 {dimension_numbers = #tpu.dot_dimension_numbers<[1], [0], [0], [1], [0, 0, 1, 1], [], []>} : vector<1x64xbf16>, vector<64x256xbf16>, vector<1x256xf32> -> vector<1x256xf32>
    %384 = arith.addf %378, %383 : vector<1x256xf32>
    %385 = vector.extract_strided_slice %372 {offsets = [0, 2, 0], sizes = [1, 1, 64], strides = [1, 1, 1]} : vector<1x5x64xbf16> to vector<1x1x64xbf16>
    %386 = vector.shape_cast %385 : vector<1x1x64xbf16> to vector<1x64xbf16>
    %c12_139 = arith.constant 12 : index
    %c0_140 = arith.constant 0 : index
    %c0_141 = arith.constant 0 : index
    %387 = vector.load %arg6[%c12_139, %c0_140, %c0_141] : memref<25x64x256xbf16, #tpu.memory_space<vmem>>, vector<1x64x256xbf16>
    %388 = vector.shape_cast %387 : vector<1x64x256xbf16> to vector<64x256xbf16>
    %cst_142 = arith.constant dense<0.000000e+00> : vector<1x256xf32>
    %389 = tpu.matmul %386, %388, %cst_142 {dimension_numbers = #tpu.dot_dimension_numbers<[1], [0], [0], [1], [0, 0, 1, 1], [], []>} : vector<1x64xbf16>, vector<64x256xbf16>, vector<1x256xf32> -> vector<1x256xf32>
    %390 = arith.addf %384, %389 : vector<1x256xf32>
    %391 = vector.extract_strided_slice %372 {offsets = [0, 3, 0], sizes = [1, 1, 64], strides = [1, 1, 1]} : vector<1x5x64xbf16> to vector<1x1x64xbf16>
    %392 = vector.shape_cast %391 : vector<1x1x64xbf16> to vector<1x64xbf16>
    %c13_143 = arith.constant 13 : index
    %c0_144 = arith.constant 0 : index
    %c0_145 = arith.constant 0 : index
    %393 = vector.load %arg6[%c13_143, %c0_144, %c0_145] : memref<25x64x256xbf16, #tpu.memory_space<vmem>>, vector<1x64x256xbf16>
    %394 = vector.shape_cast %393 : vector<1x64x256xbf16> to vector<64x256xbf16>
    %cst_146 = arith.constant dense<0.000000e+00> : vector<1x256xf32>
    %395 = tpu.matmul %392, %394, %cst_146 {dimension_numbers = #tpu.dot_dimension_numbers<[1], [0], [0], [1], [0, 0, 1, 1], [], []>} : vector<1x64xbf16>, vector<64x256xbf16>, vector<1x256xf32> -> vector<1x256xf32>
    %396 = arith.addf %390, %395 : vector<1x256xf32>
    %397 = vector.extract_strided_slice %372 {offsets = [0, 4, 0], sizes = [1, 1, 64], strides = [1, 1, 1]} : vector<1x5x64xbf16> to vector<1x1x64xbf16>
    %398 = vector.shape_cast %397 : vector<1x1x64xbf16> to vector<1x64xbf16>
    %c14_147 = arith.constant 14 : index
    %c0_148 = arith.constant 0 : index
    %c0_149 = arith.constant 0 : index
    %399 = vector.load %arg6[%c14_147, %c0_148, %c0_149] : memref<25x64x256xbf16, #tpu.memory_space<vmem>>, vector<1x64x256xbf16>
    %400 = vector.shape_cast %399 : vector<1x64x256xbf16> to vector<64x256xbf16>
    %cst_150 = arith.constant dense<0.000000e+00> : vector<1x256xf32>
    %401 = tpu.matmul %398, %400, %cst_150 {dimension_numbers = #tpu.dot_dimension_numbers<[1], [0], [0], [1], [0, 0, 1, 1], [], []>} : vector<1x64xbf16>, vector<64x256xbf16>, vector<1x256xf32> -> vector<1x256xf32>
    %402 = arith.addf %396, %401 : vector<1x256xf32>
    %403 = vector.extract_strided_slice %305 {offsets = [0, 3, 0, 0], sizes = [1, 1, 5, 64], strides = [1, 1, 1, 1]} : vector<1x5x5x64xbf16> to vector<1x1x5x64xbf16>
    %404 = vector.shape_cast %403 : vector<1x1x5x64xbf16> to vector<1x5x64xbf16>
    %405 = vector.extract_strided_slice %404 {offsets = [0, 0, 0], sizes = [1, 1, 64], strides = [1, 1, 1]} : vector<1x5x64xbf16> to vector<1x1x64xbf16>
    %406 = vector.shape_cast %405 : vector<1x1x64xbf16> to vector<1x64xbf16>
    %c15_151 = arith.constant 15 : index
    %c0_152 = arith.constant 0 : index
    %c0_153 = arith.constant 0 : index
    %407 = vector.load %arg6[%c15_151, %c0_152, %c0_153] : memref<25x64x256xbf16, #tpu.memory_space<vmem>>, vector<1x64x256xbf16>
    %408 = vector.shape_cast %407 : vector<1x64x256xbf16> to vector<64x256xbf16>
    %cst_154 = arith.constant dense<0.000000e+00> : vector<1x256xf32>
    %409 = tpu.matmul %406, %408, %cst_154 {dimension_numbers = #tpu.dot_dimension_numbers<[1], [0], [0], [1], [0, 0, 1, 1], [], []>} : vector<1x64xbf16>, vector<64x256xbf16>, vector<1x256xf32> -> vector<1x256xf32>
    %410 = arith.addf %402, %409 : vector<1x256xf32>
    %411 = vector.extract_strided_slice %404 {offsets = [0, 1, 0], sizes = [1, 1, 64], strides = [1, 1, 1]} : vector<1x5x64xbf16> to vector<1x1x64xbf16>
    %412 = vector.shape_cast %411 : vector<1x1x64xbf16> to vector<1x64xbf16>
    %c16_155 = arith.constant 16 : index
    %c0_156 = arith.constant 0 : index
    %c0_157 = arith.constant 0 : index
    %413 = vector.load %arg6[%c16_155, %c0_156, %c0_157] : memref<25x64x256xbf16, #tpu.memory_space<vmem>>, vector<1x64x256xbf16>
    %414 = vector.shape_cast %413 : vector<1x64x256xbf16> to vector<64x256xbf16>
    %cst_158 = arith.constant dense<0.000000e+00> : vector<1x256xf32>
    %415 = tpu.matmul %412, %414, %cst_158 {dimension_numbers = #tpu.dot_dimension_numbers<[1], [0], [0], [1], [0, 0, 1, 1], [], []>} : vector<1x64xbf16>, vector<64x256xbf16>, vector<1x256xf32> -> vector<1x256xf32>
    %416 = arith.addf %410, %415 : vector<1x256xf32>
    %417 = vector.extract_strided_slice %404 {offsets = [0, 2, 0], sizes = [1, 1, 64], strides = [1, 1, 1]} : vector<1x5x64xbf16> to vector<1x1x64xbf16>
    %418 = vector.shape_cast %417 : vector<1x1x64xbf16> to vector<1x64xbf16>
    %c17_159 = arith.constant 17 : index
    %c0_160 = arith.constant 0 : index
    %c0_161 = arith.constant 0 : index
    %419 = vector.load %arg6[%c17_159, %c0_160, %c0_161] : memref<25x64x256xbf16, #tpu.memory_space<vmem>>, vector<1x64x256xbf16>
    %420 = vector.shape_cast %419 : vector<1x64x256xbf16> to vector<64x256xbf16>
    %cst_162 = arith.constant dense<0.000000e+00> : vector<1x256xf32>
    %421 = tpu.matmul %418, %420, %cst_162 {dimension_numbers = #tpu.dot_dimension_numbers<[1], [0], [0], [1], [0, 0, 1, 1], [], []>} : vector<1x64xbf16>, vector<64x256xbf16>, vector<1x256xf32> -> vector<1x256xf32>
    %422 = arith.addf %416, %421 : vector<1x256xf32>
    %423 = vector.extract_strided_slice %404 {offsets = [0, 3, 0], sizes = [1, 1, 64], strides = [1, 1, 1]} : vector<1x5x64xbf16> to vector<1x1x64xbf16>
    %424 = vector.shape_cast %423 : vector<1x1x64xbf16> to vector<1x64xbf16>
    %c18_163 = arith.constant 18 : index
    %c0_164 = arith.constant 0 : index
    %c0_165 = arith.constant 0 : index
    %425 = vector.load %arg6[%c18_163, %c0_164, %c0_165] : memref<25x64x256xbf16, #tpu.memory_space<vmem>>, vector<1x64x256xbf16>
    %426 = vector.shape_cast %425 : vector<1x64x256xbf16> to vector<64x256xbf16>
    %cst_166 = arith.constant dense<0.000000e+00> : vector<1x256xf32>
    %427 = tpu.matmul %424, %426, %cst_166 {dimension_numbers = #tpu.dot_dimension_numbers<[1], [0], [0], [1], [0, 0, 1, 1], [], []>} : vector<1x64xbf16>, vector<64x256xbf16>, vector<1x256xf32> -> vector<1x256xf32>
    %428 = arith.addf %422, %427 : vector<1x256xf32>
    %429 = vector.extract_strided_slice %404 {offsets = [0, 4, 0], sizes = [1, 1, 64], strides = [1, 1, 1]} : vector<1x5x64xbf16> to vector<1x1x64xbf16>
    %430 = vector.shape_cast %429 : vector<1x1x64xbf16> to vector<1x64xbf16>
    %c19_167 = arith.constant 19 : index
    %c0_168 = arith.constant 0 : index
    %c0_169 = arith.constant 0 : index
    %431 = vector.load %arg6[%c19_167, %c0_168, %c0_169] : memref<25x64x256xbf16, #tpu.memory_space<vmem>>, vector<1x64x256xbf16>
    %432 = vector.shape_cast %431 : vector<1x64x256xbf16> to vector<64x256xbf16>
    %cst_170 = arith.constant dense<0.000000e+00> : vector<1x256xf32>
    %433 = tpu.matmul %430, %432, %cst_170 {dimension_numbers = #tpu.dot_dimension_numbers<[1], [0], [0], [1], [0, 0, 1, 1], [], []>} : vector<1x64xbf16>, vector<64x256xbf16>, vector<1x256xf32> -> vector<1x256xf32>
    %434 = arith.addf %428, %433 : vector<1x256xf32>
    %435 = vector.extract_strided_slice %305 {offsets = [0, 4, 0, 0], sizes = [1, 1, 5, 64], strides = [1, 1, 1, 1]} : vector<1x5x5x64xbf16> to vector<1x1x5x64xbf16>
    %436 = vector.shape_cast %435 : vector<1x1x5x64xbf16> to vector<1x5x64xbf16>
    %437 = vector.extract_strided_slice %436 {offsets = [0, 0, 0], sizes = [1, 1, 64], strides = [1, 1, 1]} : vector<1x5x64xbf16> to vector<1x1x64xbf16>
    %438 = vector.shape_cast %437 : vector<1x1x64xbf16> to vector<1x64xbf16>
    %c20_171 = arith.constant 20 : index
    %c0_172 = arith.constant 0 : index
    %c0_173 = arith.constant 0 : index
    %439 = vector.load %arg6[%c20_171, %c0_172, %c0_173] : memref<25x64x256xbf16, #tpu.memory_space<vmem>>, vector<1x64x256xbf16>
    %440 = vector.shape_cast %439 : vector<1x64x256xbf16> to vector<64x256xbf16>
    %cst_174 = arith.constant dense<0.000000e+00> : vector<1x256xf32>
    %441 = tpu.matmul %438, %440, %cst_174 {dimension_numbers = #tpu.dot_dimension_numbers<[1], [0], [0], [1], [0, 0, 1, 1], [], []>} : vector<1x64xbf16>, vector<64x256xbf16>, vector<1x256xf32> -> vector<1x256xf32>
    %442 = arith.addf %434, %441 : vector<1x256xf32>
    %443 = vector.extract_strided_slice %436 {offsets = [0, 1, 0], sizes = [1, 1, 64], strides = [1, 1, 1]} : vector<1x5x64xbf16> to vector<1x1x64xbf16>
    %444 = vector.shape_cast %443 : vector<1x1x64xbf16> to vector<1x64xbf16>
    %c21_175 = arith.constant 21 : index
    %c0_176 = arith.constant 0 : index
    %c0_177 = arith.constant 0 : index
    %445 = vector.load %arg6[%c21_175, %c0_176, %c0_177] : memref<25x64x256xbf16, #tpu.memory_space<vmem>>, vector<1x64x256xbf16>
    %446 = vector.shape_cast %445 : vector<1x64x256xbf16> to vector<64x256xbf16>
    %cst_178 = arith.constant dense<0.000000e+00> : vector<1x256xf32>
    %447 = tpu.matmul %444, %446, %cst_178 {dimension_numbers = #tpu.dot_dimension_numbers<[1], [0], [0], [1], [0, 0, 1, 1], [], []>} : vector<1x64xbf16>, vector<64x256xbf16>, vector<1x256xf32> -> vector<1x256xf32>
    %448 = arith.addf %442, %447 : vector<1x256xf32>
    %449 = vector.extract_strided_slice %436 {offsets = [0, 2, 0], sizes = [1, 1, 64], strides = [1, 1, 1]} : vector<1x5x64xbf16> to vector<1x1x64xbf16>
    %450 = vector.shape_cast %449 : vector<1x1x64xbf16> to vector<1x64xbf16>
    %c22_179 = arith.constant 22 : index
    %c0_180 = arith.constant 0 : index
    %c0_181 = arith.constant 0 : index
    %451 = vector.load %arg6[%c22_179, %c0_180, %c0_181] : memref<25x64x256xbf16, #tpu.memory_space<vmem>>, vector<1x64x256xbf16>
    %452 = vector.shape_cast %451 : vector<1x64x256xbf16> to vector<64x256xbf16>
    %cst_182 = arith.constant dense<0.000000e+00> : vector<1x256xf32>
    %453 = tpu.matmul %450, %452, %cst_182 {dimension_numbers = #tpu.dot_dimension_numbers<[1], [0], [0], [1], [0, 0, 1, 1], [], []>} : vector<1x64xbf16>, vector<64x256xbf16>, vector<1x256xf32> -> vector<1x256xf32>
    %454 = arith.addf %448, %453 : vector<1x256xf32>
    %455 = vector.extract_strided_slice %436 {offsets = [0, 3, 0], sizes = [1, 1, 64], strides = [1, 1, 1]} : vector<1x5x64xbf16> to vector<1x1x64xbf16>
    %456 = vector.shape_cast %455 : vector<1x1x64xbf16> to vector<1x64xbf16>
    %c23_183 = arith.constant 23 : index
    %c0_184 = arith.constant 0 : index
    %c0_185 = arith.constant 0 : index
    %457 = vector.load %arg6[%c23_183, %c0_184, %c0_185] : memref<25x64x256xbf16, #tpu.memory_space<vmem>>, vector<1x64x256xbf16>
    %458 = vector.shape_cast %457 : vector<1x64x256xbf16> to vector<64x256xbf16>
    %cst_186 = arith.constant dense<0.000000e+00> : vector<1x256xf32>
    %459 = tpu.matmul %456, %458, %cst_186 {dimension_numbers = #tpu.dot_dimension_numbers<[1], [0], [0], [1], [0, 0, 1, 1], [], []>} : vector<1x64xbf16>, vector<64x256xbf16>, vector<1x256xf32> -> vector<1x256xf32>
    %460 = arith.addf %454, %459 : vector<1x256xf32>
    %461 = vector.extract_strided_slice %436 {offsets = [0, 4, 0], sizes = [1, 1, 64], strides = [1, 1, 1]} : vector<1x5x64xbf16> to vector<1x1x64xbf16>
    %462 = vector.shape_cast %461 : vector<1x1x64xbf16> to vector<1x64xbf16>
    %c24_187 = arith.constant 24 : index
    %c0_188 = arith.constant 0 : index
    %c0_189 = arith.constant 0 : index
    %463 = vector.load %arg6[%c24_187, %c0_188, %c0_189] : memref<25x64x256xbf16, #tpu.memory_space<vmem>>, vector<1x64x256xbf16>
    %464 = vector.shape_cast %463 : vector<1x64x256xbf16> to vector<64x256xbf16>
    %cst_190 = arith.constant dense<0.000000e+00> : vector<1x256xf32>
    %465 = tpu.matmul %462, %464, %cst_190 {dimension_numbers = #tpu.dot_dimension_numbers<[1], [0], [0], [1], [0, 0, 1, 1], [], []>} : vector<1x64xbf16>, vector<64x256xbf16>, vector<1x256xf32> -> vector<1x256xf32>
    %466 = arith.addf %460, %465 : vector<1x256xf32>
    %c0_191 = arith.constant 0 : index
    %c0_192 = arith.constant 0 : index
    %467 = vector.load %arg7[%c0_191, %c0_192] : memref<1x256xf32, #tpu.memory_space<vmem>>, vector<1x256xf32>
    %468 = arith.addf %466, %467 : vector<1x256xf32>
    %cst_193 = arith.constant 0.000000e+00 : f32
    %469 = vector.broadcast %cst_193 : f32 to vector<1x256xf32>
    %470 = arith.maximumf %468, %469 : vector<1x256xf32>
    %471 = arith.truncf %470 : vector<1x256xf32> to vector<1x256xbf16>
    %c0_194 = arith.constant 0 : index
    %c0_195 = arith.constant 0 : index
    %472 = vector.load %arg8[%c0_194, %c0_195] : memref<256x10xbf16, #tpu.memory_space<vmem>>, vector<256x10xbf16>
    %cst_196 = arith.constant dense<0.000000e+00> : vector<1x10xf32>
    %473 = tpu.matmul %471, %472, %cst_196 {dimension_numbers = #tpu.dot_dimension_numbers<[1], [0], [0], [1], [0, 0, 1, 1], [], []>} : vector<1x256xbf16>, vector<256x10xbf16>, vector<1x10xf32> -> vector<1x10xf32>
    %c0_197 = arith.constant 0 : index
    %c0_198 = arith.constant 0 : index
    %474 = vector.load %arg9[%c0_197, %c0_198] : memref<1x10xf32, #tpu.memory_space<vmem>>, vector<1x10xf32>
    %475 = arith.addf %473, %474 : vector<1x10xf32>
    %476 = vector.shape_cast %475 : vector<1x10xf32> to vector<1x1x10xf32>
    %c0_199 = arith.constant 0 : index
    %c0_200 = arith.constant 0 : index
    %c0_201 = arith.constant 0 : index
    %477 = vector.load %arg10[%c0_199, %c0_200, %c0_201] : memref<1x1x10xf32, #tpu.memory_space<vmem>>, vector<1x1x10xf32>
    tpu.vector_store %arg10[%c0_199, %c0_200, %c0_201], %476 {strides = array<i32>} : memref<1x1x10xf32, #tpu.memory_space<vmem>>, vector<1x1x10xf32>,
    return
  }
  func.func @transform_0(%arg0: i32) -> (i32, i32, i32, i32, i32) {
    %c0_i32 = arith.constant 0 : i32
    %c0_i32_0 = arith.constant 0 : i32
    %c0_i32_1 = arith.constant 0 : i32
    %c0_i32_2 = arith.constant 0 : i32
    %c0_i32_3 = arith.constant 0 : i32
    return %arg0, %c0_i32, %c0_i32_0, %c0_i32_1, %c0_i32_2 : i32, i32, i32, i32, i32
  }
  func.func @transform_1(%arg0: i32) -> (i32, i32) {
    %c0_i32 = arith.constant 0 : i32
    %c0_i32_0 = arith.constant 0 : i32
    %c0_i32_1 = arith.constant 0 : i32
    return %c0_i32, %c0_i32_0 : i32, i32
  }
  func.func @transform_2(%arg0: i32) -> (i32, i32) {
    %c0_i32 = arith.constant 0 : i32
    %c0_i32_0 = arith.constant 0 : i32
    %c0_i32_1 = arith.constant 0 : i32
    return %c0_i32, %c0_i32_0 : i32, i32
  }
  func.func @transform_3(%arg0: i32) -> (i32, i32, i32) {
    %c0_i32 = arith.constant 0 : i32
    %c0_i32_0 = arith.constant 0 : i32
    %c0_i32_1 = arith.constant 0 : i32
    %c0_i32_2 = arith.constant 0 : i32
    return %c0_i32, %c0_i32_0, %c0_i32_1 : i32, i32, i32
  }
  func.func @transform_4(%arg0: i32) -> (i32, i32) {
    %c0_i32 = arith.constant 0 : i32
    %c0_i32_0 = arith.constant 0 : i32
    %c0_i32_1 = arith.constant 0 : i32
    return %c0_i32, %c0_i32_0 : i32, i32
  }
  func.func @transform_5(%arg0: i32) -> (i32, i32, i32) {
    %c0_i32 = arith.constant 0 : i32
    %c0_i32_0 = arith.constant 0 : i32
    %c0_i32_1 = arith.constant 0 : i32
    %c0_i32_2 = arith.constant 0 : i32
    return %c0_i32, %c0_i32_0, %c0_i32_1 : i32, i32, i32
  }
  func.func @transform_6(%arg0: i32) -> (i32, i32) {
    %c0_i32 = arith.constant 0 : i32
    %c0_i32_0 = arith.constant 0 : i32
    %c0_i32_1 = arith.constant 0 : i32
    return %c0_i32, %c0_i32_0 : i32, i32
  }
  func.func @transform_7(%arg0: i32) -> (i32, i32) {
    %c0_i32 = arith.constant 0 : i32
    %c0_i32_0 = arith.constant 0 : i32
    %c0_i32_1 = arith.constant 0 : i32
    return %c0_i32, %c0_i32_0 : i32, i32
  }
  func.func @transform_8(%arg0: i32) -> (i32, i32) {
    %c0_i32 = arith.constant 0 : i32
    %c0_i32_0 = arith.constant 0 : i32
    %c0_i32_1 = arith.constant 0 : i32
    return %c0_i32, %c0_i32_0 : i32, i32
  }
  func.func @transform_9(%arg0: i32) -> (i32, i32, i32) {
    %c0_i32 = arith.constant 0 : i32
    %c0_i32_0 = arith.constant 0 : i32
    %c0_i32_1 = arith.constant 0 : i32
    return %arg0, %c0_i32, %c0_i32_0 : i32, i32, i32
  }
}

</mosaic_0001>

<llo_original>
// kernel: cnn_forward.1
$region0: #{cnn_forward.1}
  #allocation0 [shape = 'u32[]', space=smem, size = 0x4, offset = 0x4, fixed_abs, tag = 'smem constant byte address 0x4 - core index']
  #allocation1 [shape = 'u32[144,128]{1,0:T(1,128)}', space=vmem, size = 0x12000, scoped, tag = 'internal scratch']
  %s0 = inlined_call_operand.vmem [shape: bf16[2,4,28,16,75], index: 0, kind: input, shape index: {}]
  %s1 = inlined_call_operand.vmem [shape: bf16[75,32], index: 1, kind: input, shape index: {}]
  %s2 = inlined_call_operand.vmem [shape: f32[1,32], index: 2, kind: input, shape index: {}]
  %s3 = inlined_call_operand.vmem [shape: bf16[25,32,64], index: 3, kind: input, shape index: {}]
  %s4 = inlined_call_operand.vmem [shape: f32[1,64], index: 4, kind: input, shape index: {}]
  %s5 = inlined_call_operand.vmem [shape: bf16[25,64,256], index: 5, kind: input, shape index: {}]
  %s6 = inlined_call_operand.vmem [shape: f32[1,256], index: 6, kind: input, shape index: {}]
  %s7 = inlined_call_operand.vmem [shape: bf16[256,10], index: 7, kind: input, shape index: {}]
  %s8 = inlined_call_operand.vmem [shape: f32[1,10], index: 8, kind: input, shape index: {}]
  %s9 = inlined_call_operand.hbm [shape: f32[2,1,10], index: 9, kind: output, shape index: {}]
  %s10 = sld [smem:[#allocation0]]
  $region69: #{cnn_forward.1} parent=0
    _
  %s12 = ssub.s32 1, %s10
  %s13 = scalar_select 0, %s12, %s10
  $region1: #{cnn_forward.1} parent=0
    #allocation2 [shape = 'u8[1024]{0}', space=vmem, size = 0x400, scoped, tag = 'output window, operand 0']
    #allocation3 [shape = 's32[2]{0}', space=sflag, size = 0x8, scoped, tag = 'scoped memory for cnn_forward.1']
    %14 = vsyncpa [#allocation3], 0
    %s15 = scalar_lea.sflag [#allocation3], 1
    %16 = vsyncpa %s15, 0
    loop: start=0, step=1, limit=4
    $region2: #{cnn_forward.1} parent=1 // loop_pre_header
      _
    $region3: #{cnn_forward.1} parent=1 // loop_header
      %s18 = sphi 0, %s22
      %p19 = scmp.ge.s32.totalorder %s18, 4
      %s28 = sphi 0, %s30
      %s31 = sphi 0, %s28
      %s32 = sphi 0, %s31
      %s48 = sphi 0, %s32
      %s52 = sphi 0, %s52
      %s54 = sphi 0, %s52
      %s55 = sphi 0, %s54
      %s69 = sphi 0, %s55
      %s73 = sphi 0, %s73
      %s75 = sphi 0, %s73
      %s76 = sphi 0, %s75
      %s90 = sphi 0, %s76
      %s94 = sphi 0, %s94
      %s96 = sphi 0, %s94
      %s97 = sphi 0, %s96
      %s111 = sphi 0, %s97
      %s115 = sphi 0, %s115
      %s117 = sphi 0, %s115
      %s118 = sphi 0, %s117
      %s132 = sphi 0, %s118
      %s136 = sphi 0, %s136
      %s138 = sphi 0, %s136
      %s139 = sphi 0, %s138
      %s153 = sphi 0, %s139
      %s157 = sphi 0, %s157
      %s159 = sphi 0, %s157
      %s160 = sphi 0, %s159
      %s174 = sphi 0, %s160
      %s178 = sphi 0, %s178
      %s180 = sphi 0, %s178
      %s181 = sphi 0, %s180
      %s195 = sphi 0, %s181
      %s199 = sphi 0, %s199
      %s201 = sphi 0, %s199
      %s202 = sphi 0, %s201
      %s216 = sphi 0, %s202
      %s222 = sphi 0, %s224
      %s225 = sphi 0, %s222
      %s226 = sphi 0, %s225
      %s242 = sphi 0, %s226
    $region4: #{cnn_forward.1} parent=1 // loop_header_branch
      %21 = sbr.rel (%p19) target = $region8
    $region5: #{cnn_forward.1} parent=1 // loop_body
      %s23 = ssub.s32 %s18, 1
      %s24 = ssub.s32 %s18, 2
      %s25 = sadd.s32 %s18, 1
      %s26 = ssub.s32 %s18, %s25
      %p27 = scmp.eq.s32.totalorder %s26, 0
      %s29 = sadd.s32 %s28, 1
      %s30 = scalar_select %p27, %s28, %s29
      %p33 = pneg %p27
      %p34 = scmp.eq.s32.totalorder %s18, 1
      %p35 = por %p33, %p34
      %p36 = scmp.ne.s32.totalorder %s28, %s31
      %p37 = scmp.eq.s32.totalorder %s18, 0
      %p38 = por %p36, %p37
      %p39 = scmp.ne.s32.totalorder %s28, %s31
      %p40 = scmp.eq.s32.totalorder %s23, 1
      %p41 = por %p39, %p40
      %p42 = scmp.ne.s32.totalorder %s31, %s32
      %p43 = scmp.eq.s32.totalorder %s23, 0
      %p44 = por %p42, %p43
      %p45 = scmp.ne.s32.totalorder %s31, %s32
      %p46 = scmp.eq.s32.totalorder %s24, 1
      %p47 = por %p45, %p46
      %p49 = scmp.ne.s32.totalorder %s32, %s48
      %p50 = scmp.eq.s32.totalorder %s24, 0
      %p51 = por %p49, %p50
      %s53 = sadd.s32 %s52, 1
      %p56 = scmp.eq.s32.totalorder %s18, 1
      %p57 = scmp.ne.s32.totalorder %s52, %s54
      %p58 = scmp.eq.s32.totalorder %s18, 0
      %p59 = por %p57, %p58
      %p60 = scmp.ne.s32.totalorder %s52, %s54
      %p61 = scmp.eq.s32.totalorder %s23, 1
      %p62 = por %p60, %p61
      %p63 = scmp.ne.s32.totalorder %s54, %s55
      %p64 = scmp.eq.s32.totalorder %s23, 0
      %p65 = por %p63, %p64
      %p66 = scmp.ne.s32.totalorder %s54, %s55
      %p67 = scmp.eq.s32.totalorder %s24, 1
      %p68 = por %p66, %p67
      %p70 = scmp.ne.s32.totalorder %s55, %s69
      %p71 = scmp.eq.s32.totalorder %s24, 0
      %p72 = por %p70, %p71
      %s74 = sadd.s32 %s73, 1
      %p77 = scmp.eq.s32.totalorder %s18, 1
      %p78 = scmp.ne.s32.totalorder %s73, %s75
      %p79 = scmp.eq.s32.totalorder %s18, 0
      %p80 = por %p78, %p79
      %p81 = scmp.ne.s32.totalorder %s73, %s75
      %p82 = scmp.eq.s32.totalorder %s23, 1
      %p83 = por %p81, %p82
      %p84 = scmp.ne.s32.totalorder %s75, %s76
      %p85 = scmp.eq.s32.totalorder %s23, 0
      %p86 = por %p84, %p85
      %p87 = scmp.ne.s32.totalorder %s75, %s76
      %p88 = scmp.eq.s32.totalorder %s24, 1
      %p89 = por %p87, %p88
      %p91 = scmp.ne.s32.totalorder %s76, %s90
      %p92 = scmp.eq.s32.totalorder %s24, 0
      %p93 = por %p91, %p92
      %s95 = sadd.s32 %s94, 1
      %p98 = scmp.eq.s32.totalorder %s18, 1
      %p99 = scmp.ne.s32.totalorder %s94, %s96
      %p100 = scmp.eq.s32.totalorder %s18, 0
      %p101 = por %p99, %p100
      %p102 = scmp.ne.s32.totalorder %s94, %s96
      %p103 = scmp.eq.s32.totalorder %s23, 1
      %p104 = por %p102, %p103
      %p105 = scmp.ne.s32.totalorder %s96, %s97
      %p106 = scmp.eq.s32.totalorder %s23, 0
      %p107 = por %p105, %p106
      %p108 = scmp.ne.s32.totalorder %s96, %s97
      %p109 = scmp.eq.s32.totalorder %s24, 1
      %p110 = por %p108, %p109
      %p112 = scmp.ne.s32.totalorder %s97, %s111
      %p113 = scmp.eq.s32.totalorder %s24, 0
      %p114 = por %p112, %p113
      %s116 = sadd.s32 %s115, 1
      %p119 = scmp.eq.s32.totalorder %s18, 1
      %p120 = scmp.ne.s32.totalorder %s115, %s117
      %p121 = scmp.eq.s32.totalorder %s18, 0
      %p122 = por %p120, %p121
      %p123 = scmp.ne.s32.totalorder %s115, %s117
      %p124 = scmp.eq.s32.totalorder %s23, 1
      %p125 = por %p123, %p124
      %p126 = scmp.ne.s32.totalorder %s117, %s118
      %p127 = scmp.eq.s32.totalorder %s23, 0
      %p128 = por %p126, %p127
      %p129 = scmp.ne.s32.totalorder %s117, %s118
      %p130 = scmp.eq.s32.totalorder %s24, 1
      %p131 = por %p129, %p130
      %p133 = scmp.ne.s32.totalorder %s118, %s132
      %p134 = scmp.eq.s32.totalorder %s24, 0
      %p135 = por %p133, %p134
      %s137 = sadd.s32 %s136, 1
      %p140 = scmp.eq.s32.totalorder %s18, 1
      %p141 = scmp.ne.s32.totalorder %s136, %s138
      %p142 = scmp.eq.s32.totalorder %s18, 0
      %p143 = por %p141, %p142
      %p144 = scmp.ne.s32.totalorder %s136, %s138
      %p145 = scmp.eq.s32.totalorder %s23, 1
      %p146 = por %p144, %p145
      %p147 = scmp.ne.s32.totalorder %s138, %s139
      %p148 = scmp.eq.s32.totalorder %s23, 0
      %p149 = por %p147, %p148
      %p150 = scmp.ne.s32.totalorder %s138, %s139
      %p151 = scmp.eq.s32.totalorder %s24, 1
      %p152 = por %p150, %p151
      %p154 = scmp.ne.s32.totalorder %s139, %s153
      %p155 = scmp.eq.s32.totalorder %s24, 0
      %p156 = por %p154, %p155
      %s158 = sadd.s32 %s157, 1
      %p161 = scmp.eq.s32.totalorder %s18, 1
      %p162 = scmp.ne.s32.totalorder %s157, %s159
      %p163 = scmp.eq.s32.totalorder %s18, 0
      %p164 = por %p162, %p163
      %p165 = scmp.ne.s32.totalorder %s157, %s159
      %p166 = scmp.eq.s32.totalorder %s23, 1
      %p167 = por %p165, %p166
      %p168 = scmp.ne.s32.totalorder %s159, %s160
      %p169 = scmp.eq.s32.totalorder %s23, 0
      %p170 = por %p168, %p169
      %p171 = scmp.ne.s32.totalorder %s159, %s160
      %p172 = scmp.eq.s32.totalorder %s24, 1
      %p173 = por %p171, %p172
      %p175 = scmp.ne.s32.totalorder %s160, %s174
      %p176 = scmp.eq.s32.totalorder %s24, 0
      %p177 = por %p175, %p176
      %s179 = sadd.s32 %s178, 1
      %p182 = scmp.eq.s32.totalorder %s18, 1
      %p183 = scmp.ne.s32.totalorder %s178, %s180
      %p184 = scmp.eq.s32.totalorder %s18, 0
      %p185 = por %p183, %p184
      %p186 = scmp.ne.s32.totalorder %s178, %s180
      %p187 = scmp.eq.s32.totalorder %s23, 1
      %p188 = por %p186, %p187
      %p189 = scmp.ne.s32.totalorder %s180, %s181
      %p190 = scmp.eq.s32.totalorder %s23, 0
      %p191 = por %p189, %p190
      %p192 = scmp.ne.s32.totalorder %s180, %s181
      %p193 = scmp.eq.s32.totalorder %s24, 1
      %p194 = por %p192, %p193
      %p196 = scmp.ne.s32.totalorder %s181, %s195
      %p197 = scmp.eq.s32.totalorder %s24, 0
      %p198 = por %p196, %p197
      %s200 = sadd.s32 %s199, 1
      %p203 = scmp.eq.s32.totalorder %s18, 1
      %p204 = scmp.ne.s32.totalorder %s199, %s201
      %p205 = scmp.eq.s32.totalorder %s18, 0
      %p206 = por %p204, %p205
      %p207 = scmp.ne.s32.totalorder %s199, %s201
      %p208 = scmp.eq.s32.totalorder %s23, 1
      %p209 = por %p207, %p208
      %p210 = scmp.ne.s32.totalorder %s201, %s202
      %p211 = scmp.eq.s32.totalorder %s23, 0
      %p212 = por %p210, %p211
      %p213 = scmp.ne.s32.totalorder %s201, %s202
      %p214 = scmp.eq.s32.totalorder %s24, 1
      %p215 = por %p213, %p214
      %p217 = scmp.ne.s32.totalorder %s202, %s216
      %p218 = scmp.eq.s32.totalorder %s24, 0
      %p219 = por %p217, %p218
      %s220 = ssub.s32 %s18, %s25
      %p221 = scmp.eq.s32.totalorder %s220, 0
      %s223 = sadd.s32 %s222, 1
      %s224 = scalar_select %p221, %s222, %s223
      %p227 = pneg %p221
      %p228 = scmp.eq.s32.totalorder %s18, 1
      %p229 = por %p227, %p228
      %p230 = scmp.ne.s32.totalorder %s222, %s225
      %p231 = scmp.eq.s32.totalorder %s18, 0
      %p232 = por %p230, %p231
      %p233 = scmp.ne.s32.totalorder %s222, %s225
      %p234 = scmp.eq.s32.totalorder %s23, 1
      %p235 = por %p233, %p234
      %p236 = scmp.ne.s32.totalorder %s225, %s226
      %p237 = scmp.eq.s32.totalorder %s23, 0
      %p238 = por %p236, %p237
      %p239 = scmp.ne.s32.totalorder %s225, %s226
      %p240 = scmp.eq.s32.totalorder %s24, 1
      %p241 = por %p239, %p240
      %p243 = scmp.ne.s32.totalorder %s226, %s242
      %p244 = scmp.eq.s32.totalorder %s24, 0
      %p245 = por %p243, %p244
      %p246 = scmp.le.s32.totalorder 1, %s18
      %p247 = scmp.lt.s32.totalorder %s18, 3
      %p248 = pnand %p246, %p247
      %p249 = pneg %p248
      // Predicated region
      $region9: #{cnn_forward.1} parent=5 // pred_check
        _
      $region10: #{cnn_forward.1} parent=5 // pred_check_branch
        %251 = sbr.rel (%p248) target = $region12
      $region11: #{cnn_forward.1} parent=5 // pred_region
        %s252 = ssub.s32 %s18, 1
        // Predicated region
        $region13: #{cnn_forward.1} parent=11 // pred_check
          %p253 = pneg %p65
        $region14: #{cnn_forward.1} parent=11 // pred_check_branch
          %255 = sbr.rel (%p253) target = $region16
        $region15: #{cnn_forward.1} parent=11 // pred_region
          _
        $region16: #{cnn_forward.1} parent=11 // pred_fallthru
          _
        // Predicated region
        $region17: #{cnn_forward.1} parent=11 // pred_check
          %p256 = pneg %p86
        $region18: #{cnn_forward.1} parent=11 // pred_check_branch
          %258 = sbr.rel (%p256) target = $region20
        $region19: #{cnn_forward.1} parent=11 // pred_region
          _
        $region20: #{cnn_forward.1} parent=11 // pred_fallthru
          _
        // Predicated region
        $region21: #{cnn_forward.1} parent=11 // pred_check
          %p259 = pneg %p107
        $region22: #{cnn_forward.1} parent=11 // pred_check_branch
          %261 = sbr.rel (%p259) target = $region24
        $region23: #{cnn_forward.1} parent=11 // pred_region
          _
        $region24: #{cnn_forward.1} parent=11 // pred_fallthru
          _
        // Predicated region
        $region25: #{cnn_forward.1} parent=11 // pred_check
          %p262 = pneg %p128
        $region26: #{cnn_forward.1} parent=11 // pred_check_branch
          %264 = sbr.rel (%p262) target = $region28
        $region27: #{cnn_forward.1} parent=11 // pred_region
          _
        $region28: #{cnn_forward.1} parent=11 // pred_fallthru
          _
        // Predicated region
        $region29: #{cnn_forward.1} parent=11 // pred_check
          %p265 = pneg %p149
        $region30: #{cnn_forward.1} parent=11 // pred_check_branch
          %267 = sbr.rel (%p265) target = $region32
        $region31: #{cnn_forward.1} parent=11 // pred_region
          _
        $region32: #{cnn_forward.1} parent=11 // pred_fallthru
          _
        // Predicated region
        $region33: #{cnn_forward.1} parent=11 // pred_check
          %p268 = pneg %p170
        $region34: #{cnn_forward.1} parent=11 // pred_check_branch
          %270 = sbr.rel (%p268) target = $region36
        $region35: #{cnn_forward.1} parent=11 // pred_region
          _
        $region36: #{cnn_forward.1} parent=11 // pred_fallthru
          _
        // Predicated region
        $region37: #{cnn_forward.1} parent=11 // pred_check
          %p271 = pneg %p191
        $region38: #{cnn_forward.1} parent=11 // pred_check_branch
          %273 = sbr.rel (%p271) target = $region40
        $region39: #{cnn_forward.1} parent=11 // pred_region
          _
        $region40: #{cnn_forward.1} parent=11 // pred_fallthru
          _
        // Predicated region
        $region41: #{cnn_forward.1} parent=11 // pred_check
          %p274 = pneg %p212
        $region42: #{cnn_forward.1} parent=11 // pred_check_branch
          %276 = sbr.rel (%p274) target = $region44
        $region43: #{cnn_forward.1} parent=11 // pred_region
          _
        $region44: #{cnn_forward.1} parent=11 // pred_fallthru
          _
      $region12: #{cnn_forward.1} parent=5 // pred_fallthru
        _
      %p277 = scmp.lt.s32.totalorder %s18, 2
      // Predicated region
      $region45: #{cnn_forward.1} parent=5 // pred_check
        %p278 = pneg %p277
      $region46: #{cnn_forward.1} parent=5 // pred_check_branch
        %280 = sbr.rel (%p278) target = $region48
      $region47: #{cnn_forward.1} parent=5 // pred_region
        // Predicated region
        $region49: #{cnn_forward.1} parent=47 // pred_check
          %p281 = pneg %p38
        $region50: #{cnn_forward.1} parent=47 // pred_check_branch
          %283 = sbr.rel (%p281) target = $region52
        $region51: #{cnn_forward.1} parent=47 // pred_region
          %p284 = scmp.lt.s32.totalorder %s18, 1
          %s285 = scalar_select %p284, %s18, 1
          %s286 = smul.addr %s285, 224
          %s287 = smul.addr %s286, 4
          %s288 = scalar_lea.vmem %s0, %s287
        $region52: #{cnn_forward.1} parent=47 // pred_fallthru
          _
      $region48: #{cnn_forward.1} parent=5 // pred_fallthru
        _
      %p289 = scmp.le.s32.totalorder 1, %s18
      %p290 = scmp.lt.s32.totalorder %s18, 3
      %p291 = pnand %p289, %p290
      %p292 = pneg %p291
      // Predicated region
      $region53: #{cnn_forward.1} parent=5 // pred_check
        _
      $region54: #{cnn_forward.1} parent=5 // pred_check_branch
        %294 = sbr.rel (%p291) target = $region56
      $region55: #{cnn_forward.1} parent=5 // pred_region
        %s295 = ssub.s32 %s18, 1
        %p296 = scmp.lt.s32.totalorder %s23, 1
        %s297 = scalar_select %p296, %s23, 1
        %s298 = smul.addr %s297, 224
        %s299 = smul.addr %s298, 4
        %s300 = scalar_lea.vmem %s0, %s299
        %p301 = pneg %p44
        %p302 = pneg %p41
        %p303 = pneg %p65
        %p304 = pneg %p62
        %p305 = pneg %p86
        %p306 = pneg %p83
        %p307 = pneg %p107
        %p308 = pneg %p104
        %p309 = pneg %p128
        %p310 = pneg %p125
        %p311 = pneg %p149
        %p312 = pneg %p146
        %p313 = pneg %p170
        %p314 = pneg %p167
        %p315 = pneg %p191
        %p316 = pneg %p188
        %p317 = pneg %p212
        %p318 = pneg %p209
        %p319 = pneg %p238
        %p320 = pneg %p235
        %s321 = sand.u32 %s225, 1
        %s322 = scalar_lea.sflag [#allocation3], %s321
        %s323 = sand.u32 %s225, 1
        %s324 = scalar_lea.vmem [#allocation2], %s323
        %p325 = scmp.lt.s32.totalorder %s23, 1
        %s326 = scalar_select %p325, %s23, 1
        %s327 = smul.addr %s326, 224
        %s328 = smul.addr %s327, 4
        %s329 = scalar_lea.vmem %s0, %s328
        %v331 = vld [vmem:[%s329] sm:$0xf]
        %v332 = vld [vmem:[%s329 + $0x4] sm:$0xf]
        %v333 = vld [vmem:[%s329 + $0x8] sm:$0xf]
        %v334 = vld [vmem:[%s329 + $0xc] sm:$0xf]
        %v335 = vld [vmem:[%s329 + $0x10] sm:$0xf]
        %v336 = vld [vmem:[%s329 + $0x14] sm:$0xf]
        %v337 = vld [vmem:[%s329 + $0x18] sm:$0xf]
        %v338 = vld [vmem:[%s329 + $0x1c] sm:$0xf]
        %v339 = vld [vmem:[%s329 + $0x20] sm:$0xf]
        %v340 = vld [vmem:[%s329 + $0x24] sm:$0xf]
        %v341 = vld [vmem:[%s329 + $0x28] sm:$0xf]
        %v342 = vld [vmem:[%s329 + $0x2c] sm:$0xf]
        %v343 = vld [vmem:[%s329 + $0x30] sm:$0xf]
        %v344 = vld [vmem:[%s329 + $0x34] sm:$0xf]
        %v345 = vld [vmem:[%s329 + $0x38] sm:$0xf]
        %v346 = vld [vmem:[%s329 + $0x3c] sm:$0xf]
        %v347 = vld [vmem:[%s329 + $0x40] sm:$0xf]
        %v348 = vld [vmem:[%s329 + $0x44] sm:$0xf]
        %v349 = vld [vmem:[%s329 + $0x48] sm:$0xf]
        %v350 = vld [vmem:[%s329 + $0x4c] sm:$0xf]
        %v351 = vld [vmem:[%s329 + $0x50] sm:$0xf]
        %v352 = vld [vmem:[%s329 + $0x54] sm:$0xf]
        %v353 = vld [vmem:[%s329 + $0x58] sm:$0xf]
        %v354 = vld [vmem:[%s329 + $0x5c] sm:$0xf]
        %v355 = vld [vmem:[%s329 + $0x60] sm:$0xf]
        %v356 = vld [vmem:[%s329 + $0x64] sm:$0xf]
        %v357 = vld [vmem:[%s329 + $0x68] sm:$0xf]
        %v358 = vld [vmem:[%s329 + $0x6c] sm:$0xf]
        %v359 = vld [vmem:[%s329 + $0x70] sm:$0xf]
        %v360 = vld [vmem:[%s329 + $0x74] sm:$0xf]
        %v361 = vld [vmem:[%s329 + $0x78] sm:$0xf]
        %v362 = vld [vmem:[%s329 + $0x7c] sm:$0xf]
        %v363 = vld [vmem:[%s329 + $0x80] sm:$0xf]
        %v364 = vld [vmem:[%s329 + $0x84] sm:$0xf]
        %v365 = vld [vmem:[%s329 + $0x88] sm:$0xf]
        %v366 = vld [vmem:[%s329 + $0x8c] sm:$0xf]
        %v367 = vld [vmem:[%s329 + $0x90] sm:$0xf]
        %v368 = vld [vmem:[%s329 + $0x94] sm:$0xf]
        %v369 = vld [vmem:[%s329 + $0x98] sm:$0xf]
        %v370 = vld [vmem:[%s329 + $0x9c] sm:$0xf]
        %v371 = vld [vmem:[%s329 + $0xa0] sm:$0xf]
        %v372 = vld [vmem:[%s329 + $0xa4] sm:$0xf]
        %v373 = vld [vmem:[%s329 + $0xa8] sm:$0xf]
        %v374 = vld [vmem:[%s329 + $0xac] sm:$0xf]
        %v375 = vld [vmem:[%s329 + $0xb0] sm:$0xf]
        %v376 = vld [vmem:[%s329 + $0xb4] sm:$0xf]
        %v377 = vld [vmem:[%s329 + $0xb8] sm:$0xf]
        %v378 = vld [vmem:[%s329 + $0xbc] sm:$0xf]
        %v379 = vld [vmem:[%s329 + $0xc0] sm:$0xf]
        %v380 = vld [vmem:[%s329 + $0xc4] sm:$0xf]
        %v381 = vld [vmem:[%s329 + $0xc8] sm:$0xf]
        %v382 = vld [vmem:[%s329 + $0xcc] sm:$0xf]
        %v383 = vld [vmem:[%s329 + $0xd0] sm:$0xf]
        %v384 = vld [vmem:[%s329 + $0xd4] sm:$0xf]
        %v385 = vld [vmem:[%s329 + $0xd8] sm:$0xf]
        %v386 = vld [vmem:[%s329 + $0xdc] sm:$0xf]
        %v387 = vld [vmem:[%s329 + $0xe0] sm:$0xf]
        %v388 = vld [vmem:[%s329 + $0xe4] sm:$0xf]
        %v389 = vld [vmem:[%s329 + $0xe8] sm:$0xf]
        %v390 = vld [vmem:[%s329 + $0xec] sm:$0xf]
        %v391 = vld [vmem:[%s329 + $0xf0] sm:$0xf]
        %v392 = vld [vmem:[%s329 + $0xf4] sm:$0xf]
        %v393 = vld [vmem:[%s329 + $0xf8] sm:$0xf]
        %v394 = vld [vmem:[%s329 + $0xfc] sm:$0xf]
        %v395 = vld [vmem:[%s329 + $0x100] sm:$0xf]
        %v396 = vld [vmem:[%s329 + $0x104] sm:$0xf]
        %v397 = vld [vmem:[%s329 + $0x108] sm:$0xf]
        %v398 = vld [vmem:[%s329 + $0x10c] sm:$0xf]
        %v399 = vld [vmem:[%s329 + $0x110] sm:$0xf]
        %v400 = vld [vmem:[%s329 + $0x114] sm:$0xf]
        %v401 = vld [vmem:[%s329 + $0x118] sm:$0xf]
        %v402 = vld [vmem:[%s329 + $0x11c] sm:$0xf]
        %v403 = vld [vmem:[%s329 + $0x120] sm:$0xf]
        %v404 = vld [vmem:[%s329 + $0x124] sm:$0xf]
        %v405 = vld [vmem:[%s329 + $0x128] sm:$0xf]
        %v406 = vld [vmem:[%s329 + $0x12c] sm:$0xf]
        %v407 = vld [vmem:[%s329 + $0x130] sm:$0xf]
        %v408 = vld [vmem:[%s329 + $0x134] sm:$0xf]
        %v409 = vld [vmem:[%s329 + $0x138] sm:$0xf]
        %v410 = vld [vmem:[%s329 + $0x13c] sm:$0xf]
        %v411 = vld [vmem:[%s329 + $0x140] sm:$0xf]
        %v412 = vld [vmem:[%s329 + $0x144] sm:$0xf]
        %v413 = vld [vmem:[%s329 + $0x148] sm:$0xf]
        %v414 = vld [vmem:[%s329 + $0x14c] sm:$0xf]
        %v415 = vld [vmem:[%s329 + $0x150] sm:$0xf]
        %v416 = vld [vmem:[%s329 + $0x154] sm:$0xf]
        %v417 = vld [vmem:[%s329 + $0x158] sm:$0xf]
        %v418 = vld [vmem:[%s329 + $0x15c] sm:$0xf]
        %v419 = vld [vmem:[%s329 + $0x160] sm:$0xf]
        %v420 = vld [vmem:[%s329 + $0x164] sm:$0xf]
        %v421 = vld [vmem:[%s329 + $0x168] sm:$0xf]
        %v422 = vld [vmem:[%s329 + $0x16c] sm:$0xf]
        %v423 = vld [vmem:[%s329 + $0x170] sm:$0xf]
        %v424 = vld [vmem:[%s329 + $0x174] sm:$0xf]
        %v425 = vld [vmem:[%s329 + $0x178] sm:$0xf]
        %v426 = vld [vmem:[%s329 + $0x17c] sm:$0xf]
        %v427 = vld [vmem:[%s329 + $0x180] sm:$0xf]
        %v428 = vld [vmem:[%s329 + $0x184] sm:$0xf]
        %v429 = vld [vmem:[%s329 + $0x188] sm:$0xf]
        %v430 = vld [vmem:[%s329 + $0x18c] sm:$0xf]
        %v431 = vld [vmem:[%s329 + $0x190] sm:$0xf]
        %v432 = vld [vmem:[%s329 + $0x194] sm:$0xf]
        %v433 = vld [vmem:[%s329 + $0x198] sm:$0xf]
        %v434 = vld [vmem:[%s329 + $0x19c] sm:$0xf]
        %v435 = vld [vmem:[%s329 + $0x1a0] sm:$0xf]
        %v436 = vld [vmem:[%s329 + $0x1a4] sm:$0xf]
        %v437 = vld [vmem:[%s329 + $0x1a8] sm:$0xf]
        %v438 = vld [vmem:[%s329 + $0x1ac] sm:$0xf]
        %v439 = vld [vmem:[%s329 + $0x1b0] sm:$0xf]
        %v440 = vld [vmem:[%s329 + $0x1b4] sm:$0xf]
        %v441 = vld [vmem:[%s329 + $0x1b8] sm:$0xf]
        %v442 = vld [vmem:[%s329 + $0x1bc] sm:$0xf]
        %v443 = vld [vmem:[%s329 + $0x1c0] sm:$0xf]
        %v444 = vld [vmem:[%s329 + $0x1c4] sm:$0xf]
        %v445 = vld [vmem:[%s329 + $0x1c8] sm:$0xf]
        %v446 = vld [vmem:[%s329 + $0x1cc] sm:$0xf]
        %v447 = vld [vmem:[%s329 + $0x1d0] sm:$0xf]
        %v448 = vld [vmem:[%s329 + $0x1d4] sm:$0xf]
        %v449 = vld [vmem:[%s329 + $0x1d8] sm:$0xf]
        %v450 = vld [vmem:[%s329 + $0x1dc] sm:$0xf]
        %v451 = vld [vmem:[%s329 + $0x1e0] sm:$0xf]
        %v452 = vld [vmem:[%s329 + $0x1e4] sm:$0xf]
        %v453 = vld [vmem:[%s329 + $0x1e8] sm:$0xf]
        %v454 = vld [vmem:[%s329 + $0x1ec] sm:$0xf]
        %v455 = vld [vmem:[%s329 + $0x1f0] sm:$0xf]
        %v456 = vld [vmem:[%s329 + $0x1f4] sm:$0xf]
        %v457 = vld [vmem:[%s329 + $0x1f8] sm:$0xf]
        %v458 = vld [vmem:[%s329 + $0x1fc] sm:$0xf]
        %v459 = vld [vmem:[%s329 + $0x200] sm:$0xf]
        %v460 = vld [vmem:[%s329 + $0x204] sm:$0xf]
        %v461 = vld [vmem:[%s329 + $0x208] sm:$0xf]
        %v462 = vld [vmem:[%s329 + $0x20c] sm:$0xf]
        %v463 = vld [vmem:[%s329 + $0x210] sm:$0xf]
        %v464 = vld [vmem:[%s329 + $0x214] sm:$0xf]
        %v465 = vld [vmem:[%s329 + $0x218] sm:$0xf]
        %v466 = vld [vmem:[%s329 + $0x21c] sm:$0xf]
        %v467 = vld [vmem:[%s329 + $0x220] sm:$0xf]
        %v468 = vld [vmem:[%s329 + $0x224] sm:$0xf]
        %v469 = vld [vmem:[%s329 + $0x228] sm:$0xf]
        %v470 = vld [vmem:[%s329 + $0x22c] sm:$0xf]
        %v471 = vld [vmem:[%s329 + $0x230] sm:$0xf]
        %v472 = vld [vmem:[%s329 + $0x234] sm:$0xf]
        %v473 = vld [vmem:[%s329 + $0x238] sm:$0xf]
        %v474 = vld [vmem:[%s329 + $0x23c] sm:$0xf]
        %v475 = vld [vmem:[%s329 + $0x240] sm:$0xf]
        %v476 = vld [vmem:[%s329 + $0x244] sm:$0xf]
        %v477 = vld [vmem:[%s329 + $0x248] sm:$0xf]
        %v478 = vld [vmem:[%s329 + $0x24c] sm:$0xf]
        %v479 = vld [vmem:[%s329 + $0x250] sm:$0xf]
        %v480 = vld [vmem:[%s329 + $0x254] sm:$0xf]
        %v481 = vld [vmem:[%s329 + $0x258] sm:$0xf]
        %v482 = vld [vmem:[%s329 + $0x25c] sm:$0xf]
        %v483 = vld [vmem:[%s329 + $0x260] sm:$0xf]
        %v484 = vld [vmem:[%s329 + $0x264] sm:$0xf]
        %v485 = vld [vmem:[%s329 + $0x268] sm:$0xf]
        %v486 = vld [vmem:[%s329 + $0x26c] sm:$0xf]
        %v487 = vld [vmem:[%s329 + $0x270] sm:$0xf]
        %v488 = vld [vmem:[%s329 + $0x274] sm:$0xf]
        %v489 = vld [vmem:[%s329 + $0x278] sm:$0xf]
        %v490 = vld [vmem:[%s329 + $0x27c] sm:$0xf]
        %v491 = vld [vmem:[%s329 + $0x280] sm:$0xf]
        %v492 = vld [vmem:[%s329 + $0x284] sm:$0xf]
        %v493 = vld [vmem:[%s329 + $0x288] sm:$0xf]
        %v494 = vld [vmem:[%s329 + $0x28c] sm:$0xf]
        %v495 = vld [vmem:[%s329 + $0x290] sm:$0xf]
        %v496 = vld [vmem:[%s329 + $0x294] sm:$0xf]
        %v497 = vld [vmem:[%s329 + $0x298] sm:$0xf]
        %v498 = vld [vmem:[%s329 + $0x29c] sm:$0xf]
        %v499 = vld [vmem:[%s329 + $0x2a0] sm:$0xf]
        %v500 = vld [vmem:[%s329 + $0x2a4] sm:$0xf]
        %v501 = vld [vmem:[%s329 + $0x2a8] sm:$0xf]
        %v502 = vld [vmem:[%s329 + $0x2ac] sm:$0xf]
        %v503 = vld [vmem:[%s329 + $0x2b0] sm:$0xf]
        %v504 = vld [vmem:[%s329 + $0x2b4] sm:$0xf]
        %v505 = vld [vmem:[%s329 + $0x2b8] sm:$0xf]
        %v506 = vld [vmem:[%s329 + $0x2bc] sm:$0xf]
        %v507 = vld [vmem:[%s329 + $0x2c0] sm:$0xf]
        %v508 = vld [vmem:[%s329 + $0x2c4] sm:$0xf]
        %v509 = vld [vmem:[%s329 + $0x2c8] sm:$0xf]
        %v510 = vld [vmem:[%s329 + $0x2cc] sm:$0xf]
        %v511 = vld [vmem:[%s329 + $0x2d0] sm:$0xf]
        %v512 = vld [vmem:[%s329 + $0x2d4] sm:$0xf]
        %v513 = vld [vmem:[%s329 + $0x2d8] sm:$0xf]
        %v514 = vld [vmem:[%s329 + $0x2dc] sm:$0xf]
        %v515 = vld [vmem:[%s329 + $0x2e0] sm:$0xf]
        %v516 = vld [vmem:[%s329 + $0x2e4] sm:$0xf]
        %v517 = vld [vmem:[%s329 + $0x2e8] sm:$0xf]
        %v518 = vld [vmem:[%s329 + $0x2ec] sm:$0xf]
        %v519 = vld [vmem:[%s329 + $0x2f0] sm:$0xf]
        %v520 = vld [vmem:[%s329 + $0x2f4] sm:$0xf]
        %v521 = vld [vmem:[%s329 + $0x2f8] sm:$0xf]
        %v522 = vld [vmem:[%s329 + $0x2fc] sm:$0xf]
        %v523 = vld [vmem:[%s329 + $0x300] sm:$0xf]
        %v524 = vld [vmem:[%s329 + $0x304] sm:$0xf]
        %v525 = vld [vmem:[%s329 + $0x308] sm:$0xf]
        %v526 = vld [vmem:[%s329 + $0x30c] sm:$0xf]
        %v527 = vld [vmem:[%s329 + $0x310] sm:$0xf]
        %v528 = vld [vmem:[%s329 + $0x314] sm:$0xf]
        %v529 = vld [vmem:[%s329 + $0x318] sm:$0xf]
        %v530 = vld [vmem:[%s329 + $0x31c] sm:$0xf]
        %v531 = vld [vmem:[%s329 + $0x320] sm:$0xf]
        %v532 = vld [vmem:[%s329 + $0x324] sm:$0xf]
        %v533 = vld [vmem:[%s329 + $0x328] sm:$0xf]
        %v534 = vld [vmem:[%s329 + $0x32c] sm:$0xf]
        %v535 = vld [vmem:[%s329 + $0x330] sm:$0xf]
        %v536 = vld [vmem:[%s329 + $0x334] sm:$0xf]
        %v537 = vld [vmem:[%s329 + $0x338] sm:$0xf]
        %v538 = vld [vmem:[%s329 + $0x33c] sm:$0xf]
        %v539 = vld [vmem:[%s329 + $0x340] sm:$0xf]
        %v540 = vld [vmem:[%s329 + $0x344] sm:$0xf]
        %v541 = vld [vmem:[%s329 + $0x348] sm:$0xf]
        %v542 = vld [vmem:[%s329 + $0x34c] sm:$0xf]
        %v543 = vld [vmem:[%s329 + $0x350] sm:$0xf]
        %v544 = vld [vmem:[%s329 + $0x354] sm:$0xf]
        %v545 = vld [vmem:[%s329 + $0x358] sm:$0xf]
        %v546 = vld [vmem:[%s329 + $0x35c] sm:$0xf]
        %v547 = vld [vmem:[%s329 + $0x360] sm:$0xf]
        %v548 = vld [vmem:[%s329 + $0x364] sm:$0xf]
        %v549 = vld [vmem:[%s329 + $0x368] sm:$0xf]
        %v550 = vld [vmem:[%s329 + $0x36c] sm:$0xf]
        %v551 = vld [vmem:[%s329 + $0x370] sm:$0xf]
        %v552 = vld [vmem:[%s329 + $0x374] sm:$0xf]
        %v553 = vld [vmem:[%s329 + $0x378] sm:$0xf]
        %v554 = vld [vmem:[%s329 + $0x37c] sm:$0xf]
        %v555 = vld [vmem:[%s1] sm:$0xf]
        %v556 = vld [vmem:[%s1 + $0x4] sm:$0xf]
        %v557 = vld [vmem:[%s1 + $0x8] sm:$0xf]
        %v558 = vld [vmem:[%s1 + $0xc] sm:$0xf]
        %v559 = vld [vmem:[%s1 + $0x10] sm:$0xf]
        %v560 = vld [vmem:[%s1 + $0x14] sm:$0xf]
        %v561 = vld [vmem:[%s1 + $0x18] sm:$0xf]
        %v562 = vld [vmem:[%s1 + $0x1c] sm:$0xf]
        %v563 = vld [vmem:[%s1 + $0x20] sm:$0xf]
        %v564 = vld [vmem:[%s1 + $0x24] sm:$0x3]
        %v565 = vld [vmem:[%s2] sm:$0x1]
        %v567 = vlaneseq
        %v568 = vshrl.u32 %v567, 7
        %v569 = vsub.s32 0, %v568
        %v570 = vrot.slane %v565, %v569
        %v796 = vunpack.c.l.b16 %v331
        %v797 = vunpack.c.l.b16 %v332
        %v798 = vunpack.c.l.b16 %v333
        %v799 = vunpack.c.l.b16 %v334
        %v800 = vunpack.c.l.b16 %v335
        %v801 = vunpack.c.l.b16 %v336
        %v802 = vunpack.c.l.b16 %v337
        %v803 = vunpack.c.l.b16 %v338
        %v804 = vunpack.c.l.b16 %v339
        %v805 = vunpack.c.l.b16 %v340
        %v806 = vunpack.c.l.b16 %v341
        %v807 = vunpack.c.l.b16 %v342
        %v808 = vunpack.c.l.b16 %v343
        %v809 = vunpack.c.l.b16 %v344
        %v810 = vunpack.c.l.b16 %v345
        %v811 = vunpack.c.l.b16 %v346
        %v812 = vunpack.c.l.b16 %v347
        %v813 = vunpack.c.l.b16 %v348
        %v814 = vunpack.c.l.b16 %v349
        %v815 = vunpack.c.l.b16 %v350
        %v816 = vunpack.c.l.b16 %v351
        %v817 = vunpack.c.l.b16 %v352
        %v818 = vunpack.c.l.b16 %v353
        %v819 = vunpack.c.l.b16 %v354
        %v820 = vunpack.c.l.b16 %v355
        %v821 = vunpack.c.l.b16 %v356
        %v822 = vunpack.c.l.b16 %v357
        %v823 = vunpack.c.l.b16 %v358
        %v824 = vunpack.c.l.b16 %v359
        %v825 = vunpack.c.l.b16 %v360
        %v826 = vunpack.c.l.b16 %v361
        %v827 = vunpack.c.l.b16 %v362
        %v828 = vunpack.c.l.b16 %v363
        %v829 = vunpack.c.l.b16 %v364
        %v830 = vunpack.c.l.b16 %v365
        %v831 = vunpack.c.l.b16 %v366
        %v832 = vunpack.c.l.b16 %v367
        %v833 = vunpack.c.l.b16 %v368
        %v834 = vunpack.c.l.b16 %v369
        %v835 = vunpack.c.l.b16 %v370
        %v836 = vunpack.c.l.b16 %v371
        %v837 = vunpack.c.l.b16 %v372
        %v838 = vunpack.c.l.b16 %v373
        %v839 = vunpack.c.l.b16 %v374
        %v840 = vunpack.c.l.b16 %v375
        %v841 = vunpack.c.l.b16 %v376
        %v842 = vunpack.c.l.b16 %v377
        %v843 = vunpack.c.l.b16 %v378
        %v844 = vunpack.c.l.b16 %v379
        %v845 = vunpack.c.l.b16 %v380
        %v846 = vunpack.c.l.b16 %v381
        %v847 = vunpack.c.l.b16 %v382
        %v848 = vunpack.c.l.b16 %v383
        %v849 = vunpack.c.l.b16 %v384
        %v850 = vunpack.c.l.b16 %v385
        %v851 = vunpack.c.l.b16 %v386
        %v852 = vunpack.c.l.b16 %v387
        %v853 = vunpack.c.l.b16 %v388
        %v854 = vunpack.c.l.b16 %v389
        %v855 = vunpack.c.l.b16 %v390
        %v856 = vunpack.c.l.b16 %v391
        %v857 = vunpack.c.l.b16 %v392
        %v858 = vunpack.c.l.b16 %v393
        %v859 = vunpack.c.l.b16 %v394
        %v860 = vunpack.c.l.b16 %v395
        %v861 = vunpack.c.l.b16 %v396
        %v862 = vunpack.c.l.b16 %v397
        %v863 = vunpack.c.l.b16 %v398
        %v864 = vunpack.c.l.b16 %v399
        %v865 = vunpack.c.l.b16 %v400
        %v866 = vunpack.c.l.b16 %v401
        %v867 = vunpack.c.l.b16 %v402
        %v868 = vunpack.c.l.b16 %v403
        %v869 = vunpack.c.l.b16 %v404
        %v870 = vunpack.c.l.b16 %v405
        %v871 = vunpack.c.l.b16 %v406
        %v872 = vunpack.c.l.b16 %v407
        %v873 = vunpack.c.l.b16 %v408
        %v874 = vunpack.c.l.b16 %v409
        %v875 = vunpack.c.l.b16 %v410
        %v876 = vunpack.c.l.b16 %v411
        %v877 = vunpack.c.l.b16 %v412
        %v878 = vunpack.c.l.b16 %v413
        %v879 = vunpack.c.l.b16 %v414
        %v880 = vunpack.c.l.b16 %v415
        %v881 = vunpack.c.l.b16 %v416
        %v882 = vunpack.c.l.b16 %v417
        %v883 = vunpack.c.l.b16 %v418
        %v884 = vunpack.c.l.b16 %v419
        %v885 = vunpack.c.l.b16 %v420
        %v886 = vunpack.c.l.b16 %v421
        %v887 = vunpack.c.l.b16 %v422
        %v888 = vunpack.c.l.b16 %v423
        %v889 = vunpack.c.l.b16 %v424
        %v890 = vunpack.c.l.b16 %v425
        %v891 = vunpack.c.l.b16 %v426
        %v892 = vunpack.c.l.b16 %v427
        %v893 = vunpack.c.l.b16 %v428
        %v894 = vunpack.c.l.b16 %v429
        %v895 = vunpack.c.l.b16 %v430
        %v896 = vunpack.c.l.b16 %v431
        %v897 = vunpack.c.l.b16 %v432
        %v898 = vunpack.c.l.b16 %v433
        %v899 = vunpack.c.l.b16 %v434
        %v900 = vunpack.c.l.b16 %v435
        %v901 = vunpack.c.l.b16 %v436
        %v902 = vunpack.c.l.b16 %v437
        %v903 = vunpack.c.l.b16 %v438
        %v904 = vunpack.c.l.b16 %v439
        %v905 = vunpack.c.l.b16 %v440
        %v906 = vunpack.c.l.b16 %v441
        %v907 = vunpack.c.l.b16 %v442
        %v908 = vunpack.c.l.b16 %v443
        %v909 = vunpack.c.l.b16 %v444
        %v910 = vunpack.c.l.b16 %v445
        %v911 = vunpack.c.l.b16 %v446
        %v912 = vunpack.c.l.b16 %v447
        %v913 = vunpack.c.l.b16 %v448
        %v914 = vunpack.c.l.b16 %v449
        %v915 = vunpack.c.l.b16 %v450
        %v916 = vunpack.c.l.b16 %v451
        %v917 = vunpack.c.l.b16 %v452
        %v918 = vunpack.c.l.b16 %v453
        %v919 = vunpack.c.l.b16 %v454
        %v920 = vunpack.c.l.b16 %v455
        %v921 = vunpack.c.l.b16 %v456
        %v922 = vunpack.c.l.b16 %v457
        %v923 = vunpack.c.l.b16 %v458
        %v924 = vunpack.c.l.b16 %v459
        %v925 = vunpack.c.l.b16 %v460
        %v926 = vunpack.c.l.b16 %v461
        %v927 = vunpack.c.l.b16 %v462
        %v928 = vunpack.c.l.b16 %v463
        %v929 = vunpack.c.l.b16 %v464
        %v930 = vunpack.c.l.b16 %v465
        %v931 = vunpack.c.l.b16 %v466
        %v932 = vunpack.c.l.b16 %v467
        %v933 = vunpack.c.l.b16 %v468
        %v934 = vunpack.c.l.b16 %v469
        %v935 = vunpack.c.l.b16 %v470
        %v936 = vunpack.c.l.b16 %v471
        %v937 = vunpack.c.l.b16 %v472
        %v938 = vunpack.c.l.b16 %v473
        %v939 = vunpack.c.l.b16 %v474
        %v940 = vunpack.c.l.b16 %v475
        %v941 = vunpack.c.l.b16 %v476
        %v942 = vunpack.c.l.b16 %v477
        %v943 = vunpack.c.l.b16 %v478
        %v944 = vunpack.c.l.b16 %v479
        %v945 = vunpack.c.l.b16 %v480
        %v946 = vunpack.c.l.b16 %v481
        %v947 = vunpack.c.l.b16 %v482
        %v948 = vunpack.c.l.b16 %v483
        %v949 = vunpack.c.l.b16 %v484
        %v950 = vunpack.c.l.b16 %v485
        %v951 = vunpack.c.l.b16 %v486
        %v952 = vunpack.c.l.b16 %v487
        %v953 = vunpack.c.l.b16 %v488
        %v954 = vunpack.c.l.b16 %v489
        %v955 = vunpack.c.l.b16 %v490
        %v956 = vunpack.c.l.b16 %v491
        %v957 = vunpack.c.l.b16 %v492
        %v958 = vunpack.c.l.b16 %v493
        %v959 = vunpack.c.l.b16 %v494
        %v960 = vunpack.c.l.b16 %v495
        %v961 = vunpack.c.l.b16 %v496
        %v962 = vunpack.c.l.b16 %v497
        %v963 = vunpack.c.l.b16 %v498
        %v964 = vunpack.c.l.b16 %v499
        %v965 = vunpack.c.l.b16 %v500
        %v966 = vunpack.c.l.b16 %v501
        %v967 = vunpack.c.l.b16 %v502
        %v968 = vunpack.c.l.b16 %v503
        %v969 = vunpack.c.l.b16 %v504
        %v970 = vunpack.c.l.b16 %v505
        %v971 = vunpack.c.l.b16 %v506
        %v972 = vunpack.c.l.b16 %v507
        %v973 = vunpack.c.l.b16 %v508
        %v974 = vunpack.c.l.b16 %v509
        %v975 = vunpack.c.l.b16 %v510
        %v976 = vunpack.c.l.b16 %v511
        %v977 = vunpack.c.l.b16 %v512
        %v978 = vunpack.c.l.b16 %v513
        %v979 = vunpack.c.l.b16 %v514
        %v980 = vunpack.c.l.b16 %v515
        %v981 = vunpack.c.l.b16 %v516
        %v982 = vunpack.c.l.b16 %v517
        %v983 = vunpack.c.l.b16 %v518
        %v984 = vunpack.c.l.b16 %v519
        %v985 = vunpack.c.l.b16 %v520
        %v986 = vunpack.c.l.b16 %v521
        %v987 = vunpack.c.l.b16 %v522
        %v988 = vunpack.c.l.b16 %v523
        %v989 = vunpack.c.l.b16 %v524
        %v990 = vunpack.c.l.b16 %v525
        %v991 = vunpack.c.l.b16 %v526
        %v992 = vunpack.c.l.b16 %v527
        %v993 = vunpack.c.l.b16 %v528
        %v994 = vunpack.c.l.b16 %v529
        %v995 = vunpack.c.l.b16 %v530
        %v996 = vunpack.c.l.b16 %v531
        %v997 = vunpack.c.l.b16 %v532
        %v998 = vunpack.c.l.b16 %v533
        %v999 = vunpack.c.l.b16 %v534
        %v1000 = vunpack.c.l.b16 %v535
        %v1001 = vunpack.c.l.b16 %v536
        %v1002 = vunpack.c.l.b16 %v537
        %v1003 = vunpack.c.l.b16 %v538
        %v1004 = vunpack.c.l.b16 %v539
        %v1005 = vunpack.c.l.b16 %v540
        %v1006 = vunpack.c.l.b16 %v541
        %v1007 = vunpack.c.l.b16 %v542
        %v1008 = vunpack.c.l.b16 %v543
        %v1009 = vunpack.c.l.b16 %v544
        %v1010 = vunpack.c.l.b16 %v545
        %v1011 = vunpack.c.l.b16 %v546
        %v1012 = vunpack.c.l.b16 %v547
        %v1013 = vunpack.c.l.b16 %v548
        %v1014 = vunpack.c.l.b16 %v549
        %v1015 = vunpack.c.l.b16 %v550
        %v1016 = vunpack.c.l.b16 %v551
        %v1017 = vunpack.c.l.b16 %v552
        %v1018 = vunpack.c.l.b16 %v553
        %v1019 = vunpack.c.l.b16 %v554
        %v1020 = vpack.c.b16 %v797, %v796
        %v1021 = vpack.c.b16 %v799, %v798
        %v1022 = vpack.c.b16 %v801, %v800
        %v1023 = vpack.c.b16 %v803, %v802
        %v1024 = vpack.c.b16 %v805, %v804
        %v1025 = vpack.c.b16 %v807, %v806
        %v1026 = vpack.c.b16 %v809, %v808
        %v1027 = vpack.c.b16 %v811, %v810
        %v1028 = vpack.c.b16 %v813, %v812
        %v1029 = vpack.c.b16 %v815, %v814
        %v1030 = vpack.c.b16 %v817, %v816
        %v1031 = vpack.c.b16 %v819, %v818
        %v1032 = vpack.c.b16 %v821, %v820
        %v1033 = vpack.c.b16 %v823, %v822
        %v1034 = vpack.c.b16 %v825, %v824
        %v1035 = vpack.c.b16 %v827, %v826
        %v1036 = vpack.c.b16 %v829, %v828
        %v1037 = vpack.c.b16 %v831, %v830
        %v1038 = vpack.c.b16 %v833, %v832
        %v1039 = vpack.c.b16 %v835, %v834
        %v1040 = vpack.c.b16 %v837, %v836
        %v1041 = vpack.c.b16 %v839, %v838
        %v1042 = vpack.c.b16 %v841, %v840
        %v1043 = vpack.c.b16 %v843, %v842
        %v1044 = vpack.c.b16 %v845, %v844
        %v1045 = vpack.c.b16 %v847, %v846
        %v1046 = vpack.c.b16 %v849, %v848
        %v1047 = vpack.c.b16 %v851, %v850
        %v1048 = vpack.c.b16 %v853, %v852
        %v1049 = vpack.c.b16 %v855, %v854
        %v1050 = vpack.c.b16 %v857, %v856
        %v1051 = vpack.c.b16 %v859, %v858
        %v1052 = vpack.c.b16 %v861, %v860
        %v1053 = vpack.c.b16 %v863, %v862
        %v1054 = vpack.c.b16 %v865, %v864
        %v1055 = vpack.c.b16 %v867, %v866
        %v1056 = vpack.c.b16 %v869, %v868
        %v1057 = vpack.c.b16 %v871, %v870
        %v1058 = vpack.c.b16 %v873, %v872
        %v1059 = vpack.c.b16 %v875, %v874
        %v1060 = vpack.c.b16 %v877, %v876
        %v1061 = vpack.c.b16 %v879, %v878
        %v1062 = vpack.c.b16 %v881, %v880
        %v1063 = vpack.c.b16 %v883, %v882
        %v1064 = vpack.c.b16 %v885, %v884
        %v1065 = vpack.c.b16 %v887, %v886
        %v1066 = vpack.c.b16 %v889, %v888
        %v1067 = vpack.c.b16 %v891, %v890
        %v1068 = vpack.c.b16 %v893, %v892
        %v1069 = vpack.c.b16 %v895, %v894
        %v1070 = vpack.c.b16 %v897, %v896
        %v1071 = vpack.c.b16 %v899, %v898
        %v1072 = vpack.c.b16 %v901, %v900
        %v1073 = vpack.c.b16 %v903, %v902
        %v1074 = vpack.c.b16 %v905, %v904
        %v1075 = vpack.c.b16 %v907, %v906
        %v1076 = vpack.c.b16 %v909, %v908
        %v1077 = vpack.c.b16 %v911, %v910
        %v1078 = vpack.c.b16 %v913, %v912
        %v1079 = vpack.c.b16 %v915, %v914
        %v1080 = vpack.c.b16 %v917, %v916
        %v1081 = vpack.c.b16 %v919, %v918
        %v1082 = vpack.c.b16 %v921, %v920
        %v1083 = vpack.c.b16 %v923, %v922
        %v1084 = vpack.c.b16 %v925, %v924
        %v1085 = vpack.c.b16 %v927, %v926
        %v1086 = vpack.c.b16 %v929, %v928
        %v1087 = vpack.c.b16 %v931, %v930
        %v1088 = vpack.c.b16 %v933, %v932
        %v1089 = vpack.c.b16 %v935, %v934
        %v1090 = vpack.c.b16 %v937, %v936
        %v1091 = vpack.c.b16 %v939, %v938
        %v1092 = vpack.c.b16 %v941, %v940
        %v1093 = vpack.c.b16 %v943, %v942
        %v1094 = vpack.c.b16 %v945, %v944
        %v1095 = vpack.c.b16 %v947, %v946
        %v1096 = vpack.c.b16 %v949, %v948
        %v1097 = vpack.c.b16 %v951, %v950
        %v1098 = vpack.c.b16 %v953, %v952
        %v1099 = vpack.c.b16 %v955, %v954
        %v1100 = vpack.c.b16 %v957, %v956
        %v1101 = vpack.c.b16 %v959, %v958
        %v1102 = vpack.c.b16 %v961, %v960
        %v1103 = vpack.c.b16 %v963, %v962
        %v1104 = vpack.c.b16 %v965, %v964
        %v1105 = vpack.c.b16 %v967, %v966
        %v1106 = vpack.c.b16 %v969, %v968
        %v1107 = vpack.c.b16 %v971, %v970
        %v1108 = vpack.c.b16 %v973, %v972
        %v1109 = vpack.c.b16 %v975, %v974
        %v1110 = vpack.c.b16 %v977, %v976
        %v1111 = vpack.c.b16 %v979, %v978
        %v1112 = vpack.c.b16 %v981, %v980
        %v1113 = vpack.c.b16 %v983, %v982
        %v1114 = vpack.c.b16 %v985, %v984
        %v1115 = vpack.c.b16 %v987, %v986
        %v1116 = vpack.c.b16 %v989, %v988
        %v1117 = vpack.c.b16 %v991, %v990
        %v1118 = vpack.c.b16 %v993, %v992
        %v1119 = vpack.c.b16 %v995, %v994
        %v1120 = vpack.c.b16 %v997, %v996
        %v1121 = vpack.c.b16 %v999, %v998
        %v1122 = vpack.c.b16 %v1001, %v1000
        %v1123 = vpack.c.b16 %v1003, %v1002
        %v1124 = vpack.c.b16 %v1005, %v1004
        %v1125 = vpack.c.b16 %v1007, %v1006
        %v1126 = vpack.c.b16 %v1009, %v1008
        %v1127 = vpack.c.b16 %v1011, %v1010
        %v1128 = vpack.c.b16 %v1013, %v1012
        %v1129 = vpack.c.b16 %v1015, %v1014
        %v1130 = vpack.c.b16 %v1017, %v1016
        %v1131 = vpack.c.b16 %v1019, %v1018
        %v1142 = vunpack.c.l.b16 %v555
        %v1143 = vunpack.c.l.b16 %v556
        %v1144 = vunpack.c.l.b16 %v557
        %v1145 = vunpack.c.l.b16 %v558
        %v1146 = vunpack.c.l.b16 %v559
        %v1147 = vunpack.c.l.b16 %v560
        %v1148 = vunpack.c.l.b16 %v561
        %v1149 = vunpack.c.l.b16 %v562
        %v1150 = vunpack.c.l.b16 %v563
        %v1151 = vunpack.c.l.b16 %v564
        %v1152 = vpack.c.b16 %v1143, %v1142
        %v1153 = vpack.c.b16 %v1145, %v1144
        %v1154 = vpack.c.b16 %v1147, %v1146
        %v1155 = vpack.c.b16 %v1149, %v1148
        %v1156 = vpack.c.b16 %v1151, %v1150
        %vm1161 = vcmask 613376
        %v1163 = vsel %vm1161, %v1020, 0
        %v1166 = vsel %vm1161, %v1021, 0
        %v1169 = vsel %vm1161, %v1022, 0
        %v1172 = vsel %vm1161, %v1023, 0
        %v1175 = vsel %vm1161, %v1024, 0
        %v1178 = vsel %vm1161, %v1025, 0
        %v1181 = vsel %vm1161, %v1026, 0
        %v1184 = vsel %vm1161, %v1027, 0
        %v1187 = vsel %vm1161, %v1028, 0
        %v1190 = vsel %vm1161, %v1029, 0
        %v1193 = vsel %vm1161, %v1030, 0
        %v1196 = vsel %vm1161, %v1031, 0
        %v1199 = vsel %vm1161, %v1032, 0
        %v1202 = vsel %vm1161, %v1033, 0
        %v1205 = vsel %vm1161, %v1034, 0
        %v1208 = vsel %vm1161, %v1035, 0
        %v1211 = vsel %vm1161, %v1036, 0
        %v1214 = vsel %vm1161, %v1037, 0
        %v1217 = vsel %vm1161, %v1038, 0
        %v1220 = vsel %vm1161, %v1039, 0
        %v1223 = vsel %vm1161, %v1040, 0
        %v1226 = vsel %vm1161, %v1041, 0
        %v1229 = vsel %vm1161, %v1042, 0
        %v1232 = vsel %vm1161, %v1043, 0
        %v1235 = vsel %vm1161, %v1044, 0
        %v1238 = vsel %vm1161, %v1045, 0
        %v1241 = vsel %vm1161, %v1046, 0
        %v1244 = vsel %vm1161, %v1047, 0
        %v1247 = vsel %vm1161, %v1048, 0
        %v1250 = vsel %vm1161, %v1049, 0
        %v1253 = vsel %vm1161, %v1050, 0
        %v1256 = vsel %vm1161, %v1051, 0
        %v1259 = vsel %vm1161, %v1052, 0
        %v1262 = vsel %vm1161, %v1053, 0
        %v1265 = vsel %vm1161, %v1054, 0
        %v1268 = vsel %vm1161, %v1055, 0
        %v1271 = vsel %vm1161, %v1056, 0
        %v1274 = vsel %vm1161, %v1057, 0
        %v1277 = vsel %vm1161, %v1058, 0
        %v1280 = vsel %vm1161, %v1059, 0
        %v1283 = vsel %vm1161, %v1060, 0
        %v1286 = vsel %vm1161, %v1061, 0
        %v1289 = vsel %vm1161, %v1062, 0
        %v1292 = vsel %vm1161, %v1063, 0
        %v1295 = vsel %vm1161, %v1064, 0
        %v1298 = vsel %vm1161, %v1065, 0
        %v1301 = vsel %vm1161, %v1066, 0
        %v1304 = vsel %vm1161, %v1067, 0
        %v1307 = vsel %vm1161, %v1068, 0
        %v1310 = vsel %vm1161, %v1069, 0
        %v1313 = vsel %vm1161, %v1070, 0
        %v1316 = vsel %vm1161, %v1071, 0
        %v1319 = vsel %vm1161, %v1072, 0
        %v1322 = vsel %vm1161, %v1073, 0
        %v1325 = vsel %vm1161, %v1074, 0
        %v1328 = vsel %vm1161, %v1075, 0
        %v1331 = vsel %vm1161, %v1076, 0
        %v1334 = vsel %vm1161, %v1077, 0
        %v1337 = vsel %vm1161, %v1078, 0
        %v1340 = vsel %vm1161, %v1079, 0
        %v1343 = vsel %vm1161, %v1080, 0
        %v1346 = vsel %vm1161, %v1081, 0
        %v1349 = vsel %vm1161, %v1082, 0
        %v1352 = vsel %vm1161, %v1083, 0
        %v1355 = vsel %vm1161, %v1084, 0
        %v1358 = vsel %vm1161, %v1085, 0
        %v1361 = vsel %vm1161, %v1086, 0
        %v1364 = vsel %vm1161, %v1087, 0
        %v1367 = vsel %vm1161, %v1088, 0
        %v1370 = vsel %vm1161, %v1089, 0
        %v1373 = vsel %vm1161, %v1090, 0
        %v1376 = vsel %vm1161, %v1091, 0
        %v1379 = vsel %vm1161, %v1092, 0
        %v1382 = vsel %vm1161, %v1093, 0
        %v1385 = vsel %vm1161, %v1094, 0
        %v1388 = vsel %vm1161, %v1095, 0
        %v1391 = vsel %vm1161, %v1096, 0
        %v1394 = vsel %vm1161, %v1097, 0
        %v1397 = vsel %vm1161, %v1098, 0
        %v1400 = vsel %vm1161, %v1099, 0
        %v1403 = vsel %vm1161, %v1100, 0
        %v1406 = vsel %vm1161, %v1101, 0
        %v1409 = vsel %vm1161, %v1102, 0
        %v1412 = vsel %vm1161, %v1103, 0
        %v1415 = vsel %vm1161, %v1104, 0
        %v1418 = vsel %vm1161, %v1105, 0
        %v1421 = vsel %vm1161, %v1106, 0
        %v1424 = vsel %vm1161, %v1107, 0
        %v1427 = vsel %vm1161, %v1108, 0
        %v1430 = vsel %vm1161, %v1109, 0
        %v1433 = vsel %vm1161, %v1110, 0
        %v1436 = vsel %vm1161, %v1111, 0
        %v1439 = vsel %vm1161, %v1112, 0
        %v1442 = vsel %vm1161, %v1113, 0
        %v1445 = vsel %vm1161, %v1114, 0
        %v1448 = vsel %vm1161, %v1115, 0
        %v1451 = vsel %vm1161, %v1116, 0
        %v1454 = vsel %vm1161, %v1117, 0
        %v1457 = vsel %vm1161, %v1118, 0
        %v1460 = vsel %vm1161, %v1119, 0
        %v1463 = vsel %vm1161, %v1120, 0
        %v1466 = vsel %vm1161, %v1121, 0
        %v1469 = vsel %vm1161, %v1122, 0
        %v1472 = vsel %vm1161, %v1123, 0
        %v1475 = vsel %vm1161, %v1124, 0
        %v1478 = vsel %vm1161, %v1125, 0
        %v1481 = vsel %vm1161, %v1126, 0
        %v1484 = vsel %vm1161, %v1127, 0
        %v1487 = vsel %vm1161, %v1128, 0
        %v1490 = vsel %vm1161, %v1129, 0
        %v1493 = vsel %vm1161, %v1130, 0
        %v1496 = vsel %vm1161, %v1131, 0
        %vm1498 = vcmask 1044480
        %vm1499 = vcmask 1045504
        %v1500 = vsel %vm1498, 4294967295, 65535
        %v1501 = vsel %vm1499, %v1500, 0
        %v1503 = vand.u32 %v1156, %v1501
        %1505 = vmatprep.subr.bf16.mxu0 0
        %1506 = vmatpush1.bf16.msra.mxu0 %v1152
        %1507 = vmatprep.subr.bf16.mxu0 0
        %1508 = vmatpush1.bf16.msra.mxu0 %v1153
        %1509 = vmatprep.subr.bf16.mxu0 0
        %1510 = vmatpush1.bf16.msra.mxu0 %v1154
        %1511 = vmatprep.subr.bf16.mxu0 0
        %1512 = vmatpush1.bf16.msra.mxu0 %v1155
        %1513 = vmatprep.subr.bf16.mxu0 0
        %1514 = vmatpush1.bf16.msra.mxu0 %v1503
        %1515 = vmatprep.subr.bf16.mxu0 0
        %1516 = vmatpush1.bf16.msra.mxu0 0
        %1517 = vmatprep.subr.bf16.mxu0 0
        %1518 = vmatpush1.bf16.msra.mxu0 0
        %1519 = vmatprep.subr.bf16.mxu0 0
        %1520 = vmatpush1.bf16.msra.mxu0 0
        %1521 = vmatprep.subr.bf16.mxu0 0
        %1522 = vmatpush1.bf16.msra.mxu0 0
        %1523 = vmatprep.subr.bf16.mxu0 0
        %1524 = vmatpush1.bf16.msra.mxu0 0
        %1525 = vmatprep.subr.bf16.mxu0 0
        %1526 = vmatpush1.bf16.msra.mxu0 0
        %1527 = vmatprep.subr.bf16.mxu0 0
        %1528 = vmatpush1.bf16.msra.mxu0 0
        %1529 = vmatprep.subr.bf16.mxu0 0
        %1530 = vmatpush1.bf16.msra.mxu0 0
        %1531 = vmatprep.subr.bf16.mxu0 0
        %1532 = vmatpush1.bf16.msra.mxu0 0
        %1533 = vmatprep.subr.bf16.mxu0 0
        %1534 = vmatpush1.bf16.msra.mxu0 0
        %1535 = vmatprep.subr.bf16.mxu0 0
        %1536 = vmatpush1.bf16.msra.mxu0 0
        %1537 = vmatprep.mubr.bf16.mxu0 0
        %1538 = vmatmul.mubr.bf16.gmra.mrb[0].mxu0 %v1163
        %v1539 = vpop.f32.mrb[0].mxu0
        %v1540 = vadd.f32 %v570, %v1539
        %v1541 = vpop.f32.mrb[0].mxu0
        %v1542 = vpop.f32.mrb[0].mxu0
        %v1543 = vadd.f32 %v570, %v1542
        %v1544 = vpop.f32.mrb[0].mxu0
        %1545 = vmatprep.mubr.bf16.mxu0 0
        %1546 = vmatmul.mubr.bf16.gmra.mrb[0].mxu0 %v1166
        %v1547 = vpop.f32.mrb[0].mxu0
        %v1548 = vadd.f32 %v570, %v1547
        %v1549 = vpop.f32.mrb[0].mxu0
        %v1550 = vpop.f32.mrb[0].mxu0
        %v1551 = vadd.f32 %v570, %v1550
        %v1552 = vpop.f32.mrb[0].mxu0
        %1553 = vmatprep.mubr.bf16.mxu0 0
        %1554 = vmatmul.mubr.bf16.gmra.mrb[0].mxu0 %v1169
        %v1555 = vpop.f32.mrb[0].mxu0
        %v1556 = vadd.f32 %v570, %v1555
        %v1557 = vpop.f32.mrb[0].mxu0
        %v1558 = vpop.f32.mrb[0].mxu0
        %v1559 = vadd.f32 %v570, %v1558
        %v1560 = vpop.f32.mrb[0].mxu0
        %1561 = vmatprep.mubr.bf16.mxu0 0
        %1562 = vmatmul.mubr.bf16.gmra.mrb[0].mxu0 %v1172
        %v1563 = vpop.f32.mrb[0].mxu0
        %v1564 = vadd.f32 %v570, %v1563
        %v1565 = vpop.f32.mrb[0].mxu0
        %v1566 = vpop.f32.mrb[0].mxu0
        %v1567 = vadd.f32 %v570, %v1566
        %v1568 = vpop.f32.mrb[0].mxu0
        %1569 = vmatprep.mubr.bf16.mxu0 0
        %1570 = vmatmul.mubr.bf16.gmra.mrb[0].mxu0 %v1175
        %v1571 = vpop.f32.mrb[0].mxu0
        %v1572 = vadd.f32 %v570, %v1571
        %v1573 = vpop.f32.mrb[0].mxu0
        %v1574 = vpop.f32.mrb[0].mxu0
        %v1575 = vadd.f32 %v570, %v1574
        %v1576 = vpop.f32.mrb[0].mxu0
        %1577 = vmatprep.mubr.bf16.mxu0 0
        %1578 = vmatmul.mubr.bf16.gmra.mrb[0].mxu0 %v1178
        %v1579 = vpop.f32.mrb[0].mxu0
        %v1580 = vadd.f32 %v570, %v1579
        %v1581 = vpop.f32.mrb[0].mxu0
        %v1582 = vpop.f32.mrb[0].mxu0
        %v1583 = vadd.f32 %v570, %v1582
        %v1584 = vpop.f32.mrb[0].mxu0
        %1585 = vmatprep.mubr.bf16.mxu0 0
        %1586 = vmatmul.mubr.bf16.gmra.mrb[0].mxu0 %v1181
        %v1587 = vpop.f32.mrb[0].mxu0
        %v1588 = vadd.f32 %v570, %v1587
        %v1589 = vpop.f32.mrb[0].mxu0
        %v1590 = vpop.f32.mrb[0].mxu0
        %v1591 = vadd.f32 %v570, %v1590
        %v1592 = vpop.f32.mrb[0].mxu0
        %1593 = vmatprep.mubr.bf16.mxu0 0
        %1594 = vmatmul.mubr.bf16.gmra.mrb[0].mxu0 %v1184
        %v1595 = vpop.f32.mrb[0].mxu0
        %v1596 = vadd.f32 %v570, %v1595
        %v1597 = vpop.f32.mrb[0].mxu0
        %v1598 = vpop.f32.mrb[0].mxu0
        %v1599 = vadd.f32 %v570, %v1598
        %v1600 = vpop.f32.mrb[0].mxu0
        %1601 = vmatprep.mubr.bf16.mxu0 0
        %1602 = vmatmul.mubr.bf16.gmra.mrb[0].mxu0 %v1187
        %v1603 = vpop.f32.mrb[0].mxu0
        %v1604 = vadd.f32 %v570, %v1603
        %v1605 = vpop.f32.mrb[0].mxu0
        %v1606 = vpop.f32.mrb[0].mxu0
        %v1607 = vadd.f32 %v570, %v1606
        %v1608 = vpop.f32.mrb[0].mxu0
        %1609 = vmatprep.mubr.bf16.mxu0 0
        %1610 = vmatmul.mubr.bf16.gmra.mrb[0].mxu0 %v1190
        %v1611 = vpop.f32.mrb[0].mxu0
        %v1612 = vadd.f32 %v570, %v1611
        %v1613 = vpop.f32.mrb[0].mxu0
        %v1614 = vpop.f32.mrb[0].mxu0
        %v1615 = vadd.f32 %v570, %v1614
        %v1616 = vpop.f32.mrb[0].mxu0
        %1617 = vmatprep.mubr.bf16.mxu0 0
        %1618 = vmatmul.mubr.bf16.gmra.mrb[0].mxu0 %v1193
        %v1619 = vpop.f32.mrb[0].mxu0
        %v1620 = vadd.f32 %v570, %v1619
        %v1621 = vpop.f32.mrb[0].mxu0
        %v1622 = vpop.f32.mrb[0].mxu0
        %v1623 = vadd.f32 %v570, %v1622
        %v1624 = vpop.f32.mrb[0].mxu0
        %1625 = vmatprep.mubr.bf16.mxu0 0
        %1626 = vmatmul.mubr.bf16.gmra.mrb[0].mxu0 %v1196
        %v1627 = vpop.f32.mrb[0].mxu0
        %v1628 = vadd.f32 %v570, %v1627
        %v1629 = vpop.f32.mrb[0].mxu0
        %v1630 = vpop.f32.mrb[0].mxu0
        %v1631 = vadd.f32 %v570, %v1630
        %v1632 = vpop.f32.mrb[0].mxu0
        %1633 = vmatprep.mubr.bf16.mxu0 0
        %1634 = vmatmul.mubr.bf16.gmra.mrb[0].mxu0 %v1199
        %v1635 = vpop.f32.mrb[0].mxu0
        %v1636 = vadd.f32 %v570, %v1635
        %v1637 = vpop.f32.mrb[0].mxu0
        %v1638 = vpop.f32.mrb[0].mxu0
        %v1639 = vadd.f32 %v570, %v1638
        %v1640 = vpop.f32.mrb[0].mxu0
        %1641 = vmatprep.mubr.bf16.mxu0 0
        %1642 = vmatmul.mubr.bf16.gmra.mrb[0].mxu0 %v1202
        %v1643 = vpop.f32.mrb[0].mxu0
        %v1644 = vadd.f32 %v570, %v1643
        %v1645 = vpop.f32.mrb[0].mxu0
        %v1646 = vpop.f32.mrb[0].mxu0
        %v1647 = vadd.f32 %v570, %v1646
        %v1648 = vpop.f32.mrb[0].mxu0
        %1649 = vmatprep.mubr.bf16.mxu0 0
        %1650 = vmatmul.mubr.bf16.gmra.mrb[0].mxu0 %v1205
        %v1651 = vpop.f32.mrb[0].mxu0
        %v1652 = vadd.f32 %v570, %v1651
        %v1653 = vpop.f32.mrb[0].mxu0
        %v1654 = vpop.f32.mrb[0].mxu0
        %v1655 = vadd.f32 %v570, %v1654
        %v1656 = vpop.f32.mrb[0].mxu0
        %1657 = vmatprep.mubr.bf16.mxu0 0
        %1658 = vmatmul.mubr.bf16.gmra.mrb[0].mxu0 %v1208
        %v1659 = vpop.f32.mrb[0].mxu0
        %v1660 = vadd.f32 %v570, %v1659
        %v1661 = vpop.f32.mrb[0].mxu0
        %v1662 = vpop.f32.mrb[0].mxu0
        %v1663 = vadd.f32 %v570, %v1662
        %v1664 = vpop.f32.mrb[0].mxu0
        %1665 = vmatprep.mubr.bf16.mxu0 0
        %1666 = vmatmul.mubr.bf16.gmra.mrb[0].mxu0 %v1211
        %v1667 = vpop.f32.mrb[0].mxu0
        %v1668 = vadd.f32 %v570, %v1667
        %v1669 = vpop.f32.mrb[0].mxu0
        %v1670 = vpop.f32.mrb[0].mxu0
        %v1671 = vadd.f32 %v570, %v1670
        %v1672 = vpop.f32.mrb[0].mxu0
        %1673 = vmatprep.mubr.bf16.mxu0 0
        %1674 = vmatmul.mubr.bf16.gmra.mrb[0].mxu0 %v1214
        %v1675 = vpop.f32.mrb[0].mxu0
        %v1676 = vadd.f32 %v570, %v1675
        %v1677 = vpop.f32.mrb[0].mxu0
        %v1678 = vpop.f32.mrb[0].mxu0
        %v1679 = vadd.f32 %v570, %v1678
        %v1680 = vpop.f32.mrb[0].mxu0
        %1681 = vmatprep.mubr.bf16.mxu0 0
        %1682 = vmatmul.mubr.bf16.gmra.mrb[0].mxu0 %v1217
        %v1683 = vpop.f32.mrb[0].mxu0
        %v1684 = vadd.f32 %v570, %v1683
        %v1685 = vpop.f32.mrb[0].mxu0
        %v1686 = vpop.f32.mrb[0].mxu0
        %v1687 = vadd.f32 %v570, %v1686
        %v1688 = vpop.f32.mrb[0].mxu0
        %1689 = vmatprep.mubr.bf16.mxu0 0
        %1690 = vmatmul.mubr.bf16.gmra.mrb[0].mxu0 %v1220
        %v1691 = vpop.f32.mrb[0].mxu0
        %v1692 = vadd.f32 %v570, %v1691
        %v1693 = vpop.f32.mrb[0].mxu0
        %v1694 = vpop.f32.mrb[0].mxu0
        %v1695 = vadd.f32 %v570, %v1694
        %v1696 = vpop.f32.mrb[0].mxu0
        %1697 = vmatprep.mubr.bf16.mxu0 0
        %1698 = vmatmul.mubr.bf16.gmra.mrb[0].mxu0 %v1223
        %v1699 = vpop.f32.mrb[0].mxu0
        %v1700 = vadd.f32 %v570, %v1699
        %v1701 = vpop.f32.mrb[0].mxu0
        %v1702 = vpop.f32.mrb[0].mxu0
        %v1703 = vadd.f32 %v570, %v1702
        %v1704 = vpop.f32.mrb[0].mxu0
        %1705 = vmatprep.mubr.bf16.mxu0 0
        %1706 = vmatmul.mubr.bf16.gmra.mrb[0].mxu0 %v1226
        %v1707 = vpop.f32.mrb[0].mxu0
        %v1708 = vadd.f32 %v570, %v1707
        %v1709 = vpop.f32.mrb[0].mxu0
        %v1710 = vpop.f32.mrb[0].mxu0
        %v1711 = vadd.f32 %v570, %v1710
        %v1712 = vpop.f32.mrb[0].mxu0
        %1713 = vmatprep.mubr.bf16.mxu0 0
        %1714 = vmatmul.mubr.bf16.gmra.mrb[0].mxu0 %v1229
        %v1715 = vpop.f32.mrb[0].mxu0
        %v1716 = vadd.f32 %v570, %v1715
        %v1717 = vpop.f32.mrb[0].mxu0
        %v1718 = vpop.f32.mrb[0].mxu0
        %v1719 = vadd.f32 %v570, %v1718
        %v1720 = vpop.f32.mrb[0].mxu0
        %1721 = vmatprep.mubr.bf16.mxu0 0
        %1722 = vmatmul.mubr.bf16.gmra.mrb[0].mxu0 %v1232
        %v1723 = vpop.f32.mrb[0].mxu0
        %v1724 = vadd.f32 %v570, %v1723
        %v1725 = vpop.f32.mrb[0].mxu0
        %v1726 = vpop.f32.mrb[0].mxu0
        %v1727 = vadd.f32 %v570, %v1726
        %v1728 = vpop.f32.mrb[0].mxu0
        %1729 = vmatprep.mubr.bf16.mxu0 0
        %1730 = vmatmul.mubr.bf16.gmra.mrb[0].mxu0 %v1235
        %v1731 = vpop.f32.mrb[0].mxu0
        %v1732 = vadd.f32 %v570, %v1731
        %v1733 = vpop.f32.mrb[0].mxu0
        %v1734 = vpop.f32.mrb[0].mxu0
        %v1735 = vadd.f32 %v570, %v1734
        %v1736 = vpop.f32.mrb[0].mxu0
        %1737 = vmatprep.mubr.bf16.mxu0 0
        %1738 = vmatmul.mubr.bf16.gmra.mrb[0].mxu0 %v1238
        %v1739 = vpop.f32.mrb[0].mxu0
        %v1740 = vadd.f32 %v570, %v1739
        %v1741 = vpop.f32.mrb[0].mxu0
        %v1742 = vpop.f32.mrb[0].mxu0
        %v1743 = vadd.f32 %v570, %v1742
        %v1744 = vpop.f32.mrb[0].mxu0
        %1745 = vmatprep.mubr.bf16.mxu0 0
        %1746 = vmatmul.mubr.bf16.gmra.mrb[0].mxu0 %v1241
        %v1747 = vpop.f32.mrb[0].mxu0
        %v1748 = vadd.f32 %v570, %v1747
        %v1749 = vpop.f32.mrb[0].mxu0
        %v1750 = vpop.f32.mrb[0].mxu0
        %v1751 = vadd.f32 %v570, %v1750
        %v1752 = vpop.f32.mrb[0].mxu0
        %1753 = vmatprep.mubr.bf16.mxu0 0
        %1754 = vmatmul.mubr.bf16.gmra.mrb[0].mxu0 %v1244
        %v1755 = vpop.f32.mrb[0].mxu0
        %v1756 = vadd.f32 %v570, %v1755
        %v1757 = vpop.f32.mrb[0].mxu0
        %v1758 = vpop.f32.mrb[0].mxu0
        %v1759 = vadd.f32 %v570, %v1758
        %v1760 = vpop.f32.mrb[0].mxu0
        %1761 = vmatprep.mubr.bf16.mxu0 0
        %1762 = vmatmul.mubr.bf16.gmra.mrb[0].mxu0 %v1247
        %v1763 = vpop.f32.mrb[0].mxu0
        %v1764 = vadd.f32 %v570, %v1763
        %v1765 = vpop.f32.mrb[0].mxu0
        %v1766 = vpop.f32.mrb[0].mxu0
        %v1767 = vadd.f32 %v570, %v1766
        %v1768 = vpop.f32.mrb[0].mxu0
        %1769 = vmatprep.mubr.bf16.mxu0 0
        %1770 = vmatmul.mubr.bf16.gmra.mrb[0].mxu0 %v1250
        %v1771 = vpop.f32.mrb[0].mxu0
        %v1772 = vadd.f32 %v570, %v1771
        %v1773 = vpop.f32.mrb[0].mxu0
        %v1774 = vpop.f32.mrb[0].mxu0
        %v1775 = vadd.f32 %v570, %v1774
        %v1776 = vpop.f32.mrb[0].mxu0
        %1777 = vmatprep.mubr.bf16.mxu0 0
        %1778 = vmatmul.mubr.bf16.gmra.mrb[0].mxu0 %v1253
        %v1779 = vpop.f32.mrb[0].mxu0
        %v1780 = vadd.f32 %v570, %v1779
        %v1781 = vpop.f32.mrb[0].mxu0
        %v1782 = vpop.f32.mrb[0].mxu0
        %v1783 = vadd.f32 %v570, %v1782
        %v1784 = vpop.f32.mrb[0].mxu0
        %1785 = vmatprep.mubr.bf16.mxu0 0
        %1786 = vmatmul.mubr.bf16.gmra.mrb[0].mxu0 %v1256
        %v1787 = vpop.f32.mrb[0].mxu0
        %v1788 = vadd.f32 %v570, %v1787
        %v1789 = vpop.f32.mrb[0].mxu0
        %v1790 = vpop.f32.mrb[0].mxu0
        %v1791 = vadd.f32 %v570, %v1790
        %v1792 = vpop.f32.mrb[0].mxu0
        %1793 = vmatprep.mubr.bf16.mxu0 0
        %1794 = vmatmul.mubr.bf16.gmra.mrb[0].mxu0 %v1259
        %v1795 = vpop.f32.mrb[0].mxu0
        %v1796 = vadd.f32 %v570, %v1795
        %v1797 = vpop.f32.mrb[0].mxu0
        %v1798 = vpop.f32.mrb[0].mxu0
        %v1799 = vadd.f32 %v570, %v1798
        %v1800 = vpop.f32.mrb[0].mxu0
        %1801 = vmatprep.mubr.bf16.mxu0 0
        %1802 = vmatmul.mubr.bf16.gmra.mrb[0].mxu0 %v1262
        %v1803 = vpop.f32.mrb[0].mxu0
        %v1804 = vadd.f32 %v570, %v1803
        %v1805 = vpop.f32.mrb[0].mxu0
        %v1806 = vpop.f32.mrb[0].mxu0
        %v1807 = vadd.f32 %v570, %v1806
        %v1808 = vpop.f32.mrb[0].mxu0
        %1809 = vmatprep.mubr.bf16.mxu0 0
        %1810 = vmatmul.mubr.bf16.gmra.mrb[0].mxu0 %v1265
        %v1811 = vpop.f32.mrb[0].mxu0
        %v1812 = vadd.f32 %v570, %v1811
        %v1813 = vpop.f32.mrb[0].mxu0
        %v1814 = vpop.f32.mrb[0].mxu0
        %v1815 = vadd.f32 %v570, %v1814
        %v1816 = vpop.f32.mrb[0].mxu0
        %1817 = vmatprep.mubr.bf16.mxu0 0
        %1818 = vmatmul.mubr.bf16.gmra.mrb[0].mxu0 %v1268
        %v1819 = vpop.f32.mrb[0].mxu0
        %v1820 = vadd.f32 %v570, %v1819
        %v1821 = vpop.f32.mrb[0].mxu0
        %v1822 = vpop.f32.mrb[0].mxu0
        %v1823 = vadd.f32 %v570, %v1822
        %v1824 = vpop.f32.mrb[0].mxu0
        %1825 = vmatprep.mubr.bf16.mxu0 0
        %1826 = vmatmul.mubr.bf16.gmra.mrb[0].mxu0 %v1271
        %v1827 = vpop.f32.mrb[0].mxu0
        %v1828 = vadd.f32 %v570, %v1827
        %v1829 = vpop.f32.mrb[0].mxu0
        %v1830 = vpop.f32.mrb[0].mxu0
        %v1831 = vadd.f32 %v570, %v1830
        %v1832 = vpop.f32.mrb[0].mxu0
        %1833 = vmatprep.mubr.bf16.mxu0 0
        %1834 = vmatmul.mubr.bf16.gmra.mrb[0].mxu0 %v1274
        %v1835 = vpop.f32.mrb[0].mxu0
        %v1836 = vadd.f32 %v570, %v1835
        %v1837 = vpop.f32.mrb[0].mxu0
        %v1838 = vpop.f32.mrb[0].mxu0
        %v1839 = vadd.f32 %v570, %v1838
        %v1840 = vpop.f32.mrb[0].mxu0
        %1841 = vmatprep.mubr.bf16.mxu0 0
        %1842 = vmatmul.mubr.bf16.gmra.mrb[0].mxu0 %v1277
        %v1843 = vpop.f32.mrb[0].mxu0
        %v1844 = vadd.f32 %v570, %v1843
        %v1845 = vpop.f32.mrb[0].mxu0
        %v1846 = vpop.f32.mrb[0].mxu0
        %v1847 = vadd.f32 %v570, %v1846
        %v1848 = vpop.f32.mrb[0].mxu0
        %1849 = vmatprep.mubr.bf16.mxu0 0
        %1850 = vmatmul.mubr.bf16.gmra.mrb[0].mxu0 %v1280
        %v1851 = vpop.f32.mrb[0].mxu0
        %v1852 = vadd.f32 %v570, %v1851
        %v1853 = vpop.f32.mrb[0].mxu0
        %v1854 = vpop.f32.mrb[0].mxu0
        %v1855 = vadd.f32 %v570, %v1854
        %v1856 = vpop.f32.mrb[0].mxu0
        %1857 = vmatprep.mubr.bf16.mxu0 0
        %1858 = vmatmul.mubr.bf16.gmra.mrb[0].mxu0 %v1283
        %v1859 = vpop.f32.mrb[0].mxu0
        %v1860 = vadd.f32 %v570, %v1859
        %v1861 = vpop.f32.mrb[0].mxu0
        %v1862 = vpop.f32.mrb[0].mxu0
        %v1863 = vadd.f32 %v570, %v1862
        %v1864 = vpop.f32.mrb[0].mxu0
        %1865 = vmatprep.mubr.bf16.mxu0 0
        %1866 = vmatmul.mubr.bf16.gmra.mrb[0].mxu0 %v1286
        %v1867 = vpop.f32.mrb[0].mxu0
        %v1868 = vadd.f32 %v570, %v1867
        %v1869 = vpop.f32.mrb[0].mxu0
        %v1870 = vpop.f32.mrb[0].mxu0
        %v1871 = vadd.f32 %v570, %v1870
        %v1872 = vpop.f32.mrb[0].mxu0
        %1873 = vmatprep.mubr.bf16.mxu0 0
        %1874 = vmatmul.mubr.bf16.gmra.mrb[0].mxu0 %v1289
        %v1875 = vpop.f32.mrb[0].mxu0
        %v1876 = vadd.f32 %v570, %v1875
        %v1877 = vpop.f32.mrb[0].mxu0
        %v1878 = vpop.f32.mrb[0].mxu0
        %v1879 = vadd.f32 %v570, %v1878
        %v1880 = vpop.f32.mrb[0].mxu0
        %1881 = vmatprep.mubr.bf16.mxu0 0
        %1882 = vmatmul.mubr.bf16.gmra.mrb[0].mxu0 %v1292
        %v1883 = vpop.f32.mrb[0].mxu0
        %v1884 = vadd.f32 %v570, %v1883
        %v1885 = vpop.f32.mrb[0].mxu0
        %v1886 = vpop.f32.mrb[0].mxu0
        %v1887 = vadd.f32 %v570, %v1886
        %v1888 = vpop.f32.mrb[0].mxu0
        %1889 = vmatprep.mubr.bf16.mxu0 0
        %1890 = vmatmul.mubr.bf16.gmra.mrb[0].mxu0 %v1295
        %v1891 = vpop.f32.mrb[0].mxu0
        %v1892 = vadd.f32 %v570, %v1891
        %v1893 = vpop.f32.mrb[0].mxu0
        %v1894 = vpop.f32.mrb[0].mxu0
        %v1895 = vadd.f32 %v570, %v1894
        %v1896 = vpop.f32.mrb[0].mxu0
        %1897 = vmatprep.mubr.bf16.mxu0 0
        %1898 = vmatmul.mubr.bf16.gmra.mrb[0].mxu0 %v1298
        %v1899 = vpop.f32.mrb[0].mxu0
        %v1900 = vadd.f32 %v570, %v1899
        %v1901 = vpop.f32.mrb[0].mxu0
        %v1902 = vpop.f32.mrb[0].mxu0
        %v1903 = vadd.f32 %v570, %v1902
        %v1904 = vpop.f32.mrb[0].mxu0
        %1905 = vmatprep.mubr.bf16.mxu0 0
        %1906 = vmatmul.mubr.bf16.gmra.mrb[0].mxu0 %v1301
        %v1907 = vpop.f32.mrb[0].mxu0
        %v1908 = vadd.f32 %v570, %v1907
        %v1909 = vpop.f32.mrb[0].mxu0
        %v1910 = vpop.f32.mrb[0].mxu0
        %v1911 = vadd.f32 %v570, %v1910
        %v1912 = vpop.f32.mrb[0].mxu0
        %1913 = vmatprep.mubr.bf16.mxu0 0
        %1914 = vmatmul.mubr.bf16.gmra.mrb[0].mxu0 %v1304
        %v1915 = vpop.f32.mrb[0].mxu0
        %v1916 = vadd.f32 %v570, %v1915
        %v1917 = vpop.f32.mrb[0].mxu0
        %v1918 = vpop.f32.mrb[0].mxu0
        %v1919 = vadd.f32 %v570, %v1918
        %v1920 = vpop.f32.mrb[0].mxu0
        %1921 = vmatprep.mubr.bf16.mxu0 0
        %1922 = vmatmul.mubr.bf16.gmra.mrb[0].mxu0 %v1307
        %v1923 = vpop.f32.mrb[0].mxu0
        %v1924 = vadd.f32 %v570, %v1923
        %v1925 = vpop.f32.mrb[0].mxu0
        %v1926 = vpop.f32.mrb[0].mxu0
        %v1927 = vadd.f32 %v570, %v1926
        %v1928 = vpop.f32.mrb[0].mxu0
        %1929 = vmatprep.mubr.bf16.mxu0 0
        %1930 = vmatmul.mubr.bf16.gmra.mrb[0].mxu0 %v1310
        %v1931 = vpop.f32.mrb[0].mxu0
        %v1932 = vadd.f32 %v570, %v1931
        %v1933 = vpop.f32.mrb[0].mxu0
        %v1934 = vpop.f32.mrb[0].mxu0
        %v1935 = vadd.f32 %v570, %v1934
        %v1936 = vpop.f32.mrb[0].mxu0
        %1937 = vmatprep.mubr.bf16.mxu0 0
        %1938 = vmatmul.mubr.bf16.gmra.mrb[0].mxu0 %v1313
        %v1939 = vpop.f32.mrb[0].mxu0
        %v1940 = vadd.f32 %v570, %v1939
        %v1941 = vpop.f32.mrb[0].mxu0
        %v1942 = vpop.f32.mrb[0].mxu0
        %v1943 = vadd.f32 %v570, %v1942
        %v1944 = vpop.f32.mrb[0].mxu0
        %1945 = vmatprep.mubr.bf16.mxu0 0
        %1946 = vmatmul.mubr.bf16.gmra.mrb[0].mxu0 %v1316
        %v1947 = vpop.f32.mrb[0].mxu0
        %v1948 = vadd.f32 %v570, %v1947
        %v1949 = vpop.f32.mrb[0].mxu0
        %v1950 = vpop.f32.mrb[0].mxu0
        %v1951 = vadd.f32 %v570, %v1950
        %v1952 = vpop.f32.mrb[0].mxu0
        %1953 = vmatprep.mubr.bf16.mxu0 0
        %1954 = vmatmul.mubr.bf16.gmra.mrb[0].mxu0 %v1319
        %v1955 = vpop.f32.mrb[0].mxu0
        %v1956 = vadd.f32 %v570, %v1955
        %v1957 = vpop.f32.mrb[0].mxu0
        %v1958 = vpop.f32.mrb[0].mxu0
        %v1959 = vadd.f32 %v570, %v1958
        %v1960 = vpop.f32.mrb[0].mxu0
        %1961 = vmatprep.mubr.bf16.mxu0 0
        %1962 = vmatmul.mubr.bf16.gmra.mrb[0].mxu0 %v1322
        %v1963 = vpop.f32.mrb[0].mxu0
        %v1964 = vadd.f32 %v570, %v1963
        %v1965 = vpop.f32.mrb[0].mxu0
        %v1966 = vpop.f32.mrb[0].mxu0
        %v1967 = vadd.f32 %v570, %v1966
        %v1968 = vpop.f32.mrb[0].mxu0
        %1969 = vmatprep.mubr.bf16.mxu0 0
        %1970 = vmatmul.mubr.bf16.gmra.mrb[0].mxu0 %v1325
        %v1971 = vpop.f32.mrb[0].mxu0
        %v1972 = vadd.f32 %v570, %v1971
        %v1973 = vpop.f32.mrb[0].mxu0
        %v1974 = vpop.f32.mrb[0].mxu0
        %v1975 = vadd.f32 %v570, %v1974
        %v1976 = vpop.f32.mrb[0].mxu0
        %1977 = vmatprep.mubr.bf16.mxu0 0
        %1978 = vmatmul.mubr.bf16.gmra.mrb[0].mxu0 %v1328
        %v1979 = vpop.f32.mrb[0].mxu0
        %v1980 = vadd.f32 %v570, %v1979
        %v1981 = vpop.f32.mrb[0].mxu0
        %v1982 = vpop.f32.mrb[0].mxu0
        %v1983 = vadd.f32 %v570, %v1982
        %v1984 = vpop.f32.mrb[0].mxu0
        %1985 = vmatprep.mubr.bf16.mxu0 0
        %1986 = vmatmul.mubr.bf16.gmra.mrb[0].mxu0 %v1331
        %v1987 = vpop.f32.mrb[0].mxu0
        %v1988 = vadd.f32 %v570, %v1987
        %v1989 = vpop.f32.mrb[0].mxu0
        %v1990 = vpop.f32.mrb[0].mxu0
        %v1991 = vadd.f32 %v570, %v1990
        %v1992 = vpop.f32.mrb[0].mxu0
        %1993 = vmatprep.mubr.bf16.mxu0 0
        %1994 = vmatmul.mubr.bf16.gmra.mrb[0].mxu0 %v1334
        %v1995 = vpop.f32.mrb[0].mxu0
        %v1996 = vadd.f32 %v570, %v1995
        %v1997 = vpop.f32.mrb[0].mxu0
        %v1998 = vpop.f32.mrb[0].mxu0
        %v1999 = vadd.f32 %v570, %v1998
        %v2000 = vpop.f32.mrb[0].mxu0
        %2001 = vmatprep.mubr.bf16.mxu0 0
        %2002 = vmatmul.mubr.bf16.gmra.mrb[0].mxu0 %v1337
        %v2003 = vpop.f32.mrb[0].mxu0
        %v2004 = vadd.f32 %v570, %v2003
        %v2005 = vpop.f32.mrb[0].mxu0
        %v2006 = vpop.f32.mrb[0].mxu0
        %v2007 = vadd.f32 %v570, %v2006
        %v2008 = vpop.f32.mrb[0].mxu0
        %2009 = vmatprep.mubr.bf16.mxu0 0
        %2010 = vmatmul.mubr.bf16.gmra.mrb[0].mxu0 %v1340
        %v2011 = vpop.f32.mrb[0].mxu0
        %v2012 = vadd.f32 %v570, %v2011
        %v2013 = vpop.f32.mrb[0].mxu0
        %v2014 = vpop.f32.mrb[0].mxu0
        %v2015 = vadd.f32 %v570, %v2014
        %v2016 = vpop.f32.mrb[0].mxu0
        %2017 = vmatprep.mubr.bf16.mxu0 0
        %2018 = vmatmul.mubr.bf16.gmra.mrb[0].mxu0 %v1343
        %v2019 = vpop.f32.mrb[0].mxu0
        %v2020 = vadd.f32 %v570, %v2019
        %v2021 = vpop.f32.mrb[0].mxu0
        %v2022 = vpop.f32.mrb[0].mxu0
        %v2023 = vadd.f32 %v570, %v2022
        %v2024 = vpop.f32.mrb[0].mxu0
        %2025 = vmatprep.mubr.bf16.mxu0 0
        %2026 = vmatmul.mubr.bf16.gmra.mrb[0].mxu0 %v1346
        %v2027 = vpop.f32.mrb[0].mxu0
        %v2028 = vadd.f32 %v570, %v2027
        %v2029 = vpop.f32.mrb[0].mxu0
        %v2030 = vpop.f32.mrb[0].mxu0
        %v2031 = vadd.f32 %v570, %v2030
        %v2032 = vpop.f32.mrb[0].mxu0
        %2033 = vmatprep.mubr.bf16.mxu0 0
        %2034 = vmatmul.mubr.bf16.gmra.mrb[0].mxu0 %v1349
        %v2035 = vpop.f32.mrb[0].mxu0
        %v2036 = vadd.f32 %v570, %v2035
        %v2037 = vpop.f32.mrb[0].mxu0
        %v2038 = vpop.f32.mrb[0].mxu0
        %v2039 = vadd.f32 %v570, %v2038
        %v2040 = vpop.f32.mrb[0].mxu0
        %2041 = vmatprep.mubr.bf16.mxu0 0
        %2042 = vmatmul.mubr.bf16.gmra.mrb[0].mxu0 %v1352
        %v2043 = vpop.f32.mrb[0].mxu0
        %v2044 = vadd.f32 %v570, %v2043
        %v2045 = vpop.f32.mrb[0].mxu0
        %v2046 = vpop.f32.mrb[0].mxu0
        %v2047 = vadd.f32 %v570, %v2046
        %v2048 = vpop.f32.mrb[0].mxu0
        %2049 = vmatprep.mubr.bf16.mxu0 0
        %2050 = vmatmul.mubr.bf16.gmra.mrb[0].mxu0 %v1355
        %v2051 = vpop.f32.mrb[0].mxu0
        %v2052 = vadd.f32 %v570, %v2051
        %v2053 = vpop.f32.mrb[0].mxu0
        %v2054 = vpop.f32.mrb[0].mxu0
        %v2055 = vadd.f32 %v570, %v2054
        %v2056 = vpop.f32.mrb[0].mxu0
        %2057 = vmatprep.mubr.bf16.mxu0 0
        %2058 = vmatmul.mubr.bf16.gmra.mrb[0].mxu0 %v1358
        %v2059 = vpop.f32.mrb[0].mxu0
        %v2060 = vadd.f32 %v570, %v2059
        %v2061 = vpop.f32.mrb[0].mxu0
        %v2062 = vpop.f32.mrb[0].mxu0
        %v2063 = vadd.f32 %v570, %v2062
        %v2064 = vpop.f32.mrb[0].mxu0
        %2065 = vmatprep.mubr.bf16.mxu0 0
        %2066 = vmatmul.mubr.bf16.gmra.mrb[0].mxu0 %v1361
        %v2067 = vpop.f32.mrb[0].mxu0
        %v2068 = vadd.f32 %v570, %v2067
        %v2069 = vpop.f32.mrb[0].mxu0
        %v2070 = vpop.f32.mrb[0].mxu0
        %v2071 = vadd.f32 %v570, %v2070
        %v2072 = vpop.f32.mrb[0].mxu0
        %2073 = vmatprep.mubr.bf16.mxu0 0
        %2074 = vmatmul.mubr.bf16.gmra.mrb[0].mxu0 %v1364
        %v2075 = vpop.f32.mrb[0].mxu0
        %v2076 = vadd.f32 %v570, %v2075
        %v2077 = vpop.f32.mrb[0].mxu0
        %v2078 = vpop.f32.mrb[0].mxu0
        %v2079 = vadd.f32 %v570, %v2078
        %v2080 = vpop.f32.mrb[0].mxu0
        %2081 = vmatprep.mubr.bf16.mxu0 0
        %2082 = vmatmul.mubr.bf16.gmra.mrb[0].mxu0 %v1367
        %v2083 = vpop.f32.mrb[0].mxu0
        %v2084 = vadd.f32 %v570, %v2083
        %v2085 = vpop.f32.mrb[0].mxu0
        %v2086 = vpop.f32.mrb[0].mxu0
        %v2087 = vadd.f32 %v570, %v2086
        %v2088 = vpop.f32.mrb[0].mxu0
        %2089 = vmatprep.mubr.bf16.mxu0 0
        %2090 = vmatmul.mubr.bf16.gmra.mrb[0].mxu0 %v1370
        %v2091 = vpop.f32.mrb[0].mxu0
        %v2092 = vadd.f32 %v570, %v2091
        %v2093 = vpop.f32.mrb[0].mxu0
        %v2094 = vpop.f32.mrb[0].mxu0
        %v2095 = vadd.f32 %v570, %v2094
        %v2096 = vpop.f32.mrb[0].mxu0
        %2097 = vmatprep.mubr.bf16.mxu0 0
        %2098 = vmatmul.mubr.bf16.gmra.mrb[0].mxu0 %v1373
        %v2099 = vpop.f32.mrb[0].mxu0
        %v2100 = vadd.f32 %v570, %v2099
        %v2101 = vpop.f32.mrb[0].mxu0
        %v2102 = vpop.f32.mrb[0].mxu0
        %v2103 = vadd.f32 %v570, %v2102
        %v2104 = vpop.f32.mrb[0].mxu0
        %2105 = vmatprep.mubr.bf16.mxu0 0
        %2106 = vmatmul.mubr.bf16.gmra.mrb[0].mxu0 %v1376
        %v2107 = vpop.f32.mrb[0].mxu0
        %v2108 = vadd.f32 %v570, %v2107
        %v2109 = vpop.f32.mrb[0].mxu0
        %v2110 = vpop.f32.mrb[0].mxu0
        %v2111 = vadd.f32 %v570, %v2110
        %v2112 = vpop.f32.mrb[0].mxu0
        %2113 = vmatprep.mubr.bf16.mxu0 0
        %2114 = vmatmul.mubr.bf16.gmra.mrb[0].mxu0 %v1379
        %v2115 = vpop.f32.mrb[0].mxu0
        %v2116 = vadd.f32 %v570, %v2115
        %v2117 = vpop.f32.mrb[0].mxu0
        %v2118 = vpop.f32.mrb[0].mxu0
        %v2119 = vadd.f32 %v570, %v2118
        %v2120 = vpop.f32.mrb[0].mxu0
        %2121 = vmatprep.mubr.bf16.mxu0 0
        %2122 = vmatmul.mubr.bf16.gmra.mrb[0].mxu0 %v1382
        %v2123 = vpop.f32.mrb[0].mxu0
        %v2124 = vadd.f32 %v570, %v2123
        %v2125 = vpop.f32.mrb[0].mxu0
        %v2126 = vpop.f32.mrb[0].mxu0
        %v2127 = vadd.f32 %v570, %v2126
        %v2128 = vpop.f32.mrb[0].mxu0
        %2129 = vmatprep.mubr.bf16.mxu0 0
        %2130 = vmatmul.mubr.bf16.gmra.mrb[0].mxu0 %v1385
        %v2131 = vpop.f32.mrb[0].mxu0
        %v2132 = vadd.f32 %v570, %v2131
        %v2133 = vpop.f32.mrb[0].mxu0
        %v2134 = vpop.f32.mrb[0].mxu0
        %v2135 = vadd.f32 %v570, %v2134
        %v2136 = vpop.f32.mrb[0].mxu0
        %2137 = vmatprep.mubr.bf16.mxu0 0
        %2138 = vmatmul.mubr.bf16.gmra.mrb[0].mxu0 %v1388
        %v2139 = vpop.f32.mrb[0].mxu0
        %v2140 = vadd.f32 %v570, %v2139
        %v2141 = vpop.f32.mrb[0].mxu0
        %v2142 = vpop.f32.mrb[0].mxu0
        %v2143 = vadd.f32 %v570, %v2142
        %v2144 = vpop.f32.mrb[0].mxu0
        %2145 = vmatprep.mubr.bf16.mxu0 0
        %2146 = vmatmul.mubr.bf16.gmra.mrb[0].mxu0 %v1391
        %v2147 = vpop.f32.mrb[0].mxu0
        %v2148 = vadd.f32 %v570, %v2147
        %v2149 = vpop.f32.mrb[0].mxu0
        %v2150 = vpop.f32.mrb[0].mxu0
        %v2151 = vadd.f32 %v570, %v2150
        %v2152 = vpop.f32.mrb[0].mxu0
        %2153 = vmatprep.mubr.bf16.mxu0 0
        %2154 = vmatmul.mubr.bf16.gmra.mrb[0].mxu0 %v1394
        %v2155 = vpop.f32.mrb[0].mxu0
        %v2156 = vadd.f32 %v570, %v2155
        %v2157 = vpop.f32.mrb[0].mxu0
        %v2158 = vpop.f32.mrb[0].mxu0
        %v2159 = vadd.f32 %v570, %v2158
        %v2160 = vpop.f32.mrb[0].mxu0
        %2161 = vmatprep.mubr.bf16.mxu0 0
        %2162 = vmatmul.mubr.bf16.gmra.mrb[0].mxu0 %v1397
        %v2163 = vpop.f32.mrb[0].mxu0
        %v2164 = vadd.f32 %v570, %v2163
        %v2165 = vpop.f32.mrb[0].mxu0
        %v2166 = vpop.f32.mrb[0].mxu0
        %v2167 = vadd.f32 %v570, %v2166
        %v2168 = vpop.f32.mrb[0].mxu0
        %2169 = vmatprep.mubr.bf16.mxu0 0
        %2170 = vmatmul.mubr.bf16.gmra.mrb[0].mxu0 %v1400
        %v2171 = vpop.f32.mrb[0].mxu0
        %v2172 = vadd.f32 %v570, %v2171
        %v2173 = vpop.f32.mrb[0].mxu0
        %v2174 = vpop.f32.mrb[0].mxu0
        %v2175 = vadd.f32 %v570, %v2174
        %v2176 = vpop.f32.mrb[0].mxu0
        %2177 = vmatprep.mubr.bf16.mxu0 0
        %2178 = vmatmul.mubr.bf16.gmra.mrb[0].mxu0 %v1403
        %v2179 = vpop.f32.mrb[0].mxu0
        %v2180 = vadd.f32 %v570, %v2179
        %v2181 = vpop.f32.mrb[0].mxu0
        %v2182 = vpop.f32.mrb[0].mxu0
        %v2183 = vadd.f32 %v570, %v2182
        %v2184 = vpop.f32.mrb[0].mxu0
        %2185 = vmatprep.mubr.bf16.mxu0 0
        %2186 = vmatmul.mubr.bf16.gmra.mrb[0].mxu0 %v1406
        %v2187 = vpop.f32.mrb[0].mxu0
        %v2188 = vadd.f32 %v570, %v2187
        %v2189 = vpop.f32.mrb[0].mxu0
        %v2190 = vpop.f32.mrb[0].mxu0
        %v2191 = vadd.f32 %v570, %v2190
        %v2192 = vpop.f32.mrb[0].mxu0
        %2193 = vmatprep.mubr.bf16.mxu0 0
        %2194 = vmatmul.mubr.bf16.gmra.mrb[0].mxu0 %v1409
        %v2195 = vpop.f32.mrb[0].mxu0
        %v2196 = vadd.f32 %v570, %v2195
        %v2197 = vpop.f32.mrb[0].mxu0
        %v2198 = vpop.f32.mrb[0].mxu0
        %v2199 = vadd.f32 %v570, %v2198
        %v2200 = vpop.f32.mrb[0].mxu0
        %2201 = vmatprep.mubr.bf16.mxu0 0
        %2202 = vmatmul.mubr.bf16.gmra.mrb[0].mxu0 %v1412
        %v2203 = vpop.f32.mrb[0].mxu0
        %v2204 = vadd.f32 %v570, %v2203
        %v2205 = vpop.f32.mrb[0].mxu0
        %v2206 = vpop.f32.mrb[0].mxu0
        %v2207 = vadd.f32 %v570, %v2206
        %v2208 = vpop.f32.mrb[0].mxu0
        %2209 = vmatprep.mubr.bf16.mxu0 0
        %2210 = vmatmul.mubr.bf16.gmra.mrb[0].mxu0 %v1415
        %v2211 = vpop.f32.mrb[0].mxu0
        %v2212 = vadd.f32 %v570, %v2211
        %v2213 = vpop.f32.mrb[0].mxu0
        %v2214 = vpop.f32.mrb[0].mxu0
        %v2215 = vadd.f32 %v570, %v2214
        %v2216 = vpop.f32.mrb[0].mxu0
        %2217 = vmatprep.mubr.bf16.mxu0 0
        %2218 = vmatmul.mubr.bf16.gmra.mrb[0].mxu0 %v1418
        %v2219 = vpop.f32.mrb[0].mxu0
        %v2220 = vadd.f32 %v570, %v2219
        %v2221 = vpop.f32.mrb[0].mxu0
        %v2222 = vpop.f32.mrb[0].mxu0
        %v2223 = vadd.f32 %v570, %v2222
        %v2224 = vpop.f32.mrb[0].mxu0
        %2225 = vmatprep.mubr.bf16.mxu0 0
        %2226 = vmatmul.mubr.bf16.gmra.mrb[0].mxu0 %v1421
        %v2227 = vpop.f32.mrb[0].mxu0
        %v2228 = vadd.f32 %v570, %v2227
        %v2229 = vpop.f32.mrb[0].mxu0
        %v2230 = vpop.f32.mrb[0].mxu0
        %v2231 = vadd.f32 %v570, %v2230
        %v2232 = vpop.f32.mrb[0].mxu0
        %2233 = vmatprep.mubr.bf16.mxu0 0
        %2234 = vmatmul.mubr.bf16.gmra.mrb[0].mxu0 %v1424
        %v2235 = vpop.f32.mrb[0].mxu0
        %v2236 = vadd.f32 %v570, %v2235
        %v2237 = vpop.f32.mrb[0].mxu0
        %v2238 = vpop.f32.mrb[0].mxu0
        %v2239 = vadd.f32 %v570, %v2238
        %v2240 = vpop.f32.mrb[0].mxu0
        %2241 = vmatprep.mubr.bf16.mxu0 0
        %2242 = vmatmul.mubr.bf16.gmra.mrb[0].mxu0 %v1427
        %v2243 = vpop.f32.mrb[0].mxu0
        %v2244 = vadd.f32 %v570, %v2243
        %v2245 = vpop.f32.mrb[0].mxu0
        %v2246 = vpop.f32.mrb[0].mxu0
        %v2247 = vadd.f32 %v570, %v2246
        %v2248 = vpop.f32.mrb[0].mxu0
        %2249 = vmatprep.mubr.bf16.mxu0 0
        %2250 = vmatmul.mubr.bf16.gmra.mrb[0].mxu0 %v1430
        %v2251 = vpop.f32.mrb[0].mxu0
        %v2252 = vadd.f32 %v570, %v2251
        %v2253 = vpop.f32.mrb[0].mxu0
        %v2254 = vpop.f32.mrb[0].mxu0
        %v2255 = vadd.f32 %v570, %v2254
        %v2256 = vpop.f32.mrb[0].mxu0
        %2257 = vmatprep.mubr.bf16.mxu0 0
        %2258 = vmatmul.mubr.bf16.gmra.mrb[0].mxu0 %v1433
        %v2259 = vpop.f32.mrb[0].mxu0
        %v2260 = vadd.f32 %v570, %v2259
        %v2261 = vpop.f32.mrb[0].mxu0
        %v2262 = vpop.f32.mrb[0].mxu0
        %v2263 = vadd.f32 %v570, %v2262
        %v2264 = vpop.f32.mrb[0].mxu0
        %2265 = vmatprep.mubr.bf16.mxu0 0
        %2266 = vmatmul.mubr.bf16.gmra.mrb[0].mxu0 %v1436
        %v2267 = vpop.f32.mrb[0].mxu0
        %v2268 = vadd.f32 %v570, %v2267
        %v2269 = vpop.f32.mrb[0].mxu0
        %v2270 = vpop.f32.mrb[0].mxu0
        %v2271 = vadd.f32 %v570, %v2270
        %v2272 = vpop.f32.mrb[0].mxu0
        %2273 = vmatprep.mubr.bf16.mxu0 0
        %2274 = vmatmul.mubr.bf16.gmra.mrb[0].mxu0 %v1439
        %v2275 = vpop.f32.mrb[0].mxu0
        %v2276 = vadd.f32 %v570, %v2275
        %v2277 = vpop.f32.mrb[0].mxu0
        %v2278 = vpop.f32.mrb[0].mxu0
        %v2279 = vadd.f32 %v570, %v2278
        %v2280 = vpop.f32.mrb[0].mxu0
        %2281 = vmatprep.mubr.bf16.mxu0 0
        %2282 = vmatmul.mubr.bf16.gmra.mrb[0].mxu0 %v1442
        %v2283 = vpop.f32.mrb[0].mxu0
        %v2284 = vadd.f32 %v570, %v2283
        %v2285 = vpop.f32.mrb[0].mxu0
        %v2286 = vpop.f32.mrb[0].mxu0
        %v2287 = vadd.f32 %v570, %v2286
        %v2288 = vpop.f32.mrb[0].mxu0
        %2289 = vmatprep.mubr.bf16.mxu0 0
        %2290 = vmatmul.mubr.bf16.gmra.mrb[0].mxu0 %v1445
        %v2291 = vpop.f32.mrb[0].mxu0
        %v2292 = vadd.f32 %v570, %v2291
        %v2293 = vpop.f32.mrb[0].mxu0
        %v2294 = vpop.f32.mrb[0].mxu0
        %v2295 = vadd.f32 %v570, %v2294
        %v2296 = vpop.f32.mrb[0].mxu0
        %2297 = vmatprep.mubr.bf16.mxu0 0
        %2298 = vmatmul.mubr.bf16.gmra.mrb[0].mxu0 %v1448
        %v2299 = vpop.f32.mrb[0].mxu0
        %v2300 = vadd.f32 %v570, %v2299
        %v2301 = vpop.f32.mrb[0].mxu0
        %v2302 = vpop.f32.mrb[0].mxu0
        %v2303 = vadd.f32 %v570, %v2302
        %v2304 = vpop.f32.mrb[0].mxu0
        %2305 = vmatprep.mubr.bf16.mxu0 0
        %2306 = vmatmul.mubr.bf16.gmra.mrb[0].mxu0 %v1451
        %v2307 = vpop.f32.mrb[0].mxu0
        %v2308 = vadd.f32 %v570, %v2307
        %v2309 = vpop.f32.mrb[0].mxu0
        %v2310 = vpop.f32.mrb[0].mxu0
        %v2311 = vadd.f32 %v570, %v2310
        %v2312 = vpop.f32.mrb[0].mxu0
        %2313 = vmatprep.mubr.bf16.mxu0 0
        %2314 = vmatmul.mubr.bf16.gmra.mrb[0].mxu0 %v1454
        %v2315 = vpop.f32.mrb[0].mxu0
        %v2316 = vadd.f32 %v570, %v2315
        %v2317 = vpop.f32.mrb[0].mxu0
        %v2318 = vpop.f32.mrb[0].mxu0
        %v2319 = vadd.f32 %v570, %v2318
        %v2320 = vpop.f32.mrb[0].mxu0
        %2321 = vmatprep.mubr.bf16.mxu0 0
        %2322 = vmatmul.mubr.bf16.gmra.mrb[0].mxu0 %v1457
        %v2323 = vpop.f32.mrb[0].mxu0
        %v2324 = vadd.f32 %v570, %v2323
        %v2325 = vpop.f32.mrb[0].mxu0
        %v2326 = vpop.f32.mrb[0].mxu0
        %v2327 = vadd.f32 %v570, %v2326
        %v2328 = vpop.f32.mrb[0].mxu0
        %2329 = vmatprep.mubr.bf16.mxu0 0
        %2330 = vmatmul.mubr.bf16.gmra.mrb[0].mxu0 %v1460
        %v2331 = vpop.f32.mrb[0].mxu0
        %v2332 = vadd.f32 %v570, %v2331
        %v2333 = vpop.f32.mrb[0].mxu0
        %v2334 = vpop.f32.mrb[0].mxu0
        %v2335 = vadd.f32 %v570, %v2334
        %v2336 = vpop.f32.mrb[0].mxu0
        %2337 = vmatprep.mubr.bf16.mxu0 0
        %2338 = vmatmul.mubr.bf16.gmra.mrb[0].mxu0 %v1463
        %v2339 = vpop.f32.mrb[0].mxu0
        %v2340 = vadd.f32 %v570, %v2339
        %v2341 = vpop.f32.mrb[0].mxu0
        %v2342 = vpop.f32.mrb[0].mxu0
        %v2343 = vadd.f32 %v570, %v2342
        %v2344 = vpop.f32.mrb[0].mxu0
        %2345 = vmatprep.mubr.bf16.mxu0 0
        %2346 = vmatmul.mubr.bf16.gmra.mrb[0].mxu0 %v1466
        %v2347 = vpop.f32.mrb[0].mxu0
        %v2348 = vadd.f32 %v570, %v2347
        %v2349 = vpop.f32.mrb[0].mxu0
        %v2350 = vpop.f32.mrb[0].mxu0
        %v2351 = vadd.f32 %v570, %v2350
        %v2352 = vpop.f32.mrb[0].mxu0
        %2353 = vmatprep.mubr.bf16.mxu0 0
        %2354 = vmatmul.mubr.bf16.gmra.mrb[0].mxu0 %v1469
        %v2355 = vpop.f32.mrb[0].mxu0
        %v2356 = vadd.f32 %v570, %v2355
        %v2357 = vpop.f32.mrb[0].mxu0
        %v2358 = vpop.f32.mrb[0].mxu0
        %v2359 = vadd.f32 %v570, %v2358
        %v2360 = vpop.f32.mrb[0].mxu0
        %2361 = vmatprep.mubr.bf16.mxu0 0
        %2362 = vmatmul.mubr.bf16.gmra.mrb[0].mxu0 %v1472
        %v2363 = vpop.f32.mrb[0].mxu0
        %v2364 = vadd.f32 %v570, %v2363
        %v2365 = vpop.f32.mrb[0].mxu0
        %v2366 = vpop.f32.mrb[0].mxu0
        %v2367 = vadd.f32 %v570, %v2366
        %v2368 = vpop.f32.mrb[0].mxu0
        %2369 = vmatprep.mubr.bf16.mxu0 0
        %2370 = vmatmul.mubr.bf16.gmra.mrb[0].mxu0 %v1475
        %v2371 = vpop.f32.mrb[0].mxu0
        %v2372 = vadd.f32 %v570, %v2371
        %v2373 = vpop.f32.mrb[0].mxu0
        %v2374 = vpop.f32.mrb[0].mxu0
        %v2375 = vadd.f32 %v570, %v2374
        %v2376 = vpop.f32.mrb[0].mxu0
        %2377 = vmatprep.mubr.bf16.mxu0 0
        %2378 = vmatmul.mubr.bf16.gmra.mrb[0].mxu0 %v1478
        %v2379 = vpop.f32.mrb[0].mxu0
        %v2380 = vadd.f32 %v570, %v2379
        %v2381 = vpop.f32.mrb[0].mxu0
        %v2382 = vpop.f32.mrb[0].mxu0
        %v2383 = vadd.f32 %v570, %v2382
        %v2384 = vpop.f32.mrb[0].mxu0
        %2385 = vmatprep.mubr.bf16.mxu0 0
        %2386 = vmatmul.mubr.bf16.gmra.mrb[0].mxu0 %v1481
        %v2387 = vpop.f32.mrb[0].mxu0
        %v2388 = vadd.f32 %v570, %v2387
        %v2389 = vpop.f32.mrb[0].mxu0
        %v2390 = vpop.f32.mrb[0].mxu0
        %v2391 = vadd.f32 %v570, %v2390
        %v2392 = vpop.f32.mrb[0].mxu0
        %2393 = vmatprep.mubr.bf16.mxu0 0
        %2394 = vmatmul.mubr.bf16.gmra.mrb[0].mxu0 %v1484
        %v2395 = vpop.f32.mrb[0].mxu0
        %v2396 = vadd.f32 %v570, %v2395
        %v2397 = vpop.f32.mrb[0].mxu0
        %v2398 = vpop.f32.mrb[0].mxu0
        %v2399 = vadd.f32 %v570, %v2398
        %v2400 = vpop.f32.mrb[0].mxu0
        %2401 = vmatprep.mubr.bf16.mxu0 0
        %2402 = vmatmul.mubr.bf16.gmra.mrb[0].mxu0 %v1487
        %v2403 = vpop.f32.mrb[0].mxu0
        %v2404 = vadd.f32 %v570, %v2403
        %v2405 = vpop.f32.mrb[0].mxu0
        %v2406 = vpop.f32.mrb[0].mxu0
        %v2407 = vadd.f32 %v570, %v2406
        %v2408 = vpop.f32.mrb[0].mxu0
        %2409 = vmatprep.mubr.bf16.mxu0 0
        %2410 = vmatmul.mubr.bf16.gmra.mrb[0].mxu0 %v1490
        %v2411 = vpop.f32.mrb[0].mxu0
        %v2412 = vadd.f32 %v570, %v2411
        %v2413 = vpop.f32.mrb[0].mxu0
        %v2414 = vpop.f32.mrb[0].mxu0
        %v2415 = vadd.f32 %v570, %v2414
        %v2416 = vpop.f32.mrb[0].mxu0
        %2417 = vmatprep.mubr.bf16.mxu0 0
        %2418 = vmatmul.mubr.bf16.gmra.mrb[0].mxu0 %v1493
        %v2419 = vpop.f32.mrb[0].mxu0
        %v2420 = vadd.f32 %v570, %v2419
        %v2421 = vpop.f32.mrb[0].mxu0
        %v2422 = vpop.f32.mrb[0].mxu0
        %v2423 = vadd.f32 %v570, %v2422
        %v2424 = vpop.f32.mrb[0].mxu0
        %2425 = vmatprep.mubr.bf16.mxu0 0
        %2426 = vmatmul.mubr.bf16.gmra.mrb[0].mxu0 %v1496
        %v2427 = vpop.f32.mrb[0].mxu0
        %v2428 = vadd.f32 %v570, %v2427
        %v2429 = vpop.f32.mrb[0].mxu0
        %v2430 = vpop.f32.mrb[0].mxu0
        %v2431 = vadd.f32 %v570, %v2430
        %v2432 = vpop.f32.mrb[0].mxu0
        %2433 = vdwg.mxu0
        %v2434 = vmax.f32 %v1540, %v1764
        %v2435 = vmax.f32 %v1543, %v1767
        %v2436 = vmax.f32 %v1548, %v1772
        %v2437 = vmax.f32 %v1551, %v1775
        %v2438 = vmax.f32 %v1556, %v1780
        %v2439 = vmax.f32 %v1559, %v1783
        %v2440 = vmax.f32 %v1564, %v1788
        %v2441 = vmax.f32 %v1567, %v1791
        %v2442 = vmax.f32 %v1572, %v1796
        %v2443 = vmax.f32 %v1575, %v1799
        %v2444 = vmax.f32 %v1580, %v1804
        %v2445 = vmax.f32 %v1583, %v1807
        %v2446 = vmax.f32 %v1588, %v1812
        %v2447 = vmax.f32 %v1591, %v1815
        %v2448 = vmax.f32 %v1596, %v1820
        %v2449 = vmax.f32 %v1599, %v1823
        %v2450 = vmax.f32 %v1604, %v1828
        %v2451 = vmax.f32 %v1607, %v1831
        %v2452 = vmax.f32 %v1612, %v1836
        %v2453 = vmax.f32 %v1615, %v1839
        %v2454 = vmax.f32 %v1620, %v1844
        %v2455 = vmax.f32 %v1623, %v1847
        %v2456 = vmax.f32 %v1628, %v1852
        %v2457 = vmax.f32 %v1631, %v1855
        %v2458 = vmax.f32 %v1636, %v1860
        %v2459 = vmax.f32 %v1639, %v1863
        %v2460 = vmax.f32 %v1644, %v1868
        %v2461 = vmax.f32 %v1647, %v1871
        %v2462 = vmax.f32 %v1652, %v1876
        %v2463 = vmax.f32 %v1655, %v1879
        %v2464 = vmax.f32 %v1660, %v1884
        %v2465 = vmax.f32 %v1663, %v1887
        %v2466 = vmax.f32 %v1668, %v1892
        %v2467 = vmax.f32 %v1671, %v1895
        %v2468 = vmax.f32 %v1676, %v1900
        %v2469 = vmax.f32 %v1679, %v1903
        %v2470 = vmax.f32 %v1684, %v1908
        %v2471 = vmax.f32 %v1687, %v1911
        %v2472 = vmax.f32 %v1692, %v1916
        %v2473 = vmax.f32 %v1695, %v1919
        %v2474 = vmax.f32 %v1700, %v1924
        %v2475 = vmax.f32 %v1703, %v1927
        %v2476 = vmax.f32 %v1708, %v1932
        %v2477 = vmax.f32 %v1711, %v1935
        %v2478 = vmax.f32 %v1716, %v1940
        %v2479 = vmax.f32 %v1719, %v1943
        %v2480 = vmax.f32 %v1724, %v1948
        %v2481 = vmax.f32 %v1727, %v1951
        %v2482 = vmax.f32 %v1732, %v1956
        %v2483 = vmax.f32 %v1735, %v1959
        %v2484 = vmax.f32 %v1740, %v1964
        %v2485 = vmax.f32 %v1743, %v1967
        %v2486 = vmax.f32 %v1748, %v1972
        %v2487 = vmax.f32 %v1751, %v1975
        %v2488 = vmax.f32 %v1756, %v1980
        %v2489 = vmax.f32 %v1759, %v1983
        %v2490 = vmax.f32 %v1988, %v2212
        %v2491 = vmax.f32 %v1991, %v2215
        %v2492 = vmax.f32 %v1996, %v2220
        %v2493 = vmax.f32 %v1999, %v2223
        %v2494 = vmax.f32 %v2004, %v2228
        %v2495 = vmax.f32 %v2007, %v2231
        %v2496 = vmax.f32 %v2012, %v2236
        %v2497 = vmax.f32 %v2015, %v2239
        %v2498 = vmax.f32 %v2020, %v2244
        %v2499 = vmax.f32 %v2023, %v2247
        %v2500 = vmax.f32 %v2028, %v2252
        %v2501 = vmax.f32 %v2031, %v2255
        %v2502 = vmax.f32 %v2036, %v2260
        %v2503 = vmax.f32 %v2039, %v2263
        %v2504 = vmax.f32 %v2044, %v2268
        %v2505 = vmax.f32 %v2047, %v2271
        %v2506 = vmax.f32 %v2052, %v2276
        %v2507 = vmax.f32 %v2055, %v2279
        %v2508 = vmax.f32 %v2060, %v2284
        %v2509 = vmax.f32 %v2063, %v2287
        %v2510 = vmax.f32 %v2068, %v2292
        %v2511 = vmax.f32 %v2071, %v2295
        %v2512 = vmax.f32 %v2076, %v2300
        %v2513 = vmax.f32 %v2079, %v2303
        %v2514 = vmax.f32 %v2084, %v2308
        %v2515 = vmax.f32 %v2087, %v2311
        %v2516 = vmax.f32 %v2092, %v2316
        %v2517 = vmax.f32 %v2095, %v2319
        %v2518 = vmax.f32 %v2100, %v2324
        %v2519 = vmax.f32 %v2103, %v2327
        %v2520 = vmax.f32 %v2108, %v2332
        %v2521 = vmax.f32 %v2111, %v2335
        %v2522 = vmax.f32 %v2116, %v2340
        %v2523 = vmax.f32 %v2119, %v2343
        %v2524 = vmax.f32 %v2124, %v2348
        %v2525 = vmax.f32 %v2127, %v2351
        %v2526 = vmax.f32 %v2132, %v2356
        %v2527 = vmax.f32 %v2135, %v2359
        %v2528 = vmax.f32 %v2140, %v2364
        %v2529 = vmax.f32 %v2143, %v2367
        %v2530 = vmax.f32 %v2148, %v2372
        %v2531 = vmax.f32 %v2151, %v2375
        %v2532 = vmax.f32 %v2156, %v2380
        %v2533 = vmax.f32 %v2159, %v2383
        %v2534 = vmax.f32 %v2164, %v2388
        %v2535 = vmax.f32 %v2167, %v2391
        %v2536 = vmax.f32 %v2172, %v2396
        %v2537 = vmax.f32 %v2175, %v2399
        %v2538 = vmax.f32 %v2180, %v2404
        %v2539 = vmax.f32 %v2183, %v2407
        %v2540 = vmax.f32 %v2188, %v2412
        %v2541 = vmax.f32 %v2191, %v2415
        %v2542 = vmax.f32 %v2196, %v2420
        %v2543 = vmax.f32 %v2199, %v2423
        %v2544 = vmax.f32 %v2204, %v2428
        %v2545 = vmax.f32 %v2207, %v2431
        %v2546 = vmax.f32 %v2434, %v2436
        %v2547 = vmax.f32 %v2435, %v2437
        %v2548 = vmax.f32 %v2438, %v2440
        %v2549 = vmax.f32 %v2439, %v2441
        %v2550 = vmax.f32 %v2442, %v2444
        %v2551 = vmax.f32 %v2443, %v2445
        %v2552 = vmax.f32 %v2446, %v2448
        %v2553 = vmax.f32 %v2447, %v2449
        %v2554 = vmax.f32 %v2450, %v2452
        %v2555 = vmax.f32 %v2451, %v2453
        %v2556 = vmax.f32 %v2454, %v2456
        %v2557 = vmax.f32 %v2455, %v2457
        %v2558 = vmax.f32 %v2458, %v2460
        %v2559 = vmax.f32 %v2459, %v2461
        %v2560 = vmax.f32 %v2462, %v2464
        %v2561 = vmax.f32 %v2463, %v2465
        %v2562 = vmax.f32 %v2466, %v2468
        %v2563 = vmax.f32 %v2467, %v2469
        %v2564 = vmax.f32 %v2470, %v2472
        %v2565 = vmax.f32 %v2471, %v2473
        %v2566 = vmax.f32 %v2474, %v2476
        %v2567 = vmax.f32 %v2475, %v2477
        %v2568 = vmax.f32 %v2478, %v2480
        %v2569 = vmax.f32 %v2479, %v2481
        %v2570 = vmax.f32 %v2482, %v2484
        %v2571 = vmax.f32 %v2483, %v2485
        %v2572 = vmax.f32 %v2486, %v2488
        %v2573 = vmax.f32 %v2487, %v2489
        %v2574 = vmax.f32 %v2546, 0.0
        %v2575 = vmax.f32 %v2547, 0.0
        %v2576 = vmax.f32 %v2548, 0.0
        %v2577 = vmax.f32 %v2549, 0.0
        %v2578 = vmax.f32 %v2550, 0.0
        %v2579 = vmax.f32 %v2551, 0.0
        %v2580 = vmax.f32 %v2552, 0.0
        %v2581 = vmax.f32 %v2553, 0.0
        %v2582 = vmax.f32 %v2554, 0.0
        %v2583 = vmax.f32 %v2555, 0.0
        %v2584 = vmax.f32 %v2556, 0.0
        %v2585 = vmax.f32 %v2557, 0.0
        %v2586 = vmax.f32 %v2558, 0.0
        %v2587 = vmax.f32 %v2559, 0.0
        %v2588 = vmax.f32 %v2560, 0.0
        %v2589 = vmax.f32 %v2561, 0.0
        %v2590 = vmax.f32 %v2562, 0.0
        %v2591 = vmax.f32 %v2563, 0.0
        %v2592 = vmax.f32 %v2564, 0.0
        %v2593 = vmax.f32 %v2565, 0.0
        %v2594 = vmax.f32 %v2566, 0.0
        %v2595 = vmax.f32 %v2567, 0.0
        %v2596 = vmax.f32 %v2568, 0.0
        %v2597 = vmax.f32 %v2569, 0.0
        %v2598 = vmax.f32 %v2570, 0.0
        %v2599 = vmax.f32 %v2571, 0.0
        %v2600 = vmax.f32 %v2572, 0.0
        %v2601 = vmax.f32 %v2573, 0.0
        %v2602 = vpack.c.bf16 %v2575, %v2574
        %v2603 = vpack.c.bf16 %v2577, %v2576
        %v2604 = vpack.c.bf16 %v2579, %v2578
        %v2605 = vpack.c.bf16 %v2581, %v2580
        %v2606 = vpack.c.bf16 %v2583, %v2582
        %v2607 = vpack.c.bf16 %v2585, %v2584
        %v2608 = vpack.c.bf16 %v2587, %v2586
        %v2609 = vpack.c.bf16 %v2589, %v2588
        %v2610 = vpack.c.bf16 %v2591, %v2590
        %v2611 = vpack.c.bf16 %v2593, %v2592
        %v2612 = vpack.c.bf16 %v2595, %v2594
        %v2613 = vpack.c.bf16 %v2597, %v2596
        %v2614 = vpack.c.bf16 %v2599, %v2598
        %v2615 = vpack.c.bf16 %v2601, %v2600
        %v2616 = vmax.f32 %v2490, %v2492
        %v2617 = vmax.f32 %v2491, %v2493
        %v2618 = vmax.f32 %v2494, %v2496
        %v2619 = vmax.f32 %v2495, %v2497
        %v2620 = vmax.f32 %v2498, %v2500
        %v2621 = vmax.f32 %v2499, %v2501
        %v2622 = vmax.f32 %v2502, %v2504
        %v2623 = vmax.f32 %v2503, %v2505
        %v2624 = vmax.f32 %v2506, %v2508
        %v2625 = vmax.f32 %v2507, %v2509
        %v2626 = vmax.f32 %v2510, %v2512
        %v2627 = vmax.f32 %v2511, %v2513
        %v2628 = vmax.f32 %v2514, %v2516
        %v2629 = vmax.f32 %v2515, %v2517
        %v2630 = vmax.f32 %v2518, %v2520
        %v2631 = vmax.f32 %v2519, %v2521
        %v2632 = vmax.f32 %v2522, %v2524
        %v2633 = vmax.f32 %v2523, %v2525
        %v2634 = vmax.f32 %v2526, %v2528
        %v2635 = vmax.f32 %v2527, %v2529
        %v2636 = vmax.f32 %v2530, %v2532
        %v2637 = vmax.f32 %v2531, %v2533
        %v2638 = vmax.f32 %v2534, %v2536
        %v2639 = vmax.f32 %v2535, %v2537
        %v2640 = vmax.f32 %v2538, %v2540
        %v2641 = vmax.f32 %v2539, %v2541
        %v2642 = vmax.f32 %v2542, %v2544
        %v2643 = vmax.f32 %v2543, %v2545
        %v2644 = vmax.f32 %v2616, 0.0
        %v2645 = vmax.f32 %v2617, 0.0
        %v2646 = vmax.f32 %v2618, 0.0
        %v2647 = vmax.f32 %v2619, 0.0
        %v2648 = vmax.f32 %v2620, 0.0
        %v2649 = vmax.f32 %v2621, 0.0
        %v2650 = vmax.f32 %v2622, 0.0
        %v2651 = vmax.f32 %v2623, 0.0
        %v2652 = vmax.f32 %v2624, 0.0
        %v2653 = vmax.f32 %v2625, 0.0
        %v2654 = vmax.f32 %v2626, 0.0
        %v2655 = vmax.f32 %v2627, 0.0
        %v2656 = vmax.f32 %v2628, 0.0
        %v2657 = vmax.f32 %v2629, 0.0
        %v2658 = vmax.f32 %v2630, 0.0
        %v2659 = vmax.f32 %v2631, 0.0
        %v2660 = vmax.f32 %v2632, 0.0
        %v2661 = vmax.f32 %v2633, 0.0
        %v2662 = vmax.f32 %v2634, 0.0
        %v2663 = vmax.f32 %v2635, 0.0
        %v2664 = vmax.f32 %v2636, 0.0
        %v2665 = vmax.f32 %v2637, 0.0
        %v2666 = vmax.f32 %v2638, 0.0
        %v2667 = vmax.f32 %v2639, 0.0
        %v2668 = vmax.f32 %v2640, 0.0
        %v2669 = vmax.f32 %v2641, 0.0
        %v2670 = vmax.f32 %v2642, 0.0
        %v2671 = vmax.f32 %v2643, 0.0
        %v2672 = vpack.c.bf16 %v2645, %v2644
        %v2673 = vpack.c.bf16 %v2647, %v2646
        %v2674 = vpack.c.bf16 %v2649, %v2648
        %v2675 = vpack.c.bf16 %v2651, %v2650
        %v2676 = vpack.c.bf16 %v2653, %v2652
        %v2677 = vpack.c.bf16 %v2655, %v2654
        %v2678 = vpack.c.bf16 %v2657, %v2656
        %v2679 = vpack.c.bf16 %v2659, %v2658
        %v2680 = vpack.c.bf16 %v2661, %v2660
        %v2681 = vpack.c.bf16 %v2663, %v2662
        %v2682 = vpack.c.bf16 %v2665, %v2664
        %v2683 = vpack.c.bf16 %v2667, %v2666
        %v2684 = vpack.c.bf16 %v2669, %v2668
        %v2685 = vpack.c.bf16 %v2671, %v2670
        %v2686 = vld [vmem:[%s3] sm:$0xf]
        %v2687 = vld [vmem:[%s3 + $0x4] sm:$0xf]
        %v2688 = vld [vmem:[%s3 + $0x8] sm:$0xf]
        %v2689 = vld [vmem:[%s3 + $0xc] sm:$0xf]
        %v2691 = vshrl.u32 %v2602, 16
        %v2693 = vshll.u32 %v2602, 16
        %v2695 = vrot.slane %v2693, 1
        %v2696 = vor.u32 %v2691, %v2695
        %v2698 = vshrl.u32 %v2603, 16
        %v2700 = vshll.u32 %v2603, 16
        %v2702 = vrot.slane %v2700, 1
        %v2703 = vor.u32 %v2698, %v2702
        %v2705 = vshrl.u32 %v2604, 16
        %v2707 = vshll.u32 %v2604, 16
        %v2709 = vrot.slane %v2707, 1
        %v2710 = vor.u32 %v2705, %v2709
        %v2712 = vshrl.u32 %v2605, 16
        %v2714 = vshll.u32 %v2605, 16
        %v2716 = vrot.slane %v2714, 1
        %v2717 = vor.u32 %v2712, %v2716
        %v2719 = vshrl.u32 %v2606, 16
        %v2721 = vshll.u32 %v2606, 16
        %v2723 = vrot.slane %v2721, 1
        %v2724 = vor.u32 %v2719, %v2723
        %v2726 = vshrl.u32 %v2607, 16
        %v2728 = vshll.u32 %v2607, 16
        %v2730 = vrot.slane %v2728, 1
        %v2731 = vor.u32 %v2726, %v2730
        %v2733 = vshrl.u32 %v2608, 16
        %v2735 = vshll.u32 %v2608, 16
        %v2737 = vrot.slane %v2735, 1
        %v2738 = vor.u32 %v2733, %v2737
        %v2740 = vshrl.u32 %v2609, 16
        %v2742 = vshll.u32 %v2609, 16
        %v2744 = vrot.slane %v2742, 1
        %v2745 = vor.u32 %v2740, %v2744
        %v2747 = vshrl.u32 %v2610, 16
        %v2749 = vshll.u32 %v2610, 16
        %v2751 = vrot.slane %v2749, 1
        %v2752 = vor.u32 %v2747, %v2751
        %v2754 = vshrl.u32 %v2611, 16
        %v2756 = vshll.u32 %v2611, 16
        %v2758 = vrot.slane %v2756, 1
        %v2759 = vor.u32 %v2754, %v2758
        %s2760 = scalar_lea.vmem %s3, 16
        %v2761 = vld [vmem:[%s2760] sm:$0xf]
        %v2762 = vld [vmem:[%s2760 + $0x4] sm:$0xf]
        %v2763 = vld [vmem:[%s2760 + $0x8] sm:$0xf]
        %v2764 = vld [vmem:[%s2760 + $0xc] sm:$0xf]
        %v2775 = vunpack.c.l.b16 %v2672
        %v2776 = vunpack.c.l.b16 %v2673
        %v2777 = vunpack.c.l.b16 %v2674
        %v2778 = vunpack.c.l.b16 %v2675
        %v2779 = vunpack.c.l.b16 %v2676
        %v2780 = vunpack.c.l.b16 %v2677
        %v2781 = vunpack.c.l.b16 %v2678
        %v2782 = vunpack.c.l.b16 %v2679
        %v2783 = vunpack.c.l.b16 %v2680
        %v2784 = vunpack.c.l.b16 %v2681
        %v2785 = vunpack.c.l.b16 %v2696
        %v2786 = vunpack.c.l.b16 %v2703
        %v2787 = vunpack.c.l.b16 %v2710
        %v2788 = vunpack.c.l.b16 %v2717
        %v2789 = vunpack.c.l.b16 %v2724
        %v2790 = vunpack.c.l.b16 %v2731
        %v2791 = vunpack.c.l.b16 %v2738
        %v2792 = vunpack.c.l.b16 %v2745
        %v2793 = vunpack.c.l.b16 %v2752
        %v2794 = vunpack.c.l.b16 %v2759
        %v2795 = vpack.c.b16 %v2776, %v2775
        %v2796 = vpack.c.b16 %v2778, %v2777
        %v2797 = vpack.c.b16 %v2780, %v2779
        %v2798 = vpack.c.b16 %v2782, %v2781
        %v2799 = vpack.c.b16 %v2784, %v2783
        %v2800 = vpack.c.b16 %v2786, %v2785
        %v2801 = vpack.c.b16 %v2788, %v2787
        %v2802 = vpack.c.b16 %v2790, %v2789
        %v2803 = vpack.c.b16 %v2792, %v2791
        %v2804 = vpack.c.b16 %v2794, %v2793
        %v2809 = vunpack.c.l.b16 %v2761
        %v2810 = vunpack.c.l.b16 %v2762
        %v2811 = vunpack.c.l.b16 %v2763
        %v2812 = vunpack.c.l.b16 %v2764
        %v2813 = vpack.c.b16 %v2810, %v2809
        %v2814 = vpack.c.b16 %v2812, %v2811
        %vm2817 = vcmask 261120
        %v2819 = vsel %vm2817, %v2795, 0
        %v2822 = vsel %vm2817, %v2796, 0
        %v2825 = vsel %vm2817, %v2797, 0
        %v2828 = vsel %vm2817, %v2798, 0
        %v2831 = vsel %vm2817, %v2799, 0
        %v2834 = vsel %vm2817, %v2800, 0
        %v2837 = vsel %vm2817, %v2801, 0
        %v2840 = vsel %vm2817, %v2802, 0
        %v2843 = vsel %vm2817, %v2803, 0
        %v2846 = vsel %vm2817, %v2804, 0
        %2848 = vmatprep.subr.bf16.mxu0 0
        %2849 = vmatpush1.bf16.msra.mxu0 %v2813
        %2850 = vmatprep.subr.bf16.mxu0 0
        %2851 = vmatpush1.bf16.msra.mxu0 %v2814
        %2852 = vmatprep.subr.bf16.mxu0 0
        %2853 = vmatpush1.bf16.msra.mxu0 0
        %2854 = vmatprep.subr.bf16.mxu0 0
        %2855 = vmatpush1.bf16.msra.mxu0 0
        %2856 = vmatprep.subr.bf16.mxu0 0
        %2857 = vmatpush1.bf16.msra.mxu0 0
        %2858 = vmatprep.subr.bf16.mxu0 0
        %2859 = vmatpush1.bf16.msra.mxu0 0
        %2860 = vmatprep.subr.bf16.mxu0 0
        %2861 = vmatpush1.bf16.msra.mxu0 0
        %2862 = vmatprep.subr.bf16.mxu0 0
        %2863 = vmatpush1.bf16.msra.mxu0 0
        %2864 = vmatprep.subr.bf16.mxu0 0
        %2865 = vmatpush1.bf16.msra.mxu0 0
        %2866 = vmatprep.subr.bf16.mxu0 0
        %2867 = vmatpush1.bf16.msra.mxu0 0
        %2868 = vmatprep.subr.bf16.mxu0 0
        %2869 = vmatpush1.bf16.msra.mxu0 0
        %2870 = vmatprep.subr.bf16.mxu0 0
        %2871 = vmatpush1.bf16.msra.mxu0 0
        %2872 = vmatprep.subr.bf16.mxu0 0
        %2873 = vmatpush1.bf16.msra.mxu0 0
        %2874 = vmatprep.subr.bf16.mxu0 0
        %2875 = vmatpush1.bf16.msra.mxu0 0
        %2876 = vmatprep.subr.bf16.mxu0 0
        %2877 = vmatpush1.bf16.msra.mxu0 0
        %2878 = vmatprep.subr.bf16.mxu0 0
        %2879 = vmatpush1.bf16.msra.mxu0 0
        %2880 = vmatprep.mubr.bf16.mxu0 0
        %2881 = vmatmul.mubr.bf16.gmra.mrb[0].mxu0 %v2819
        %v2882 = vpop.f32.mrb[0].mxu0
        %v2883 = vadd.f32 0.0, %v2882
        %v2884 = vpop.f32.mrb[0].mxu0
        %v2885 = vpop.f32.mrb[0].mxu0
        %v2886 = vadd.f32 0.0, %v2885
        %v2887 = vpop.f32.mrb[0].mxu0
        %2888 = vmatprep.mubr.bf16.mxu0 0
        %2889 = vmatmul.mubr.bf16.gmra.mrb[0].mxu0 %v2822
        %v2890 = vpop.f32.mrb[0].mxu0
        %v2891 = vadd.f32 0.0, %v2890
        %v2892 = vpop.f32.mrb[0].mxu0
        %v2893 = vpop.f32.mrb[0].mxu0
        %v2894 = vadd.f32 0.0, %v2893
        %v2895 = vpop.f32.mrb[0].mxu0
        %2896 = vmatprep.mubr.bf16.mxu0 0
        %2897 = vmatmul.mubr.bf16.gmra.mrb[0].mxu0 %v2825
        %v2898 = vpop.f32.mrb[0].mxu0
        %v2899 = vadd.f32 0.0, %v2898
        %v2900 = vpop.f32.mrb[0].mxu0
        %v2901 = vpop.f32.mrb[0].mxu0
        %v2902 = vadd.f32 0.0, %v2901
        %v2903 = vpop.f32.mrb[0].mxu0
        %2904 = vmatprep.mubr.bf16.mxu0 0
        %2905 = vmatmul.mubr.bf16.gmra.mrb[0].mxu0 %v2828
        %v2906 = vpop.f32.mrb[0].mxu0
        %v2907 = vadd.f32 0.0, %v2906
        %v2908 = vpop.f32.mrb[0].mxu0
        %v2909 = vpop.f32.mrb[0].mxu0
        %v2910 = vadd.f32 0.0, %v2909
        %v2911 = vpop.f32.mrb[0].mxu0
        %2912 = vmatprep.mubr.bf16.mxu0 0
        %2913 = vmatmul.mubr.bf16.gmra.mrb[0].mxu0 %v2831
        %v2914 = vpop.f32.mrb[0].mxu0
        %v2915 = vadd.f32 0.0, %v2914
        %v2916 = vpop.f32.mrb[0].mxu0
        %v2917 = vpop.f32.mrb[0].mxu0
        %v2918 = vadd.f32 0.0, %v2917
        %v2919 = vpop.f32.mrb[0].mxu0
        %2920 = vmatprep.mubr.bf16.mxu0 0
        %2921 = vmatmul.mubr.bf16.gmra.mrb[0].mxu0 %v2834
        %v2922 = vpop.f32.mrb[0].mxu0
        %v2923 = vadd.f32 0.0, %v2922
        %v2924 = vpop.f32.mrb[0].mxu0
        %v2925 = vpop.f32.mrb[0].mxu0
        %v2926 = vadd.f32 0.0, %v2925
        %v2927 = vpop.f32.mrb[0].mxu0
        %2928 = vmatprep.mubr.bf16.mxu0 0
        %2929 = vmatmul.mubr.bf16.gmra.mrb[0].mxu0 %v2837
        %v2930 = vpop.f32.mrb[0].mxu0
        %v2931 = vadd.f32 0.0, %v2930
        %v2932 = vpop.f32.mrb[0].mxu0
        %v2933 = vpop.f32.mrb[0].mxu0
        %v2934 = vadd.f32 0.0, %v2933
        %v2935 = vpop.f32.mrb[0].mxu0
        %2936 = vmatprep.mubr.bf16.mxu0 0
        %2937 = vmatmul.mubr.bf16.gmra.mrb[0].mxu0 %v2840
        %v2938 = vpop.f32.mrb[0].mxu0
        %v2939 = vadd.f32 0.0, %v2938
        %v2940 = vpop.f32.mrb[0].mxu0
        %v2941 = vpop.f32.mrb[0].mxu0
        %v2942 = vadd.f32 0.0, %v2941
        %v2943 = vpop.f32.mrb[0].mxu0
        %2944 = vmatprep.mubr.bf16.mxu0 0
        %2945 = vmatmul.mubr.bf16.gmra.mrb[0].mxu0 %v2843
        %v2946 = vpop.f32.mrb[0].mxu0
        %v2947 = vadd.f32 0.0, %v2946
        %v2948 = vpop.f32.mrb[0].mxu0
        %v2949 = vpop.f32.mrb[0].mxu0
        %v2950 = vadd.f32 0.0, %v2949
        %v2951 = vpop.f32.mrb[0].mxu0
        %2952 = vmatprep.mubr.bf16.mxu0 0
        %2953 = vmatmul.mubr.bf16.gmra.mrb[0].mxu0 %v2846
        %v2954 = vpop.f32.mrb[0].mxu0
        %v2955 = vadd.f32 0.0, %v2954
        %v2956 = vpop.f32.mrb[0].mxu0
        %v2957 = vpop.f32.mrb[0].mxu0
        %v2958 = vadd.f32 0.0, %v2957
        %v2959 = vpop.f32.mrb[0].mxu0
        %2960 = vdwg.mxu0
        %v2971 = vunpack.c.l.b16 %v2602
        %v2972 = vunpack.c.l.b16 %v2603
        %v2973 = vunpack.c.l.b16 %v2604
        %v2974 = vunpack.c.l.b16 %v2605
        %v2975 = vunpack.c.l.b16 %v2606
        %v2976 = vunpack.c.l.b16 %v2607
        %v2977 = vunpack.c.l.b16 %v2608
        %v2978 = vunpack.c.l.b16 %v2609
        %v2979 = vunpack.c.l.b16 %v2610
        %v2980 = vunpack.c.l.b16 %v2611
        %v2981 = vpack.c.b16 %v2972, %v2971
        %v2982 = vpack.c.b16 %v2974, %v2973
        %v2983 = vpack.c.b16 %v2976, %v2975
        %v2984 = vpack.c.b16 %v2978, %v2977
        %v2985 = vpack.c.b16 %v2980, %v2979
        %v2990 = vunpack.c.l.b16 %v2686
        %v2991 = vunpack.c.l.b16 %v2687
        %v2992 = vunpack.c.l.b16 %v2688
        %v2993 = vunpack.c.l.b16 %v2689
        %v2994 = vpack.c.b16 %v2991, %v2990
        %v2995 = vpack.c.b16 %v2993, %v2992
        %v2999 = vsel %vm2817, %v2981, 0
        %v3002 = vsel %vm2817, %v2982, 0
        %v3005 = vsel %vm2817, %v2983, 0
        %v3008 = vsel %vm2817, %v2984, 0
        %v3011 = vsel %vm2817, %v2985, 0
        %3013 = vmatprep.subr.bf16.mxu0 0
        %3014 = vmatpush1.bf16.msra.mxu0 %v2994
        %3015 = vmatprep.subr.bf16.mxu0 0
        %3016 = vmatpush1.bf16.msra.mxu0 %v2995
        %3017 = vmatprep.subr.bf16.mxu0 0
        %3018 = vmatpush1.bf16.msra.mxu0 0
        %3019 = vmatprep.subr.bf16.mxu0 0
        %3020 = vmatpush1.bf16.msra.mxu0 0
        %3021 = vmatprep.subr.bf16.mxu0 0
        %3022 = vmatpush1.bf16.msra.mxu0 0
        %3023 = vmatprep.subr.bf16.mxu0 0
        %3024 = vmatpush1.bf16.msra.mxu0 0
        %3025 = vmatprep.subr.bf16.mxu0 0
        %3026 = vmatpush1.bf16.msra.mxu0 0
        %3027 = vmatprep.subr.bf16.mxu0 0
        %3028 = vmatpush1.bf16.msra.mxu0 0
        %3029 = vmatprep.subr.bf16.mxu0 0
        %3030 = vmatpush1.bf16.msra.mxu0 0
        %3031 = vmatprep.subr.bf16.mxu0 0
        %3032 = vmatpush1.bf16.msra.mxu0 0
        %3033 = vmatprep.subr.bf16.mxu0 0
        %3034 = vmatpush1.bf16.msra.mxu0 0
        %3035 = vmatprep.subr.bf16.mxu0 0
        %3036 = vmatpush1.bf16.msra.mxu0 0
        %3037 = vmatprep.subr.bf16.mxu0 0
        %3038 = vmatpush1.bf16.msra.mxu0 0
        %3039 = vmatprep.subr.bf16.mxu0 0
        %3040 = vmatpush1.bf16.msra.mxu0 0
        %3041 = vmatprep.subr.bf16.mxu0 0
        %3042 = vmatpush1.bf16.msra.mxu0 0
        %3043 = vmatprep.subr.bf16.mxu0 0
        %3044 = vmatpush1.bf16.msra.mxu0 0
        %3045 = vmatprep.mubr.bf16.mxu0 0
        %3046 = vmatmul.mubr.bf16.gmra.mrb[0].mxu0 %v2999
        %v3047 = vpop.f32.mrb[0].mxu0
        %v3048 = vadd.f32 %v2883, %v3047
        %v3049 = vpop.f32.mrb[0].mxu0
        %v3050 = vpop.f32.mrb[0].mxu0
        %v3051 = vadd.f32 %v2886, %v3050
        %v3052 = vpop.f32.mrb[0].mxu0
        %3053 = vmatprep.mubr.bf16.mxu0 0
        %3054 = vmatmul.mubr.bf16.gmra.mrb[0].mxu0 %v3002
        %v3055 = vpop.f32.mrb[0].mxu0
        %v3056 = vadd.f32 %v2891, %v3055
        %v3057 = vpop.f32.mrb[0].mxu0
        %v3058 = vpop.f32.mrb[0].mxu0
        %v3059 = vadd.f32 %v2894, %v3058
        %v3060 = vpop.f32.mrb[0].mxu0
        %3061 = vmatprep.mubr.bf16.mxu0 0
        %3062 = vmatmul.mubr.bf16.gmra.mrb[0].mxu0 %v3005
        %v3063 = vpop.f32.mrb[0].mxu0
        %v3064 = vadd.f32 %v2899, %v3063
        %v3065 = vpop.f32.mrb[0].mxu0
        %v3066 = vpop.f32.mrb[0].mxu0
        %v3067 = vadd.f32 %v2902, %v3066
        %v3068 = vpop.f32.mrb[0].mxu0
        %3069 = vmatprep.mubr.bf16.mxu0 0
        %3070 = vmatmul.mubr.bf16.gmra.mrb[0].mxu0 %v3008
        %v3071 = vpop.f32.mrb[0].mxu0
        %v3072 = vadd.f32 %v2907, %v3071
        %v3073 = vpop.f32.mrb[0].mxu0
        %v3074 = vpop.f32.mrb[0].mxu0
        %v3075 = vadd.f32 %v2910, %v3074
        %v3076 = vpop.f32.mrb[0].mxu0
        %3077 = vmatprep.mubr.bf16.mxu0 0
        %3078 = vmatmul.mubr.bf16.gmra.mrb[0].mxu0 %v3011
        %v3079 = vpop.f32.mrb[0].mxu0
        %v3080 = vadd.f32 %v2915, %v3079
        %v3081 = vpop.f32.mrb[0].mxu0
        %v3082 = vpop.f32.mrb[0].mxu0
        %v3083 = vadd.f32 %v2918, %v3082
        %v3084 = vpop.f32.mrb[0].mxu0
        %3085 = vmatprep.mubr.bf16.mxu0 0
        %3086 = vmatmul.mubr.bf16.gmra.mrb[0].mxu0 %v2819
        %v3087 = vpop.f32.mrb[0].mxu0
        %v3088 = vadd.f32 %v2923, %v3087
        %v3089 = vpop.f32.mrb[0].mxu0
        %v3090 = vpop.f32.mrb[0].mxu0
        %v3091 = vadd.f32 %v2926, %v3090
        %v3092 = vpop.f32.mrb[0].mxu0
        %3093 = vmatprep.mubr.bf16.mxu0 0
        %3094 = vmatmul.mubr.bf16.gmra.mrb[0].mxu0 %v2822
        %v3095 = vpop.f32.mrb[0].mxu0
        %v3096 = vadd.f32 %v2931, %v3095
        %v3097 = vpop.f32.mrb[0].mxu0
        %v3098 = vpop.f32.mrb[0].mxu0
        %v3099 = vadd.f32 %v2934, %v3098
        %v3100 = vpop.f32.mrb[0].mxu0
        %3101 = vmatprep.mubr.bf16.mxu0 0
        %3102 = vmatmul.mubr.bf16.gmra.mrb[0].mxu0 %v2825
        %v3103 = vpop.f32.mrb[0].mxu0
        %v3104 = vadd.f32 %v2939, %v3103
        %v3105 = vpop.f32.mrb[0].mxu0
        %v3106 = vpop.f32.mrb[0].mxu0
        %v3107 = vadd.f32 %v2942, %v3106
        %v3108 = vpop.f32.mrb[0].mxu0
        %3109 = vmatprep.mubr.bf16.mxu0 0
        %3110 = vmatmul.mubr.bf16.gmra.mrb[0].mxu0 %v2828
        %v3111 = vpop.f32.mrb[0].mxu0
        %v3112 = vadd.f32 %v2947, %v3111
        %v3113 = vpop.f32.mrb[0].mxu0
        %v3114 = vpop.f32.mrb[0].mxu0
        %v3115 = vadd.f32 %v2950, %v3114
        %v3116 = vpop.f32.mrb[0].mxu0
        %3117 = vmatprep.mubr.bf16.mxu0 0
        %3118 = vmatmul.mubr.bf16.gmra.mrb[0].mxu0 %v2831
        %v3119 = vpop.f32.mrb[0].mxu0
        %v3120 = vadd.f32 %v2955, %v3119
        %v3121 = vpop.f32.mrb[0].mxu0
        %v3122 = vpop.f32.mrb[0].mxu0
        %v3123 = vadd.f32 %v2958, %v3122
        %v3124 = vpop.f32.mrb[0].mxu0
        %3125 = vdwg.mxu0
        %v3126 = vunpack.c.h.b16 %v2602
        %v3127 = vunpack.c.h.b16 %v2603
        %v3128 = vunpack.c.h.b16 %v2604
        %v3129 = vunpack.c.h.b16 %v2605
        %v3130 = vunpack.c.h.b16 %v2606
        %v3131 = vunpack.c.h.b16 %v2607
        %v3132 = vunpack.c.h.b16 %v2608
        %v3133 = vunpack.c.h.b16 %v2609
        %v3134 = vunpack.c.h.b16 %v2610
        %v3135 = vunpack.c.h.b16 %v2611
        %v3136 = vunpack.c.h.b16 %v2672
        %v3137 = vunpack.c.h.b16 %v2673
        %v3138 = vunpack.c.h.b16 %v2674
        %v3139 = vunpack.c.h.b16 %v2675
        %v3140 = vunpack.c.h.b16 %v2676
        %v3141 = vunpack.c.h.b16 %v2677
        %v3142 = vunpack.c.h.b16 %v2678
        %v3143 = vunpack.c.h.b16 %v2679
        %v3144 = vunpack.c.h.b16 %v2680
        %v3145 = vunpack.c.h.b16 %v2681
        %v3146 = vpack.c.b16 %v2971, %v2971
        %v3147 = vpack.c.b16 %v3126, %v3126
        %v3148 = vpack.c.b16 %v2972, %v2972
        %v3149 = vpack.c.b16 %v3127, %v3127
        %v3150 = vpack.c.b16 %v2973, %v2973
        %v3151 = vpack.c.b16 %v3128, %v3128
        %v3152 = vpack.c.b16 %v2974, %v2974
        %v3153 = vpack.c.b16 %v3129, %v3129
        %v3154 = vpack.c.b16 %v2975, %v2975
        %v3155 = vpack.c.b16 %v3130, %v3130
        %v3156 = vpack.c.b16 %v2976, %v2976
        %v3157 = vpack.c.b16 %v3131, %v3131
        %v3158 = vpack.c.b16 %v2977, %v2977
        %v3159 = vpack.c.b16 %v3132, %v3132
        %v3160 = vpack.c.b16 %v2978, %v2978
        %v3161 = vpack.c.b16 %v3133, %v3133
        %v3162 = vpack.c.b16 %v2979, %v2979
        %v3163 = vpack.c.b16 %v3134, %v3134
        %v3164 = vpack.c.b16 %v2980, %v2980
        %v3165 = vpack.c.b16 %v3135, %v3135
        %v3166 = vpack.c.b16 %v2775, %v2775
        %v3167 = vpack.c.b16 %v3136, %v3136
        %v3168 = vpack.c.b16 %v2776, %v2776
        %v3169 = vpack.c.b16 %v3137, %v3137
        %v3170 = vpack.c.b16 %v2777, %v2777
        %v3171 = vpack.c.b16 %v3138, %v3138
        %v3172 = vpack.c.b16 %v2778, %v2778
        %v3173 = vpack.c.b16 %v3139, %v3139
        %v3174 = vpack.c.b16 %v2779, %v2779
        %v3175 = vpack.c.b16 %v3140, %v3140
        %v3176 = vpack.c.b16 %v2780, %v2780
        %v3177 = vpack.c.b16 %v3141, %v3141
        %v3178 = vpack.c.b16 %v2781, %v2781
        %v3179 = vpack.c.b16 %v3142, %v3142
        %v3180 = vpack.c.b16 %v2782, %v2782
        %v3181 = vpack.c.b16 %v3143, %v3143
        %v3182 = vpack.c.b16 %v2783, %v2783
        %v3183 = vpack.c.b16 %v3144, %v3144
        %v3184 = vpack.c.b16 %v2784, %v2784
        %v3185 = vpack.c.b16 %v3145, %v3145
        %vm3186 = vsmask.f32 3328
        %vm3187 = vsmask.f32 7440
        %vm3188 = vmor %vm3186, %vm3187
        %v3190 = vshrl.u32 %v3146, 16
        %v3192 = vrot.slane %v3190, 4
        %v3193 = vshll.u32 %v3146, 16
        %v3195 = vrot.slane %v3193, 5
        %v3196 = vor.u32 %v3192, %v3195
        %v3197 = vrot.slane %v3196, 4
        %v3199 = vshll.u32 %v3147, 16
        %v3201 = vrot.slane %v3199, 5
        %v3202 = vsel %vm3188, %v3197, %v3201
        %v3204 = vshrl.u32 %v3148, 16
        %v3206 = vrot.slane %v3204, 4
        %v3207 = vshll.u32 %v3148, 16
        %v3209 = vrot.slane %v3207, 5
        %v3210 = vor.u32 %v3206, %v3209
        %v3211 = vrot.slane %v3210, 4
        %v3213 = vshll.u32 %v3149, 16
        %v3215 = vrot.slane %v3213, 5
        %v3216 = vsel %vm3188, %v3211, %v3215
        %v3218 = vshrl.u32 %v3150, 16
        %v3220 = vrot.slane %v3218, 4
        %v3221 = vshll.u32 %v3150, 16
        %v3223 = vrot.slane %v3221, 5
        %v3224 = vor.u32 %v3220, %v3223
        %v3225 = vrot.slane %v3224, 4
        %v3227 = vshll.u32 %v3151, 16
        %v3229 = vrot.slane %v3227, 5
        %v3230 = vsel %vm3188, %v3225, %v3229
        %v3232 = vshrl.u32 %v3152, 16
        %v3234 = vrot.slane %v3232, 4
        %v3235 = vshll.u32 %v3152, 16
        %v3237 = vrot.slane %v3235, 5
        %v3238 = vor.u32 %v3234, %v3237
        %v3239 = vrot.slane %v3238, 4
        %v3241 = vshll.u32 %v3153, 16
        %v3243 = vrot.slane %v3241, 5
        %v3244 = vsel %vm3188, %v3239, %v3243
        %v3246 = vshrl.u32 %v3154, 16
        %v3248 = vrot.slane %v3246, 4
        %v3249 = vshll.u32 %v3154, 16
        %v3251 = vrot.slane %v3249, 5
        %v3252 = vor.u32 %v3248, %v3251
        %v3253 = vrot.slane %v3252, 4
        %v3255 = vshll.u32 %v3155, 16
        %v3257 = vrot.slane %v3255, 5
        %v3258 = vsel %vm3188, %v3253, %v3257
        %v3260 = vshrl.u32 %v3156, 16
        %v3262 = vrot.slane %v3260, 4
        %v3263 = vshll.u32 %v3156, 16
        %v3265 = vrot.slane %v3263, 5
        %v3266 = vor.u32 %v3262, %v3265
        %v3267 = vrot.slane %v3266, 4
        %v3269 = vshll.u32 %v3157, 16
        %v3271 = vrot.slane %v3269, 5
        %v3272 = vsel %vm3188, %v3267, %v3271
        %v3274 = vshrl.u32 %v3158, 16
        %v3276 = vrot.slane %v3274, 4
        %v3277 = vshll.u32 %v3158, 16
        %v3279 = vrot.slane %v3277, 5
        %v3280 = vor.u32 %v3276, %v3279
        %v3281 = vrot.slane %v3280, 4
        %v3283 = vshll.u32 %v3159, 16
        %v3285 = vrot.slane %v3283, 5
        %v3286 = vsel %vm3188, %v3281, %v3285
        %v3288 = vshrl.u32 %v3160, 16
        %v3290 = vrot.slane %v3288, 4
        %v3291 = vshll.u32 %v3160, 16
        %v3293 = vrot.slane %v3291, 5
        %v3294 = vor.u32 %v3290, %v3293
        %v3295 = vrot.slane %v3294, 4
        %v3297 = vshll.u32 %v3161, 16
        %v3299 = vrot.slane %v3297, 5
        %v3300 = vsel %vm3188, %v3295, %v3299
        %v3302 = vshrl.u32 %v3162, 16
        %v3304 = vrot.slane %v3302, 4
        %v3305 = vshll.u32 %v3162, 16
        %v3307 = vrot.slane %v3305, 5
        %v3308 = vor.u32 %v3304, %v3307
        %v3309 = vrot.slane %v3308, 4
        %v3311 = vshll.u32 %v3163, 16
        %v3313 = vrot.slane %v3311, 5
        %v3314 = vsel %vm3188, %v3309, %v3313
        %v3316 = vshrl.u32 %v3164, 16
        %v3318 = vrot.slane %v3316, 4
        %v3319 = vshll.u32 %v3164, 16
        %v3321 = vrot.slane %v3319, 5
        %v3322 = vor.u32 %v3318, %v3321
        %v3323 = vrot.slane %v3322, 4
        %v3325 = vshll.u32 %v3165, 16
        %v3327 = vrot.slane %v3325, 5
        %v3328 = vsel %vm3188, %v3323, %v3327
        %v3330 = vshrl.u32 %v3166, 16
        %v3332 = vrot.slane %v3330, 4
        %v3333 = vshll.u32 %v3166, 16
        %v3335 = vrot.slane %v3333, 5
        %v3336 = vor.u32 %v3332, %v3335
        %v3337 = vrot.slane %v3336, 4
        %v3339 = vshll.u32 %v3167, 16
        %v3341 = vrot.slane %v3339, 5
        %v3342 = vsel %vm3188, %v3337, %v3341
        %v3344 = vshrl.u32 %v3168, 16
        %v3346 = vrot.slane %v3344, 4
        %v3347 = vshll.u32 %v3168, 16
        %v3349 = vrot.slane %v3347, 5
        %v3350 = vor.u32 %v3346, %v3349
        %v3351 = vrot.slane %v3350, 4
        %v3353 = vshll.u32 %v3169, 16
        %v3355 = vrot.slane %v3353, 5
        %v3356 = vsel %vm3188, %v3351, %v3355
        %v3358 = vshrl.u32 %v3170, 16
        %v3360 = vrot.slane %v3358, 4
        %v3361 = vshll.u32 %v3170, 16
        %v3363 = vrot.slane %v3361, 5
        %v3364 = vor.u32 %v3360, %v3363
        %v3365 = vrot.slane %v3364, 4
        %v3367 = vshll.u32 %v3171, 16
        %v3369 = vrot.slane %v3367, 5
        %v3370 = vsel %vm3188, %v3365, %v3369
        %v3372 = vshrl.u32 %v3172, 16
        %v3374 = vrot.slane %v3372, 4
        %v3375 = vshll.u32 %v3172, 16
        %v3377 = vrot.slane %v3375, 5
        %v3378 = vor.u32 %v3374, %v3377
        %v3379 = vrot.slane %v3378, 4
        %v3381 = vshll.u32 %v3173, 16
        %v3383 = vrot.slane %v3381, 5
        %v3384 = vsel %vm3188, %v3379, %v3383
        %v3386 = vshrl.u32 %v3174, 16
        %v3388 = vrot.slane %v3386, 4
        %v3389 = vshll.u32 %v3174, 16
        %v3391 = vrot.slane %v3389, 5
        %v3392 = vor.u32 %v3388, %v3391
        %v3393 = vrot.slane %v3392, 4
        %v3395 = vshll.u32 %v3175, 16
        %v3397 = vrot.slane %v3395, 5
        %v3398 = vsel %vm3188, %v3393, %v3397
        %v3400 = vshrl.u32 %v3176, 16
        %v3402 = vrot.slane %v3400, 4
        %v3403 = vshll.u32 %v3176, 16
        %v3405 = vrot.slane %v3403, 5
        %v3406 = vor.u32 %v3402, %v3405
        %v3407 = vrot.slane %v3406, 4
        %v3409 = vshll.u32 %v3177, 16
        %v3411 = vrot.slane %v3409, 5
        %v3412 = vsel %vm3188, %v3407, %v3411
        %v3414 = vshrl.u32 %v3178, 16
        %v3416 = vrot.slane %v3414, 4
        %v3417 = vshll.u32 %v3178, 16
        %v3419 = vrot.slane %v3417, 5
        %v3420 = vor.u32 %v3416, %v3419
        %v3421 = vrot.slane %v3420, 4
        %v3423 = vshll.u32 %v3179, 16
        %v3425 = vrot.slane %v3423, 5
        %v3426 = vsel %vm3188, %v3421, %v3425
        %v3428 = vshrl.u32 %v3180, 16
        %v3430 = vrot.slane %v3428, 4
        %v3431 = vshll.u32 %v3180, 16
        %v3433 = vrot.slane %v3431, 5
        %v3434 = vor.u32 %v3430, %v3433
        %v3435 = vrot.slane %v3434, 4
        %v3437 = vshll.u32 %v3181, 16
        %v3439 = vrot.slane %v3437, 5
        %v3440 = vsel %vm3188, %v3435, %v3439
        %v3442 = vshrl.u32 %v3182, 16
        %v3444 = vrot.slane %v3442, 4
        %v3445 = vshll.u32 %v3182, 16
        %v3447 = vrot.slane %v3445, 5
        %v3448 = vor.u32 %v3444, %v3447
        %v3449 = vrot.slane %v3448, 4
        %v3451 = vshll.u32 %v3183, 16
        %v3453 = vrot.slane %v3451, 5
        %v3454 = vsel %vm3188, %v3449, %v3453
        %v3456 = vshrl.u32 %v3184, 16
        %v3458 = vrot.slane %v3456, 4
        %v3459 = vshll.u32 %v3184, 16
        %v3461 = vrot.slane %v3459, 5
        %v3462 = vor.u32 %v3458, %v3461
        %v3463 = vrot.slane %v3462, 4
        %v3465 = vshll.u32 %v3185, 16
        %v3467 = vrot.slane %v3465, 5
        %v3468 = vsel %vm3188, %v3463, %v3467
        %s3469 = scalar_lea.vmem %s3, 32
        %v3470 = vld [vmem:[%s3469] sm:$0xf]
        %v3471 = vld [vmem:[%s3469 + $0x4] sm:$0xf]
        %v3472 = vld [vmem:[%s3469 + $0x8] sm:$0xf]
        %v3473 = vld [vmem:[%s3469 + $0xc] sm:$0xf]
        %v3474 = vunpack.c.l.b16 %v3202
        %v3475 = vunpack.c.l.b16 %v3216
        %v3476 = vunpack.c.l.b16 %v3230
        %v3477 = vunpack.c.l.b16 %v3244
        %v3478 = vunpack.c.l.b16 %v3258
        %v3479 = vunpack.c.l.b16 %v3272
        %v3480 = vunpack.c.l.b16 %v3286
        %v3481 = vunpack.c.l.b16 %v3300
        %v3482 = vunpack.c.l.b16 %v3314
        %v3483 = vunpack.c.l.b16 %v3328
        %v3484 = vunpack.c.l.b16 %v3342
        %v3485 = vunpack.c.l.b16 %v3356
        %v3486 = vunpack.c.l.b16 %v3370
        %v3487 = vunpack.c.l.b16 %v3384
        %v3488 = vunpack.c.l.b16 %v3398
        %v3489 = vunpack.c.l.b16 %v3412
        %v3490 = vunpack.c.l.b16 %v3426
        %v3491 = vunpack.c.l.b16 %v3440
        %v3492 = vunpack.c.l.b16 %v3454
        %v3493 = vunpack.c.l.b16 %v3468
        %v3494 = vpack.c.b16 %v3475, %v3474
        %v3495 = vpack.c.b16 %v3477, %v3476
        %v3496 = vpack.c.b16 %v3479, %v3478
        %v3497 = vpack.c.b16 %v3481, %v3480
        %v3498 = vpack.c.b16 %v3483, %v3482
        %v3499 = vpack.c.b16 %v3485, %v3484
        %v3500 = vpack.c.b16 %v3487, %v3486
        %v3501 = vpack.c.b16 %v3489, %v3488
        %v3502 = vpack.c.b16 %v3491, %v3490
        %v3503 = vpack.c.b16 %v3493, %v3492
        %v3508 = vunpack.c.l.b16 %v3470
        %v3509 = vunpack.c.l.b16 %v3471
        %v3510 = vunpack.c.l.b16 %v3472
        %v3511 = vunpack.c.l.b16 %v3473
        %v3512 = vpack.c.b16 %v3509, %v3508
        %v3513 = vpack.c.b16 %v3511, %v3510
        %v3517 = vsel %vm2817, %v3494, 0
        %v3520 = vsel %vm2817, %v3495, 0
        %v3523 = vsel %vm2817, %v3496, 0
        %v3526 = vsel %vm2817, %v3497, 0
        %v3529 = vsel %vm2817, %v3498, 0
        %v3532 = vsel %vm2817, %v3499, 0
        %v3535 = vsel %vm2817, %v3500, 0
        %v3538 = vsel %vm2817, %v3501, 0
        %v3541 = vsel %vm2817, %v3502, 0
        %v3544 = vsel %vm2817, %v3503, 0
        %3546 = vmatprep.subr.bf16.mxu0 0
        %3547 = vmatpush1.bf16.msra.mxu0 %v3512
        %3548 = vmatprep.subr.bf16.mxu0 0
        %3549 = vmatpush1.bf16.msra.mxu0 %v3513
        %3550 = vmatprep.subr.bf16.mxu0 0
        %3551 = vmatpush1.bf16.msra.mxu0 0
        %3552 = vmatprep.subr.bf16.mxu0 0
        %3553 = vmatpush1.bf16.msra.mxu0 0
        %3554 = vmatprep.subr.bf16.mxu0 0
        %3555 = vmatpush1.bf16.msra.mxu0 0
        %3556 = vmatprep.subr.bf16.mxu0 0
        %3557 = vmatpush1.bf16.msra.mxu0 0
        %3558 = vmatprep.subr.bf16.mxu0 0
        %3559 = vmatpush1.bf16.msra.mxu0 0
        %3560 = vmatprep.subr.bf16.mxu0 0
        %3561 = vmatpush1.bf16.msra.mxu0 0
        %3562 = vmatprep.subr.bf16.mxu0 0
        %3563 = vmatpush1.bf16.msra.mxu0 0
        %3564 = vmatprep.subr.bf16.mxu0 0
        %3565 = vmatpush1.bf16.msra.mxu0 0
        %3566 = vmatprep.subr.bf16.mxu0 0
        %3567 = vmatpush1.bf16.msra.mxu0 0
        %3568 = vmatprep.subr.bf16.mxu0 0
        %3569 = vmatpush1.bf16.msra.mxu0 0
        %3570 = vmatprep.subr.bf16.mxu0 0
        %3571 = vmatpush1.bf16.msra.mxu0 0
        %3572 = vmatprep.subr.bf16.mxu0 0
        %3573 = vmatpush1.bf16.msra.mxu0 0
        %3574 = vmatprep.subr.bf16.mxu0 0
        %3575 = vmatpush1.bf16.msra.mxu0 0
        %3576 = vmatprep.subr.bf16.mxu0 0
        %3577 = vmatpush1.bf16.msra.mxu0 0
        %3578 = vmatprep.mubr.bf16.mxu0 0
        %3579 = vmatmul.mubr.bf16.gmra.mrb[0].mxu0 %v3517
        %v3580 = vpop.f32.mrb[0].mxu0
        %v3581 = vadd.f32 0.0, %v3580
        %v3582 = vpop.f32.mrb[0].mxu0
        %v3583 = vpop.f32.mrb[0].mxu0
        %v3584 = vadd.f32 0.0, %v3583
        %v3585 = vpop.f32.mrb[0].mxu0
        %3586 = vmatprep.mubr.bf16.mxu0 0
        %3587 = vmatmul.mubr.bf16.gmra.mrb[0].mxu0 %v3520
        %v3588 = vpop.f32.mrb[0].mxu0
        %v3589 = vadd.f32 0.0, %v3588
        %v3590 = vpop.f32.mrb[0].mxu0
        %v3591 = vpop.f32.mrb[0].mxu0
        %v3592 = vadd.f32 0.0, %v3591
        %v3593 = vpop.f32.mrb[0].mxu0
        %3594 = vmatprep.mubr.bf16.mxu0 0
        %3595 = vmatmul.mubr.bf16.gmra.mrb[0].mxu0 %v3523
        %v3596 = vpop.f32.mrb[0].mxu0
        %v3597 = vadd.f32 0.0, %v3596
        %v3598 = vpop.f32.mrb[0].mxu0
        %v3599 = vpop.f32.mrb[0].mxu0
        %v3600 = vadd.f32 0.0, %v3599
        %v3601 = vpop.f32.mrb[0].mxu0
        %3602 = vmatprep.mubr.bf16.mxu0 0
        %3603 = vmatmul.mubr.bf16.gmra.mrb[0].mxu0 %v3526
        %v3604 = vpop.f32.mrb[0].mxu0
        %v3605 = vadd.f32 0.0, %v3604
        %v3606 = vpop.f32.mrb[0].mxu0
        %v3607 = vpop.f32.mrb[0].mxu0
        %v3608 = vadd.f32 0.0, %v3607
        %v3609 = vpop.f32.mrb[0].mxu0
        %3610 = vmatprep.mubr.bf16.mxu0 0
        %3611 = vmatmul.mubr.bf16.gmra.mrb[0].mxu0 %v3529
        %v3612 = vpop.f32.mrb[0].mxu0
        %v3613 = vadd.f32 0.0, %v3612
        %v3614 = vpop.f32.mrb[0].mxu0
        %v3615 = vpop.f32.mrb[0].mxu0
        %v3616 = vadd.f32 0.0, %v3615
        %v3617 = vpop.f32.mrb[0].mxu0
        %3618 = vmatprep.mubr.bf16.mxu0 0
        %3619 = vmatmul.mubr.bf16.gmra.mrb[0].mxu0 %v3532
        %v3620 = vpop.f32.mrb[0].mxu0
        %v3621 = vadd.f32 0.0, %v3620
        %v3622 = vpop.f32.mrb[0].mxu0
        %v3623 = vpop.f32.mrb[0].mxu0
        %v3624 = vadd.f32 0.0, %v3623
        %v3625 = vpop.f32.mrb[0].mxu0
        %3626 = vmatprep.mubr.bf16.mxu0 0
        %3627 = vmatmul.mubr.bf16.gmra.mrb[0].mxu0 %v3535
        %v3628 = vpop.f32.mrb[0].mxu0
        %v3629 = vadd.f32 0.0, %v3628
        %v3630 = vpop.f32.mrb[0].mxu0
        %v3631 = vpop.f32.mrb[0].mxu0
        %v3632 = vadd.f32 0.0, %v3631
        %v3633 = vpop.f32.mrb[0].mxu0
        %3634 = vmatprep.mubr.bf16.mxu0 0
        %3635 = vmatmul.mubr.bf16.gmra.mrb[0].mxu0 %v3538
        %v3636 = vpop.f32.mrb[0].mxu0
        %v3637 = vadd.f32 0.0, %v3636
        %v3638 = vpop.f32.mrb[0].mxu0
        %v3639 = vpop.f32.mrb[0].mxu0
        %v3640 = vadd.f32 0.0, %v3639
        %v3641 = vpop.f32.mrb[0].mxu0
        %3642 = vmatprep.mubr.bf16.mxu0 0
        %3643 = vmatmul.mubr.bf16.gmra.mrb[0].mxu0 %v3541
        %v3644 = vpop.f32.mrb[0].mxu0
        %v3645 = vadd.f32 0.0, %v3644
        %v3646 = vpop.f32.mrb[0].mxu0
        %v3647 = vpop.f32.mrb[0].mxu0
        %v3648 = vadd.f32 0.0, %v3647
        %v3649 = vpop.f32.mrb[0].mxu0
        %3650 = vmatprep.mubr.bf16.mxu0 0
        %3651 = vmatmul.mubr.bf16.gmra.mrb[0].mxu0 %v3544
        %v3652 = vpop.f32.mrb[0].mxu0
        %v3653 = vadd.f32 0.0, %v3652
        %v3654 = vpop.f32.mrb[0].mxu0
        %v3655 = vpop.f32.mrb[0].mxu0
        %v3656 = vadd.f32 0.0, %v3655
        %v3657 = vpop.f32.mrb[0].mxu0
        %3658 = vdwg.mxu0
        %v3659 = vadd.f32 %v3048, %v3581
        %v3660 = vadd.f32 %v3051, %v3584
        %v3661 = vadd.f32 %v3056, %v3589
        %v3662 = vadd.f32 %v3059, %v3592
        %v3663 = vadd.f32 %v3064, %v3597
        %v3664 = vadd.f32 %v3067, %v3600
        %v3665 = vadd.f32 %v3072, %v3605
        %v3666 = vadd.f32 %v3075, %v3608
        %v3667 = vadd.f32 %v3080, %v3613
        %v3668 = vadd.f32 %v3083, %v3616
        %v3669 = vadd.f32 %v3088, %v3621
        %v3670 = vadd.f32 %v3091, %v3624
        %v3671 = vadd.f32 %v3096, %v3629
        %v3672 = vadd.f32 %v3099, %v3632
        %v3673 = vadd.f32 %v3104, %v3637
        %v3674 = vadd.f32 %v3107, %v3640
        %v3675 = vadd.f32 %v3112, %v3645
        %v3676 = vadd.f32 %v3115, %v3648
        %v3677 = vadd.f32 %v3120, %v3653
        %v3678 = vadd.f32 %v3123, %v3656
        %v3679 = vunpack.c.h.b16 %v2696
        %v3680 = vunpack.c.h.b16 %v2703
        %v3681 = vunpack.c.h.b16 %v2710
        %v3682 = vunpack.c.h.b16 %v2717
        %v3683 = vunpack.c.h.b16 %v2724
        %v3684 = vunpack.c.h.b16 %v2731
        %v3685 = vunpack.c.h.b16 %v2738
        %v3686 = vunpack.c.h.b16 %v2745
        %v3687 = vunpack.c.h.b16 %v2752
        %v3688 = vunpack.c.h.b16 %v2759
        %v3689 = vpack.c.b16 %v2785, %v2785
        %v3690 = vpack.c.b16 %v3679, %v3679
        %v3691 = vpack.c.b16 %v2786, %v2786
        %v3692 = vpack.c.b16 %v3680, %v3680
        %v3693 = vpack.c.b16 %v2787, %v2787
        %v3694 = vpack.c.b16 %v3681, %v3681
        %v3695 = vpack.c.b16 %v2788, %v2788
        %v3696 = vpack.c.b16 %v3682, %v3682
        %v3697 = vpack.c.b16 %v2789, %v2789
        %v3698 = vpack.c.b16 %v3683, %v3683
        %v3699 = vpack.c.b16 %v2790, %v2790
        %v3700 = vpack.c.b16 %v3684, %v3684
        %v3701 = vpack.c.b16 %v2791, %v2791
        %v3702 = vpack.c.b16 %v3685, %v3685
        %v3703 = vpack.c.b16 %v2792, %v2792
        %v3704 = vpack.c.b16 %v3686, %v3686
        %v3705 = vpack.c.b16 %v2793, %v2793
        %v3706 = vpack.c.b16 %v3687, %v3687
        %v3707 = vpack.c.b16 %v2794, %v2794
        %v3708 = vpack.c.b16 %v3688, %v3688
        %v3710 = vshrl.u32 %v3689, 16
        %v3712 = vrot.slane %v3710, 4
        %v3713 = vshll.u32 %v3689, 16
        %v3715 = vrot.slane %v3713, 5
        %v3716 = vor.u32 %v3712, %v3715
        %v3717 = vrot.slane %v3716, 4
        %v3719 = vshll.u32 %v3690, 16
        %v3721 = vrot.slane %v3719, 5
        %v3722 = vsel %vm3188, %v3717, %v3721
        %v3724 = vshrl.u32 %v3691, 16
        %v3726 = vrot.slane %v3724, 4
        %v3727 = vshll.u32 %v3691, 16
        %v3729 = vrot.slane %v3727, 5
        %v3730 = vor.u32 %v3726, %v3729
        %v3731 = vrot.slane %v3730, 4
        %v3733 = vshll.u32 %v3692, 16
        %v3735 = vrot.slane %v3733, 5
        %v3736 = vsel %vm3188, %v3731, %v3735
        %v3738 = vshrl.u32 %v3693, 16
        %v3740 = vrot.slane %v3738, 4
        %v3741 = vshll.u32 %v3693, 16
        %v3743 = vrot.slane %v3741, 5
        %v3744 = vor.u32 %v3740, %v3743
        %v3745 = vrot.slane %v3744, 4
        %v3747 = vshll.u32 %v3694, 16
        %v3749 = vrot.slane %v3747, 5
        %v3750 = vsel %vm3188, %v3745, %v3749
        %v3752 = vshrl.u32 %v3695, 16
        %v3754 = vrot.slane %v3752, 4
        %v3755 = vshll.u32 %v3695, 16
        %v3757 = vrot.slane %v3755, 5
        %v3758 = vor.u32 %v3754, %v3757
        %v3759 = vrot.slane %v3758, 4
        %v3761 = vshll.u32 %v3696, 16
        %v3763 = vrot.slane %v3761, 5
        %v3764 = vsel %vm3188, %v3759, %v3763
        %v3766 = vshrl.u32 %v3697, 16
        %v3768 = vrot.slane %v3766, 4
        %v3769 = vshll.u32 %v3697, 16
        %v3771 = vrot.slane %v3769, 5
        %v3772 = vor.u32 %v3768, %v3771
        %v3773 = vrot.slane %v3772, 4
        %v3775 = vshll.u32 %v3698, 16
        %v3777 = vrot.slane %v3775, 5
        %v3778 = vsel %vm3188, %v3773, %v3777
        %v3780 = vshrl.u32 %v3699, 16
        %v3782 = vrot.slane %v3780, 4
        %v3783 = vshll.u32 %v3699, 16
        %v3785 = vrot.slane %v3783, 5
        %v3786 = vor.u32 %v3782, %v3785
        %v3787 = vrot.slane %v3786, 4
        %v3789 = vshll.u32 %v3700, 16
        %v3791 = vrot.slane %v3789, 5
        %v3792 = vsel %vm3188, %v3787, %v3791
        %v3794 = vshrl.u32 %v3701, 16
        %v3796 = vrot.slane %v3794, 4
        %v3797 = vshll.u32 %v3701, 16
        %v3799 = vrot.slane %v3797, 5
        %v3800 = vor.u32 %v3796, %v3799
        %v3801 = vrot.slane %v3800, 4
        %v3803 = vshll.u32 %v3702, 16
        %v3805 = vrot.slane %v3803, 5
        %v3806 = vsel %vm3188, %v3801, %v3805
        %v3808 = vshrl.u32 %v3703, 16
        %v3810 = vrot.slane %v3808, 4
        %v3811 = vshll.u32 %v3703, 16
        %v3813 = vrot.slane %v3811, 5
        %v3814 = vor.u32 %v3810, %v3813
        %v3815 = vrot.slane %v3814, 4
        %v3817 = vshll.u32 %v3704, 16
        %v3819 = vrot.slane %v3817, 5
        %v3820 = vsel %vm3188, %v3815, %v3819
        %v3822 = vshrl.u32 %v3705, 16
        %v3824 = vrot.slane %v3822, 4
        %v3825 = vshll.u32 %v3705, 16
        %v3827 = vrot.slane %v3825, 5
        %v3828 = vor.u32 %v3824, %v3827
        %v3829 = vrot.slane %v3828, 4
        %v3831 = vshll.u32 %v3706, 16
        %v3833 = vrot.slane %v3831, 5
        %v3834 = vsel %vm3188, %v3829, %v3833
        %v3836 = vshrl.u32 %v3707, 16
        %v3838 = vrot.slane %v3836, 4
        %v3839 = vshll.u32 %v3707, 16
        %v3841 = vrot.slane %v3839, 5
        %v3842 = vor.u32 %v3838, %v3841
        %v3843 = vrot.slane %v3842, 4
        %v3845 = vshll.u32 %v3708, 16
        %v3847 = vrot.slane %v3845, 5
        %v3848 = vsel %vm3188, %v3843, %v3847
        %s3849 = scalar_lea.vmem %s3, 48
        %v3850 = vld [vmem:[%s3849] sm:$0xf]
        %v3851 = vld [vmem:[%s3849 + $0x4] sm:$0xf]
        %v3852 = vld [vmem:[%s3849 + $0x8] sm:$0xf]
        %v3853 = vld [vmem:[%s3849 + $0xc] sm:$0xf]
        %v3854 = vunpack.c.l.b16 %v3722
        %v3855 = vunpack.c.l.b16 %v3736
        %v3856 = vunpack.c.l.b16 %v3750
        %v3857 = vunpack.c.l.b16 %v3764
        %v3858 = vunpack.c.l.b16 %v3778
        %v3859 = vunpack.c.l.b16 %v3792
        %v3860 = vunpack.c.l.b16 %v3806
        %v3861 = vunpack.c.l.b16 %v3820
        %v3862 = vunpack.c.l.b16 %v3834
        %v3863 = vunpack.c.l.b16 %v3848
        %v3864 = vpack.c.b16 %v3855, %v3854
        %v3865 = vpack.c.b16 %v3857, %v3856
        %v3866 = vpack.c.b16 %v3859, %v3858
        %v3867 = vpack.c.b16 %v3861, %v3860
        %v3868 = vpack.c.b16 %v3863, %v3862
        %v3873 = vunpack.c.l.b16 %v3850
        %v3874 = vunpack.c.l.b16 %v3851
        %v3875 = vunpack.c.l.b16 %v3852
        %v3876 = vunpack.c.l.b16 %v3853
        %v3877 = vpack.c.b16 %v3874, %v3873
        %v3878 = vpack.c.b16 %v3876, %v3875
        %v3882 = vsel %vm2817, %v3864, 0
        %v3885 = vsel %vm2817, %v3865, 0
        %v3888 = vsel %vm2817, %v3866, 0
        %v3891 = vsel %vm2817, %v3867, 0
        %v3894 = vsel %vm2817, %v3868, 0
        %3896 = vmatprep.subr.bf16.mxu0 0
        %3897 = vmatpush1.bf16.msra.mxu0 %v3877
        %3898 = vmatprep.subr.bf16.mxu0 0
        %3899 = vmatpush1.bf16.msra.mxu0 %v3878
        %3900 = vmatprep.subr.bf16.mxu0 0
        %3901 = vmatpush1.bf16.msra.mxu0 0
        %3902 = vmatprep.subr.bf16.mxu0 0
        %3903 = vmatpush1.bf16.msra.mxu0 0
        %3904 = vmatprep.subr.bf16.mxu0 0
        %3905 = vmatpush1.bf16.msra.mxu0 0
        %3906 = vmatprep.subr.bf16.mxu0 0
        %3907 = vmatpush1.bf16.msra.mxu0 0
        %3908 = vmatprep.subr.bf16.mxu0 0
        %3909 = vmatpush1.bf16.msra.mxu0 0
        %3910 = vmatprep.subr.bf16.mxu0 0
        %3911 = vmatpush1.bf16.msra.mxu0 0
        %3912 = vmatprep.subr.bf16.mxu0 0
        %3913 = vmatpush1.bf16.msra.mxu0 0
        %3914 = vmatprep.subr.bf16.mxu0 0
        %3915 = vmatpush1.bf16.msra.mxu0 0
        %3916 = vmatprep.subr.bf16.mxu0 0
        %3917 = vmatpush1.bf16.msra.mxu0 0
        %3918 = vmatprep.subr.bf16.mxu0 0
        %3919 = vmatpush1.bf16.msra.mxu0 0
        %3920 = vmatprep.subr.bf16.mxu0 0
        %3921 = vmatpush1.bf16.msra.mxu0 0
        %3922 = vmatprep.subr.bf16.mxu0 0
        %3923 = vmatpush1.bf16.msra.mxu0 0
        %3924 = vmatprep.subr.bf16.mxu0 0
        %3925 = vmatpush1.bf16.msra.mxu0 0
        %3926 = vmatprep.subr.bf16.mxu0 0
        %3927 = vmatpush1.bf16.msra.mxu0 0
        %3928 = vmatprep.mubr.bf16.mxu0 0
        %3929 = vmatmul.mubr.bf16.gmra.mrb[0].mxu0 %v3532
        %v3930 = vpop.f32.mrb[0].mxu0
        %v3931 = vadd.f32 0.0, %v3930
        %v3932 = vpop.f32.mrb[0].mxu0
        %v3933 = vpop.f32.mrb[0].mxu0
        %v3934 = vadd.f32 0.0, %v3933
        %v3935 = vpop.f32.mrb[0].mxu0
        %3936 = vmatprep.mubr.bf16.mxu0 0
        %3937 = vmatmul.mubr.bf16.gmra.mrb[0].mxu0 %v3535
        %v3938 = vpop.f32.mrb[0].mxu0
        %v3939 = vadd.f32 0.0, %v3938
        %v3940 = vpop.f32.mrb[0].mxu0
        %v3941 = vpop.f32.mrb[0].mxu0
        %v3942 = vadd.f32 0.0, %v3941
        %v3943 = vpop.f32.mrb[0].mxu0
        %3944 = vmatprep.mubr.bf16.mxu0 0
        %3945 = vmatmul.mubr.bf16.gmra.mrb[0].mxu0 %v3538
        %v3946 = vpop.f32.mrb[0].mxu0
        %v3947 = vadd.f32 0.0, %v3946
        %v3948 = vpop.f32.mrb[0].mxu0
        %v3949 = vpop.f32.mrb[0].mxu0
        %v3950 = vadd.f32 0.0, %v3949
        %v3951 = vpop.f32.mrb[0].mxu0
        %3952 = vmatprep.mubr.bf16.mxu0 0
        %3953 = vmatmul.mubr.bf16.gmra.mrb[0].mxu0 %v3541
        %v3954 = vpop.f32.mrb[0].mxu0
        %v3955 = vadd.f32 0.0, %v3954
        %v3956 = vpop.f32.mrb[0].mxu0
        %v3957 = vpop.f32.mrb[0].mxu0
        %v3958 = vadd.f32 0.0, %v3957
        %v3959 = vpop.f32.mrb[0].mxu0
        %3960 = vmatprep.mubr.bf16.mxu0 0
        %3961 = vmatmul.mubr.bf16.gmra.mrb[0].mxu0 %v3544
        %v3962 = vpop.f32.mrb[0].mxu0
        %v3963 = vadd.f32 0.0, %v3962
        %v3964 = vpop.f32.mrb[0].mxu0
        %v3965 = vpop.f32.mrb[0].mxu0
        %v3966 = vadd.f32 0.0, %v3965
        %v3967 = vpop.f32.mrb[0].mxu0
        %3968 = vmatprep.mubr.bf16.mxu0 0
        %3969 = vmatmul.mubr.bf16.gmra.mrb[0].mxu0 %v3882
        %v3970 = vpop.f32.mrb[0].mxu0
        %v3971 = vadd.f32 0.0, %v3970
        %v3972 = vpop.f32.mrb[0].mxu0
        %v3973 = vpop.f32.mrb[0].mxu0
        %v3974 = vadd.f32 0.0, %v3973
        %v3975 = vpop.f32.mrb[0].mxu0
        %3976 = vmatprep.mubr.bf16.mxu0 0
        %3977 = vmatmul.mubr.bf16.gmra.mrb[0].mxu0 %v3885
        %v3978 = vpop.f32.mrb[0].mxu0
        %v3979 = vadd.f32 0.0, %v3978
        %v3980 = vpop.f32.mrb[0].mxu0
        %v3981 = vpop.f32.mrb[0].mxu0
        %v3982 = vadd.f32 0.0, %v3981
        %v3983 = vpop.f32.mrb[0].mxu0
        %3984 = vmatprep.mubr.bf16.mxu0 0
        %3985 = vmatmul.mubr.bf16.gmra.mrb[0].mxu0 %v3888
        %v3986 = vpop.f32.mrb[0].mxu0
        %v3987 = vadd.f32 0.0, %v3986
        %v3988 = vpop.f32.mrb[0].mxu0
        %v3989 = vpop.f32.mrb[0].mxu0
        %v3990 = vadd.f32 0.0, %v3989
        %v3991 = vpop.f32.mrb[0].mxu0
        %3992 = vmatprep.mubr.bf16.mxu0 0
        %3993 = vmatmul.mubr.bf16.gmra.mrb[0].mxu0 %v3891
        %v3994 = vpop.f32.mrb[0].mxu0
        %v3995 = vadd.f32 0.0, %v3994
        %v3996 = vpop.f32.mrb[0].mxu0
        %v3997 = vpop.f32.mrb[0].mxu0
        %v3998 = vadd.f32 0.0, %v3997
        %v3999 = vpop.f32.mrb[0].mxu0
        %4000 = vmatprep.mubr.bf16.mxu0 0
        %4001 = vmatmul.mubr.bf16.gmra.mrb[0].mxu0 %v3894
        %v4002 = vpop.f32.mrb[0].mxu0
        %v4003 = vadd.f32 0.0, %v4002
        %v4004 = vpop.f32.mrb[0].mxu0
        %v4005 = vpop.f32.mrb[0].mxu0
        %v4006 = vadd.f32 0.0, %v4005
        %v4007 = vpop.f32.mrb[0].mxu0
        %4008 = vdwg.mxu0
        %v4009 = vadd.f32 %v3659, %v3931
        %v4010 = vadd.f32 %v3660, %v3934
        %v4011 = vadd.f32 %v3661, %v3939
        %v4012 = vadd.f32 %v3662, %v3942
        %v4013 = vadd.f32 %v3663, %v3947
        %v4014 = vadd.f32 %v3664, %v3950
        %v4015 = vadd.f32 %v3665, %v3955
        %v4016 = vadd.f32 %v3666, %v3958
        %v4017 = vadd.f32 %v3667, %v3963
        %v4018 = vadd.f32 %v3668, %v3966
        %v4019 = vadd.f32 %v3669, %v3971
        %v4020 = vadd.f32 %v3670, %v3974
        %v4021 = vadd.f32 %v3671, %v3979
        %v4022 = vadd.f32 %v3672, %v3982
        %v4023 = vadd.f32 %v3673, %v3987
        %v4024 = vadd.f32 %v3674, %v3990
        %v4025 = vadd.f32 %v3675, %v3995
        %v4026 = vadd.f32 %v3676, %v3998
        %v4027 = vadd.f32 %v3677, %v4003
        %v4028 = vadd.f32 %v3678, %v4006
        %vm4029 = vcmask 1042432
        %vm4030 = vcmask 1046532
        %vm4031 = vmor %vm4029, %vm4030
        %v4032 = vrot.slane %v3146, 5
        %v4033 = vrot.slane %v4032, 4
        %v4034 = vrot.slane %v3147, 5
        %v4035 = vsel %vm4031, %v4033, %v4034
        %v4036 = vrot.slane %v3148, 5
        %v4037 = vrot.slane %v4036, 4
        %v4038 = vrot.slane %v3149, 5
        %v4039 = vsel %vm4031, %v4037, %v4038
        %v4040 = vrot.slane %v3150, 5
        %v4041 = vrot.slane %v4040, 4
        %v4042 = vrot.slane %v3151, 5
        %v4043 = vsel %vm4031, %v4041, %v4042
        %v4044 = vrot.slane %v3152, 5
        %v4045 = vrot.slane %v4044, 4
        %v4046 = vrot.slane %v3153, 5
        %v4047 = vsel %vm4031, %v4045, %v4046
        %v4048 = vrot.slane %v3154, 5
        %v4049 = vrot.slane %v4048, 4
        %v4050 = vrot.slane %v3155, 5
        %v4051 = vsel %vm4031, %v4049, %v4050
        %v4052 = vrot.slane %v3156, 5
        %v4053 = vrot.slane %v4052, 4
        %v4054 = vrot.slane %v3157, 5
        %v4055 = vsel %vm4031, %v4053, %v4054
        %v4056 = vrot.slane %v3158, 5
        %v4057 = vrot.slane %v4056, 4
        %v4058 = vrot.slane %v3159, 5
        %v4059 = vsel %vm4031, %v4057, %v4058
        %v4060 = vrot.slane %v3160, 5
        %v4061 = vrot.slane %v4060, 4
        %v4062 = vrot.slane %v3161, 5
        %v4063 = vsel %vm4031, %v4061, %v4062
        %v4064 = vrot.slane %v3162, 5
        %v4065 = vrot.slane %v4064, 4
        %v4066 = vrot.slane %v3163, 5
        %v4067 = vsel %vm4031, %v4065, %v4066
        %v4068 = vrot.slane %v3164, 5
        %v4069 = vrot.slane %v4068, 4
        %v4070 = vrot.slane %v3165, 5
        %v4071 = vsel %vm4031, %v4069, %v4070
        %v4072 = vrot.slane %v3166, 5
        %v4073 = vrot.slane %v4072, 4
        %v4074 = vrot.slane %v3167, 5
        %v4075 = vsel %vm4031, %v4073, %v4074
        %v4076 = vrot.slane %v3168, 5
        %v4077 = vrot.slane %v4076, 4
        %v4078 = vrot.slane %v3169, 5
        %v4079 = vsel %vm4031, %v4077, %v4078
        %v4080 = vrot.slane %v3170, 5
        %v4081 = vrot.slane %v4080, 4
        %v4082 = vrot.slane %v3171, 5
        %v4083 = vsel %vm4031, %v4081, %v4082
        %v4084 = vrot.slane %v3172, 5
        %v4085 = vrot.slane %v4084, 4
        %v4086 = vrot.slane %v3173, 5
        %v4087 = vsel %vm4031, %v4085, %v4086
        %v4088 = vrot.slane %v3174, 5
        %v4089 = vrot.slane %v4088, 4
        %v4090 = vrot.slane %v3175, 5
        %v4091 = vsel %vm4031, %v4089, %v4090
        %v4092 = vrot.slane %v3176, 5
        %v4093 = vrot.slane %v4092, 4
        %v4094 = vrot.slane %v3177, 5
        %v4095 = vsel %vm4031, %v4093, %v4094
        %v4096 = vrot.slane %v3178, 5
        %v4097 = vrot.slane %v4096, 4
        %v4098 = vrot.slane %v3179, 5
        %v4099 = vsel %vm4031, %v4097, %v4098
        %v4100 = vrot.slane %v3180, 5
        %v4101 = vrot.slane %v4100, 4
        %v4102 = vrot.slane %v3181, 5
        %v4103 = vsel %vm4031, %v4101, %v4102
        %v4104 = vrot.slane %v3182, 5
        %v4105 = vrot.slane %v4104, 4
        %v4106 = vrot.slane %v3183, 5
        %v4107 = vsel %vm4031, %v4105, %v4106
        %v4108 = vrot.slane %v3184, 5
        %v4109 = vrot.slane %v4108, 4
        %v4110 = vrot.slane %v3185, 5
        %v4111 = vsel %vm4031, %v4109, %v4110
        %s4112 = scalar_lea.vmem %s3, 64
        %v4113 = vld [vmem:[%s4112] sm:$0xf]
        %v4114 = vld [vmem:[%s4112 + $0x4] sm:$0xf]
        %v4115 = vld [vmem:[%s4112 + $0x8] sm:$0xf]
        %v4116 = vld [vmem:[%s4112 + $0xc] sm:$0xf]
        %v4117 = vunpack.c.l.b16 %v4035
        %v4118 = vunpack.c.l.b16 %v4039
        %v4119 = vunpack.c.l.b16 %v4043
        %v4120 = vunpack.c.l.b16 %v4047
        %v4121 = vunpack.c.l.b16 %v4051
        %v4122 = vunpack.c.l.b16 %v4055
        %v4123 = vunpack.c.l.b16 %v4059
        %v4124 = vunpack.c.l.b16 %v4063
        %v4125 = vunpack.c.l.b16 %v4067
        %v4126 = vunpack.c.l.b16 %v4071
        %v4127 = vunpack.c.l.b16 %v4075
        %v4128 = vunpack.c.l.b16 %v4079
        %v4129 = vunpack.c.l.b16 %v4083
        %v4130 = vunpack.c.l.b16 %v4087
        %v4131 = vunpack.c.l.b16 %v4091
        %v4132 = vunpack.c.l.b16 %v4095
        %v4133 = vunpack.c.l.b16 %v4099
        %v4134 = vunpack.c.l.b16 %v4103
        %v4135 = vunpack.c.l.b16 %v4107
        %v4136 = vunpack.c.l.b16 %v4111
        %v4137 = vpack.c.b16 %v4118, %v4117
        %v4138 = vpack.c.b16 %v4120, %v4119
        %v4139 = vpack.c.b16 %v4122, %v4121
        %v4140 = vpack.c.b16 %v4124, %v4123
        %v4141 = vpack.c.b16 %v4126, %v4125
        %v4142 = vpack.c.b16 %v4128, %v4127
        %v4143 = vpack.c.b16 %v4130, %v4129
        %v4144 = vpack.c.b16 %v4132, %v4131
        %v4145 = vpack.c.b16 %v4134, %v4133
        %v4146 = vpack.c.b16 %v4136, %v4135
        %v4151 = vunpack.c.l.b16 %v4113
        %v4152 = vunpack.c.l.b16 %v4114
        %v4153 = vunpack.c.l.b16 %v4115
        %v4154 = vunpack.c.l.b16 %v4116
        %v4155 = vpack.c.b16 %v4152, %v4151
        %v4156 = vpack.c.b16 %v4154, %v4153
        %v4160 = vsel %vm2817, %v4137, 0
        %v4163 = vsel %vm2817, %v4138, 0
        %v4166 = vsel %vm2817, %v4139, 0
        %v4169 = vsel %vm2817, %v4140, 0
        %v4172 = vsel %vm2817, %v4141, 0
        %v4175 = vsel %vm2817, %v4142, 0
        %v4178 = vsel %vm2817, %v4143, 0
        %v4181 = vsel %vm2817, %v4144, 0
        %v4184 = vsel %vm2817, %v4145, 0
        %v4187 = vsel %vm2817, %v4146, 0
        %4189 = vmatprep.subr.bf16.mxu0 0
        %4190 = vmatpush1.bf16.msra.mxu0 %v4155
        %4191 = vmatprep.subr.bf16.mxu0 0
        %4192 = vmatpush1.bf16.msra.mxu0 %v4156
        %4193 = vmatprep.subr.bf16.mxu0 0
        %4194 = vmatpush1.bf16.msra.mxu0 0
        %4195 = vmatprep.subr.bf16.mxu0 0
        %4196 = vmatpush1.bf16.msra.mxu0 0
        %4197 = vmatprep.subr.bf16.mxu0 0
        %4198 = vmatpush1.bf16.msra.mxu0 0
        %4199 = vmatprep.subr.bf16.mxu0 0
        %4200 = vmatpush1.bf16.msra.mxu0 0
        %4201 = vmatprep.subr.bf16.mxu0 0
        %4202 = vmatpush1.bf16.msra.mxu0 0
        %4203 = vmatprep.subr.bf16.mxu0 0
        %4204 = vmatpush1.bf16.msra.mxu0 0
        %4205 = vmatprep.subr.bf16.mxu0 0
        %4206 = vmatpush1.bf16.msra.mxu0 0
        %4207 = vmatprep.subr.bf16.mxu0 0
        %4208 = vmatpush1.bf16.msra.mxu0 0
        %4209 = vmatprep.subr.bf16.mxu0 0
        %4210 = vmatpush1.bf16.msra.mxu0 0
        %4211 = vmatprep.subr.bf16.mxu0 0
        %4212 = vmatpush1.bf16.msra.mxu0 0
        %4213 = vmatprep.subr.bf16.mxu0 0
        %4214 = vmatpush1.bf16.msra.mxu0 0
        %4215 = vmatprep.subr.bf16.mxu0 0
        %4216 = vmatpush1.bf16.msra.mxu0 0
        %4217 = vmatprep.subr.bf16.mxu0 0
        %4218 = vmatpush1.bf16.msra.mxu0 0
        %4219 = vmatprep.subr.bf16.mxu0 0
        %4220 = vmatpush1.bf16.msra.mxu0 0
        %4221 = vmatprep.mubr.bf16.mxu0 0
        %4222 = vmatmul.mubr.bf16.gmra.mrb[0].mxu0 %v4160
        %v4223 = vpop.f32.mrb[0].mxu0
        %v4224 = vadd.f32 0.0, %v4223
        %v4225 = vpop.f32.mrb[0].mxu0
        %v4226 = vpop.f32.mrb[0].mxu0
        %v4227 = vadd.f32 0.0, %v4226
        %v4228 = vpop.f32.mrb[0].mxu0
        %4229 = vmatprep.mubr.bf16.mxu0 0
        %4230 = vmatmul.mubr.bf16.gmra.mrb[0].mxu0 %v4163
        %v4231 = vpop.f32.mrb[0].mxu0
        %v4232 = vadd.f32 0.0, %v4231
        %v4233 = vpop.f32.mrb[0].mxu0
        %v4234 = vpop.f32.mrb[0].mxu0
        %v4235 = vadd.f32 0.0, %v4234
        %v4236 = vpop.f32.mrb[0].mxu0
        %4237 = vmatprep.mubr.bf16.mxu0 0
        %4238 = vmatmul.mubr.bf16.gmra.mrb[0].mxu0 %v4166
        %v4239 = vpop.f32.mrb[0].mxu0
        %v4240 = vadd.f32 0.0, %v4239
        %v4241 = vpop.f32.mrb[0].mxu0
        %v4242 = vpop.f32.mrb[0].mxu0
        %v4243 = vadd.f32 0.0, %v4242
        %v4244 = vpop.f32.mrb[0].mxu0
        %4245 = vmatprep.mubr.bf16.mxu0 0
        %4246 = vmatmul.mubr.bf16.gmra.mrb[0].mxu0 %v4169
        %v4247 = vpop.f32.mrb[0].mxu0
        %v4248 = vadd.f32 0.0, %v4247
        %v4249 = vpop.f32.mrb[0].mxu0
        %v4250 = vpop.f32.mrb[0].mxu0
        %v4251 = vadd.f32 0.0, %v4250
        %v4252 = vpop.f32.mrb[0].mxu0
        %4253 = vmatprep.mubr.bf16.mxu0 0
        %4254 = vmatmul.mubr.bf16.gmra.mrb[0].mxu0 %v4172
        %v4255 = vpop.f32.mrb[0].mxu0
        %v4256 = vadd.f32 0.0, %v4255
        %v4257 = vpop.f32.mrb[0].mxu0
        %v4258 = vpop.f32.mrb[0].mxu0
        %v4259 = vadd.f32 0.0, %v4258
        %v4260 = vpop.f32.mrb[0].mxu0
        %4261 = vmatprep.mubr.bf16.mxu0 0
        %4262 = vmatmul.mubr.bf16.gmra.mrb[0].mxu0 %v4175
        %v4263 = vpop.f32.mrb[0].mxu0
        %v4264 = vadd.f32 0.0, %v4263
        %v4265 = vpop.f32.mrb[0].mxu0
        %v4266 = vpop.f32.mrb[0].mxu0
        %v4267 = vadd.f32 0.0, %v4266
        %v4268 = vpop.f32.mrb[0].mxu0
        %4269 = vmatprep.mubr.bf16.mxu0 0
        %4270 = vmatmul.mubr.bf16.gmra.mrb[0].mxu0 %v4178
        %v4271 = vpop.f32.mrb[0].mxu0
        %v4272 = vadd.f32 0.0, %v4271
        %v4273 = vpop.f32.mrb[0].mxu0
        %v4274 = vpop.f32.mrb[0].mxu0
        %v4275 = vadd.f32 0.0, %v4274
        %v4276 = vpop.f32.mrb[0].mxu0
        %4277 = vmatprep.mubr.bf16.mxu0 0
        %4278 = vmatmul.mubr.bf16.gmra.mrb[0].mxu0 %v4181
        %v4279 = vpop.f32.mrb[0].mxu0
        %v4280 = vadd.f32 0.0, %v4279
        %v4281 = vpop.f32.mrb[0].mxu0
        %v4282 = vpop.f32.mrb[0].mxu0
        %v4283 = vadd.f32 0.0, %v4282
        %v4284 = vpop.f32.mrb[0].mxu0
        %4285 = vmatprep.mubr.bf16.mxu0 0
        %4286 = vmatmul.mubr.bf16.gmra.mrb[0].mxu0 %v4184
        %v4287 = vpop.f32.mrb[0].mxu0
        %v4288 = vadd.f32 0.0, %v4287
        %v4289 = vpop.f32.mrb[0].mxu0
        %v4290 = vpop.f32.mrb[0].mxu0
        %v4291 = vadd.f32 0.0, %v4290
        %v4292 = vpop.f32.mrb[0].mxu0
        %4293 = vmatprep.mubr.bf16.mxu0 0
        %4294 = vmatmul.mubr.bf16.gmra.mrb[0].mxu0 %v4187
        %v4295 = vpop.f32.mrb[0].mxu0
        %v4296 = vadd.f32 0.0, %v4295
        %v4297 = vpop.f32.mrb[0].mxu0
        %v4298 = vpop.f32.mrb[0].mxu0
        %v4299 = vadd.f32 0.0, %v4298
        %v4300 = vpop.f32.mrb[0].mxu0
        %4301 = vdwg.mxu0
        %v4302 = vadd.f32 %v4009, %v4224
        %v4303 = vadd.f32 %v4010, %v4227
        %v4304 = vadd.f32 %v4011, %v4232
        %v4305 = vadd.f32 %v4012, %v4235
        %v4306 = vadd.f32 %v4013, %v4240
        %v4307 = vadd.f32 %v4014, %v4243
        %v4308 = vadd.f32 %v4015, %v4248
        %v4309 = vadd.f32 %v4016, %v4251
        %v4310 = vadd.f32 %v4017, %v4256
        %v4311 = vadd.f32 %v4018, %v4259
        %v4312 = vadd.f32 %v4019, %v4264
        %v4313 = vadd.f32 %v4020, %v4267
        %v4314 = vadd.f32 %v4021, %v4272
        %v4315 = vadd.f32 %v4022, %v4275
        %v4316 = vadd.f32 %v4023, %v4280
        %v4317 = vadd.f32 %v4024, %v4283
        %v4318 = vadd.f32 %v4025, %v4288
        %v4319 = vadd.f32 %v4026, %v4291
        %v4320 = vadd.f32 %v4027, %v4296
        %v4321 = vadd.f32 %v4028, %v4299
        %s4322 = scalar_lea.vmem %s3, 80
        %v4323 = vld [vmem:[%s4322] sm:$0xf]
        %v4324 = vld [vmem:[%s4322 + $0x4] sm:$0xf]
        %v4325 = vld [vmem:[%s4322 + $0x8] sm:$0xf]
        %v4326 = vld [vmem:[%s4322 + $0xc] sm:$0xf]
        %v4329 = vunpack.c.l.b16 %v2612
        %v4330 = vunpack.c.l.b16 %v2682
        %v4331 = vpack.c.b16 %v2973, %v2972
        %v4332 = vpack.c.b16 %v2975, %v2974
        %v4333 = vpack.c.b16 %v2977, %v2976
        %v4334 = vpack.c.b16 %v2979, %v2978
        %v4335 = vpack.c.b16 %v4329, %v2980
        %v4336 = vpack.c.b16 %v2777, %v2776
        %v4337 = vpack.c.b16 %v2779, %v2778
        %v4338 = vpack.c.b16 %v2781, %v2780
        %v4339 = vpack.c.b16 %v2783, %v2782
        %v4340 = vpack.c.b16 %v4330, %v2784
        %v4345 = vunpack.c.l.b16 %v4323
        %v4346 = vunpack.c.l.b16 %v4324
        %v4347 = vunpack.c.l.b16 %v4325
        %v4348 = vunpack.c.l.b16 %v4326
        %v4349 = vpack.c.b16 %v4346, %v4345
        %v4350 = vpack.c.b16 %v4348, %v4347
        %v4354 = vsel %vm2817, %v4331, 0
        %v4357 = vsel %vm2817, %v4332, 0
        %v4360 = vsel %vm2817, %v4333, 0
        %v4363 = vsel %vm2817, %v4334, 0
        %v4366 = vsel %vm2817, %v4335, 0
        %v4369 = vsel %vm2817, %v4336, 0
        %v4372 = vsel %vm2817, %v4337, 0
        %v4375 = vsel %vm2817, %v4338, 0
        %v4378 = vsel %vm2817, %v4339, 0
        %v4381 = vsel %vm2817, %v4340, 0
        %4383 = vmatprep.subr.bf16.mxu0 0
        %4384 = vmatpush1.bf16.msra.mxu0 %v4349
        %4385 = vmatprep.subr.bf16.mxu0 0
        %4386 = vmatpush1.bf16.msra.mxu0 %v4350
        %4387 = vmatprep.subr.bf16.mxu0 0
        %4388 = vmatpush1.bf16.msra.mxu0 0
        %4389 = vmatprep.subr.bf16.mxu0 0
        %4390 = vmatpush1.bf16.msra.mxu0 0
        %4391 = vmatprep.subr.bf16.mxu0 0
        %4392 = vmatpush1.bf16.msra.mxu0 0
        %4393 = vmatprep.subr.bf16.mxu0 0
        %4394 = vmatpush1.bf16.msra.mxu0 0
        %4395 = vmatprep.subr.bf16.mxu0 0
        %4396 = vmatpush1.bf16.msra.mxu0 0
        %4397 = vmatprep.subr.bf16.mxu0 0
        %4398 = vmatpush1.bf16.msra.mxu0 0
        %4399 = vmatprep.subr.bf16.mxu0 0
        %4400 = vmatpush1.bf16.msra.mxu0 0
        %4401 = vmatprep.subr.bf16.mxu0 0
        %4402 = vmatpush1.bf16.msra.mxu0 0
        %4403 = vmatprep.subr.bf16.mxu0 0
        %4404 = vmatpush1.bf16.msra.mxu0 0
        %4405 = vmatprep.subr.bf16.mxu0 0
        %4406 = vmatpush1.bf16.msra.mxu0 0
        %4407 = vmatprep.subr.bf16.mxu0 0
        %4408 = vmatpush1.bf16.msra.mxu0 0
        %4409 = vmatprep.subr.bf16.mxu0 0
        %4410 = vmatpush1.bf16.msra.mxu0 0
        %4411 = vmatprep.subr.bf16.mxu0 0
        %4412 = vmatpush1.bf16.msra.mxu0 0
        %4413 = vmatprep.subr.bf16.mxu0 0
        %4414 = vmatpush1.bf16.msra.mxu0 0
        %4415 = vmatprep.mubr.bf16.mxu0 0
        %4416 = vmatmul.mubr.bf16.gmra.mrb[0].mxu0 %v4354
        %v4417 = vpop.f32.mrb[0].mxu0
        %v4418 = vadd.f32 0.0, %v4417
        %v4419 = vpop.f32.mrb[0].mxu0
        %v4420 = vpop.f32.mrb[0].mxu0
        %v4421 = vadd.f32 0.0, %v4420
        %v4422 = vpop.f32.mrb[0].mxu0
        %4423 = vmatprep.mubr.bf16.mxu0 0
        %4424 = vmatmul.mubr.bf16.gmra.mrb[0].mxu0 %v4357
        %v4425 = vpop.f32.mrb[0].mxu0
        %v4426 = vadd.f32 0.0, %v4425
        %v4427 = vpop.f32.mrb[0].mxu0
        %v4428 = vpop.f32.mrb[0].mxu0
        %v4429 = vadd.f32 0.0, %v4428
        %v4430 = vpop.f32.mrb[0].mxu0
        %4431 = vmatprep.mubr.bf16.mxu0 0
        %4432 = vmatmul.mubr.bf16.gmra.mrb[0].mxu0 %v4360
        %v4433 = vpop.f32.mrb[0].mxu0
        %v4434 = vadd.f32 0.0, %v4433
        %v4435 = vpop.f32.mrb[0].mxu0
        %v4436 = vpop.f32.mrb[0].mxu0
        %v4437 = vadd.f32 0.0, %v4436
        %v4438 = vpop.f32.mrb[0].mxu0
        %4439 = vmatprep.mubr.bf16.mxu0 0
        %4440 = vmatmul.mubr.bf16.gmra.mrb[0].mxu0 %v4363
        %v4441 = vpop.f32.mrb[0].mxu0
        %v4442 = vadd.f32 0.0, %v4441
        %v4443 = vpop.f32.mrb[0].mxu0
        %v4444 = vpop.f32.mrb[0].mxu0
        %v4445 = vadd.f32 0.0, %v4444
        %v4446 = vpop.f32.mrb[0].mxu0
        %4447 = vmatprep.mubr.bf16.mxu0 0
        %4448 = vmatmul.mubr.bf16.gmra.mrb[0].mxu0 %v4366
        %v4449 = vpop.f32.mrb[0].mxu0
        %v4450 = vadd.f32 0.0, %v4449
        %v4451 = vpop.f32.mrb[0].mxu0
        %v4452 = vpop.f32.mrb[0].mxu0
        %v4453 = vadd.f32 0.0, %v4452
        %v4454 = vpop.f32.mrb[0].mxu0
        %4455 = vmatprep.mubr.bf16.mxu0 0
        %4456 = vmatmul.mubr.bf16.gmra.mrb[0].mxu0 %v4369
        %v4457 = vpop.f32.mrb[0].mxu0
        %v4458 = vadd.f32 0.0, %v4457
        %v4459 = vpop.f32.mrb[0].mxu0
        %v4460 = vpop.f32.mrb[0].mxu0
        %v4461 = vadd.f32 0.0, %v4460
        %v4462 = vpop.f32.mrb[0].mxu0
        %4463 = vmatprep.mubr.bf16.mxu0 0
        %4464 = vmatmul.mubr.bf16.gmra.mrb[0].mxu0 %v4372
        %v4465 = vpop.f32.mrb[0].mxu0
        %v4466 = vadd.f32 0.0, %v4465
        %v4467 = vpop.f32.mrb[0].mxu0
        %v4468 = vpop.f32.mrb[0].mxu0
        %v4469 = vadd.f32 0.0, %v4468
        %v4470 = vpop.f32.mrb[0].mxu0
        %4471 = vmatprep.mubr.bf16.mxu0 0
        %4472 = vmatmul.mubr.bf16.gmra.mrb[0].mxu0 %v4375
        %v4473 = vpop.f32.mrb[0].mxu0
        %v4474 = vadd.f32 0.0, %v4473
        %v4475 = vpop.f32.mrb[0].mxu0
        %v4476 = vpop.f32.mrb[0].mxu0
        %v4477 = vadd.f32 0.0, %v4476
        %v4478 = vpop.f32.mrb[0].mxu0
        %4479 = vmatprep.mubr.bf16.mxu0 0
        %4480 = vmatmul.mubr.bf16.gmra.mrb[0].mxu0 %v4378
        %v4481 = vpop.f32.mrb[0].mxu0
        %v4482 = vadd.f32 0.0, %v4481
        %v4483 = vpop.f32.mrb[0].mxu0
        %v4484 = vpop.f32.mrb[0].mxu0
        %v4485 = vadd.f32 0.0, %v4484
        %v4486 = vpop.f32.mrb[0].mxu0
        %4487 = vmatprep.mubr.bf16.mxu0 0
        %4488 = vmatmul.mubr.bf16.gmra.mrb[0].mxu0 %v4381
        %v4489 = vpop.f32.mrb[0].mxu0
        %v4490 = vadd.f32 0.0, %v4489
        %v4491 = vpop.f32.mrb[0].mxu0
        %v4492 = vpop.f32.mrb[0].mxu0
        %v4493 = vadd.f32 0.0, %v4492
        %v4494 = vpop.f32.mrb[0].mxu0
        %4495 = vdwg.mxu0
        %v4496 = vadd.f32 %v4302, %v4418
        %v4497 = vadd.f32 %v4303, %v4421
        %v4498 = vadd.f32 %v4304, %v4426
        %v4499 = vadd.f32 %v4305, %v4429
        %v4500 = vadd.f32 %v4306, %v4434
        %v4501 = vadd.f32 %v4307, %v4437
        %v4502 = vadd.f32 %v4308, %v4442
        %v4503 = vadd.f32 %v4309, %v4445
        %v4504 = vadd.f32 %v4310, %v4450
        %v4505 = vadd.f32 %v4311, %v4453
        %v4506 = vadd.f32 %v4312, %v4458
        %v4507 = vadd.f32 %v4313, %v4461
        %v4508 = vadd.f32 %v4314, %v4466
        %v4509 = vadd.f32 %v4315, %v4469
        %v4510 = vadd.f32 %v4316, %v4474
        %v4511 = vadd.f32 %v4317, %v4477
        %v4512 = vadd.f32 %v4318, %v4482
        %v4513 = vadd.f32 %v4319, %v4485
        %v4514 = vadd.f32 %v4320, %v4490
        %v4515 = vadd.f32 %v4321, %v4493
        %v4517 = vshrl.u32 %v2612, 16
        %v4519 = vshll.u32 %v2612, 16
        %v4521 = vrot.slane %v4519, 1
        %v4522 = vor.u32 %v4517, %v4521
        %s4523 = scalar_lea.vmem %s3, 96
        %v4524 = vld [vmem:[%s4523] sm:$0xf]
        %v4525 = vld [vmem:[%s4523 + $0x4] sm:$0xf]
        %v4526 = vld [vmem:[%s4523 + $0x8] sm:$0xf]
        %v4527 = vld [vmem:[%s4523 + $0xc] sm:$0xf]
        %v4528 = vunpack.c.l.b16 %v4522
        %v4529 = vpack.c.b16 %v2787, %v2786
        %v4530 = vpack.c.b16 %v2789, %v2788
        %v4531 = vpack.c.b16 %v2791, %v2790
        %v4532 = vpack.c.b16 %v2793, %v2792
        %v4533 = vpack.c.b16 %v4528, %v2794
        %v4538 = vunpack.c.l.b16 %v4524
        %v4539 = vunpack.c.l.b16 %v4525
        %v4540 = vunpack.c.l.b16 %v4526
        %v4541 = vunpack.c.l.b16 %v4527
        %v4542 = vpack.c.b16 %v4539, %v4538
        %v4543 = vpack.c.b16 %v4541, %v4540
        %v4547 = vsel %vm2817, %v4529, 0
        %v4550 = vsel %vm2817, %v4530, 0
        %v4553 = vsel %vm2817, %v4531, 0
        %v4556 = vsel %vm2817, %v4532, 0
        %v4559 = vsel %vm2817, %v4533, 0
        %4561 = vmatprep.subr.bf16.mxu0 0
        %4562 = vmatpush1.bf16.msra.mxu0 %v4542
        %4563 = vmatprep.subr.bf16.mxu0 0
        %4564 = vmatpush1.bf16.msra.mxu0 %v4543
        %4565 = vmatprep.subr.bf16.mxu0 0
        %4566 = vmatpush1.bf16.msra.mxu0 0
        %4567 = vmatprep.subr.bf16.mxu0 0
        %4568 = vmatpush1.bf16.msra.mxu0 0
        %4569 = vmatprep.subr.bf16.mxu0 0
        %4570 = vmatpush1.bf16.msra.mxu0 0
        %4571 = vmatprep.subr.bf16.mxu0 0
        %4572 = vmatpush1.bf16.msra.mxu0 0
        %4573 = vmatprep.subr.bf16.mxu0 0
        %4574 = vmatpush1.bf16.msra.mxu0 0
        %4575 = vmatprep.subr.bf16.mxu0 0
        %4576 = vmatpush1.bf16.msra.mxu0 0
        %4577 = vmatprep.subr.bf16.mxu0 0
        %4578 = vmatpush1.bf16.msra.mxu0 0
        %4579 = vmatprep.subr.bf16.mxu0 0
        %4580 = vmatpush1.bf16.msra.mxu0 0
        %4581 = vmatprep.subr.bf16.mxu0 0
        %4582 = vmatpush1.bf16.msra.mxu0 0
        %4583 = vmatprep.subr.bf16.mxu0 0
        %4584 = vmatpush1.bf16.msra.mxu0 0
        %4585 = vmatprep.subr.bf16.mxu0 0
        %4586 = vmatpush1.bf16.msra.mxu0 0
        %4587 = vmatprep.subr.bf16.mxu0 0
        %4588 = vmatpush1.bf16.msra.mxu0 0
        %4589 = vmatprep.subr.bf16.mxu0 0
        %4590 = vmatpush1.bf16.msra.mxu0 0
        %4591 = vmatprep.subr.bf16.mxu0 0
        %4592 = vmatpush1.bf16.msra.mxu0 0
        %4593 = vmatprep.mubr.bf16.mxu0 0
        %4594 = vmatmul.mubr.bf16.gmra.mrb[0].mxu0 %v4369
        %v4595 = vpop.f32.mrb[0].mxu0
        %v4596 = vadd.f32 0.0, %v4595
        %v4597 = vpop.f32.mrb[0].mxu0
        %v4598 = vpop.f32.mrb[0].mxu0
        %v4599 = vadd.f32 0.0, %v4598
        %v4600 = vpop.f32.mrb[0].mxu0
        %4601 = vmatprep.mubr.bf16.mxu0 0
        %4602 = vmatmul.mubr.bf16.gmra.mrb[0].mxu0 %v4372
        %v4603 = vpop.f32.mrb[0].mxu0
        %v4604 = vadd.f32 0.0, %v4603
        %v4605 = vpop.f32.mrb[0].mxu0
        %v4606 = vpop.f32.mrb[0].mxu0
        %v4607 = vadd.f32 0.0, %v4606
        %v4608 = vpop.f32.mrb[0].mxu0
        %4609 = vmatprep.mubr.bf16.mxu0 0
        %4610 = vmatmul.mubr.bf16.gmra.mrb[0].mxu0 %v4375
        %v4611 = vpop.f32.mrb[0].mxu0
        %v4612 = vadd.f32 0.0, %v4611
        %v4613 = vpop.f32.mrb[0].mxu0
        %v4614 = vpop.f32.mrb[0].mxu0
        %v4615 = vadd.f32 0.0, %v4614
        %v4616 = vpop.f32.mrb[0].mxu0
        %4617 = vmatprep.mubr.bf16.mxu0 0
        %4618 = vmatmul.mubr.bf16.gmra.mrb[0].mxu0 %v4378
        %v4619 = vpop.f32.mrb[0].mxu0
        %v4620 = vadd.f32 0.0, %v4619
        %v4621 = vpop.f32.mrb[0].mxu0
        %v4622 = vpop.f32.mrb[0].mxu0
        %v4623 = vadd.f32 0.0, %v4622
        %v4624 = vpop.f32.mrb[0].mxu0
        %4625 = vmatprep.mubr.bf16.mxu0 0
        %4626 = vmatmul.mubr.bf16.gmra.mrb[0].mxu0 %v4381
        %v4627 = vpop.f32.mrb[0].mxu0
        %v4628 = vadd.f32 0.0, %v4627
        %v4629 = vpop.f32.mrb[0].mxu0
        %v4630 = vpop.f32.mrb[0].mxu0
        %v4631 = vadd.f32 0.0, %v4630
        %v4632 = vpop.f32.mrb[0].mxu0
        %4633 = vmatprep.mubr.bf16.mxu0 0
        %4634 = vmatmul.mubr.bf16.gmra.mrb[0].mxu0 %v4547
        %v4635 = vpop.f32.mrb[0].mxu0
        %v4636 = vadd.f32 0.0, %v4635
        %v4637 = vpop.f32.mrb[0].mxu0
        %v4638 = vpop.f32.mrb[0].mxu0
        %v4639 = vadd.f32 0.0, %v4638
        %v4640 = vpop.f32.mrb[0].mxu0
        %4641 = vmatprep.mubr.bf16.mxu0 0
        %4642 = vmatmul.mubr.bf16.gmra.mrb[0].mxu0 %v4550
        %v4643 = vpop.f32.mrb[0].mxu0
        %v4644 = vadd.f32 0.0, %v4643
        %v4645 = vpop.f32.mrb[0].mxu0
        %v4646 = vpop.f32.mrb[0].mxu0
        %v4647 = vadd.f32 0.0, %v4646
        %v4648 = vpop.f32.mrb[0].mxu0
        %4649 = vmatprep.mubr.bf16.mxu0 0
        %4650 = vmatmul.mubr.bf16.gmra.mrb[0].mxu0 %v4553
        %v4651 = vpop.f32.mrb[0].mxu0
        %v4652 = vadd.f32 0.0, %v4651
        %v4653 = vpop.f32.mrb[0].mxu0
        %v4654 = vpop.f32.mrb[0].mxu0
        %v4655 = vadd.f32 0.0, %v4654
        %v4656 = vpop.f32.mrb[0].mxu0
        %4657 = vmatprep.mubr.bf16.mxu0 0
        %4658 = vmatmul.mubr.bf16.gmra.mrb[0].mxu0 %v4556
        %v4659 = vpop.f32.mrb[0].mxu0
        %v4660 = vadd.f32 0.0, %v4659
        %v4661 = vpop.f32.mrb[0].mxu0
        %v4662 = vpop.f32.mrb[0].mxu0
        %v4663 = vadd.f32 0.0, %v4662
        %v4664 = vpop.f32.mrb[0].mxu0
        %4665 = vmatprep.mubr.bf16.mxu0 0
        %4666 = vmatmul.mubr.bf16.gmra.mrb[0].mxu0 %v4559
        %v4667 = vpop.f32.mrb[0].mxu0
        %v4668 = vadd.f32 0.0, %v4667
        %v4669 = vpop.f32.mrb[0].mxu0
        %v4670 = vpop.f32.mrb[0].mxu0
        %v4671 = vadd.f32 0.0, %v4670
        %v4672 = vpop.f32.mrb[0].mxu0
        %4673 = vdwg.mxu0
        %v4674 = vadd.f32 %v4496, %v4596
        %v4675 = vadd.f32 %v4497, %v4599
        %v4676 = vadd.f32 %v4498, %v4604
        %v4677 = vadd.f32 %v4499, %v4607
        %v4678 = vadd.f32 %v4500, %v4612
        %v4679 = vadd.f32 %v4501, %v4615
        %v4680 = vadd.f32 %v4502, %v4620
        %v4681 = vadd.f32 %v4503, %v4623
        %v4682 = vadd.f32 %v4504, %v4628
        %v4683 = vadd.f32 %v4505, %v4631
        %v4684 = vadd.f32 %v4506, %v4636
        %v4685 = vadd.f32 %v4507, %v4639
        %v4686 = vadd.f32 %v4508, %v4644
        %v4687 = vadd.f32 %v4509, %v4647
        %v4688 = vadd.f32 %v4510, %v4652
        %v4689 = vadd.f32 %v4511, %v4655
        %v4690 = vadd.f32 %v4512, %v4660
        %v4691 = vadd.f32 %v4513, %v4663
        %v4692 = vadd.f32 %v4514, %v4668
        %v4693 = vadd.f32 %v4515, %v4671
        %v4694 = vunpack.c.h.b16 %v2612
        %v4695 = vunpack.c.h.b16 %v2682
        %v4696 = vpack.c.b16 %v4329, %v4329
        %v4697 = vpack.c.b16 %v4694, %v4694
        %v4698 = vpack.c.b16 %v4330, %v4330
        %v4699 = vpack.c.b16 %v4695, %v4695
        %v4701 = vshrl.u32 %v4696, 16
        %v4703 = vrot.slane %v4701, 4
        %v4704 = vshll.u32 %v4696, 16
        %v4706 = vrot.slane %v4704, 5
        %v4707 = vor.u32 %v4703, %v4706
        %v4708 = vrot.slane %v4707, 4
        %v4710 = vshll.u32 %v4697, 16
        %v4712 = vrot.slane %v4710, 5
        %v4713 = vsel %vm3188, %v4708, %v4712
        %v4715 = vshrl.u32 %v4698, 16
        %v4717 = vrot.slane %v4715, 4
        %v4718 = vshll.u32 %v4698, 16
        %v4720 = vrot.slane %v4718, 5
        %v4721 = vor.u32 %v4717, %v4720
        %v4722 = vrot.slane %v4721, 4
        %v4724 = vshll.u32 %v4699, 16
        %v4726 = vrot.slane %v4724, 5
        %v4727 = vsel %vm3188, %v4722, %v4726
        %s4728 = scalar_lea.vmem %s3, 112
        %v4729 = vld [vmem:[%s4728] sm:$0xf]
        %v4730 = vld [vmem:[%s4728 + $0x4] sm:$0xf]
        %v4731 = vld [vmem:[%s4728 + $0x8] sm:$0xf]
        %v4732 = vld [vmem:[%s4728 + $0xc] sm:$0xf]
        %v4733 = vunpack.c.l.b16 %v4713
        %v4734 = vunpack.c.l.b16 %v4727
        %v4735 = vpack.c.b16 %v3476, %v3475
        %v4736 = vpack.c.b16 %v3478, %v3477
        %v4737 = vpack.c.b16 %v3480, %v3479
        %v4738 = vpack.c.b16 %v3482, %v3481
        %v4739 = vpack.c.b16 %v4733, %v3483
        %v4740 = vpack.c.b16 %v3486, %v3485
        %v4741 = vpack.c.b16 %v3488, %v3487
        %v4742 = vpack.c.b16 %v3490, %v3489
        %v4743 = vpack.c.b16 %v3492, %v3491
        %v4744 = vpack.c.b16 %v4734, %v3493
        %v4749 = vunpack.c.l.b16 %v4729
        %v4750 = vunpack.c.l.b16 %v4730
        %v4751 = vunpack.c.l.b16 %v4731
        %v4752 = vunpack.c.l.b16 %v4732
        %v4753 = vpack.c.b16 %v4750, %v4749
        %v4754 = vpack.c.b16 %v4752, %v4751
        %v4758 = vsel %vm2817, %v4735, 0
        %v4761 = vsel %vm2817, %v4736, 0
        %v4764 = vsel %vm2817, %v4737, 0
        %v4767 = vsel %vm2817, %v4738, 0
        %v4770 = vsel %vm2817, %v4739, 0
        %v4773 = vsel %vm2817, %v4740, 0
        %v4776 = vsel %vm2817, %v4741, 0
        %v4779 = vsel %vm2817, %v4742, 0
        %v4782 = vsel %vm2817, %v4743, 0
        %v4785 = vsel %vm2817, %v4744, 0
        %4787 = vmatprep.subr.bf16.mxu0 0
        %4788 = vmatpush1.bf16.msra.mxu0 %v4753
        %4789 = vmatprep.subr.bf16.mxu0 0
        %4790 = vmatpush1.bf16.msra.mxu0 %v4754
        %4791 = vmatprep.subr.bf16.mxu0 0
        %4792 = vmatpush1.bf16.msra.mxu0 0
        %4793 = vmatprep.subr.bf16.mxu0 0
        %4794 = vmatpush1.bf16.msra.mxu0 0
        %4795 = vmatprep.subr.bf16.mxu0 0
        %4796 = vmatpush1.bf16.msra.mxu0 0
        %4797 = vmatprep.subr.bf16.mxu0 0
        %4798 = vmatpush1.bf16.msra.mxu0 0
        %4799 = vmatprep.subr.bf16.mxu0 0
        %4800 = vmatpush1.bf16.msra.mxu0 0
        %4801 = vmatprep.subr.bf16.mxu0 0
        %4802 = vmatpush1.bf16.msra.mxu0 0
        %4803 = vmatprep.subr.bf16.mxu0 0
        %4804 = vmatpush1.bf16.msra.mxu0 0
        %4805 = vmatprep.subr.bf16.mxu0 0
        %4806 = vmatpush1.bf16.msra.mxu0 0
        %4807 = vmatprep.subr.bf16.mxu0 0
        %4808 = vmatpush1.bf16.msra.mxu0 0
        %4809 = vmatprep.subr.bf16.mxu0 0
        %4810 = vmatpush1.bf16.msra.mxu0 0
        %4811 = vmatprep.subr.bf16.mxu0 0
        %4812 = vmatpush1.bf16.msra.mxu0 0
        %4813 = vmatprep.subr.bf16.mxu0 0
        %4814 = vmatpush1.bf16.msra.mxu0 0
        %4815 = vmatprep.subr.bf16.mxu0 0
        %4816 = vmatpush1.bf16.msra.mxu0 0
        %4817 = vmatprep.subr.bf16.mxu0 0
        %4818 = vmatpush1.bf16.msra.mxu0 0
        %4819 = vmatprep.mubr.bf16.mxu0 0
        %4820 = vmatmul.mubr.bf16.gmra.mrb[0].mxu0 %v4758
        %v4821 = vpop.f32.mrb[0].mxu0
        %v4822 = vadd.f32 0.0, %v4821
        %v4823 = vpop.f32.mrb[0].mxu0
        %v4824 = vpop.f32.mrb[0].mxu0
        %v4825 = vadd.f32 0.0, %v4824
        %v4826 = vpop.f32.mrb[0].mxu0
        %4827 = vmatprep.mubr.bf16.mxu0 0
        %4828 = vmatmul.mubr.bf16.gmra.mrb[0].mxu0 %v4761
        %v4829 = vpop.f32.mrb[0].mxu0
        %v4830 = vadd.f32 0.0, %v4829
        %v4831 = vpop.f32.mrb[0].mxu0
        %v4832 = vpop.f32.mrb[0].mxu0
        %v4833 = vadd.f32 0.0, %v4832
        %v4834 = vpop.f32.mrb[0].mxu0
        %4835 = vmatprep.mubr.bf16.mxu0 0
        %4836 = vmatmul.mubr.bf16.gmra.mrb[0].mxu0 %v4764
        %v4837 = vpop.f32.mrb[0].mxu0
        %v4838 = vadd.f32 0.0, %v4837
        %v4839 = vpop.f32.mrb[0].mxu0
        %v4840 = vpop.f32.mrb[0].mxu0
        %v4841 = vadd.f32 0.0, %v4840
        %v4842 = vpop.f32.mrb[0].mxu0
        %4843 = vmatprep.mubr.bf16.mxu0 0
        %4844 = vmatmul.mubr.bf16.gmra.mrb[0].mxu0 %v4767
        %v4845 = vpop.f32.mrb[0].mxu0
        %v4846 = vadd.f32 0.0, %v4845
        %v4847 = vpop.f32.mrb[0].mxu0
        %v4848 = vpop.f32.mrb[0].mxu0
        %v4849 = vadd.f32 0.0, %v4848
        %v4850 = vpop.f32.mrb[0].mxu0
        %4851 = vmatprep.mubr.bf16.mxu0 0
        %4852 = vmatmul.mubr.bf16.gmra.mrb[0].mxu0 %v4770
        %v4853 = vpop.f32.mrb[0].mxu0
        %v4854 = vadd.f32 0.0, %v4853
        %v4855 = vpop.f32.mrb[0].mxu0
        %v4856 = vpop.f32.mrb[0].mxu0
        %v4857 = vadd.f32 0.0, %v4856
        %v4858 = vpop.f32.mrb[0].mxu0
        %4859 = vmatprep.mubr.bf16.mxu0 0
        %4860 = vmatmul.mubr.bf16.gmra.mrb[0].mxu0 %v4773
        %v4861 = vpop.f32.mrb[0].mxu0
        %v4862 = vadd.f32 0.0, %v4861
        %v4863 = vpop.f32.mrb[0].mxu0
        %v4864 = vpop.f32.mrb[0].mxu0
        %v4865 = vadd.f32 0.0, %v4864
        %v4866 = vpop.f32.mrb[0].mxu0
        %4867 = vmatprep.mubr.bf16.mxu0 0
        %4868 = vmatmul.mubr.bf16.gmra.mrb[0].mxu0 %v4776
        %v4869 = vpop.f32.mrb[0].mxu0
        %v4870 = vadd.f32 0.0, %v4869
        %v4871 = vpop.f32.mrb[0].mxu0
        %v4872 = vpop.f32.mrb[0].mxu0
        %v4873 = vadd.f32 0.0, %v4872
        %v4874 = vpop.f32.mrb[0].mxu0
        %4875 = vmatprep.mubr.bf16.mxu0 0
        %4876 = vmatmul.mubr.bf16.gmra.mrb[0].mxu0 %v4779
        %v4877 = vpop.f32.mrb[0].mxu0
        %v4878 = vadd.f32 0.0, %v4877
        %v4879 = vpop.f32.mrb[0].mxu0
        %v4880 = vpop.f32.mrb[0].mxu0
        %v4881 = vadd.f32 0.0, %v4880
        %v4882 = vpop.f32.mrb[0].mxu0
        %4883 = vmatprep.mubr.bf16.mxu0 0
        %4884 = vmatmul.mubr.bf16.gmra.mrb[0].mxu0 %v4782
        %v4885 = vpop.f32.mrb[0].mxu0
        %v4886 = vadd.f32 0.0, %v4885
        %v4887 = vpop.f32.mrb[0].mxu0
        %v4888 = vpop.f32.mrb[0].mxu0
        %v4889 = vadd.f32 0.0, %v4888
        %v4890 = vpop.f32.mrb[0].mxu0
        %4891 = vmatprep.mubr.bf16.mxu0 0
        %4892 = vmatmul.mubr.bf16.gmra.mrb[0].mxu0 %v4785
        %v4893 = vpop.f32.mrb[0].mxu0
        %v4894 = vadd.f32 0.0, %v4893
        %v4895 = vpop.f32.mrb[0].mxu0
        %v4896 = vpop.f32.mrb[0].mxu0
        %v4897 = vadd.f32 0.0, %v4896
        %v4898 = vpop.f32.mrb[0].mxu0
        %4899 = vdwg.mxu0
        %v4900 = vadd.f32 %v4674, %v4822
        %v4901 = vadd.f32 %v4675, %v4825
        %v4902 = vadd.f32 %v4676, %v4830
        %v4903 = vadd.f32 %v4677, %v4833
        %v4904 = vadd.f32 %v4678, %v4838
        %v4905 = vadd.f32 %v4679, %v4841
        %v4906 = vadd.f32 %v4680, %v4846
        %v4907 = vadd.f32 %v4681, %v4849
        %v4908 = vadd.f32 %v4682, %v4854
        %v4909 = vadd.f32 %v4683, %v4857
        %v4910 = vadd.f32 %v4684, %v4862
        %v4911 = vadd.f32 %v4685, %v4865
        %v4912 = vadd.f32 %v4686, %v4870
        %v4913 = vadd.f32 %v4687, %v4873
        %v4914 = vadd.f32 %v4688, %v4878
        %v4915 = vadd.f32 %v4689, %v4881
        %v4916 = vadd.f32 %v4690, %v4886
        %v4917 = vadd.f32 %v4691, %v4889
        %v4918 = vadd.f32 %v4692, %v4894
        %v4919 = vadd.f32 %v4693, %v4897
        %v4920 = vunpack.c.h.b16 %v4522
        %v4921 = vpack.c.b16 %v4528, %v4528
        %v4922 = vpack.c.b16 %v4920, %v4920
        %v4924 = vshrl.u32 %v4921, 16
        %v4926 = vrot.slane %v4924, 4
        %v4927 = vshll.u32 %v4921, 16
        %v4929 = vrot.slane %v4927, 5
        %v4930 = vor.u32 %v4926, %v4929
        %v4931 = vrot.slane %v4930, 4
        %v4933 = vshll.u32 %v4922, 16
        %v4935 = vrot.slane %v4933, 5
        %v4936 = vsel %vm3188, %v4931, %v4935
        %s4937 = scalar_lea.vmem %s3, 128
        %v4938 = vld [vmem:[%s4937] sm:$0xf]
        %v4939 = vld [vmem:[%s4937 + $0x4] sm:$0xf]
        %v4940 = vld [vmem:[%s4937 + $0x8] sm:$0xf]
        %v4941 = vld [vmem:[%s4937 + $0xc] sm:$0xf]
        %v4942 = vunpack.c.l.b16 %v4936
        %v4943 = vpack.c.b16 %v3856, %v3855
        %v4944 = vpack.c.b16 %v3858, %v3857
        %v4945 = vpack.c.b16 %v3860, %v3859
        %v4946 = vpack.c.b16 %v3862, %v3861
        %v4947 = vpack.c.b16 %v4942, %v3863
        %v4952 = vunpack.c.l.b16 %v4938
        %v4953 = vunpack.c.l.b16 %v4939
        %v4954 = vunpack.c.l.b16 %v4940
        %v4955 = vunpack.c.l.b16 %v4941
        %v4956 = vpack.c.b16 %v4953, %v4952
        %v4957 = vpack.c.b16 %v4955, %v4954
        %v4961 = vsel %vm2817, %v4943, 0
        %v4964 = vsel %vm2817, %v4944, 0
        %v4967 = vsel %vm2817, %v4945, 0
        %v4970 = vsel %vm2817, %v4946, 0
        %v4973 = vsel %vm2817, %v4947, 0
        %4975 = vmatprep.subr.bf16.mxu0 0
        %4976 = vmatpush1.bf16.msra.mxu0 %v4956
        %4977 = vmatprep.subr.bf16.mxu0 0
        %4978 = vmatpush1.bf16.msra.mxu0 %v4957
        %4979 = vmatprep.subr.bf16.mxu0 0
        %4980 = vmatpush1.bf16.msra.mxu0 0
        %4981 = vmatprep.subr.bf16.mxu0 0
        %4982 = vmatpush1.bf16.msra.mxu0 0
        %4983 = vmatprep.subr.bf16.mxu0 0
        %4984 = vmatpush1.bf16.msra.mxu0 0
        %4985 = vmatprep.subr.bf16.mxu0 0
        %4986 = vmatpush1.bf16.msra.mxu0 0
        %4987 = vmatprep.subr.bf16.mxu0 0
        %4988 = vmatpush1.bf16.msra.mxu0 0
        %4989 = vmatprep.subr.bf16.mxu0 0
        %4990 = vmatpush1.bf16.msra.mxu0 0
        %4991 = vmatprep.subr.bf16.mxu0 0
        %4992 = vmatpush1.bf16.msra.mxu0 0
        %4993 = vmatprep.subr.bf16.mxu0 0
        %4994 = vmatpush1.bf16.msra.mxu0 0
        %4995 = vmatprep.subr.bf16.mxu0 0
        %4996 = vmatpush1.bf16.msra.mxu0 0
        %4997 = vmatprep.subr.bf16.mxu0 0
        %4998 = vmatpush1.bf16.msra.mxu0 0
        %4999 = vmatprep.subr.bf16.mxu0 0
        %5000 = vmatpush1.bf16.msra.mxu0 0
        %5001 = vmatprep.subr.bf16.mxu0 0
        %5002 = vmatpush1.bf16.msra.mxu0 0
        %5003 = vmatprep.subr.bf16.mxu0 0
        %5004 = vmatpush1.bf16.msra.mxu0 0
        %5005 = vmatprep.subr.bf16.mxu0 0
        %5006 = vmatpush1.bf16.msra.mxu0 0
        %5007 = vmatprep.mubr.bf16.mxu0 0
        %5008 = vmatmul.mubr.bf16.gmra.mrb[0].mxu0 %v4773
        %v5009 = vpop.f32.mrb[0].mxu0
        %v5010 = vadd.f32 0.0, %v5009
        %v5011 = vpop.f32.mrb[0].mxu0
        %v5012 = vpop.f32.mrb[0].mxu0
        %v5013 = vadd.f32 0.0, %v5012
        %v5014 = vpop.f32.mrb[0].mxu0
        %5015 = vmatprep.mubr.bf16.mxu0 0
        %5016 = vmatmul.mubr.bf16.gmra.mrb[0].mxu0 %v4776
        %v5017 = vpop.f32.mrb[0].mxu0
        %v5018 = vadd.f32 0.0, %v5017
        %v5019 = vpop.f32.mrb[0].mxu0
        %v5020 = vpop.f32.mrb[0].mxu0
        %v5021 = vadd.f32 0.0, %v5020
        %v5022 = vpop.f32.mrb[0].mxu0
        %5023 = vmatprep.mubr.bf16.mxu0 0
        %5024 = vmatmul.mubr.bf16.gmra.mrb[0].mxu0 %v4779
        %v5025 = vpop.f32.mrb[0].mxu0
        %v5026 = vadd.f32 0.0, %v5025
        %v5027 = vpop.f32.mrb[0].mxu0
        %v5028 = vpop.f32.mrb[0].mxu0
        %v5029 = vadd.f32 0.0, %v5028
        %v5030 = vpop.f32.mrb[0].mxu0
        %5031 = vmatprep.mubr.bf16.mxu0 0
        %5032 = vmatmul.mubr.bf16.gmra.mrb[0].mxu0 %v4782
        %v5033 = vpop.f32.mrb[0].mxu0
        %v5034 = vadd.f32 0.0, %v5033
        %v5035 = vpop.f32.mrb[0].mxu0
        %v5036 = vpop.f32.mrb[0].mxu0
        %v5037 = vadd.f32 0.0, %v5036
        %v5038 = vpop.f32.mrb[0].mxu0
        %5039 = vmatprep.mubr.bf16.mxu0 0
        %5040 = vmatmul.mubr.bf16.gmra.mrb[0].mxu0 %v4785
        %v5041 = vpop.f32.mrb[0].mxu0
        %v5042 = vadd.f32 0.0, %v5041
        %v5043 = vpop.f32.mrb[0].mxu0
        %v5044 = vpop.f32.mrb[0].mxu0
        %v5045 = vadd.f32 0.0, %v5044
        %v5046 = vpop.f32.mrb[0].mxu0
        %5047 = vmatprep.mubr.bf16.mxu0 0
        %5048 = vmatmul.mubr.bf16.gmra.mrb[0].mxu0 %v4961
        %v5049 = vpop.f32.mrb[0].mxu0
        %v5050 = vadd.f32 0.0, %v5049
        %v5051 = vpop.f32.mrb[0].mxu0
        %v5052 = vpop.f32.mrb[0].mxu0
        %v5053 = vadd.f32 0.0, %v5052
        %v5054 = vpop.f32.mrb[0].mxu0
        %5055 = vmatprep.mubr.bf16.mxu0 0
        %5056 = vmatmul.mubr.bf16.gmra.mrb[0].mxu0 %v4964
        %v5057 = vpop.f32.mrb[0].mxu0
        %v5058 = vadd.f32 0.0, %v5057
        %v5059 = vpop.f32.mrb[0].mxu0
        %v5060 = vpop.f32.mrb[0].mxu0
        %v5061 = vadd.f32 0.0, %v5060
        %v5062 = vpop.f32.mrb[0].mxu0
        %5063 = vmatprep.mubr.bf16.mxu0 0
        %5064 = vmatmul.mubr.bf16.gmra.mrb[0].mxu0 %v4967
        %v5065 = vpop.f32.mrb[0].mxu0
        %v5066 = vadd.f32 0.0, %v5065
        %v5067 = vpop.f32.mrb[0].mxu0
        %v5068 = vpop.f32.mrb[0].mxu0
        %v5069 = vadd.f32 0.0, %v5068
        %v5070 = vpop.f32.mrb[0].mxu0
        %5071 = vmatprep.mubr.bf16.mxu0 0
        %5072 = vmatmul.mubr.bf16.gmra.mrb[0].mxu0 %v4970
        %v5073 = vpop.f32.mrb[0].mxu0
        %v5074 = vadd.f32 0.0, %v5073
        %v5075 = vpop.f32.mrb[0].mxu0
        %v5076 = vpop.f32.mrb[0].mxu0
        %v5077 = vadd.f32 0.0, %v5076
        %v5078 = vpop.f32.mrb[0].mxu0
        %5079 = vmatprep.mubr.bf16.mxu0 0
        %5080 = vmatmul.mubr.bf16.gmra.mrb[0].mxu0 %v4973
        %v5081 = vpop.f32.mrb[0].mxu0
        %v5082 = vadd.f32 0.0, %v5081
        %v5083 = vpop.f32.mrb[0].mxu0
        %v5084 = vpop.f32.mrb[0].mxu0
        %v5085 = vadd.f32 0.0, %v5084
        %v5086 = vpop.f32.mrb[0].mxu0
        %5087 = vdwg.mxu0
        %v5088 = vadd.f32 %v4900, %v5010
        %v5089 = vadd.f32 %v4901, %v5013
        %v5090 = vadd.f32 %v4902, %v5018
        %v5091 = vadd.f32 %v4903, %v5021
        %v5092 = vadd.f32 %v4904, %v5026
        %v5093 = vadd.f32 %v4905, %v5029
        %v5094 = vadd.f32 %v4906, %v5034
        %v5095 = vadd.f32 %v4907, %v5037
        %v5096 = vadd.f32 %v4908, %v5042
        %v5097 = vadd.f32 %v4909, %v5045
        %v5098 = vadd.f32 %v4910, %v5050
        %v5099 = vadd.f32 %v4911, %v5053
        %v5100 = vadd.f32 %v4912, %v5058
        %v5101 = vadd.f32 %v4913, %v5061
        %v5102 = vadd.f32 %v4914, %v5066
        %v5103 = vadd.f32 %v4915, %v5069
        %v5104 = vadd.f32 %v4916, %v5074
        %v5105 = vadd.f32 %v4917, %v5077
        %v5106 = vadd.f32 %v4918, %v5082
        %v5107 = vadd.f32 %v4919, %v5085
        %v5108 = vrot.slane %v4696, 5
        %v5109 = vrot.slane %v5108, 4
        %v5110 = vrot.slane %v4697, 5
        %v5111 = vsel %vm4031, %v5109, %v5110
        %v5112 = vrot.slane %v4698, 5
        %v5113 = vrot.slane %v5112, 4
        %v5114 = vrot.slane %v4699, 5
        %v5115 = vsel %vm4031, %v5113, %v5114
        %s5116 = scalar_lea.vmem %s3, 144
        %v5117 = vld [vmem:[%s5116] sm:$0xf]
        %v5118 = vld [vmem:[%s5116 + $0x4] sm:$0xf]
        %v5119 = vld [vmem:[%s5116 + $0x8] sm:$0xf]
        %v5120 = vld [vmem:[%s5116 + $0xc] sm:$0xf]
        %v5121 = vunpack.c.l.b16 %v5111
        %v5122 = vunpack.c.l.b16 %v5115
        %v5123 = vpack.c.b16 %v4119, %v4118
        %v5124 = vpack.c.b16 %v4121, %v4120
        %v5125 = vpack.c.b16 %v4123, %v4122
        %v5126 = vpack.c.b16 %v4125, %v4124
        %v5127 = vpack.c.b16 %v5121, %v4126
        %v5128 = vpack.c.b16 %v4129, %v4128
        %v5129 = vpack.c.b16 %v4131, %v4130
        %v5130 = vpack.c.b16 %v4133, %v4132
        %v5131 = vpack.c.b16 %v4135, %v4134
        %v5132 = vpack.c.b16 %v5122, %v4136
        %v5137 = vunpack.c.l.b16 %v5117
        %v5138 = vunpack.c.l.b16 %v5118
        %v5139 = vunpack.c.l.b16 %v5119
        %v5140 = vunpack.c.l.b16 %v5120
        %v5141 = vpack.c.b16 %v5138, %v5137
        %v5142 = vpack.c.b16 %v5140, %v5139
        %v5146 = vsel %vm2817, %v5123, 0
        %v5149 = vsel %vm2817, %v5124, 0
        %v5152 = vsel %vm2817, %v5125, 0
        %v5155 = vsel %vm2817, %v5126, 0
        %v5158 = vsel %vm2817, %v5127, 0
        %v5161 = vsel %vm2817, %v5128, 0
        %v5164 = vsel %vm2817, %v5129, 0
        %v5167 = vsel %vm2817, %v5130, 0
        %v5170 = vsel %vm2817, %v5131, 0
        %v5173 = vsel %vm2817, %v5132, 0
        %5175 = vmatprep.subr.bf16.mxu0 0
        %5176 = vmatpush1.bf16.msra.mxu0 %v5141
        %5177 = vmatprep.subr.bf16.mxu0 0
        %5178 = vmatpush1.bf16.msra.mxu0 %v5142
        %5179 = vmatprep.subr.bf16.mxu0 0
        %5180 = vmatpush1.bf16.msra.mxu0 0
        %5181 = vmatprep.subr.bf16.mxu0 0
        %5182 = vmatpush1.bf16.msra.mxu0 0
        %5183 = vmatprep.subr.bf16.mxu0 0
        %5184 = vmatpush1.bf16.msra.mxu0 0
        %5185 = vmatprep.subr.bf16.mxu0 0
        %5186 = vmatpush1.bf16.msra.mxu0 0
        %5187 = vmatprep.subr.bf16.mxu0 0
        %5188 = vmatpush1.bf16.msra.mxu0 0
        %5189 = vmatprep.subr.bf16.mxu0 0
        %5190 = vmatpush1.bf16.msra.mxu0 0
        %5191 = vmatprep.subr.bf16.mxu0 0
        %5192 = vmatpush1.bf16.msra.mxu0 0
        %5193 = vmatprep.subr.bf16.mxu0 0
        %5194 = vmatpush1.bf16.msra.mxu0 0
        %5195 = vmatprep.subr.bf16.mxu0 0
        %5196 = vmatpush1.bf16.msra.mxu0 0
        %5197 = vmatprep.subr.bf16.mxu0 0
        %5198 = vmatpush1.bf16.msra.mxu0 0
        %5199 = vmatprep.subr.bf16.mxu0 0
        %5200 = vmatpush1.bf16.msra.mxu0 0
        %5201 = vmatprep.subr.bf16.mxu0 0
        %5202 = vmatpush1.bf16.msra.mxu0 0
        %5203 = vmatprep.subr.bf16.mxu0 0
        %5204 = vmatpush1.bf16.msra.mxu0 0
        %5205 = vmatprep.subr.bf16.mxu0 0
        %5206 = vmatpush1.bf16.msra.mxu0 0
        %5207 = vmatprep.mubr.bf16.mxu0 0
        %5208 = vmatmul.mubr.bf16.gmra.mrb[0].mxu0 %v5146
        %v5209 = vpop.f32.mrb[0].mxu0
        %v5210 = vadd.f32 0.0, %v5209
        %v5211 = vpop.f32.mrb[0].mxu0
        %v5212 = vpop.f32.mrb[0].mxu0
        %v5213 = vadd.f32 0.0, %v5212
        %v5214 = vpop.f32.mrb[0].mxu0
        %5215 = vmatprep.mubr.bf16.mxu0 0
        %5216 = vmatmul.mubr.bf16.gmra.mrb[0].mxu0 %v5149
        %v5217 = vpop.f32.mrb[0].mxu0
        %v5218 = vadd.f32 0.0, %v5217
        %v5219 = vpop.f32.mrb[0].mxu0
        %v5220 = vpop.f32.mrb[0].mxu0
        %v5221 = vadd.f32 0.0, %v5220
        %v5222 = vpop.f32.mrb[0].mxu0
        %5223 = vmatprep.mubr.bf16.mxu0 0
        %5224 = vmatmul.mubr.bf16.gmra.mrb[0].mxu0 %v5152
        %v5225 = vpop.f32.mrb[0].mxu0
        %v5226 = vadd.f32 0.0, %v5225
        %v5227 = vpop.f32.mrb[0].mxu0
        %v5228 = vpop.f32.mrb[0].mxu0
        %v5229 = vadd.f32 0.0, %v5228
        %v5230 = vpop.f32.mrb[0].mxu0
        %5231 = vmatprep.mubr.bf16.mxu0 0
        %5232 = vmatmul.mubr.bf16.gmra.mrb[0].mxu0 %v5155
        %v5233 = vpop.f32.mrb[0].mxu0
        %v5234 = vadd.f32 0.0, %v5233
        %v5235 = vpop.f32.mrb[0].mxu0
        %v5236 = vpop.f32.mrb[0].mxu0
        %v5237 = vadd.f32 0.0, %v5236
        %v5238 = vpop.f32.mrb[0].mxu0
        %5239 = vmatprep.mubr.bf16.mxu0 0
        %5240 = vmatmul.mubr.bf16.gmra.mrb[0].mxu0 %v5158
        %v5241 = vpop.f32.mrb[0].mxu0
        %v5242 = vadd.f32 0.0, %v5241
        %v5243 = vpop.f32.mrb[0].mxu0
        %v5244 = vpop.f32.mrb[0].mxu0
        %v5245 = vadd.f32 0.0, %v5244
        %v5246 = vpop.f32.mrb[0].mxu0
        %5247 = vmatprep.mubr.bf16.mxu0 0
        %5248 = vmatmul.mubr.bf16.gmra.mrb[0].mxu0 %v5161
        %v5249 = vpop.f32.mrb[0].mxu0
        %v5250 = vadd.f32 0.0, %v5249
        %v5251 = vpop.f32.mrb[0].mxu0
        %v5252 = vpop.f32.mrb[0].mxu0
        %v5253 = vadd.f32 0.0, %v5252
        %v5254 = vpop.f32.mrb[0].mxu0
        %5255 = vmatprep.mubr.bf16.mxu0 0
        %5256 = vmatmul.mubr.bf16.gmra.mrb[0].mxu0 %v5164
        %v5257 = vpop.f32.mrb[0].mxu0
        %v5258 = vadd.f32 0.0, %v5257
        %v5259 = vpop.f32.mrb[0].mxu0
        %v5260 = vpop.f32.mrb[0].mxu0
        %v5261 = vadd.f32 0.0, %v5260
        %v5262 = vpop.f32.mrb[0].mxu0
        %5263 = vmatprep.mubr.bf16.mxu0 0
        %5264 = vmatmul.mubr.bf16.gmra.mrb[0].mxu0 %v5167
        %v5265 = vpop.f32.mrb[0].mxu0
        %v5266 = vadd.f32 0.0, %v5265
        %v5267 = vpop.f32.mrb[0].mxu0
        %v5268 = vpop.f32.mrb[0].mxu0
        %v5269 = vadd.f32 0.0, %v5268
        %v5270 = vpop.f32.mrb[0].mxu0
        %5271 = vmatprep.mubr.bf16.mxu0 0
        %5272 = vmatmul.mubr.bf16.gmra.mrb[0].mxu0 %v5170
        %v5273 = vpop.f32.mrb[0].mxu0
        %v5274 = vadd.f32 0.0, %v5273
        %v5275 = vpop.f32.mrb[0].mxu0
        %v5276 = vpop.f32.mrb[0].mxu0
        %v5277 = vadd.f32 0.0, %v5276
        %v5278 = vpop.f32.mrb[0].mxu0
        %5279 = vmatprep.mubr.bf16.mxu0 0
        %5280 = vmatmul.mubr.bf16.gmra.mrb[0].mxu0 %v5173
        %v5281 = vpop.f32.mrb[0].mxu0
        %v5282 = vadd.f32 0.0, %v5281
        %v5283 = vpop.f32.mrb[0].mxu0
        %v5284 = vpop.f32.mrb[0].mxu0
        %v5285 = vadd.f32 0.0, %v5284
        %v5286 = vpop.f32.mrb[0].mxu0
        %5287 = vdwg.mxu0
        %v5288 = vadd.f32 %v5088, %v5210
        %v5289 = vadd.f32 %v5089, %v5213
        %v5290 = vadd.f32 %v5090, %v5218
        %v5291 = vadd.f32 %v5091, %v5221
        %v5292 = vadd.f32 %v5092, %v5226
        %v5293 = vadd.f32 %v5093, %v5229
        %v5294 = vadd.f32 %v5094, %v5234
        %v5295 = vadd.f32 %v5095, %v5237
        %v5296 = vadd.f32 %v5096, %v5242
        %v5297 = vadd.f32 %v5097, %v5245
        %v5298 = vadd.f32 %v5098, %v5250
        %v5299 = vadd.f32 %v5099, %v5253
        %v5300 = vadd.f32 %v5100, %v5258
        %v5301 = vadd.f32 %v5101, %v5261
        %v5302 = vadd.f32 %v5102, %v5266
        %v5303 = vadd.f32 %v5103, %v5269
        %v5304 = vadd.f32 %v5104, %v5274
        %v5305 = vadd.f32 %v5105, %v5277
        %v5306 = vadd.f32 %v5106, %v5282
        %v5307 = vadd.f32 %v5107, %v5285
        %s5308 = scalar_lea.vmem %s3, 160
        %v5309 = vld [vmem:[%s5308] sm:$0xf]
        %v5310 = vld [vmem:[%s5308 + $0x4] sm:$0xf]
        %v5311 = vld [vmem:[%s5308 + $0x8] sm:$0xf]
        %v5312 = vld [vmem:[%s5308 + $0xc] sm:$0xf]
        %v5315 = vunpack.c.l.b16 %v2613
        %v5316 = vunpack.c.l.b16 %v2683
        %v5317 = vpack.c.b16 %v5315, %v4329
        %v5318 = vpack.c.b16 %v5316, %v4330
        %v5323 = vunpack.c.l.b16 %v5309
        %v5324 = vunpack.c.l.b16 %v5310
        %v5325 = vunpack.c.l.b16 %v5311
        %v5326 = vunpack.c.l.b16 %v5312
        %v5327 = vpack.c.b16 %v5324, %v5323
        %v5328 = vpack.c.b16 %v5326, %v5325
        %v5332 = vsel %vm2817, %v5317, 0
        %v5335 = vsel %vm2817, %v5318, 0
        %5337 = vmatprep.subr.bf16.mxu0 0
        %5338 = vmatpush1.bf16.msra.mxu0 %v5327
        %5339 = vmatprep.subr.bf16.mxu0 0
        %5340 = vmatpush1.bf16.msra.mxu0 %v5328
        %5341 = vmatprep.subr.bf16.mxu0 0
        %5342 = vmatpush1.bf16.msra.mxu0 0
        %5343 = vmatprep.subr.bf16.mxu0 0
        %5344 = vmatpush1.bf16.msra.mxu0 0
        %5345 = vmatprep.subr.bf16.mxu0 0
        %5346 = vmatpush1.bf16.msra.mxu0 0
        %5347 = vmatprep.subr.bf16.mxu0 0
        %5348 = vmatpush1.bf16.msra.mxu0 0
        %5349 = vmatprep.subr.bf16.mxu0 0
        %5350 = vmatpush1.bf16.msra.mxu0 0
        %5351 = vmatprep.subr.bf16.mxu0 0
        %5352 = vmatpush1.bf16.msra.mxu0 0
        %5353 = vmatprep.subr.bf16.mxu0 0
        %5354 = vmatpush1.bf16.msra.mxu0 0
        %5355 = vmatprep.subr.bf16.mxu0 0
        %5356 = vmatpush1.bf16.msra.mxu0 0
        %5357 = vmatprep.subr.bf16.mxu0 0
        %5358 = vmatpush1.bf16.msra.mxu0 0
        %5359 = vmatprep.subr.bf16.mxu0 0
        %5360 = vmatpush1.bf16.msra.mxu0 0
        %5361 = vmatprep.subr.bf16.mxu0 0
        %5362 = vmatpush1.bf16.msra.mxu0 0
        %5363 = vmatprep.subr.bf16.mxu0 0
        %5364 = vmatpush1.bf16.msra.mxu0 0
        %5365 = vmatprep.subr.bf16.mxu0 0
        %5366 = vmatpush1.bf16.msra.mxu0 0
        %5367 = vmatprep.subr.bf16.mxu0 0
        %5368 = vmatpush1.bf16.msra.mxu0 0
        %5369 = vmatprep.mubr.bf16.mxu0 0
        %5370 = vmatmul.mubr.bf16.gmra.mrb[0].mxu0 %v3002
        %v5371 = vpop.f32.mrb[0].mxu0
        %v5372 = vadd.f32 0.0, %v5371
        %v5373 = vpop.f32.mrb[0].mxu0
        %v5374 = vpop.f32.mrb[0].mxu0
        %v5375 = vadd.f32 0.0, %v5374
        %v5376 = vpop.f32.mrb[0].mxu0
        %5377 = vmatprep.mubr.bf16.mxu0 0
        %5378 = vmatmul.mubr.bf16.gmra.mrb[0].mxu0 %v3005
        %v5379 = vpop.f32.mrb[0].mxu0
        %v5380 = vadd.f32 0.0, %v5379
        %v5381 = vpop.f32.mrb[0].mxu0
        %v5382 = vpop.f32.mrb[0].mxu0
        %v5383 = vadd.f32 0.0, %v5382
        %v5384 = vpop.f32.mrb[0].mxu0
        %5385 = vmatprep.mubr.bf16.mxu0 0
        %5386 = vmatmul.mubr.bf16.gmra.mrb[0].mxu0 %v3008
        %v5387 = vpop.f32.mrb[0].mxu0
        %v5388 = vadd.f32 0.0, %v5387
        %v5389 = vpop.f32.mrb[0].mxu0
        %v5390 = vpop.f32.mrb[0].mxu0
        %v5391 = vadd.f32 0.0, %v5390
        %v5392 = vpop.f32.mrb[0].mxu0
        %5393 = vmatprep.mubr.bf16.mxu0 0
        %5394 = vmatmul.mubr.bf16.gmra.mrb[0].mxu0 %v3011
        %v5395 = vpop.f32.mrb[0].mxu0
        %v5396 = vadd.f32 0.0, %v5395
        %v5397 = vpop.f32.mrb[0].mxu0
        %v5398 = vpop.f32.mrb[0].mxu0
        %v5399 = vadd.f32 0.0, %v5398
        %v5400 = vpop.f32.mrb[0].mxu0
        %5401 = vmatprep.mubr.bf16.mxu0 0
        %5402 = vmatmul.mubr.bf16.gmra.mrb[0].mxu0 %v5332
        %v5403 = vpop.f32.mrb[0].mxu0
        %v5404 = vadd.f32 0.0, %v5403
        %v5405 = vpop.f32.mrb[0].mxu0
        %v5406 = vpop.f32.mrb[0].mxu0
        %v5407 = vadd.f32 0.0, %v5406
        %v5408 = vpop.f32.mrb[0].mxu0
        %5409 = vmatprep.mubr.bf16.mxu0 0
        %5410 = vmatmul.mubr.bf16.gmra.mrb[0].mxu0 %v2822
        %v5411 = vpop.f32.mrb[0].mxu0
        %v5412 = vadd.f32 0.0, %v5411
        %v5413 = vpop.f32.mrb[0].mxu0
        %v5414 = vpop.f32.mrb[0].mxu0
        %v5415 = vadd.f32 0.0, %v5414
        %v5416 = vpop.f32.mrb[0].mxu0
        %5417 = vmatprep.mubr.bf16.mxu0 0
        %5418 = vmatmul.mubr.bf16.gmra.mrb[0].mxu0 %v2825
        %v5419 = vpop.f32.mrb[0].mxu0
        %v5420 = vadd.f32 0.0, %v5419
        %v5421 = vpop.f32.mrb[0].mxu0
        %v5422 = vpop.f32.mrb[0].mxu0
        %v5423 = vadd.f32 0.0, %v5422
        %v5424 = vpop.f32.mrb[0].mxu0
        %5425 = vmatprep.mubr.bf16.mxu0 0
        %5426 = vmatmul.mubr.bf16.gmra.mrb[0].mxu0 %v2828
        %v5427 = vpop.f32.mrb[0].mxu0
        %v5428 = vadd.f32 0.0, %v5427
        %v5429 = vpop.f32.mrb[0].mxu0
        %v5430 = vpop.f32.mrb[0].mxu0
        %v5431 = vadd.f32 0.0, %v5430
        %v5432 = vpop.f32.mrb[0].mxu0
        %5433 = vmatprep.mubr.bf16.mxu0 0
        %5434 = vmatmul.mubr.bf16.gmra.mrb[0].mxu0 %v2831
        %v5435 = vpop.f32.mrb[0].mxu0
        %v5436 = vadd.f32 0.0, %v5435
        %v5437 = vpop.f32.mrb[0].mxu0
        %v5438 = vpop.f32.mrb[0].mxu0
        %v5439 = vadd.f32 0.0, %v5438
        %v5440 = vpop.f32.mrb[0].mxu0
        %5441 = vmatprep.mubr.bf16.mxu0 0
        %5442 = vmatmul.mubr.bf16.gmra.mrb[0].mxu0 %v5335
        %v5443 = vpop.f32.mrb[0].mxu0
        %v5444 = vadd.f32 0.0, %v5443
        %v5445 = vpop.f32.mrb[0].mxu0
        %v5446 = vpop.f32.mrb[0].mxu0
        %v5447 = vadd.f32 0.0, %v5446
        %v5448 = vpop.f32.mrb[0].mxu0
        %5449 = vdwg.mxu0
        %v5450 = vadd.f32 %v5288, %v5372
        %v5451 = vadd.f32 %v5289, %v5375
        %v5452 = vadd.f32 %v5290, %v5380
        %v5453 = vadd.f32 %v5291, %v5383
        %v5454 = vadd.f32 %v5292, %v5388
        %v5455 = vadd.f32 %v5293, %v5391
        %v5456 = vadd.f32 %v5294, %v5396
        %v5457 = vadd.f32 %v5295, %v5399
        %v5458 = vadd.f32 %v5296, %v5404
        %v5459 = vadd.f32 %v5297, %v5407
        %v5460 = vadd.f32 %v5298, %v5412
        %v5461 = vadd.f32 %v5299, %v5415
        %v5462 = vadd.f32 %v5300, %v5420
        %v5463 = vadd.f32 %v5301, %v5423
        %v5464 = vadd.f32 %v5302, %v5428
        %v5465 = vadd.f32 %v5303, %v5431
        %v5466 = vadd.f32 %v5304, %v5436
        %v5467 = vadd.f32 %v5305, %v5439
        %v5468 = vadd.f32 %v5306, %v5444
        %v5469 = vadd.f32 %v5307, %v5447
        %v5471 = vshrl.u32 %v2613, 16
        %v5473 = vshll.u32 %v2613, 16
        %v5475 = vrot.slane %v5473, 1
        %v5476 = vor.u32 %v5471, %v5475
        %s5477 = scalar_lea.vmem %s3, 176
        %v5478 = vld [vmem:[%s5477] sm:$0xf]
        %v5479 = vld [vmem:[%s5477 + $0x4] sm:$0xf]
        %v5480 = vld [vmem:[%s5477 + $0x8] sm:$0xf]
        %v5481 = vld [vmem:[%s5477 + $0xc] sm:$0xf]
        %v5482 = vunpack.c.l.b16 %v5476
        %v5483 = vpack.c.b16 %v5482, %v4528
        %v5488 = vunpack.c.l.b16 %v5478
        %v5489 = vunpack.c.l.b16 %v5479
        %v5490 = vunpack.c.l.b16 %v5480
        %v5491 = vunpack.c.l.b16 %v5481
        %v5492 = vpack.c.b16 %v5489, %v5488
        %v5493 = vpack.c.b16 %v5491, %v5490
        %v5497 = vsel %vm2817, %v5483, 0
        %5499 = vmatprep.subr.bf16.mxu0 0
        %5500 = vmatpush1.bf16.msra.mxu0 %v5492
        %5501 = vmatprep.subr.bf16.mxu0 0
        %5502 = vmatpush1.bf16.msra.mxu0 %v5493
        %5503 = vmatprep.subr.bf16.mxu0 0
        %5504 = vmatpush1.bf16.msra.mxu0 0
        %5505 = vmatprep.subr.bf16.mxu0 0
        %5506 = vmatpush1.bf16.msra.mxu0 0
        %5507 = vmatprep.subr.bf16.mxu0 0
        %5508 = vmatpush1.bf16.msra.mxu0 0
        %5509 = vmatprep.subr.bf16.mxu0 0
        %5510 = vmatpush1.bf16.msra.mxu0 0
        %5511 = vmatprep.subr.bf16.mxu0 0
        %5512 = vmatpush1.bf16.msra.mxu0 0
        %5513 = vmatprep.subr.bf16.mxu0 0
        %5514 = vmatpush1.bf16.msra.mxu0 0
        %5515 = vmatprep.subr.bf16.mxu0 0
        %5516 = vmatpush1.bf16.msra.mxu0 0
        %5517 = vmatprep.subr.bf16.mxu0 0
        %5518 = vmatpush1.bf16.msra.mxu0 0
        %5519 = vmatprep.subr.bf16.mxu0 0
        %5520 = vmatpush1.bf16.msra.mxu0 0
        %5521 = vmatprep.subr.bf16.mxu0 0
        %5522 = vmatpush1.bf16.msra.mxu0 0
        %5523 = vmatprep.subr.bf16.mxu0 0
        %5524 = vmatpush1.bf16.msra.mxu0 0
        %5525 = vmatprep.subr.bf16.mxu0 0
        %5526 = vmatpush1.bf16.msra.mxu0 0
        %5527 = vmatprep.subr.bf16.mxu0 0
        %5528 = vmatpush1.bf16.msra.mxu0 0
        %5529 = vmatprep.subr.bf16.mxu0 0
        %5530 = vmatpush1.bf16.msra.mxu0 0
        %5531 = vmatprep.mubr.bf16.mxu0 0
        %5532 = vmatmul.mubr.bf16.gmra.mrb[0].mxu0 %v2822
        %v5533 = vpop.f32.mrb[0].mxu0
        %v5534 = vadd.f32 0.0, %v5533
        %v5535 = vpop.f32.mrb[0].mxu0
        %v5536 = vpop.f32.mrb[0].mxu0
        %v5537 = vadd.f32 0.0, %v5536
        %v5538 = vpop.f32.mrb[0].mxu0
        %5539 = vmatprep.mubr.bf16.mxu0 0
        %5540 = vmatmul.mubr.bf16.gmra.mrb[0].mxu0 %v2825
        %v5541 = vpop.f32.mrb[0].mxu0
        %v5542 = vadd.f32 0.0, %v5541
        %v5543 = vpop.f32.mrb[0].mxu0
        %v5544 = vpop.f32.mrb[0].mxu0
        %v5545 = vadd.f32 0.0, %v5544
        %v5546 = vpop.f32.mrb[0].mxu0
        %5547 = vmatprep.mubr.bf16.mxu0 0
        %5548 = vmatmul.mubr.bf16.gmra.mrb[0].mxu0 %v2828
        %v5549 = vpop.f32.mrb[0].mxu0
        %v5550 = vadd.f32 0.0, %v5549
        %v5551 = vpop.f32.mrb[0].mxu0
        %v5552 = vpop.f32.mrb[0].mxu0
        %v5553 = vadd.f32 0.0, %v5552
        %v5554 = vpop.f32.mrb[0].mxu0
        %5555 = vmatprep.mubr.bf16.mxu0 0
        %5556 = vmatmul.mubr.bf16.gmra.mrb[0].mxu0 %v2831
        %v5557 = vpop.f32.mrb[0].mxu0
        %v5558 = vadd.f32 0.0, %v5557
        %v5559 = vpop.f32.mrb[0].mxu0
        %v5560 = vpop.f32.mrb[0].mxu0
        %v5561 = vadd.f32 0.0, %v5560
        %v5562 = vpop.f32.mrb[0].mxu0
        %5563 = vmatprep.mubr.bf16.mxu0 0
        %5564 = vmatmul.mubr.bf16.gmra.mrb[0].mxu0 %v5335
        %v5565 = vpop.f32.mrb[0].mxu0
        %v5566 = vadd.f32 0.0, %v5565
        %v5567 = vpop.f32.mrb[0].mxu0
        %v5568 = vpop.f32.mrb[0].mxu0
        %v5569 = vadd.f32 0.0, %v5568
        %v5570 = vpop.f32.mrb[0].mxu0
        %5571 = vmatprep.mubr.bf16.mxu0 0
        %5572 = vmatmul.mubr.bf16.gmra.mrb[0].mxu0 %v2837
        %v5573 = vpop.f32.mrb[0].mxu0
        %v5574 = vadd.f32 0.0, %v5573
        %v5575 = vpop.f32.mrb[0].mxu0
        %v5576 = vpop.f32.mrb[0].mxu0
        %v5577 = vadd.f32 0.0, %v5576
        %v5578 = vpop.f32.mrb[0].mxu0
        %5579 = vmatprep.mubr.bf16.mxu0 0
        %5580 = vmatmul.mubr.bf16.gmra.mrb[0].mxu0 %v2840
        %v5581 = vpop.f32.mrb[0].mxu0
        %v5582 = vadd.f32 0.0, %v5581
        %v5583 = vpop.f32.mrb[0].mxu0
        %v5584 = vpop.f32.mrb[0].mxu0
        %v5585 = vadd.f32 0.0, %v5584
        %v5586 = vpop.f32.mrb[0].mxu0
        %5587 = vmatprep.mubr.bf16.mxu0 0
        %5588 = vmatmul.mubr.bf16.gmra.mrb[0].mxu0 %v2843
        %v5589 = vpop.f32.mrb[0].mxu0
        %v5590 = vadd.f32 0.0, %v5589
        %v5591 = vpop.f32.mrb[0].mxu0
        %v5592 = vpop.f32.mrb[0].mxu0
        %v5593 = vadd.f32 0.0, %v5592
        %v5594 = vpop.f32.mrb[0].mxu0
        %5595 = vmatprep.mubr.bf16.mxu0 0
        %5596 = vmatmul.mubr.bf16.gmra.mrb[0].mxu0 %v2846
        %v5597 = vpop.f32.mrb[0].mxu0
        %v5598 = vadd.f32 0.0, %v5597
        %v5599 = vpop.f32.mrb[0].mxu0
        %v5600 = vpop.f32.mrb[0].mxu0
        %v5601 = vadd.f32 0.0, %v5600
        %v5602 = vpop.f32.mrb[0].mxu0
        %5603 = vmatprep.mubr.bf16.mxu0 0
        %5604 = vmatmul.mubr.bf16.gmra.mrb[0].mxu0 %v5497
        %v5605 = vpop.f32.mrb[0].mxu0
        %v5606 = vadd.f32 0.0, %v5605
        %v5607 = vpop.f32.mrb[0].mxu0
        %v5608 = vpop.f32.mrb[0].mxu0
        %v5609 = vadd.f32 0.0, %v5608
        %v5610 = vpop.f32.mrb[0].mxu0
        %5611 = vdwg.mxu0
        %v5612 = vadd.f32 %v5450, %v5534
        %v5613 = vadd.f32 %v5451, %v5537
        %v5614 = vadd.f32 %v5452, %v5542
        %v5615 = vadd.f32 %v5453, %v5545
        %v5616 = vadd.f32 %v5454, %v5550
        %v5617 = vadd.f32 %v5455, %v5553
        %v5618 = vadd.f32 %v5456, %v5558
        %v5619 = vadd.f32 %v5457, %v5561
        %v5620 = vadd.f32 %v5458, %v5566
        %v5621 = vadd.f32 %v5459, %v5569
        %v5622 = vadd.f32 %v5460, %v5574
        %v5623 = vadd.f32 %v5461, %v5577
        %v5624 = vadd.f32 %v5462, %v5582
        %v5625 = vadd.f32 %v5463, %v5585
        %v5626 = vadd.f32 %v5464, %v5590
        %v5627 = vadd.f32 %v5465, %v5593
        %v5628 = vadd.f32 %v5466, %v5598
        %v5629 = vadd.f32 %v5467, %v5601
        %v5630 = vadd.f32 %v5468, %v5606
        %v5631 = vadd.f32 %v5469, %v5609
        %v5632 = vunpack.c.h.b16 %v2613
        %v5633 = vunpack.c.h.b16 %v2683
        %v5634 = vpack.c.b16 %v5315, %v5315
        %v5635 = vpack.c.b16 %v5632, %v5632
        %v5636 = vpack.c.b16 %v5316, %v5316
        %v5637 = vpack.c.b16 %v5633, %v5633
        %v5639 = vshrl.u32 %v5634, 16
        %v5641 = vrot.slane %v5639, 4
        %v5642 = vshll.u32 %v5634, 16
        %v5644 = vrot.slane %v5642, 5
        %v5645 = vor.u32 %v5641, %v5644
        %v5646 = vrot.slane %v5645, 4
        %v5648 = vshll.u32 %v5635, 16
        %v5650 = vrot.slane %v5648, 5
        %v5651 = vsel %vm3188, %v5646, %v5650
        %v5653 = vshrl.u32 %v5636, 16
        %v5655 = vrot.slane %v5653, 4
        %v5656 = vshll.u32 %v5636, 16
        %v5658 = vrot.slane %v5656, 5
        %v5659 = vor.u32 %v5655, %v5658
        %v5660 = vrot.slane %v5659, 4
        %v5662 = vshll.u32 %v5637, 16
        %v5664 = vrot.slane %v5662, 5
        %v5665 = vsel %vm3188, %v5660, %v5664
        %s5666 = scalar_lea.vmem %s3, 192
        %v5667 = vld [vmem:[%s5666] sm:$0xf]
        %v5668 = vld [vmem:[%s5666 + $0x4] sm:$0xf]
        %v5669 = vld [vmem:[%s5666 + $0x8] sm:$0xf]
        %v5670 = vld [vmem:[%s5666 + $0xc] sm:$0xf]
        %v5671 = vunpack.c.l.b16 %v5651
        %v5672 = vunpack.c.l.b16 %v5665
        %v5673 = vpack.c.b16 %v5671, %v4733
        %v5674 = vpack.c.b16 %v5672, %v4734
        %v5679 = vunpack.c.l.b16 %v5667
        %v5680 = vunpack.c.l.b16 %v5668
        %v5681 = vunpack.c.l.b16 %v5669
        %v5682 = vunpack.c.l.b16 %v5670
        %v5683 = vpack.c.b16 %v5680, %v5679
        %v5684 = vpack.c.b16 %v5682, %v5681
        %v5688 = vsel %vm2817, %v5673, 0
        %v5691 = vsel %vm2817, %v5674, 0
        %5693 = vmatprep.subr.bf16.mxu0 0
        %5694 = vmatpush1.bf16.msra.mxu0 %v5683
        %5695 = vmatprep.subr.bf16.mxu0 0
        %5696 = vmatpush1.bf16.msra.mxu0 %v5684
        %5697 = vmatprep.subr.bf16.mxu0 0
        %5698 = vmatpush1.bf16.msra.mxu0 0
        %5699 = vmatprep.subr.bf16.mxu0 0
        %5700 = vmatpush1.bf16.msra.mxu0 0
        %5701 = vmatprep.subr.bf16.mxu0 0
        %5702 = vmatpush1.bf16.msra.mxu0 0
        %5703 = vmatprep.subr.bf16.mxu0 0
        %5704 = vmatpush1.bf16.msra.mxu0 0
        %5705 = vmatprep.subr.bf16.mxu0 0
        %5706 = vmatpush1.bf16.msra.mxu0 0
        %5707 = vmatprep.subr.bf16.mxu0 0
        %5708 = vmatpush1.bf16.msra.mxu0 0
        %5709 = vmatprep.subr.bf16.mxu0 0
        %5710 = vmatpush1.bf16.msra.mxu0 0
        %5711 = vmatprep.subr.bf16.mxu0 0
        %5712 = vmatpush1.bf16.msra.mxu0 0
        %5713 = vmatprep.subr.bf16.mxu0 0
        %5714 = vmatpush1.bf16.msra.mxu0 0
        %5715 = vmatprep.subr.bf16.mxu0 0
        %5716 = vmatpush1.bf16.msra.mxu0 0
        %5717 = vmatprep.subr.bf16.mxu0 0
        %5718 = vmatpush1.bf16.msra.mxu0 0
        %5719 = vmatprep.subr.bf16.mxu0 0
        %5720 = vmatpush1.bf16.msra.mxu0 0
        %5721 = vmatprep.subr.bf16.mxu0 0
        %5722 = vmatpush1.bf16.msra.mxu0 0
        %5723 = vmatprep.subr.bf16.mxu0 0
        %5724 = vmatpush1.bf16.msra.mxu0 0
        %5725 = vmatprep.mubr.bf16.mxu0 0
        %5726 = vmatmul.mubr.bf16.gmra.mrb[0].mxu0 %v3520
        %v5727 = vpop.f32.mrb[0].mxu0
        %v5728 = vadd.f32 0.0, %v5727
        %v5729 = vpop.f32.mrb[0].mxu0
        %v5730 = vpop.f32.mrb[0].mxu0
        %v5731 = vadd.f32 0.0, %v5730
        %v5732 = vpop.f32.mrb[0].mxu0
        %5733 = vmatprep.mubr.bf16.mxu0 0
        %5734 = vmatmul.mubr.bf16.gmra.mrb[0].mxu0 %v3523
        %v5735 = vpop.f32.mrb[0].mxu0
        %v5736 = vadd.f32 0.0, %v5735
        %v5737 = vpop.f32.mrb[0].mxu0
        %v5738 = vpop.f32.mrb[0].mxu0
        %v5739 = vadd.f32 0.0, %v5738
        %v5740 = vpop.f32.mrb[0].mxu0
        %5741 = vmatprep.mubr.bf16.mxu0 0
        %5742 = vmatmul.mubr.bf16.gmra.mrb[0].mxu0 %v3526
        %v5743 = vpop.f32.mrb[0].mxu0
        %v5744 = vadd.f32 0.0, %v5743
        %v5745 = vpop.f32.mrb[0].mxu0
        %v5746 = vpop.f32.mrb[0].mxu0
        %v5747 = vadd.f32 0.0, %v5746
        %v5748 = vpop.f32.mrb[0].mxu0
        %5749 = vmatprep.mubr.bf16.mxu0 0
        %5750 = vmatmul.mubr.bf16.gmra.mrb[0].mxu0 %v3529
        %v5751 = vpop.f32.mrb[0].mxu0
        %v5752 = vadd.f32 0.0, %v5751
        %v5753 = vpop.f32.mrb[0].mxu0
        %v5754 = vpop.f32.mrb[0].mxu0
        %v5755 = vadd.f32 0.0, %v5754
        %v5756 = vpop.f32.mrb[0].mxu0
        %5757 = vmatprep.mubr.bf16.mxu0 0
        %5758 = vmatmul.mubr.bf16.gmra.mrb[0].mxu0 %v5688
        %v5759 = vpop.f32.mrb[0].mxu0
        %v5760 = vadd.f32 0.0, %v5759
        %v5761 = vpop.f32.mrb[0].mxu0
        %v5762 = vpop.f32.mrb[0].mxu0
        %v5763 = vadd.f32 0.0, %v5762
        %v5764 = vpop.f32.mrb[0].mxu0
        %5765 = vmatprep.mubr.bf16.mxu0 0
        %5766 = vmatmul.mubr.bf16.gmra.mrb[0].mxu0 %v3535
        %v5767 = vpop.f32.mrb[0].mxu0
        %v5768 = vadd.f32 0.0, %v5767
        %v5769 = vpop.f32.mrb[0].mxu0
        %v5770 = vpop.f32.mrb[0].mxu0
        %v5771 = vadd.f32 0.0, %v5770
        %v5772 = vpop.f32.mrb[0].mxu0
        %5773 = vmatprep.mubr.bf16.mxu0 0
        %5774 = vmatmul.mubr.bf16.gmra.mrb[0].mxu0 %v3538
        %v5775 = vpop.f32.mrb[0].mxu0
        %v5776 = vadd.f32 0.0, %v5775
        %v5777 = vpop.f32.mrb[0].mxu0
        %v5778 = vpop.f32.mrb[0].mxu0
        %v5779 = vadd.f32 0.0, %v5778
        %v5780 = vpop.f32.mrb[0].mxu0
        %5781 = vmatprep.mubr.bf16.mxu0 0
        %5782 = vmatmul.mubr.bf16.gmra.mrb[0].mxu0 %v3541
        %v5783 = vpop.f32.mrb[0].mxu0
        %v5784 = vadd.f32 0.0, %v5783
        %v5785 = vpop.f32.mrb[0].mxu0
        %v5786 = vpop.f32.mrb[0].mxu0
        %v5787 = vadd.f32 0.0, %v5786
        %v5788 = vpop.f32.mrb[0].mxu0
        %5789 = vmatprep.mubr.bf16.mxu0 0
        %5790 = vmatmul.mubr.bf16.gmra.mrb[0].mxu0 %v3544
        %v5791 = vpop.f32.mrb[0].mxu0
        %v5792 = vadd.f32 0.0, %v5791
        %v5793 = vpop.f32.mrb[0].mxu0
        %v5794 = vpop.f32.mrb[0].mxu0
        %v5795 = vadd.f32 0.0, %v5794
        %v5796 = vpop.f32.mrb[0].mxu0
        %5797 = vmatprep.mubr.bf16.mxu0 0
        %5798 = vmatmul.mubr.bf16.gmra.mrb[0].mxu0 %v5691
        %v5799 = vpop.f32.mrb[0].mxu0
        %v5800 = vadd.f32 0.0, %v5799
        %v5801 = vpop.f32.mrb[0].mxu0
        %v5802 = vpop.f32.mrb[0].mxu0
        %v5803 = vadd.f32 0.0, %v5802
        %v5804 = vpop.f32.mrb[0].mxu0
        %5805 = vdwg.mxu0
        %v5806 = vadd.f32 %v5612, %v5728
        %v5807 = vadd.f32 %v5613, %v5731
        %v5808 = vadd.f32 %v5614, %v5736
        %v5809 = vadd.f32 %v5615, %v5739
        %v5810 = vadd.f32 %v5616, %v5744
        %v5811 = vadd.f32 %v5617, %v5747
        %v5812 = vadd.f32 %v5618, %v5752
        %v5813 = vadd.f32 %v5619, %v5755
        %v5814 = vadd.f32 %v5620, %v5760
        %v5815 = vadd.f32 %v5621, %v5763
        %v5816 = vadd.f32 %v5622, %v5768
        %v5817 = vadd.f32 %v5623, %v5771
        %v5818 = vadd.f32 %v5624, %v5776
        %v5819 = vadd.f32 %v5625, %v5779
        %v5820 = vadd.f32 %v5626, %v5784
        %v5821 = vadd.f32 %v5627, %v5787
        %v5822 = vadd.f32 %v5628, %v5792
        %v5823 = vadd.f32 %v5629, %v5795
        %v5824 = vadd.f32 %v5630, %v5800
        %v5825 = vadd.f32 %v5631, %v5803
        %v5826 = vunpack.c.h.b16 %v5476
        %v5827 = vpack.c.b16 %v5482, %v5482
        %v5828 = vpack.c.b16 %v5826, %v5826
        %v5830 = vshrl.u32 %v5827, 16
        %v5832 = vrot.slane %v5830, 4
        %v5833 = vshll.u32 %v5827, 16
        %v5835 = vrot.slane %v5833, 5
        %v5836 = vor.u32 %v5832, %v5835
        %v5837 = vrot.slane %v5836, 4
        %v5839 = vshll.u32 %v5828, 16
        %v5841 = vrot.slane %v5839, 5
        %v5842 = vsel %vm3188, %v5837, %v5841
        %s5843 = scalar_lea.vmem %s3, 208
        %v5844 = vld [vmem:[%s5843] sm:$0xf]
        %v5845 = vld [vmem:[%s5843 + $0x4] sm:$0xf]
        %v5846 = vld [vmem:[%s5843 + $0x8] sm:$0xf]
        %v5847 = vld [vmem:[%s5843 + $0xc] sm:$0xf]
        %v5848 = vunpack.c.l.b16 %v5842
        %v5849 = vpack.c.b16 %v5848, %v4942
        %v5854 = vunpack.c.l.b16 %v5844
        %v5855 = vunpack.c.l.b16 %v5845
        %v5856 = vunpack.c.l.b16 %v5846
        %v5857 = vunpack.c.l.b16 %v5847
        %v5858 = vpack.c.b16 %v5855, %v5854
        %v5859 = vpack.c.b16 %v5857, %v5856
        %v5863 = vsel %vm2817, %v5849, 0
        %5865 = vmatprep.subr.bf16.mxu0 0
        %5866 = vmatpush1.bf16.msra.mxu0 %v5858
        %5867 = vmatprep.subr.bf16.mxu0 0
        %5868 = vmatpush1.bf16.msra.mxu0 %v5859
        %5869 = vmatprep.subr.bf16.mxu0 0
        %5870 = vmatpush1.bf16.msra.mxu0 0
        %5871 = vmatprep.subr.bf16.mxu0 0
        %5872 = vmatpush1.bf16.msra.mxu0 0
        %5873 = vmatprep.subr.bf16.mxu0 0
        %5874 = vmatpush1.bf16.msra.mxu0 0
        %5875 = vmatprep.subr.bf16.mxu0 0
        %5876 = vmatpush1.bf16.msra.mxu0 0
        %5877 = vmatprep.subr.bf16.mxu0 0
        %5878 = vmatpush1.bf16.msra.mxu0 0
        %5879 = vmatprep.subr.bf16.mxu0 0
        %5880 = vmatpush1.bf16.msra.mxu0 0
        %5881 = vmatprep.subr.bf16.mxu0 0
        %5882 = vmatpush1.bf16.msra.mxu0 0
        %5883 = vmatprep.subr.bf16.mxu0 0
        %5884 = vmatpush1.bf16.msra.mxu0 0
        %5885 = vmatprep.subr.bf16.mxu0 0
        %5886 = vmatpush1.bf16.msra.mxu0 0
        %5887 = vmatprep.subr.bf16.mxu0 0
        %5888 = vmatpush1.bf16.msra.mxu0 0
        %5889 = vmatprep.subr.bf16.mxu0 0
        %5890 = vmatpush1.bf16.msra.mxu0 0
        %5891 = vmatprep.subr.bf16.mxu0 0
        %5892 = vmatpush1.bf16.msra.mxu0 0
        %5893 = vmatprep.subr.bf16.mxu0 0
        %5894 = vmatpush1.bf16.msra.mxu0 0
        %5895 = vmatprep.subr.bf16.mxu0 0
        %5896 = vmatpush1.bf16.msra.mxu0 0
        %5897 = vmatprep.mubr.bf16.mxu0 0
        %5898 = vmatmul.mubr.bf16.gmra.mrb[0].mxu0 %v3535
        %v5899 = vpop.f32.mrb[0].mxu0
        %v5900 = vadd.f32 0.0, %v5899
        %v5901 = vpop.f32.mrb[0].mxu0
        %v5902 = vpop.f32.mrb[0].mxu0
        %v5903 = vadd.f32 0.0, %v5902
        %v5904 = vpop.f32.mrb[0].mxu0
        %5905 = vmatprep.mubr.bf16.mxu0 0
        %5906 = vmatmul.mubr.bf16.gmra.mrb[0].mxu0 %v3538
        %v5907 = vpop.f32.mrb[0].mxu0
        %v5908 = vadd.f32 0.0, %v5907
        %v5909 = vpop.f32.mrb[0].mxu0
        %v5910 = vpop.f32.mrb[0].mxu0
        %v5911 = vadd.f32 0.0, %v5910
        %v5912 = vpop.f32.mrb[0].mxu0
        %5913 = vmatprep.mubr.bf16.mxu0 0
        %5914 = vmatmul.mubr.bf16.gmra.mrb[0].mxu0 %v3541
        %v5915 = vpop.f32.mrb[0].mxu0
        %v5916 = vadd.f32 0.0, %v5915
        %v5917 = vpop.f32.mrb[0].mxu0
        %v5918 = vpop.f32.mrb[0].mxu0
        %v5919 = vadd.f32 0.0, %v5918
        %v5920 = vpop.f32.mrb[0].mxu0
        %5921 = vmatprep.mubr.bf16.mxu0 0
        %5922 = vmatmul.mubr.bf16.gmra.mrb[0].mxu0 %v3544
        %v5923 = vpop.f32.mrb[0].mxu0
        %v5924 = vadd.f32 0.0, %v5923
        %v5925 = vpop.f32.mrb[0].mxu0
        %v5926 = vpop.f32.mrb[0].mxu0
        %v5927 = vadd.f32 0.0, %v5926
        %v5928 = vpop.f32.mrb[0].mxu0
        %5929 = vmatprep.mubr.bf16.mxu0 0
        %5930 = vmatmul.mubr.bf16.gmra.mrb[0].mxu0 %v5691
        %v5931 = vpop.f32.mrb[0].mxu0
        %v5932 = vadd.f32 0.0, %v5931
        %v5933 = vpop.f32.mrb[0].mxu0
        %v5934 = vpop.f32.mrb[0].mxu0
        %v5935 = vadd.f32 0.0, %v5934
        %v5936 = vpop.f32.mrb[0].mxu0
        %5937 = vmatprep.mubr.bf16.mxu0 0
        %5938 = vmatmul.mubr.bf16.gmra.mrb[0].mxu0 %v3885
        %v5939 = vpop.f32.mrb[0].mxu0
        %v5940 = vadd.f32 0.0, %v5939
        %v5941 = vpop.f32.mrb[0].mxu0
        %v5942 = vpop.f32.mrb[0].mxu0
        %v5943 = vadd.f32 0.0, %v5942
        %v5944 = vpop.f32.mrb[0].mxu0
        %5945 = vmatprep.mubr.bf16.mxu0 0
        %5946 = vmatmul.mubr.bf16.gmra.mrb[0].mxu0 %v3888
        %v5947 = vpop.f32.mrb[0].mxu0
        %v5948 = vadd.f32 0.0, %v5947
        %v5949 = vpop.f32.mrb[0].mxu0
        %v5950 = vpop.f32.mrb[0].mxu0
        %v5951 = vadd.f32 0.0, %v5950
        %v5952 = vpop.f32.mrb[0].mxu0
        %5953 = vmatprep.mubr.bf16.mxu0 0
        %5954 = vmatmul.mubr.bf16.gmra.mrb[0].mxu0 %v3891
        %v5955 = vpop.f32.mrb[0].mxu0
        %v5956 = vadd.f32 0.0, %v5955
        %v5957 = vpop.f32.mrb[0].mxu0
        %v5958 = vpop.f32.mrb[0].mxu0
        %v5959 = vadd.f32 0.0, %v5958
        %v5960 = vpop.f32.mrb[0].mxu0
        %5961 = vmatprep.mubr.bf16.mxu0 0
        %5962 = vmatmul.mubr.bf16.gmra.mrb[0].mxu0 %v3894
        %v5963 = vpop.f32.mrb[0].mxu0
        %v5964 = vadd.f32 0.0, %v5963
        %v5965 = vpop.f32.mrb[0].mxu0
        %v5966 = vpop.f32.mrb[0].mxu0
        %v5967 = vadd.f32 0.0, %v5966
        %v5968 = vpop.f32.mrb[0].mxu0
        %5969 = vmatprep.mubr.bf16.mxu0 0
        %5970 = vmatmul.mubr.bf16.gmra.mrb[0].mxu0 %v5863
        %v5971 = vpop.f32.mrb[0].mxu0
        %v5972 = vadd.f32 0.0, %v5971
        %v5973 = vpop.f32.mrb[0].mxu0
        %v5974 = vpop.f32.mrb[0].mxu0
        %v5975 = vadd.f32 0.0, %v5974
        %v5976 = vpop.f32.mrb[0].mxu0
        %5977 = vdwg.mxu0
        %v5978 = vadd.f32 %v5806, %v5900
        %v5979 = vadd.f32 %v5807, %v5903
        %v5980 = vadd.f32 %v5808, %v5908
        %v5981 = vadd.f32 %v5809, %v5911
        %v5982 = vadd.f32 %v5810, %v5916
        %v5983 = vadd.f32 %v5811, %v5919
        %v5984 = vadd.f32 %v5812, %v5924
        %v5985 = vadd.f32 %v5813, %v5927
        %v5986 = vadd.f32 %v5814, %v5932
        %v5987 = vadd.f32 %v5815, %v5935
        %v5988 = vadd.f32 %v5816, %v5940
        %v5989 = vadd.f32 %v5817, %v5943
        %v5990 = vadd.f32 %v5818, %v5948
        %v5991 = vadd.f32 %v5819, %v5951
        %v5992 = vadd.f32 %v5820, %v5956
        %v5993 = vadd.f32 %v5821, %v5959
        %v5994 = vadd.f32 %v5822, %v5964
        %v5995 = vadd.f32 %v5823, %v5967
        %v5996 = vadd.f32 %v5824, %v5972
        %v5997 = vadd.f32 %v5825, %v5975
        %v5998 = vrot.slane %v5634, 5
        %v5999 = vrot.slane %v5998, 4
        %v6000 = vrot.slane %v5635, 5
        %v6001 = vsel %vm4031, %v5999, %v6000
        %v6002 = vrot.slane %v5636, 5
        %v6003 = vrot.slane %v6002, 4
        %v6004 = vrot.slane %v5637, 5
        %v6005 = vsel %vm4031, %v6003, %v6004
        %s6006 = scalar_lea.vmem %s3, 224
        %v6007 = vld [vmem:[%s6006] sm:$0xf]
        %v6008 = vld [vmem:[%s6006 + $0x4] sm:$0xf]
        %v6009 = vld [vmem:[%s6006 + $0x8] sm:$0xf]
        %v6010 = vld [vmem:[%s6006 + $0xc] sm:$0xf]
        %v6011 = vunpack.c.l.b16 %v6001
        %v6012 = vunpack.c.l.b16 %v6005
        %v6013 = vpack.c.b16 %v6011, %v5121
        %v6014 = vpack.c.b16 %v6012, %v5122
        %v6019 = vunpack.c.l.b16 %v6007
        %v6020 = vunpack.c.l.b16 %v6008
        %v6021 = vunpack.c.l.b16 %v6009
        %v6022 = vunpack.c.l.b16 %v6010
        %v6023 = vpack.c.b16 %v6020, %v6019
        %v6024 = vpack.c.b16 %v6022, %v6021
        %v6028 = vsel %vm2817, %v6013, 0
        %v6031 = vsel %vm2817, %v6014, 0
        %6033 = vmatprep.subr.bf16.mxu0 0
        %6034 = vmatpush1.bf16.msra.mxu0 %v6023
        %6035 = vmatprep.subr.bf16.mxu0 0
        %6036 = vmatpush1.bf16.msra.mxu0 %v6024
        %6037 = vmatprep.subr.bf16.mxu0 0
        %6038 = vmatpush1.bf16.msra.mxu0 0
        %6039 = vmatprep.subr.bf16.mxu0 0
        %6040 = vmatpush1.bf16.msra.mxu0 0
        %6041 = vmatprep.subr.bf16.mxu0 0
        %6042 = vmatpush1.bf16.msra.mxu0 0
        %6043 = vmatprep.subr.bf16.mxu0 0
        %6044 = vmatpush1.bf16.msra.mxu0 0
        %6045 = vmatprep.subr.bf16.mxu0 0
        %6046 = vmatpush1.bf16.msra.mxu0 0
        %6047 = vmatprep.subr.bf16.mxu0 0
        %6048 = vmatpush1.bf16.msra.mxu0 0
        %6049 = vmatprep.subr.bf16.mxu0 0
        %6050 = vmatpush1.bf16.msra.mxu0 0
        %6051 = vmatprep.subr.bf16.mxu0 0
        %6052 = vmatpush1.bf16.msra.mxu0 0
        %6053 = vmatprep.subr.bf16.mxu0 0
        %6054 = vmatpush1.bf16.msra.mxu0 0
        %6055 = vmatprep.subr.bf16.mxu0 0
        %6056 = vmatpush1.bf16.msra.mxu0 0
        %6057 = vmatprep.subr.bf16.mxu0 0
        %6058 = vmatpush1.bf16.msra.mxu0 0
        %6059 = vmatprep.subr.bf16.mxu0 0
        %6060 = vmatpush1.bf16.msra.mxu0 0
        %6061 = vmatprep.subr.bf16.mxu0 0
        %6062 = vmatpush1.bf16.msra.mxu0 0
        %6063 = vmatprep.subr.bf16.mxu0 0
        %6064 = vmatpush1.bf16.msra.mxu0 0
        %6065 = vmatprep.mubr.bf16.mxu0 0
        %6066 = vmatmul.mubr.bf16.gmra.mrb[0].mxu0 %v4163
        %v6067 = vpop.f32.mrb[0].mxu0
        %v6068 = vadd.f32 0.0, %v6067
        %v6069 = vpop.f32.mrb[0].mxu0
        %v6070 = vpop.f32.mrb[0].mxu0
        %v6071 = vadd.f32 0.0, %v6070
        %v6072 = vpop.f32.mrb[0].mxu0
        %6073 = vmatprep.mubr.bf16.mxu0 0
        %6074 = vmatmul.mubr.bf16.gmra.mrb[0].mxu0 %v4166
        %v6075 = vpop.f32.mrb[0].mxu0
        %v6076 = vadd.f32 0.0, %v6075
        %v6077 = vpop.f32.mrb[0].mxu0
        %v6078 = vpop.f32.mrb[0].mxu0
        %v6079 = vadd.f32 0.0, %v6078
        %v6080 = vpop.f32.mrb[0].mxu0
        %6081 = vmatprep.mubr.bf16.mxu0 0
        %6082 = vmatmul.mubr.bf16.gmra.mrb[0].mxu0 %v4169
        %v6083 = vpop.f32.mrb[0].mxu0
        %v6084 = vadd.f32 0.0, %v6083
        %v6085 = vpop.f32.mrb[0].mxu0
        %v6086 = vpop.f32.mrb[0].mxu0
        %v6087 = vadd.f32 0.0, %v6086
        %v6088 = vpop.f32.mrb[0].mxu0
        %6089 = vmatprep.mubr.bf16.mxu0 0
        %6090 = vmatmul.mubr.bf16.gmra.mrb[0].mxu0 %v4172
        %v6091 = vpop.f32.mrb[0].mxu0
        %v6092 = vadd.f32 0.0, %v6091
        %v6093 = vpop.f32.mrb[0].mxu0
        %v6094 = vpop.f32.mrb[0].mxu0
        %v6095 = vadd.f32 0.0, %v6094
        %v6096 = vpop.f32.mrb[0].mxu0
        %6097 = vmatprep.mubr.bf16.mxu0 0
        %6098 = vmatmul.mubr.bf16.gmra.mrb[0].mxu0 %v6028
        %v6099 = vpop.f32.mrb[0].mxu0
        %v6100 = vadd.f32 0.0, %v6099
        %v6101 = vpop.f32.mrb[0].mxu0
        %v6102 = vpop.f32.mrb[0].mxu0
        %v6103 = vadd.f32 0.0, %v6102
        %v6104 = vpop.f32.mrb[0].mxu0
        %6105 = vmatprep.mubr.bf16.mxu0 0
        %6106 = vmatmul.mubr.bf16.gmra.mrb[0].mxu0 %v4178
        %v6107 = vpop.f32.mrb[0].mxu0
        %v6108 = vadd.f32 0.0, %v6107
        %v6109 = vpop.f32.mrb[0].mxu0
        %v6110 = vpop.f32.mrb[0].mxu0
        %v6111 = vadd.f32 0.0, %v6110
        %v6112 = vpop.f32.mrb[0].mxu0
        %6113 = vmatprep.mubr.bf16.mxu0 0
        %6114 = vmatmul.mubr.bf16.gmra.mrb[0].mxu0 %v4181
        %v6115 = vpop.f32.mrb[0].mxu0
        %v6116 = vadd.f32 0.0, %v6115
        %v6117 = vpop.f32.mrb[0].mxu0
        %v6118 = vpop.f32.mrb[0].mxu0
        %v6119 = vadd.f32 0.0, %v6118
        %v6120 = vpop.f32.mrb[0].mxu0
        %6121 = vmatprep.mubr.bf16.mxu0 0
        %6122 = vmatmul.mubr.bf16.gmra.mrb[0].mxu0 %v4184
        %v6123 = vpop.f32.mrb[0].mxu0
        %v6124 = vadd.f32 0.0, %v6123
        %v6125 = vpop.f32.mrb[0].mxu0
        %v6126 = vpop.f32.mrb[0].mxu0
        %v6127 = vadd.f32 0.0, %v6126
        %v6128 = vpop.f32.mrb[0].mxu0
        %6129 = vmatprep.mubr.bf16.mxu0 0
        %6130 = vmatmul.mubr.bf16.gmra.mrb[0].mxu0 %v4187
        %v6131 = vpop.f32.mrb[0].mxu0
        %v6132 = vadd.f32 0.0, %v6131
        %v6133 = vpop.f32.mrb[0].mxu0
        %v6134 = vpop.f32.mrb[0].mxu0
        %v6135 = vadd.f32 0.0, %v6134
        %v6136 = vpop.f32.mrb[0].mxu0
        %6137 = vmatprep.mubr.bf16.mxu0 0
        %6138 = vmatmul.mubr.bf16.gmra.mrb[0].mxu0 %v6031
        %v6139 = vpop.f32.mrb[0].mxu0
        %v6140 = vadd.f32 0.0, %v6139
        %v6141 = vpop.f32.mrb[0].mxu0
        %v6142 = vpop.f32.mrb[0].mxu0
        %v6143 = vadd.f32 0.0, %v6142
        %v6144 = vpop.f32.mrb[0].mxu0
        %6145 = vdwg.mxu0
        %v6146 = vadd.f32 %v5978, %v6068
        %v6147 = vadd.f32 %v5979, %v6071
        %v6148 = vadd.f32 %v5980, %v6076
        %v6149 = vadd.f32 %v5981, %v6079
        %v6150 = vadd.f32 %v5982, %v6084
        %v6151 = vadd.f32 %v5983, %v6087
        %v6152 = vadd.f32 %v5984, %v6092
        %v6153 = vadd.f32 %v5985, %v6095
        %v6154 = vadd.f32 %v5986, %v6100
        %v6155 = vadd.f32 %v5987, %v6103
        %v6156 = vadd.f32 %v5988, %v6108
        %v6157 = vadd.f32 %v5989, %v6111
        %v6158 = vadd.f32 %v5990, %v6116
        %v6159 = vadd.f32 %v5991, %v6119
        %v6160 = vadd.f32 %v5992, %v6124
        %v6161 = vadd.f32 %v5993, %v6127
        %v6162 = vadd.f32 %v5994, %v6132
        %v6163 = vadd.f32 %v5995, %v6135
        %v6164 = vadd.f32 %v5996, %v6140
        %v6165 = vadd.f32 %v5997, %v6143
        %s6166 = scalar_lea.vmem %s3, 240
        %v6167 = vld [vmem:[%s6166] sm:$0xf]
        %v6168 = vld [vmem:[%s6166 + $0x4] sm:$0xf]
        %v6169 = vld [vmem:[%s6166 + $0x8] sm:$0xf]
        %v6170 = vld [vmem:[%s6166 + $0xc] sm:$0xf]
        %v6173 = vunpack.c.l.b16 %v2614
        %v6174 = vunpack.c.l.b16 %v2684
        %v6175 = vpack.c.b16 %v6173, %v5315
        %v6176 = vpack.c.b16 %v6174, %v5316
        %v6181 = vunpack.c.l.b16 %v6167
        %v6182 = vunpack.c.l.b16 %v6168
        %v6183 = vunpack.c.l.b16 %v6169
        %v6184 = vunpack.c.l.b16 %v6170
        %v6185 = vpack.c.b16 %v6182, %v6181
        %v6186 = vpack.c.b16 %v6184, %v6183
        %v6190 = vsel %vm2817, %v6175, 0
        %v6193 = vsel %vm2817, %v6176, 0
        %6195 = vmatprep.subr.bf16.mxu0 0
        %6196 = vmatpush1.bf16.msra.mxu0 %v6185
        %6197 = vmatprep.subr.bf16.mxu0 0
        %6198 = vmatpush1.bf16.msra.mxu0 %v6186
        %6199 = vmatprep.subr.bf16.mxu0 0
        %6200 = vmatpush1.bf16.msra.mxu0 0
        %6201 = vmatprep.subr.bf16.mxu0 0
        %6202 = vmatpush1.bf16.msra.mxu0 0
        %6203 = vmatprep.subr.bf16.mxu0 0
        %6204 = vmatpush1.bf16.msra.mxu0 0
        %6205 = vmatprep.subr.bf16.mxu0 0
        %6206 = vmatpush1.bf16.msra.mxu0 0
        %6207 = vmatprep.subr.bf16.mxu0 0
        %6208 = vmatpush1.bf16.msra.mxu0 0
        %6209 = vmatprep.subr.bf16.mxu0 0
        %6210 = vmatpush1.bf16.msra.mxu0 0
        %6211 = vmatprep.subr.bf16.mxu0 0
        %6212 = vmatpush1.bf16.msra.mxu0 0
        %6213 = vmatprep.subr.bf16.mxu0 0
        %6214 = vmatpush1.bf16.msra.mxu0 0
        %6215 = vmatprep.subr.bf16.mxu0 0
        %6216 = vmatpush1.bf16.msra.mxu0 0
        %6217 = vmatprep.subr.bf16.mxu0 0
        %6218 = vmatpush1.bf16.msra.mxu0 0
        %6219 = vmatprep.subr.bf16.mxu0 0
        %6220 = vmatpush1.bf16.msra.mxu0 0
        %6221 = vmatprep.subr.bf16.mxu0 0
        %6222 = vmatpush1.bf16.msra.mxu0 0
        %6223 = vmatprep.subr.bf16.mxu0 0
        %6224 = vmatpush1.bf16.msra.mxu0 0
        %6225 = vmatprep.subr.bf16.mxu0 0
        %6226 = vmatpush1.bf16.msra.mxu0 0
        %6227 = vmatprep.mubr.bf16.mxu0 0
        %6228 = vmatmul.mubr.bf16.gmra.mrb[0].mxu0 %v4357
        %v6229 = vpop.f32.mrb[0].mxu0
        %v6230 = vadd.f32 0.0, %v6229
        %v6231 = vpop.f32.mrb[0].mxu0
        %v6232 = vpop.f32.mrb[0].mxu0
        %v6233 = vadd.f32 0.0, %v6232
        %v6234 = vpop.f32.mrb[0].mxu0
        %6235 = vmatprep.mubr.bf16.mxu0 0
        %6236 = vmatmul.mubr.bf16.gmra.mrb[0].mxu0 %v4360
        %v6237 = vpop.f32.mrb[0].mxu0
        %v6238 = vadd.f32 0.0, %v6237
        %v6239 = vpop.f32.mrb[0].mxu0
        %v6240 = vpop.f32.mrb[0].mxu0
        %v6241 = vadd.f32 0.0, %v6240
        %v6242 = vpop.f32.mrb[0].mxu0
        %6243 = vmatprep.mubr.bf16.mxu0 0
        %6244 = vmatmul.mubr.bf16.gmra.mrb[0].mxu0 %v4363
        %v6245 = vpop.f32.mrb[0].mxu0
        %v6246 = vadd.f32 0.0, %v6245
        %v6247 = vpop.f32.mrb[0].mxu0
        %v6248 = vpop.f32.mrb[0].mxu0
        %v6249 = vadd.f32 0.0, %v6248
        %v6250 = vpop.f32.mrb[0].mxu0
        %6251 = vmatprep.mubr.bf16.mxu0 0
        %6252 = vmatmul.mubr.bf16.gmra.mrb[0].mxu0 %v4366
        %v6253 = vpop.f32.mrb[0].mxu0
        %v6254 = vadd.f32 0.0, %v6253
        %v6255 = vpop.f32.mrb[0].mxu0
        %v6256 = vpop.f32.mrb[0].mxu0
        %v6257 = vadd.f32 0.0, %v6256
        %v6258 = vpop.f32.mrb[0].mxu0
        %6259 = vmatprep.mubr.bf16.mxu0 0
        %6260 = vmatmul.mubr.bf16.gmra.mrb[0].mxu0 %v6190
        %v6261 = vpop.f32.mrb[0].mxu0
        %v6262 = vadd.f32 0.0, %v6261
        %v6263 = vpop.f32.mrb[0].mxu0
        %v6264 = vpop.f32.mrb[0].mxu0
        %v6265 = vadd.f32 0.0, %v6264
        %v6266 = vpop.f32.mrb[0].mxu0
        %6267 = vmatprep.mubr.bf16.mxu0 0
        %6268 = vmatmul.mubr.bf16.gmra.mrb[0].mxu0 %v4372
        %v6269 = vpop.f32.mrb[0].mxu0
        %v6270 = vadd.f32 0.0, %v6269
        %v6271 = vpop.f32.mrb[0].mxu0
        %v6272 = vpop.f32.mrb[0].mxu0
        %v6273 = vadd.f32 0.0, %v6272
        %v6274 = vpop.f32.mrb[0].mxu0
        %6275 = vmatprep.mubr.bf16.mxu0 0
        %6276 = vmatmul.mubr.bf16.gmra.mrb[0].mxu0 %v4375
        %v6277 = vpop.f32.mrb[0].mxu0
        %v6278 = vadd.f32 0.0, %v6277
        %v6279 = vpop.f32.mrb[0].mxu0
        %v6280 = vpop.f32.mrb[0].mxu0
        %v6281 = vadd.f32 0.0, %v6280
        %v6282 = vpop.f32.mrb[0].mxu0
        %6283 = vmatprep.mubr.bf16.mxu0 0
        %6284 = vmatmul.mubr.bf16.gmra.mrb[0].mxu0 %v4378
        %v6285 = vpop.f32.mrb[0].mxu0
        %v6286 = vadd.f32 0.0, %v6285
        %v6287 = vpop.f32.mrb[0].mxu0
        %v6288 = vpop.f32.mrb[0].mxu0
        %v6289 = vadd.f32 0.0, %v6288
        %v6290 = vpop.f32.mrb[0].mxu0
        %6291 = vmatprep.mubr.bf16.mxu0 0
        %6292 = vmatmul.mubr.bf16.gmra.mrb[0].mxu0 %v4381
        %v6293 = vpop.f32.mrb[0].mxu0
        %v6294 = vadd.f32 0.0, %v6293
        %v6295 = vpop.f32.mrb[0].mxu0
        %v6296 = vpop.f32.mrb[0].mxu0
        %v6297 = vadd.f32 0.0, %v6296
        %v6298 = vpop.f32.mrb[0].mxu0
        %6299 = vmatprep.mubr.bf16.mxu0 0
        %6300 = vmatmul.mubr.bf16.gmra.mrb[0].mxu0 %v6193
        %v6301 = vpop.f32.mrb[0].mxu0
        %v6302 = vadd.f32 0.0, %v6301
        %v6303 = vpop.f32.mrb[0].mxu0
        %v6304 = vpop.f32.mrb[0].mxu0
        %v6305 = vadd.f32 0.0, %v6304
        %v6306 = vpop.f32.mrb[0].mxu0
        %6307 = vdwg.mxu0
        %v6308 = vadd.f32 %v6146, %v6230
        %v6309 = vadd.f32 %v6147, %v6233
        %v6310 = vadd.f32 %v6148, %v6238
        %v6311 = vadd.f32 %v6149, %v6241
        %v6312 = vadd.f32 %v6150, %v6246
        %v6313 = vadd.f32 %v6151, %v6249
        %v6314 = vadd.f32 %v6152, %v6254
        %v6315 = vadd.f32 %v6153, %v6257
        %v6316 = vadd.f32 %v6154, %v6262
        %v6317 = vadd.f32 %v6155, %v6265
        %v6318 = vadd.f32 %v6156, %v6270
        %v6319 = vadd.f32 %v6157, %v6273
        %v6320 = vadd.f32 %v6158, %v6278
        %v6321 = vadd.f32 %v6159, %v6281
        %v6322 = vadd.f32 %v6160, %v6286
        %v6323 = vadd.f32 %v6161, %v6289
        %v6324 = vadd.f32 %v6162, %v6294
        %v6325 = vadd.f32 %v6163, %v6297
        %v6326 = vadd.f32 %v6164, %v6302
        %v6327 = vadd.f32 %v6165, %v6305
        %v6329 = vshrl.u32 %v2614, 16
        %v6331 = vshll.u32 %v2614, 16
        %v6333 = vrot.slane %v6331, 1
        %v6334 = vor.u32 %v6329, %v6333
        %s6335 = scalar_lea.vmem %s3, 256
        %v6336 = vld [vmem:[%s6335] sm:$0xf]
        %v6337 = vld [vmem:[%s6335 + $0x4] sm:$0xf]
        %v6338 = vld [vmem:[%s6335 + $0x8] sm:$0xf]
        %v6339 = vld [vmem:[%s6335 + $0xc] sm:$0xf]
        %v6340 = vunpack.c.l.b16 %v6334
        %v6341 = vpack.c.b16 %v6340, %v5482
        %v6346 = vunpack.c.l.b16 %v6336
        %v6347 = vunpack.c.l.b16 %v6337
        %v6348 = vunpack.c.l.b16 %v6338
        %v6349 = vunpack.c.l.b16 %v6339
        %v6350 = vpack.c.b16 %v6347, %v6346
        %v6351 = vpack.c.b16 %v6349, %v6348
        %v6355 = vsel %vm2817, %v6341, 0
        %6357 = vmatprep.subr.bf16.mxu0 0
        %6358 = vmatpush1.bf16.msra.mxu0 %v6350
        %6359 = vmatprep.subr.bf16.mxu0 0
        %6360 = vmatpush1.bf16.msra.mxu0 %v6351
        %6361 = vmatprep.subr.bf16.mxu0 0
        %6362 = vmatpush1.bf16.msra.mxu0 0
        %6363 = vmatprep.subr.bf16.mxu0 0
        %6364 = vmatpush1.bf16.msra.mxu0 0
        %6365 = vmatprep.subr.bf16.mxu0 0
        %6366 = vmatpush1.bf16.msra.mxu0 0
        %6367 = vmatprep.subr.bf16.mxu0 0
        %6368 = vmatpush1.bf16.msra.mxu0 0
        %6369 = vmatprep.subr.bf16.mxu0 0
        %6370 = vmatpush1.bf16.msra.mxu0 0
        %6371 = vmatprep.subr.bf16.mxu0 0
        %6372 = vmatpush1.bf16.msra.mxu0 0
        %6373 = vmatprep.subr.bf16.mxu0 0
        %6374 = vmatpush1.bf16.msra.mxu0 0
        %6375 = vmatprep.subr.bf16.mxu0 0
        %6376 = vmatpush1.bf16.msra.mxu0 0
        %6377 = vmatprep.subr.bf16.mxu0 0
        %6378 = vmatpush1.bf16.msra.mxu0 0
        %6379 = vmatprep.subr.bf16.mxu0 0
        %6380 = vmatpush1.bf16.msra.mxu0 0
        %6381 = vmatprep.subr.bf16.mxu0 0
        %6382 = vmatpush1.bf16.msra.mxu0 0
        %6383 = vmatprep.subr.bf16.mxu0 0
        %6384 = vmatpush1.bf16.msra.mxu0 0
        %6385 = vmatprep.subr.bf16.mxu0 0
        %6386 = vmatpush1.bf16.msra.mxu0 0
        %6387 = vmatprep.subr.bf16.mxu0 0
        %6388 = vmatpush1.bf16.msra.mxu0 0
        %6389 = vmatprep.mubr.bf16.mxu0 0
        %6390 = vmatmul.mubr.bf16.gmra.mrb[0].mxu0 %v4372
        %v6391 = vpop.f32.mrb[0].mxu0
        %v6392 = vadd.f32 0.0, %v6391
        %v6393 = vpop.f32.mrb[0].mxu0
        %v6394 = vpop.f32.mrb[0].mxu0
        %v6395 = vadd.f32 0.0, %v6394
        %v6396 = vpop.f32.mrb[0].mxu0
        %6397 = vmatprep.mubr.bf16.mxu0 0
        %6398 = vmatmul.mubr.bf16.gmra.mrb[0].mxu0 %v4375
        %v6399 = vpop.f32.mrb[0].mxu0
        %v6400 = vadd.f32 0.0, %v6399
        %v6401 = vpop.f32.mrb[0].mxu0
        %v6402 = vpop.f32.mrb[0].mxu0
        %v6403 = vadd.f32 0.0, %v6402
        %v6404 = vpop.f32.mrb[0].mxu0
        %6405 = vmatprep.mubr.bf16.mxu0 0
        %6406 = vmatmul.mubr.bf16.gmra.mrb[0].mxu0 %v4378
        %v6407 = vpop.f32.mrb[0].mxu0
        %v6408 = vadd.f32 0.0, %v6407
        %v6409 = vpop.f32.mrb[0].mxu0
        %v6410 = vpop.f32.mrb[0].mxu0
        %v6411 = vadd.f32 0.0, %v6410
        %v6412 = vpop.f32.mrb[0].mxu0
        %6413 = vmatprep.mubr.bf16.mxu0 0
        %6414 = vmatmul.mubr.bf16.gmra.mrb[0].mxu0 %v4381
        %v6415 = vpop.f32.mrb[0].mxu0
        %v6416 = vadd.f32 0.0, %v6415
        %v6417 = vpop.f32.mrb[0].mxu0
        %v6418 = vpop.f32.mrb[0].mxu0
        %v6419 = vadd.f32 0.0, %v6418
        %v6420 = vpop.f32.mrb[0].mxu0
        %6421 = vmatprep.mubr.bf16.mxu0 0
        %6422 = vmatmul.mubr.bf16.gmra.mrb[0].mxu0 %v6193
        %v6423 = vpop.f32.mrb[0].mxu0
        %v6424 = vadd.f32 0.0, %v6423
        %v6425 = vpop.f32.mrb[0].mxu0
        %v6426 = vpop.f32.mrb[0].mxu0
        %v6427 = vadd.f32 0.0, %v6426
        %v6428 = vpop.f32.mrb[0].mxu0
        %6429 = vmatprep.mubr.bf16.mxu0 0
        %6430 = vmatmul.mubr.bf16.gmra.mrb[0].mxu0 %v4550
        %v6431 = vpop.f32.mrb[0].mxu0
        %v6432 = vadd.f32 0.0, %v6431
        %v6433 = vpop.f32.mrb[0].mxu0
        %v6434 = vpop.f32.mrb[0].mxu0
        %v6435 = vadd.f32 0.0, %v6434
        %v6436 = vpop.f32.mrb[0].mxu0
        %6437 = vmatprep.mubr.bf16.mxu0 0
        %6438 = vmatmul.mubr.bf16.gmra.mrb[0].mxu0 %v4553
        %v6439 = vpop.f32.mrb[0].mxu0
        %v6440 = vadd.f32 0.0, %v6439
        %v6441 = vpop.f32.mrb[0].mxu0
        %v6442 = vpop.f32.mrb[0].mxu0
        %v6443 = vadd.f32 0.0, %v6442
        %v6444 = vpop.f32.mrb[0].mxu0
        %6445 = vmatprep.mubr.bf16.mxu0 0
        %6446 = vmatmul.mubr.bf16.gmra.mrb[0].mxu0 %v4556
        %v6447 = vpop.f32.mrb[0].mxu0
        %v6448 = vadd.f32 0.0, %v6447
        %v6449 = vpop.f32.mrb[0].mxu0
        %v6450 = vpop.f32.mrb[0].mxu0
        %v6451 = vadd.f32 0.0, %v6450
        %v6452 = vpop.f32.mrb[0].mxu0
        %6453 = vmatprep.mubr.bf16.mxu0 0
        %6454 = vmatmul.mubr.bf16.gmra.mrb[0].mxu0 %v4559
        %v6455 = vpop.f32.mrb[0].mxu0
        %v6456 = vadd.f32 0.0, %v6455
        %v6457 = vpop.f32.mrb[0].mxu0
        %v6458 = vpop.f32.mrb[0].mxu0
        %v6459 = vadd.f32 0.0, %v6458
        %v6460 = vpop.f32.mrb[0].mxu0
        %6461 = vmatprep.mubr.bf16.mxu0 0
        %6462 = vmatmul.mubr.bf16.gmra.mrb[0].mxu0 %v6355
        %v6463 = vpop.f32.mrb[0].mxu0
        %v6464 = vadd.f32 0.0, %v6463
        %v6465 = vpop.f32.mrb[0].mxu0
        %v6466 = vpop.f32.mrb[0].mxu0
        %v6467 = vadd.f32 0.0, %v6466
        %v6468 = vpop.f32.mrb[0].mxu0
        %6469 = vdwg.mxu0
        %v6470 = vadd.f32 %v6308, %v6392
        %v6471 = vadd.f32 %v6309, %v6395
        %v6472 = vadd.f32 %v6310, %v6400
        %v6473 = vadd.f32 %v6311, %v6403
        %v6474 = vadd.f32 %v6312, %v6408
        %v6475 = vadd.f32 %v6313, %v6411
        %v6476 = vadd.f32 %v6314, %v6416
        %v6477 = vadd.f32 %v6315, %v6419
        %v6478 = vadd.f32 %v6316, %v6424
        %v6479 = vadd.f32 %v6317, %v6427
        %v6480 = vadd.f32 %v6318, %v6432
        %v6481 = vadd.f32 %v6319, %v6435
        %v6482 = vadd.f32 %v6320, %v6440
        %v6483 = vadd.f32 %v6321, %v6443
        %v6484 = vadd.f32 %v6322, %v6448
        %v6485 = vadd.f32 %v6323, %v6451
        %v6486 = vadd.f32 %v6324, %v6456
        %v6487 = vadd.f32 %v6325, %v6459
        %v6488 = vadd.f32 %v6326, %v6464
        %v6489 = vadd.f32 %v6327, %v6467
        %v6490 = vunpack.c.h.b16 %v2614
        %v6491 = vunpack.c.h.b16 %v2684
        %v6492 = vpack.c.b16 %v6173, %v6173
        %v6493 = vpack.c.b16 %v6490, %v6490
        %v6494 = vpack.c.b16 %v6174, %v6174
        %v6495 = vpack.c.b16 %v6491, %v6491
        %v6497 = vshrl.u32 %v6492, 16
        %v6499 = vrot.slane %v6497, 4
        %v6500 = vshll.u32 %v6492, 16
        %v6502 = vrot.slane %v6500, 5
        %v6503 = vor.u32 %v6499, %v6502
        %v6504 = vrot.slane %v6503, 4
        %v6506 = vshll.u32 %v6493, 16
        %v6508 = vrot.slane %v6506, 5
        %v6509 = vsel %vm3188, %v6504, %v6508
        %v6511 = vshrl.u32 %v6494, 16
        %v6513 = vrot.slane %v6511, 4
        %v6514 = vshll.u32 %v6494, 16
        %v6516 = vrot.slane %v6514, 5
        %v6517 = vor.u32 %v6513, %v6516
        %v6518 = vrot.slane %v6517, 4
        %v6520 = vshll.u32 %v6495, 16
        %v6522 = vrot.slane %v6520, 5
        %v6523 = vsel %vm3188, %v6518, %v6522
        %s6524 = scalar_lea.vmem %s3, 272
        %v6525 = vld [vmem:[%s6524] sm:$0xf]
        %v6526 = vld [vmem:[%s6524 + $0x4] sm:$0xf]
        %v6527 = vld [vmem:[%s6524 + $0x8] sm:$0xf]
        %v6528 = vld [vmem:[%s6524 + $0xc] sm:$0xf]
        %v6529 = vunpack.c.l.b16 %v6509
        %v6530 = vunpack.c.l.b16 %v6523
        %v6531 = vpack.c.b16 %v6529, %v5671
        %v6532 = vpack.c.b16 %v6530, %v5672
        %v6537 = vunpack.c.l.b16 %v6525
        %v6538 = vunpack.c.l.b16 %v6526
        %v6539 = vunpack.c.l.b16 %v6527
        %v6540 = vunpack.c.l.b16 %v6528
        %v6541 = vpack.c.b16 %v6538, %v6537
        %v6542 = vpack.c.b16 %v6540, %v6539
        %v6546 = vsel %vm2817, %v6531, 0
        %v6549 = vsel %vm2817, %v6532, 0
        %6551 = vmatprep.subr.bf16.mxu0 0
        %6552 = vmatpush1.bf16.msra.mxu0 %v6541
        %6553 = vmatprep.subr.bf16.mxu0 0
        %6554 = vmatpush1.bf16.msra.mxu0 %v6542
        %6555 = vmatprep.subr.bf16.mxu0 0
        %6556 = vmatpush1.bf16.msra.mxu0 0
        %6557 = vmatprep.subr.bf16.mxu0 0
        %6558 = vmatpush1.bf16.msra.mxu0 0
        %6559 = vmatprep.subr.bf16.mxu0 0
        %6560 = vmatpush1.bf16.msra.mxu0 0
        %6561 = vmatprep.subr.bf16.mxu0 0
        %6562 = vmatpush1.bf16.msra.mxu0 0
        %6563 = vmatprep.subr.bf16.mxu0 0
        %6564 = vmatpush1.bf16.msra.mxu0 0
        %6565 = vmatprep.subr.bf16.mxu0 0
        %6566 = vmatpush1.bf16.msra.mxu0 0
        %6567 = vmatprep.subr.bf16.mxu0 0
        %6568 = vmatpush1.bf16.msra.mxu0 0
        %6569 = vmatprep.subr.bf16.mxu0 0
        %6570 = vmatpush1.bf16.msra.mxu0 0
        %6571 = vmatprep.subr.bf16.mxu0 0
        %6572 = vmatpush1.bf16.msra.mxu0 0
        %6573 = vmatprep.subr.bf16.mxu0 0
        %6574 = vmatpush1.bf16.msra.mxu0 0
        %6575 = vmatprep.subr.bf16.mxu0 0
        %6576 = vmatpush1.bf16.msra.mxu0 0
        %6577 = vmatprep.subr.bf16.mxu0 0
        %6578 = vmatpush1.bf16.msra.mxu0 0
        %6579 = vmatprep.subr.bf16.mxu0 0
        %6580 = vmatpush1.bf16.msra.mxu0 0
        %6581 = vmatprep.subr.bf16.mxu0 0
        %6582 = vmatpush1.bf16.msra.mxu0 0
        %6583 = vmatprep.mubr.bf16.mxu0 0
        %6584 = vmatmul.mubr.bf16.gmra.mrb[0].mxu0 %v4761
        %v6585 = vpop.f32.mrb[0].mxu0
        %v6586 = vadd.f32 0.0, %v6585
        %v6587 = vpop.f32.mrb[0].mxu0
        %v6588 = vpop.f32.mrb[0].mxu0
        %v6589 = vadd.f32 0.0, %v6588
        %v6590 = vpop.f32.mrb[0].mxu0
        %6591 = vmatprep.mubr.bf16.mxu0 0
        %6592 = vmatmul.mubr.bf16.gmra.mrb[0].mxu0 %v4764
        %v6593 = vpop.f32.mrb[0].mxu0
        %v6594 = vadd.f32 0.0, %v6593
        %v6595 = vpop.f32.mrb[0].mxu0
        %v6596 = vpop.f32.mrb[0].mxu0
        %v6597 = vadd.f32 0.0, %v6596
        %v6598 = vpop.f32.mrb[0].mxu0
        %6599 = vmatprep.mubr.bf16.mxu0 0
        %6600 = vmatmul.mubr.bf16.gmra.mrb[0].mxu0 %v4767
        %v6601 = vpop.f32.mrb[0].mxu0
        %v6602 = vadd.f32 0.0, %v6601
        %v6603 = vpop.f32.mrb[0].mxu0
        %v6604 = vpop.f32.mrb[0].mxu0
        %v6605 = vadd.f32 0.0, %v6604
        %v6606 = vpop.f32.mrb[0].mxu0
        %6607 = vmatprep.mubr.bf16.mxu0 0
        %6608 = vmatmul.mubr.bf16.gmra.mrb[0].mxu0 %v4770
        %v6609 = vpop.f32.mrb[0].mxu0
        %v6610 = vadd.f32 0.0, %v6609
        %v6611 = vpop.f32.mrb[0].mxu0
        %v6612 = vpop.f32.mrb[0].mxu0
        %v6613 = vadd.f32 0.0, %v6612
        %v6614 = vpop.f32.mrb[0].mxu0
        %6615 = vmatprep.mubr.bf16.mxu0 0
        %6616 = vmatmul.mubr.bf16.gmra.mrb[0].mxu0 %v6546
        %v6617 = vpop.f32.mrb[0].mxu0
        %v6618 = vadd.f32 0.0, %v6617
        %v6619 = vpop.f32.mrb[0].mxu0
        %v6620 = vpop.f32.mrb[0].mxu0
        %v6621 = vadd.f32 0.0, %v6620
        %v6622 = vpop.f32.mrb[0].mxu0
        %6623 = vmatprep.mubr.bf16.mxu0 0
        %6624 = vmatmul.mubr.bf16.gmra.mrb[0].mxu0 %v4776
        %v6625 = vpop.f32.mrb[0].mxu0
        %v6626 = vadd.f32 0.0, %v6625
        %v6627 = vpop.f32.mrb[0].mxu0
        %v6628 = vpop.f32.mrb[0].mxu0
        %v6629 = vadd.f32 0.0, %v6628
        %v6630 = vpop.f32.mrb[0].mxu0
        %6631 = vmatprep.mubr.bf16.mxu0 0
        %6632 = vmatmul.mubr.bf16.gmra.mrb[0].mxu0 %v4779
        %v6633 = vpop.f32.mrb[0].mxu0
        %v6634 = vadd.f32 0.0, %v6633
        %v6635 = vpop.f32.mrb[0].mxu0
        %v6636 = vpop.f32.mrb[0].mxu0
        %v6637 = vadd.f32 0.0, %v6636
        %v6638 = vpop.f32.mrb[0].mxu0
        %6639 = vmatprep.mubr.bf16.mxu0 0
        %6640 = vmatmul.mubr.bf16.gmra.mrb[0].mxu0 %v4782
        %v6641 = vpop.f32.mrb[0].mxu0
        %v6642 = vadd.f32 0.0, %v6641
        %v6643 = vpop.f32.mrb[0].mxu0
        %v6644 = vpop.f32.mrb[0].mxu0
        %v6645 = vadd.f32 0.0, %v6644
        %v6646 = vpop.f32.mrb[0].mxu0
        %6647 = vmatprep.mubr.bf16.mxu0 0
        %6648 = vmatmul.mubr.bf16.gmra.mrb[0].mxu0 %v4785
        %v6649 = vpop.f32.mrb[0].mxu0
        %v6650 = vadd.f32 0.0, %v6649
        %v6651 = vpop.f32.mrb[0].mxu0
        %v6652 = vpop.f32.mrb[0].mxu0
        %v6653 = vadd.f32 0.0, %v6652
        %v6654 = vpop.f32.mrb[0].mxu0
        %6655 = vmatprep.mubr.bf16.mxu0 0
        %6656 = vmatmul.mubr.bf16.gmra.mrb[0].mxu0 %v6549
        %v6657 = vpop.f32.mrb[0].mxu0
        %v6658 = vadd.f32 0.0, %v6657
        %v6659 = vpop.f32.mrb[0].mxu0
        %v6660 = vpop.f32.mrb[0].mxu0
        %v6661 = vadd.f32 0.0, %v6660
        %v6662 = vpop.f32.mrb[0].mxu0
        %6663 = vdwg.mxu0
        %v6664 = vadd.f32 %v6470, %v6586
        %v6665 = vadd.f32 %v6471, %v6589
        %v6666 = vadd.f32 %v6472, %v6594
        %v6667 = vadd.f32 %v6473, %v6597
        %v6668 = vadd.f32 %v6474, %v6602
        %v6669 = vadd.f32 %v6475, %v6605
        %v6670 = vadd.f32 %v6476, %v6610
        %v6671 = vadd.f32 %v6477, %v6613
        %v6672 = vadd.f32 %v6478, %v6618
        %v6673 = vadd.f32 %v6479, %v6621
        %v6674 = vadd.f32 %v6480, %v6626
        %v6675 = vadd.f32 %v6481, %v6629
        %v6676 = vadd.f32 %v6482, %v6634
        %v6677 = vadd.f32 %v6483, %v6637
        %v6678 = vadd.f32 %v6484, %v6642
        %v6679 = vadd.f32 %v6485, %v6645
        %v6680 = vadd.f32 %v6486, %v6650
        %v6681 = vadd.f32 %v6487, %v6653
        %v6682 = vadd.f32 %v6488, %v6658
        %v6683 = vadd.f32 %v6489, %v6661
        %v6684 = vunpack.c.h.b16 %v6334
        %v6685 = vpack.c.b16 %v6340, %v6340
        %v6686 = vpack.c.b16 %v6684, %v6684
        %v6688 = vshrl.u32 %v6685, 16
        %v6690 = vrot.slane %v6688, 4
        %v6691 = vshll.u32 %v6685, 16
        %v6693 = vrot.slane %v6691, 5
        %v6694 = vor.u32 %v6690, %v6693
        %v6695 = vrot.slane %v6694, 4
        %v6697 = vshll.u32 %v6686, 16
        %v6699 = vrot.slane %v6697, 5
        %v6700 = vsel %vm3188, %v6695, %v6699
        %s6701 = scalar_lea.vmem %s3, 288
        %v6702 = vld [vmem:[%s6701] sm:$0xf]
        %v6703 = vld [vmem:[%s6701 + $0x4] sm:$0xf]
        %v6704 = vld [vmem:[%s6701 + $0x8] sm:$0xf]
        %v6705 = vld [vmem:[%s6701 + $0xc] sm:$0xf]
        %v6706 = vunpack.c.l.b16 %v6700
        %v6707 = vpack.c.b16 %v6706, %v5848
        %v6712 = vunpack.c.l.b16 %v6702
        %v6713 = vunpack.c.l.b16 %v6703
        %v6714 = vunpack.c.l.b16 %v6704
        %v6715 = vunpack.c.l.b16 %v6705
        %v6716 = vpack.c.b16 %v6713, %v6712
        %v6717 = vpack.c.b16 %v6715, %v6714
        %v6721 = vsel %vm2817, %v6707, 0
        %6723 = vmatprep.subr.bf16.mxu0 0
        %6724 = vmatpush1.bf16.msra.mxu0 %v6716
        %6725 = vmatprep.subr.bf16.mxu0 0
        %6726 = vmatpush1.bf16.msra.mxu0 %v6717
        %6727 = vmatprep.subr.bf16.mxu0 0
        %6728 = vmatpush1.bf16.msra.mxu0 0
        %6729 = vmatprep.subr.bf16.mxu0 0
        %6730 = vmatpush1.bf16.msra.mxu0 0
        %6731 = vmatprep.subr.bf16.mxu0 0
        %6732 = vmatpush1.bf16.msra.mxu0 0
        %6733 = vmatprep.subr.bf16.mxu0 0
        %6734 = vmatpush1.bf16.msra.mxu0 0
        %6735 = vmatprep.subr.bf16.mxu0 0
        %6736 = vmatpush1.bf16.msra.mxu0 0
        %6737 = vmatprep.subr.bf16.mxu0 0
        %6738 = vmatpush1.bf16.msra.mxu0 0
        %6739 = vmatprep.subr.bf16.mxu0 0
        %6740 = vmatpush1.bf16.msra.mxu0 0
        %6741 = vmatprep.subr.bf16.mxu0 0
        %6742 = vmatpush1.bf16.msra.mxu0 0
        %6743 = vmatprep.subr.bf16.mxu0 0
        %6744 = vmatpush1.bf16.msra.mxu0 0
        %6745 = vmatprep.subr.bf16.mxu0 0
        %6746 = vmatpush1.bf16.msra.mxu0 0
        %6747 = vmatprep.subr.bf16.mxu0 0
        %6748 = vmatpush1.bf16.msra.mxu0 0
        %6749 = vmatprep.subr.bf16.mxu0 0
        %6750 = vmatpush1.bf16.msra.mxu0 0
        %6751 = vmatprep.subr.bf16.mxu0 0
        %6752 = vmatpush1.bf16.msra.mxu0 0
        %6753 = vmatprep.subr.bf16.mxu0 0
        %6754 = vmatpush1.bf16.msra.mxu0 0
        %6755 = vmatprep.mubr.bf16.mxu0 0
        %6756 = vmatmul.mubr.bf16.gmra.mrb[0].mxu0 %v4776
        %v6757 = vpop.f32.mrb[0].mxu0
        %v6758 = vadd.f32 0.0, %v6757
        %v6759 = vpop.f32.mrb[0].mxu0
        %v6760 = vpop.f32.mrb[0].mxu0
        %v6761 = vadd.f32 0.0, %v6760
        %v6762 = vpop.f32.mrb[0].mxu0
        %6763 = vmatprep.mubr.bf16.mxu0 0
        %6764 = vmatmul.mubr.bf16.gmra.mrb[0].mxu0 %v4779
        %v6765 = vpop.f32.mrb[0].mxu0
        %v6766 = vadd.f32 0.0, %v6765
        %v6767 = vpop.f32.mrb[0].mxu0
        %v6768 = vpop.f32.mrb[0].mxu0
        %v6769 = vadd.f32 0.0, %v6768
        %v6770 = vpop.f32.mrb[0].mxu0
        %6771 = vmatprep.mubr.bf16.mxu0 0
        %6772 = vmatmul.mubr.bf16.gmra.mrb[0].mxu0 %v4782
        %v6773 = vpop.f32.mrb[0].mxu0
        %v6774 = vadd.f32 0.0, %v6773
        %v6775 = vpop.f32.mrb[0].mxu0
        %v6776 = vpop.f32.mrb[0].mxu0
        %v6777 = vadd.f32 0.0, %v6776
        %v6778 = vpop.f32.mrb[0].mxu0
        %6779 = vmatprep.mubr.bf16.mxu0 0
        %6780 = vmatmul.mubr.bf16.gmra.mrb[0].mxu0 %v4785
        %v6781 = vpop.f32.mrb[0].mxu0
        %v6782 = vadd.f32 0.0, %v6781
        %v6783 = vpop.f32.mrb[0].mxu0
        %v6784 = vpop.f32.mrb[0].mxu0
        %v6785 = vadd.f32 0.0, %v6784
        %v6786 = vpop.f32.mrb[0].mxu0
        %6787 = vmatprep.mubr.bf16.mxu0 0
        %6788 = vmatmul.mubr.bf16.gmra.mrb[0].mxu0 %v6549
        %v6789 = vpop.f32.mrb[0].mxu0
        %v6790 = vadd.f32 0.0, %v6789
        %v6791 = vpop.f32.mrb[0].mxu0
        %v6792 = vpop.f32.mrb[0].mxu0
        %v6793 = vadd.f32 0.0, %v6792
        %v6794 = vpop.f32.mrb[0].mxu0
        %6795 = vmatprep.mubr.bf16.mxu0 0
        %6796 = vmatmul.mubr.bf16.gmra.mrb[0].mxu0 %v4964
        %v6797 = vpop.f32.mrb[0].mxu0
        %v6798 = vadd.f32 0.0, %v6797
        %v6799 = vpop.f32.mrb[0].mxu0
        %v6800 = vpop.f32.mrb[0].mxu0
        %v6801 = vadd.f32 0.0, %v6800
        %v6802 = vpop.f32.mrb[0].mxu0
        %6803 = vmatprep.mubr.bf16.mxu0 0
        %6804 = vmatmul.mubr.bf16.gmra.mrb[0].mxu0 %v4967
        %v6805 = vpop.f32.mrb[0].mxu0
        %v6806 = vadd.f32 0.0, %v6805
        %v6807 = vpop.f32.mrb[0].mxu0
        %v6808 = vpop.f32.mrb[0].mxu0
        %v6809 = vadd.f32 0.0, %v6808
        %v6810 = vpop.f32.mrb[0].mxu0
        %6811 = vmatprep.mubr.bf16.mxu0 0
        %6812 = vmatmul.mubr.bf16.gmra.mrb[0].mxu0 %v4970
        %v6813 = vpop.f32.mrb[0].mxu0
        %v6814 = vadd.f32 0.0, %v6813
        %v6815 = vpop.f32.mrb[0].mxu0
        %v6816 = vpop.f32.mrb[0].mxu0
        %v6817 = vadd.f32 0.0, %v6816
        %v6818 = vpop.f32.mrb[0].mxu0
        %6819 = vmatprep.mubr.bf16.mxu0 0
        %6820 = vmatmul.mubr.bf16.gmra.mrb[0].mxu0 %v4973
        %v6821 = vpop.f32.mrb[0].mxu0
        %v6822 = vadd.f32 0.0, %v6821
        %v6823 = vpop.f32.mrb[0].mxu0
        %v6824 = vpop.f32.mrb[0].mxu0
        %v6825 = vadd.f32 0.0, %v6824
        %v6826 = vpop.f32.mrb[0].mxu0
        %6827 = vmatprep.mubr.bf16.mxu0 0
        %6828 = vmatmul.mubr.bf16.gmra.mrb[0].mxu0 %v6721
        %v6829 = vpop.f32.mrb[0].mxu0
        %v6830 = vadd.f32 0.0, %v6829
        %v6831 = vpop.f32.mrb[0].mxu0
        %v6832 = vpop.f32.mrb[0].mxu0
        %v6833 = vadd.f32 0.0, %v6832
        %v6834 = vpop.f32.mrb[0].mxu0
        %6835 = vdwg.mxu0
        %v6836 = vadd.f32 %v6664, %v6758
        %v6837 = vadd.f32 %v6665, %v6761
        %v6838 = vadd.f32 %v6666, %v6766
        %v6839 = vadd.f32 %v6667, %v6769
        %v6840 = vadd.f32 %v6668, %v6774
        %v6841 = vadd.f32 %v6669, %v6777
        %v6842 = vadd.f32 %v6670, %v6782
        %v6843 = vadd.f32 %v6671, %v6785
        %v6844 = vadd.f32 %v6672, %v6790
        %v6845 = vadd.f32 %v6673, %v6793
        %v6846 = vadd.f32 %v6674, %v6798
        %v6847 = vadd.f32 %v6675, %v6801
        %v6848 = vadd.f32 %v6676, %v6806
        %v6849 = vadd.f32 %v6677, %v6809
        %v6850 = vadd.f32 %v6678, %v6814
        %v6851 = vadd.f32 %v6679, %v6817
        %v6852 = vadd.f32 %v6680, %v6822
        %v6853 = vadd.f32 %v6681, %v6825
        %v6854 = vadd.f32 %v6682, %v6830
        %v6855 = vadd.f32 %v6683, %v6833
        %v6856 = vrot.slane %v6492, 5
        %v6857 = vrot.slane %v6856, 4
        %v6858 = vrot.slane %v6493, 5
        %v6859 = vsel %vm4031, %v6857, %v6858
        %v6860 = vrot.slane %v6494, 5
        %v6861 = vrot.slane %v6860, 4
        %v6862 = vrot.slane %v6495, 5
        %v6863 = vsel %vm4031, %v6861, %v6862
        %s6864 = scalar_lea.vmem %s3, 304
        %v6865 = vld [vmem:[%s6864] sm:$0xf]
        %v6866 = vld [vmem:[%s6864 + $0x4] sm:$0xf]
        %v6867 = vld [vmem:[%s6864 + $0x8] sm:$0xf]
        %v6868 = vld [vmem:[%s6864 + $0xc] sm:$0xf]
        %v6869 = vunpack.c.l.b16 %v6859
        %v6870 = vunpack.c.l.b16 %v6863
        %v6871 = vpack.c.b16 %v6869, %v6011
        %v6872 = vpack.c.b16 %v6870, %v6012
        %v6877 = vunpack.c.l.b16 %v6865
        %v6878 = vunpack.c.l.b16 %v6866
        %v6879 = vunpack.c.l.b16 %v6867
        %v6880 = vunpack.c.l.b16 %v6868
        %v6881 = vpack.c.b16 %v6878, %v6877
        %v6882 = vpack.c.b16 %v6880, %v6879
        %v6886 = vsel %vm2817, %v6871, 0
        %v6889 = vsel %vm2817, %v6872, 0
        %6891 = vmatprep.subr.bf16.mxu0 0
        %6892 = vmatpush1.bf16.msra.mxu0 %v6881
        %6893 = vmatprep.subr.bf16.mxu0 0
        %6894 = vmatpush1.bf16.msra.mxu0 %v6882
        %6895 = vmatprep.subr.bf16.mxu0 0
        %6896 = vmatpush1.bf16.msra.mxu0 0
        %6897 = vmatprep.subr.bf16.mxu0 0
        %6898 = vmatpush1.bf16.msra.mxu0 0
        %6899 = vmatprep.subr.bf16.mxu0 0
        %6900 = vmatpush1.bf16.msra.mxu0 0
        %6901 = vmatprep.subr.bf16.mxu0 0
        %6902 = vmatpush1.bf16.msra.mxu0 0
        %6903 = vmatprep.subr.bf16.mxu0 0
        %6904 = vmatpush1.bf16.msra.mxu0 0
        %6905 = vmatprep.subr.bf16.mxu0 0
        %6906 = vmatpush1.bf16.msra.mxu0 0
        %6907 = vmatprep.subr.bf16.mxu0 0
        %6908 = vmatpush1.bf16.msra.mxu0 0
        %6909 = vmatprep.subr.bf16.mxu0 0
        %6910 = vmatpush1.bf16.msra.mxu0 0
        %6911 = vmatprep.subr.bf16.mxu0 0
        %6912 = vmatpush1.bf16.msra.mxu0 0
        %6913 = vmatprep.subr.bf16.mxu0 0
        %6914 = vmatpush1.bf16.msra.mxu0 0
        %6915 = vmatprep.subr.bf16.mxu0 0
        %6916 = vmatpush1.bf16.msra.mxu0 0
        %6917 = vmatprep.subr.bf16.mxu0 0
        %6918 = vmatpush1.bf16.msra.mxu0 0
        %6919 = vmatprep.subr.bf16.mxu0 0
        %6920 = vmatpush1.bf16.msra.mxu0 0
        %6921 = vmatprep.subr.bf16.mxu0 0
        %6922 = vmatpush1.bf16.msra.mxu0 0
        %6923 = vmatprep.mubr.bf16.mxu0 0
        %6924 = vmatmul.mubr.bf16.gmra.mrb[0].mxu0 %v5149
        %v6925 = vpop.f32.mrb[0].mxu0
        %v6926 = vadd.f32 0.0, %v6925
        %v6927 = vpop.f32.mrb[0].mxu0
        %v6928 = vpop.f32.mrb[0].mxu0
        %v6929 = vadd.f32 0.0, %v6928
        %v6930 = vpop.f32.mrb[0].mxu0
        %6931 = vmatprep.mubr.bf16.mxu0 0
        %6932 = vmatmul.mubr.bf16.gmra.mrb[0].mxu0 %v5152
        %v6933 = vpop.f32.mrb[0].mxu0
        %v6934 = vadd.f32 0.0, %v6933
        %v6935 = vpop.f32.mrb[0].mxu0
        %v6936 = vpop.f32.mrb[0].mxu0
        %v6937 = vadd.f32 0.0, %v6936
        %v6938 = vpop.f32.mrb[0].mxu0
        %6939 = vmatprep.mubr.bf16.mxu0 0
        %6940 = vmatmul.mubr.bf16.gmra.mrb[0].mxu0 %v5155
        %v6941 = vpop.f32.mrb[0].mxu0
        %v6942 = vadd.f32 0.0, %v6941
        %v6943 = vpop.f32.mrb[0].mxu0
        %v6944 = vpop.f32.mrb[0].mxu0
        %v6945 = vadd.f32 0.0, %v6944
        %v6946 = vpop.f32.mrb[0].mxu0
        %6947 = vmatprep.mubr.bf16.mxu0 0
        %6948 = vmatmul.mubr.bf16.gmra.mrb[0].mxu0 %v5158
        %v6949 = vpop.f32.mrb[0].mxu0
        %v6950 = vadd.f32 0.0, %v6949
        %v6951 = vpop.f32.mrb[0].mxu0
        %v6952 = vpop.f32.mrb[0].mxu0
        %v6953 = vadd.f32 0.0, %v6952
        %v6954 = vpop.f32.mrb[0].mxu0
        %6955 = vmatprep.mubr.bf16.mxu0 0
        %6956 = vmatmul.mubr.bf16.gmra.mrb[0].mxu0 %v6886
        %v6957 = vpop.f32.mrb[0].mxu0
        %v6958 = vadd.f32 0.0, %v6957
        %v6959 = vpop.f32.mrb[0].mxu0
        %v6960 = vpop.f32.mrb[0].mxu0
        %v6961 = vadd.f32 0.0, %v6960
        %v6962 = vpop.f32.mrb[0].mxu0
        %6963 = vmatprep.mubr.bf16.mxu0 0
        %6964 = vmatmul.mubr.bf16.gmra.mrb[0].mxu0 %v5164
        %v6965 = vpop.f32.mrb[0].mxu0
        %v6966 = vadd.f32 0.0, %v6965
        %v6967 = vpop.f32.mrb[0].mxu0
        %v6968 = vpop.f32.mrb[0].mxu0
        %v6969 = vadd.f32 0.0, %v6968
        %v6970 = vpop.f32.mrb[0].mxu0
        %6971 = vmatprep.mubr.bf16.mxu0 0
        %6972 = vmatmul.mubr.bf16.gmra.mrb[0].mxu0 %v5167
        %v6973 = vpop.f32.mrb[0].mxu0
        %v6974 = vadd.f32 0.0, %v6973
        %v6975 = vpop.f32.mrb[0].mxu0
        %v6976 = vpop.f32.mrb[0].mxu0
        %v6977 = vadd.f32 0.0, %v6976
        %v6978 = vpop.f32.mrb[0].mxu0
        %6979 = vmatprep.mubr.bf16.mxu0 0
        %6980 = vmatmul.mubr.bf16.gmra.mrb[0].mxu0 %v5170
        %v6981 = vpop.f32.mrb[0].mxu0
        %v6982 = vadd.f32 0.0, %v6981
        %v6983 = vpop.f32.mrb[0].mxu0
        %v6984 = vpop.f32.mrb[0].mxu0
        %v6985 = vadd.f32 0.0, %v6984
        %v6986 = vpop.f32.mrb[0].mxu0
        %6987 = vmatprep.mubr.bf16.mxu0 0
        %6988 = vmatmul.mubr.bf16.gmra.mrb[0].mxu0 %v5173
        %v6989 = vpop.f32.mrb[0].mxu0
        %v6990 = vadd.f32 0.0, %v6989
        %v6991 = vpop.f32.mrb[0].mxu0
        %v6992 = vpop.f32.mrb[0].mxu0
        %v6993 = vadd.f32 0.0, %v6992
        %v6994 = vpop.f32.mrb[0].mxu0
        %6995 = vmatprep.mubr.bf16.mxu0 0
        %6996 = vmatmul.mubr.bf16.gmra.mrb[0].mxu0 %v6889
        %v6997 = vpop.f32.mrb[0].mxu0
        %v6998 = vadd.f32 0.0, %v6997
        %v6999 = vpop.f32.mrb[0].mxu0
        %v7000 = vpop.f32.mrb[0].mxu0
        %v7001 = vadd.f32 0.0, %v7000
        %v7002 = vpop.f32.mrb[0].mxu0
        %7003 = vdwg.mxu0
        %v7004 = vadd.f32 %v6836, %v6926
        %v7005 = vadd.f32 %v6837, %v6929
        %v7006 = vadd.f32 %v6838, %v6934
        %v7007 = vadd.f32 %v6839, %v6937
        %v7008 = vadd.f32 %v6840, %v6942
        %v7009 = vadd.f32 %v6841, %v6945
        %v7010 = vadd.f32 %v6842, %v6950
        %v7011 = vadd.f32 %v6843, %v6953
        %v7012 = vadd.f32 %v6844, %v6958
        %v7013 = vadd.f32 %v6845, %v6961
        %v7014 = vadd.f32 %v6846, %v6966
        %v7015 = vadd.f32 %v6847, %v6969
        %v7016 = vadd.f32 %v6848, %v6974
        %v7017 = vadd.f32 %v6849, %v6977
        %v7018 = vadd.f32 %v6850, %v6982
        %v7019 = vadd.f32 %v6851, %v6985
        %v7020 = vadd.f32 %v6852, %v6990
        %v7021 = vadd.f32 %v6853, %v6993
        %v7022 = vadd.f32 %v6854, %v6998
        %v7023 = vadd.f32 %v6855, %v7001
        %s7024 = scalar_lea.vmem %s3, 320
        %v7025 = vld [vmem:[%s7024] sm:$0xf]
        %v7026 = vld [vmem:[%s7024 + $0x4] sm:$0xf]
        %v7027 = vld [vmem:[%s7024 + $0x8] sm:$0xf]
        %v7028 = vld [vmem:[%s7024 + $0xc] sm:$0xf]
        %v7031 = vunpack.c.l.b16 %v2615
        %v7032 = vunpack.c.l.b16 %v2685
        %v7033 = vpack.c.b16 %v7031, %v6173
        %v7034 = vpack.c.b16 %v7032, %v6174
        %v7039 = vunpack.c.l.b16 %v7025
        %v7040 = vunpack.c.l.b16 %v7026
        %v7041 = vunpack.c.l.b16 %v7027
        %v7042 = vunpack.c.l.b16 %v7028
        %v7043 = vpack.c.b16 %v7040, %v7039
        %v7044 = vpack.c.b16 %v7042, %v7041
        %v7048 = vsel %vm2817, %v7033, 0
        %v7051 = vsel %vm2817, %v7034, 0
        %7053 = vmatprep.subr.bf16.mxu0 0
        %7054 = vmatpush1.bf16.msra.mxu0 %v7043
        %7055 = vmatprep.subr.bf16.mxu0 0
        %7056 = vmatpush1.bf16.msra.mxu0 %v7044
        %7057 = vmatprep.subr.bf16.mxu0 0
        %7058 = vmatpush1.bf16.msra.mxu0 0
        %7059 = vmatprep.subr.bf16.mxu0 0
        %7060 = vmatpush1.bf16.msra.mxu0 0
        %7061 = vmatprep.subr.bf16.mxu0 0
        %7062 = vmatpush1.bf16.msra.mxu0 0
        %7063 = vmatprep.subr.bf16.mxu0 0
        %7064 = vmatpush1.bf16.msra.mxu0 0
        %7065 = vmatprep.subr.bf16.mxu0 0
        %7066 = vmatpush1.bf16.msra.mxu0 0
        %7067 = vmatprep.subr.bf16.mxu0 0
        %7068 = vmatpush1.bf16.msra.mxu0 0
        %7069 = vmatprep.subr.bf16.mxu0 0
        %7070 = vmatpush1.bf16.msra.mxu0 0
        %7071 = vmatprep.subr.bf16.mxu0 0
        %7072 = vmatpush1.bf16.msra.mxu0 0
        %7073 = vmatprep.subr.bf16.mxu0 0
        %7074 = vmatpush1.bf16.msra.mxu0 0
        %7075 = vmatprep.subr.bf16.mxu0 0
        %7076 = vmatpush1.bf16.msra.mxu0 0
        %7077 = vmatprep.subr.bf16.mxu0 0
        %7078 = vmatpush1.bf16.msra.mxu0 0
        %7079 = vmatprep.subr.bf16.mxu0 0
        %7080 = vmatpush1.bf16.msra.mxu0 0
        %7081 = vmatprep.subr.bf16.mxu0 0
        %7082 = vmatpush1.bf16.msra.mxu0 0
        %7083 = vmatprep.subr.bf16.mxu0 0
        %7084 = vmatpush1.bf16.msra.mxu0 0
        %7085 = vmatprep.mubr.bf16.mxu0 0
        %7086 = vmatmul.mubr.bf16.gmra.mrb[0].mxu0 %v3005
        %v7087 = vpop.f32.mrb[0].mxu0
        %v7088 = vadd.f32 0.0, %v7087
        %v7089 = vpop.f32.mrb[0].mxu0
        %v7090 = vpop.f32.mrb[0].mxu0
        %v7091 = vadd.f32 0.0, %v7090
        %v7092 = vpop.f32.mrb[0].mxu0
        %7093 = vmatprep.mubr.bf16.mxu0 0
        %7094 = vmatmul.mubr.bf16.gmra.mrb[0].mxu0 %v3008
        %v7095 = vpop.f32.mrb[0].mxu0
        %v7096 = vadd.f32 0.0, %v7095
        %v7097 = vpop.f32.mrb[0].mxu0
        %v7098 = vpop.f32.mrb[0].mxu0
        %v7099 = vadd.f32 0.0, %v7098
        %v7100 = vpop.f32.mrb[0].mxu0
        %7101 = vmatprep.mubr.bf16.mxu0 0
        %7102 = vmatmul.mubr.bf16.gmra.mrb[0].mxu0 %v3011
        %v7103 = vpop.f32.mrb[0].mxu0
        %v7104 = vadd.f32 0.0, %v7103
        %v7105 = vpop.f32.mrb[0].mxu0
        %v7106 = vpop.f32.mrb[0].mxu0
        %v7107 = vadd.f32 0.0, %v7106
        %v7108 = vpop.f32.mrb[0].mxu0
        %7109 = vmatprep.mubr.bf16.mxu0 0
        %7110 = vmatmul.mubr.bf16.gmra.mrb[0].mxu0 %v5332
        %v7111 = vpop.f32.mrb[0].mxu0
        %v7112 = vadd.f32 0.0, %v7111
        %v7113 = vpop.f32.mrb[0].mxu0
        %v7114 = vpop.f32.mrb[0].mxu0
        %v7115 = vadd.f32 0.0, %v7114
        %v7116 = vpop.f32.mrb[0].mxu0
        %7117 = vmatprep.mubr.bf16.mxu0 0
        %7118 = vmatmul.mubr.bf16.gmra.mrb[0].mxu0 %v7048
        %v7119 = vpop.f32.mrb[0].mxu0
        %v7120 = vadd.f32 0.0, %v7119
        %v7121 = vpop.f32.mrb[0].mxu0
        %v7122 = vpop.f32.mrb[0].mxu0
        %v7123 = vadd.f32 0.0, %v7122
        %v7124 = vpop.f32.mrb[0].mxu0
        %7125 = vmatprep.mubr.bf16.mxu0 0
        %7126 = vmatmul.mubr.bf16.gmra.mrb[0].mxu0 %v2825
        %v7127 = vpop.f32.mrb[0].mxu0
        %v7128 = vadd.f32 0.0, %v7127
        %v7129 = vpop.f32.mrb[0].mxu0
        %v7130 = vpop.f32.mrb[0].mxu0
        %v7131 = vadd.f32 0.0, %v7130
        %v7132 = vpop.f32.mrb[0].mxu0
        %7133 = vmatprep.mubr.bf16.mxu0 0
        %7134 = vmatmul.mubr.bf16.gmra.mrb[0].mxu0 %v2828
        %v7135 = vpop.f32.mrb[0].mxu0
        %v7136 = vadd.f32 0.0, %v7135
        %v7137 = vpop.f32.mrb[0].mxu0
        %v7138 = vpop.f32.mrb[0].mxu0
        %v7139 = vadd.f32 0.0, %v7138
        %v7140 = vpop.f32.mrb[0].mxu0
        %7141 = vmatprep.mubr.bf16.mxu0 0
        %7142 = vmatmul.mubr.bf16.gmra.mrb[0].mxu0 %v2831
        %v7143 = vpop.f32.mrb[0].mxu0
        %v7144 = vadd.f32 0.0, %v7143
        %v7145 = vpop.f32.mrb[0].mxu0
        %v7146 = vpop.f32.mrb[0].mxu0
        %v7147 = vadd.f32 0.0, %v7146
        %v7148 = vpop.f32.mrb[0].mxu0
        %7149 = vmatprep.mubr.bf16.mxu0 0
        %7150 = vmatmul.mubr.bf16.gmra.mrb[0].mxu0 %v5335
        %v7151 = vpop.f32.mrb[0].mxu0
        %v7152 = vadd.f32 0.0, %v7151
        %v7153 = vpop.f32.mrb[0].mxu0
        %v7154 = vpop.f32.mrb[0].mxu0
        %v7155 = vadd.f32 0.0, %v7154
        %v7156 = vpop.f32.mrb[0].mxu0
        %7157 = vmatprep.mubr.bf16.mxu0 0
        %7158 = vmatmul.mubr.bf16.gmra.mrb[0].mxu0 %v7051
        %v7159 = vpop.f32.mrb[0].mxu0
        %v7160 = vadd.f32 0.0, %v7159
        %v7161 = vpop.f32.mrb[0].mxu0
        %v7162 = vpop.f32.mrb[0].mxu0
        %v7163 = vadd.f32 0.0, %v7162
        %v7164 = vpop.f32.mrb[0].mxu0
        %7165 = vdwg.mxu0
        %v7166 = vadd.f32 %v7004, %v7088
        %v7167 = vadd.f32 %v7005, %v7091
        %v7168 = vadd.f32 %v7006, %v7096
        %v7169 = vadd.f32 %v7007, %v7099
        %v7170 = vadd.f32 %v7008, %v7104
        %v7171 = vadd.f32 %v7009, %v7107
        %v7172 = vadd.f32 %v7010, %v7112
        %v7173 = vadd.f32 %v7011, %v7115
        %v7174 = vadd.f32 %v7012, %v7120
        %v7175 = vadd.f32 %v7013, %v7123
        %v7176 = vadd.f32 %v7014, %v7128
        %v7177 = vadd.f32 %v7015, %v7131
        %v7178 = vadd.f32 %v7016, %v7136
        %v7179 = vadd.f32 %v7017, %v7139
        %v7180 = vadd.f32 %v7018, %v7144
        %v7181 = vadd.f32 %v7019, %v7147
        %v7182 = vadd.f32 %v7020, %v7152
        %v7183 = vadd.f32 %v7021, %v7155
        %v7184 = vadd.f32 %v7022, %v7160
        %v7185 = vadd.f32 %v7023, %v7163
        %v7187 = vshrl.u32 %v2615, 16
        %v7189 = vshll.u32 %v2615, 16
        %v7191 = vrot.slane %v7189, 1
        %v7192 = vor.u32 %v7187, %v7191
        %s7193 = scalar_lea.vmem %s3, 336
        %v7194 = vld [vmem:[%s7193] sm:$0xf]
        %v7195 = vld [vmem:[%s7193 + $0x4] sm:$0xf]
        %v7196 = vld [vmem:[%s7193 + $0x8] sm:$0xf]
        %v7197 = vld [vmem:[%s7193 + $0xc] sm:$0xf]
        %v7198 = vunpack.c.l.b16 %v7192
        %v7199 = vpack.c.b16 %v7198, %v6340
        %v7204 = vunpack.c.l.b16 %v7194
        %v7205 = vunpack.c.l.b16 %v7195
        %v7206 = vunpack.c.l.b16 %v7196
        %v7207 = vunpack.c.l.b16 %v7197
        %v7208 = vpack.c.b16 %v7205, %v7204
        %v7209 = vpack.c.b16 %v7207, %v7206
        %v7213 = vsel %vm2817, %v7199, 0
        %7215 = vmatprep.subr.bf16.mxu0 0
        %7216 = vmatpush1.bf16.msra.mxu0 %v7208
        %7217 = vmatprep.subr.bf16.mxu0 0
        %7218 = vmatpush1.bf16.msra.mxu0 %v7209
        %7219 = vmatprep.subr.bf16.mxu0 0
        %7220 = vmatpush1.bf16.msra.mxu0 0
        %7221 = vmatprep.subr.bf16.mxu0 0
        %7222 = vmatpush1.bf16.msra.mxu0 0
        %7223 = vmatprep.subr.bf16.mxu0 0
        %7224 = vmatpush1.bf16.msra.mxu0 0
        %7225 = vmatprep.subr.bf16.mxu0 0
        %7226 = vmatpush1.bf16.msra.mxu0 0
        %7227 = vmatprep.subr.bf16.mxu0 0
        %7228 = vmatpush1.bf16.msra.mxu0 0
        %7229 = vmatprep.subr.bf16.mxu0 0
        %7230 = vmatpush1.bf16.msra.mxu0 0
        %7231 = vmatprep.subr.bf16.mxu0 0
        %7232 = vmatpush1.bf16.msra.mxu0 0
        %7233 = vmatprep.subr.bf16.mxu0 0
        %7234 = vmatpush1.bf16.msra.mxu0 0
        %7235 = vmatprep.subr.bf16.mxu0 0
        %7236 = vmatpush1.bf16.msra.mxu0 0
        %7237 = vmatprep.subr.bf16.mxu0 0
        %7238 = vmatpush1.bf16.msra.mxu0 0
        %7239 = vmatprep.subr.bf16.mxu0 0
        %7240 = vmatpush1.bf16.msra.mxu0 0
        %7241 = vmatprep.subr.bf16.mxu0 0
        %7242 = vmatpush1.bf16.msra.mxu0 0
        %7243 = vmatprep.subr.bf16.mxu0 0
        %7244 = vmatpush1.bf16.msra.mxu0 0
        %7245 = vmatprep.subr.bf16.mxu0 0
        %7246 = vmatpush1.bf16.msra.mxu0 0
        %7247 = vmatprep.mubr.bf16.mxu0 0
        %7248 = vmatmul.mubr.bf16.gmra.mrb[0].mxu0 %v2825
        %v7249 = vpop.f32.mrb[0].mxu0
        %v7250 = vadd.f32 0.0, %v7249
        %v7251 = vpop.f32.mrb[0].mxu0
        %v7252 = vpop.f32.mrb[0].mxu0
        %v7253 = vadd.f32 0.0, %v7252
        %v7254 = vpop.f32.mrb[0].mxu0
        %7255 = vmatprep.mubr.bf16.mxu0 0
        %7256 = vmatmul.mubr.bf16.gmra.mrb[0].mxu0 %v2828
        %v7257 = vpop.f32.mrb[0].mxu0
        %v7258 = vadd.f32 0.0, %v7257
        %v7259 = vpop.f32.mrb[0].mxu0
        %v7260 = vpop.f32.mrb[0].mxu0
        %v7261 = vadd.f32 0.0, %v7260
        %v7262 = vpop.f32.mrb[0].mxu0
        %7263 = vmatprep.mubr.bf16.mxu0 0
        %7264 = vmatmul.mubr.bf16.gmra.mrb[0].mxu0 %v2831
        %v7265 = vpop.f32.mrb[0].mxu0
        %v7266 = vadd.f32 0.0, %v7265
        %v7267 = vpop.f32.mrb[0].mxu0
        %v7268 = vpop.f32.mrb[0].mxu0
        %v7269 = vadd.f32 0.0, %v7268
        %v7270 = vpop.f32.mrb[0].mxu0
        %7271 = vmatprep.mubr.bf16.mxu0 0
        %7272 = vmatmul.mubr.bf16.gmra.mrb[0].mxu0 %v5335
        %v7273 = vpop.f32.mrb[0].mxu0
        %v7274 = vadd.f32 0.0, %v7273
        %v7275 = vpop.f32.mrb[0].mxu0
        %v7276 = vpop.f32.mrb[0].mxu0
        %v7277 = vadd.f32 0.0, %v7276
        %v7278 = vpop.f32.mrb[0].mxu0
        %7279 = vmatprep.mubr.bf16.mxu0 0
        %7280 = vmatmul.mubr.bf16.gmra.mrb[0].mxu0 %v7051
        %v7281 = vpop.f32.mrb[0].mxu0
        %v7282 = vadd.f32 0.0, %v7281
        %v7283 = vpop.f32.mrb[0].mxu0
        %v7284 = vpop.f32.mrb[0].mxu0
        %v7285 = vadd.f32 0.0, %v7284
        %v7286 = vpop.f32.mrb[0].mxu0
        %7287 = vmatprep.mubr.bf16.mxu0 0
        %7288 = vmatmul.mubr.bf16.gmra.mrb[0].mxu0 %v2840
        %v7289 = vpop.f32.mrb[0].mxu0
        %v7290 = vadd.f32 0.0, %v7289
        %v7291 = vpop.f32.mrb[0].mxu0
        %v7292 = vpop.f32.mrb[0].mxu0
        %v7293 = vadd.f32 0.0, %v7292
        %v7294 = vpop.f32.mrb[0].mxu0
        %7295 = vmatprep.mubr.bf16.mxu0 0
        %7296 = vmatmul.mubr.bf16.gmra.mrb[0].mxu0 %v2843
        %v7297 = vpop.f32.mrb[0].mxu0
        %v7298 = vadd.f32 0.0, %v7297
        %v7299 = vpop.f32.mrb[0].mxu0
        %v7300 = vpop.f32.mrb[0].mxu0
        %v7301 = vadd.f32 0.0, %v7300
        %v7302 = vpop.f32.mrb[0].mxu0
        %7303 = vmatprep.mubr.bf16.mxu0 0
        %7304 = vmatmul.mubr.bf16.gmra.mrb[0].mxu0 %v2846
        %v7305 = vpop.f32.mrb[0].mxu0
        %v7306 = vadd.f32 0.0, %v7305
        %v7307 = vpop.f32.mrb[0].mxu0
        %v7308 = vpop.f32.mrb[0].mxu0
        %v7309 = vadd.f32 0.0, %v7308
        %v7310 = vpop.f32.mrb[0].mxu0
        %7311 = vmatprep.mubr.bf16.mxu0 0
        %7312 = vmatmul.mubr.bf16.gmra.mrb[0].mxu0 %v5497
        %v7313 = vpop.f32.mrb[0].mxu0
        %v7314 = vadd.f32 0.0, %v7313
        %v7315 = vpop.f32.mrb[0].mxu0
        %v7316 = vpop.f32.mrb[0].mxu0
        %v7317 = vadd.f32 0.0, %v7316
        %v7318 = vpop.f32.mrb[0].mxu0
        %7319 = vmatprep.mubr.bf16.mxu0 0
        %7320 = vmatmul.mubr.bf16.gmra.mrb[0].mxu0 %v7213
        %v7321 = vpop.f32.mrb[0].mxu0
        %v7322 = vadd.f32 0.0, %v7321
        %v7323 = vpop.f32.mrb[0].mxu0
        %v7324 = vpop.f32.mrb[0].mxu0
        %v7325 = vadd.f32 0.0, %v7324
        %v7326 = vpop.f32.mrb[0].mxu0
        %7327 = vdwg.mxu0
        %v7328 = vadd.f32 %v7166, %v7250
        %v7329 = vadd.f32 %v7167, %v7253
        %v7330 = vadd.f32 %v7168, %v7258
        %v7331 = vadd.f32 %v7169, %v7261
        %v7332 = vadd.f32 %v7170, %v7266
        %v7333 = vadd.f32 %v7171, %v7269
        %v7334 = vadd.f32 %v7172, %v7274
        %v7335 = vadd.f32 %v7173, %v7277
        %v7336 = vadd.f32 %v7174, %v7282
        %v7337 = vadd.f32 %v7175, %v7285
        %v7338 = vadd.f32 %v7176, %v7290
        %v7339 = vadd.f32 %v7177, %v7293
        %v7340 = vadd.f32 %v7178, %v7298
        %v7341 = vadd.f32 %v7179, %v7301
        %v7342 = vadd.f32 %v7180, %v7306
        %v7343 = vadd.f32 %v7181, %v7309
        %v7344 = vadd.f32 %v7182, %v7314
        %v7345 = vadd.f32 %v7183, %v7317
        %v7346 = vadd.f32 %v7184, %v7322
        %v7347 = vadd.f32 %v7185, %v7325
        %v7348 = vunpack.c.h.b16 %v2615
        %v7349 = vunpack.c.h.b16 %v2685
        %v7350 = vpack.c.b16 %v7031, %v7031
        %v7351 = vpack.c.b16 %v7348, %v7348
        %v7352 = vpack.c.b16 %v7032, %v7032
        %v7353 = vpack.c.b16 %v7349, %v7349
        %v7355 = vshrl.u32 %v7350, 16
        %v7357 = vrot.slane %v7355, 4
        %v7358 = vshll.u32 %v7350, 16
        %v7360 = vrot.slane %v7358, 5
        %v7361 = vor.u32 %v7357, %v7360
        %v7362 = vrot.slane %v7361, 4
        %v7364 = vshll.u32 %v7351, 16
        %v7366 = vrot.slane %v7364, 5
        %v7367 = vsel %vm3188, %v7362, %v7366
        %v7369 = vshrl.u32 %v7352, 16
        %v7371 = vrot.slane %v7369, 4
        %v7372 = vshll.u32 %v7352, 16
        %v7374 = vrot.slane %v7372, 5
        %v7375 = vor.u32 %v7371, %v7374
        %v7376 = vrot.slane %v7375, 4
        %v7378 = vshll.u32 %v7353, 16
        %v7380 = vrot.slane %v7378, 5
        %v7381 = vsel %vm3188, %v7376, %v7380
        %s7382 = scalar_lea.vmem %s3, 352
        %v7383 = vld [vmem:[%s7382] sm:$0xf]
        %v7384 = vld [vmem:[%s7382 + $0x4] sm:$0xf]
        %v7385 = vld [vmem:[%s7382 + $0x8] sm:$0xf]
        %v7386 = vld [vmem:[%s7382 + $0xc] sm:$0xf]
        %v7387 = vunpack.c.l.b16 %v7367
        %v7388 = vunpack.c.l.b16 %v7381
        %v7389 = vpack.c.b16 %v7387, %v6529
        %v7390 = vpack.c.b16 %v7388, %v6530
        %v7395 = vunpack.c.l.b16 %v7383
        %v7396 = vunpack.c.l.b16 %v7384
        %v7397 = vunpack.c.l.b16 %v7385
        %v7398 = vunpack.c.l.b16 %v7386
        %v7399 = vpack.c.b16 %v7396, %v7395
        %v7400 = vpack.c.b16 %v7398, %v7397
        %v7404 = vsel %vm2817, %v7389, 0
        %v7407 = vsel %vm2817, %v7390, 0
        %7409 = vmatprep.subr.bf16.mxu0 0
        %7410 = vmatpush1.bf16.msra.mxu0 %v7399
        %7411 = vmatprep.subr.bf16.mxu0 0
        %7412 = vmatpush1.bf16.msra.mxu0 %v7400
        %7413 = vmatprep.subr.bf16.mxu0 0
        %7414 = vmatpush1.bf16.msra.mxu0 0
        %7415 = vmatprep.subr.bf16.mxu0 0
        %7416 = vmatpush1.bf16.msra.mxu0 0
        %7417 = vmatprep.subr.bf16.mxu0 0
        %7418 = vmatpush1.bf16.msra.mxu0 0
        %7419 = vmatprep.subr.bf16.mxu0 0
        %7420 = vmatpush1.bf16.msra.mxu0 0
        %7421 = vmatprep.subr.bf16.mxu0 0
        %7422 = vmatpush1.bf16.msra.mxu0 0
        %7423 = vmatprep.subr.bf16.mxu0 0
        %7424 = vmatpush1.bf16.msra.mxu0 0
        %7425 = vmatprep.subr.bf16.mxu0 0
        %7426 = vmatpush1.bf16.msra.mxu0 0
        %7427 = vmatprep.subr.bf16.mxu0 0
        %7428 = vmatpush1.bf16.msra.mxu0 0
        %7429 = vmatprep.subr.bf16.mxu0 0
        %7430 = vmatpush1.bf16.msra.mxu0 0
        %7431 = vmatprep.subr.bf16.mxu0 0
        %7432 = vmatpush1.bf16.msra.mxu0 0
        %7433 = vmatprep.subr.bf16.mxu0 0
        %7434 = vmatpush1.bf16.msra.mxu0 0
        %7435 = vmatprep.subr.bf16.mxu0 0
        %7436 = vmatpush1.bf16.msra.mxu0 0
        %7437 = vmatprep.subr.bf16.mxu0 0
        %7438 = vmatpush1.bf16.msra.mxu0 0
        %7439 = vmatprep.subr.bf16.mxu0 0
        %7440 = vmatpush1.bf16.msra.mxu0 0
        %7441 = vmatprep.mubr.bf16.mxu0 0
        %7442 = vmatmul.mubr.bf16.gmra.mrb[0].mxu0 %v3523
        %v7443 = vpop.f32.mrb[0].mxu0
        %v7444 = vadd.f32 0.0, %v7443
        %v7445 = vpop.f32.mrb[0].mxu0
        %v7446 = vpop.f32.mrb[0].mxu0
        %v7447 = vadd.f32 0.0, %v7446
        %v7448 = vpop.f32.mrb[0].mxu0
        %7449 = vmatprep.mubr.bf16.mxu0 0
        %7450 = vmatmul.mubr.bf16.gmra.mrb[0].mxu0 %v3526
        %v7451 = vpop.f32.mrb[0].mxu0
        %v7452 = vadd.f32 0.0, %v7451
        %v7453 = vpop.f32.mrb[0].mxu0
        %v7454 = vpop.f32.mrb[0].mxu0
        %v7455 = vadd.f32 0.0, %v7454
        %v7456 = vpop.f32.mrb[0].mxu0
        %7457 = vmatprep.mubr.bf16.mxu0 0
        %7458 = vmatmul.mubr.bf16.gmra.mrb[0].mxu0 %v3529
        %v7459 = vpop.f32.mrb[0].mxu0
        %v7460 = vadd.f32 0.0, %v7459
        %v7461 = vpop.f32.mrb[0].mxu0
        %v7462 = vpop.f32.mrb[0].mxu0
        %v7463 = vadd.f32 0.0, %v7462
        %v7464 = vpop.f32.mrb[0].mxu0
        %7465 = vmatprep.mubr.bf16.mxu0 0
        %7466 = vmatmul.mubr.bf16.gmra.mrb[0].mxu0 %v5688
        %v7467 = vpop.f32.mrb[0].mxu0
        %v7468 = vadd.f32 0.0, %v7467
        %v7469 = vpop.f32.mrb[0].mxu0
        %v7470 = vpop.f32.mrb[0].mxu0
        %v7471 = vadd.f32 0.0, %v7470
        %v7472 = vpop.f32.mrb[0].mxu0
        %7473 = vmatprep.mubr.bf16.mxu0 0
        %7474 = vmatmul.mubr.bf16.gmra.mrb[0].mxu0 %v7404
        %v7475 = vpop.f32.mrb[0].mxu0
        %v7476 = vadd.f32 0.0, %v7475
        %v7477 = vpop.f32.mrb[0].mxu0
        %v7478 = vpop.f32.mrb[0].mxu0
        %v7479 = vadd.f32 0.0, %v7478
        %v7480 = vpop.f32.mrb[0].mxu0
        %7481 = vmatprep.mubr.bf16.mxu0 0
        %7482 = vmatmul.mubr.bf16.gmra.mrb[0].mxu0 %v3538
        %v7483 = vpop.f32.mrb[0].mxu0
        %v7484 = vadd.f32 0.0, %v7483
        %v7485 = vpop.f32.mrb[0].mxu0
        %v7486 = vpop.f32.mrb[0].mxu0
        %v7487 = vadd.f32 0.0, %v7486
        %v7488 = vpop.f32.mrb[0].mxu0
        %7489 = vmatprep.mubr.bf16.mxu0 0
        %7490 = vmatmul.mubr.bf16.gmra.mrb[0].mxu0 %v3541
        %v7491 = vpop.f32.mrb[0].mxu0
        %v7492 = vadd.f32 0.0, %v7491
        %v7493 = vpop.f32.mrb[0].mxu0
        %v7494 = vpop.f32.mrb[0].mxu0
        %v7495 = vadd.f32 0.0, %v7494
        %v7496 = vpop.f32.mrb[0].mxu0
        %7497 = vmatprep.mubr.bf16.mxu0 0
        %7498 = vmatmul.mubr.bf16.gmra.mrb[0].mxu0 %v3544
        %v7499 = vpop.f32.mrb[0].mxu0
        %v7500 = vadd.f32 0.0, %v7499
        %v7501 = vpop.f32.mrb[0].mxu0
        %v7502 = vpop.f32.mrb[0].mxu0
        %v7503 = vadd.f32 0.0, %v7502
        %v7504 = vpop.f32.mrb[0].mxu0
        %7505 = vmatprep.mubr.bf16.mxu0 0
        %7506 = vmatmul.mubr.bf16.gmra.mrb[0].mxu0 %v5691
        %v7507 = vpop.f32.mrb[0].mxu0
        %v7508 = vadd.f32 0.0, %v7507
        %v7509 = vpop.f32.mrb[0].mxu0
        %v7510 = vpop.f32.mrb[0].mxu0
        %v7511 = vadd.f32 0.0, %v7510
        %v7512 = vpop.f32.mrb[0].mxu0
        %7513 = vmatprep.mubr.bf16.mxu0 0
        %7514 = vmatmul.mubr.bf16.gmra.mrb[0].mxu0 %v7407
        %v7515 = vpop.f32.mrb[0].mxu0
        %v7516 = vadd.f32 0.0, %v7515
        %v7517 = vpop.f32.mrb[0].mxu0
        %v7518 = vpop.f32.mrb[0].mxu0
        %v7519 = vadd.f32 0.0, %v7518
        %v7520 = vpop.f32.mrb[0].mxu0
        %7521 = vdwg.mxu0
        %v7522 = vadd.f32 %v7328, %v7444
        %v7523 = vadd.f32 %v7329, %v7447
        %v7524 = vadd.f32 %v7330, %v7452
        %v7525 = vadd.f32 %v7331, %v7455
        %v7526 = vadd.f32 %v7332, %v7460
        %v7527 = vadd.f32 %v7333, %v7463
        %v7528 = vadd.f32 %v7334, %v7468
        %v7529 = vadd.f32 %v7335, %v7471
        %v7530 = vadd.f32 %v7336, %v7476
        %v7531 = vadd.f32 %v7337, %v7479
        %v7532 = vadd.f32 %v7338, %v7484
        %v7533 = vadd.f32 %v7339, %v7487
        %v7534 = vadd.f32 %v7340, %v7492
        %v7535 = vadd.f32 %v7341, %v7495
        %v7536 = vadd.f32 %v7342, %v7500
        %v7537 = vadd.f32 %v7343, %v7503
        %v7538 = vadd.f32 %v7344, %v7508
        %v7539 = vadd.f32 %v7345, %v7511
        %v7540 = vadd.f32 %v7346, %v7516
        %v7541 = vadd.f32 %v7347, %v7519
        %v7542 = vunpack.c.h.b16 %v7192
        %v7543 = vpack.c.b16 %v7198, %v7198
        %v7544 = vpack.c.b16 %v7542, %v7542
        %v7546 = vshrl.u32 %v7543, 16
        %v7548 = vrot.slane %v7546, 4
        %v7549 = vshll.u32 %v7543, 16
        %v7551 = vrot.slane %v7549, 5
        %v7552 = vor.u32 %v7548, %v7551
        %v7553 = vrot.slane %v7552, 4
        %v7555 = vshll.u32 %v7544, 16
        %v7557 = vrot.slane %v7555, 5
        %v7558 = vsel %vm3188, %v7553, %v7557
        %s7559 = scalar_lea.vmem %s3, 368
        %v7560 = vld [vmem:[%s7559] sm:$0xf]
        %v7561 = vld [vmem:[%s7559 + $0x4] sm:$0xf]
        %v7562 = vld [vmem:[%s7559 + $0x8] sm:$0xf]
        %v7563 = vld [vmem:[%s7559 + $0xc] sm:$0xf]
        %v7564 = vunpack.c.l.b16 %v7558
        %v7565 = vpack.c.b16 %v7564, %v6706
        %v7570 = vunpack.c.l.b16 %v7560
        %v7571 = vunpack.c.l.b16 %v7561
        %v7572 = vunpack.c.l.b16 %v7562
        %v7573 = vunpack.c.l.b16 %v7563
        %v7574 = vpack.c.b16 %v7571, %v7570
        %v7575 = vpack.c.b16 %v7573, %v7572
        %v7579 = vsel %vm2817, %v7565, 0
        %7581 = vmatprep.subr.bf16.mxu0 0
        %7582 = vmatpush1.bf16.msra.mxu0 %v7574
        %7583 = vmatprep.subr.bf16.mxu0 0
        %7584 = vmatpush1.bf16.msra.mxu0 %v7575
        %7585 = vmatprep.subr.bf16.mxu0 0
        %7586 = vmatpush1.bf16.msra.mxu0 0
        %7587 = vmatprep.subr.bf16.mxu0 0
        %7588 = vmatpush1.bf16.msra.mxu0 0
        %7589 = vmatprep.subr.bf16.mxu0 0
        %7590 = vmatpush1.bf16.msra.mxu0 0
        %7591 = vmatprep.subr.bf16.mxu0 0
        %7592 = vmatpush1.bf16.msra.mxu0 0
        %7593 = vmatprep.subr.bf16.mxu0 0
        %7594 = vmatpush1.bf16.msra.mxu0 0
        %7595 = vmatprep.subr.bf16.mxu0 0
        %7596 = vmatpush1.bf16.msra.mxu0 0
        %7597 = vmatprep.subr.bf16.mxu0 0
        %7598 = vmatpush1.bf16.msra.mxu0 0
        %7599 = vmatprep.subr.bf16.mxu0 0
        %7600 = vmatpush1.bf16.msra.mxu0 0
        %7601 = vmatprep.subr.bf16.mxu0 0
        %7602 = vmatpush1.bf16.msra.mxu0 0
        %7603 = vmatprep.subr.bf16.mxu0 0
        %7604 = vmatpush1.bf16.msra.mxu0 0
        %7605 = vmatprep.subr.bf16.mxu0 0
        %7606 = vmatpush1.bf16.msra.mxu0 0
        %7607 = vmatprep.subr.bf16.mxu0 0
        %7608 = vmatpush1.bf16.msra.mxu0 0
        %7609 = vmatprep.subr.bf16.mxu0 0
        %7610 = vmatpush1.bf16.msra.mxu0 0
        %7611 = vmatprep.subr.bf16.mxu0 0
        %7612 = vmatpush1.bf16.msra.mxu0 0
        %7613 = vmatprep.mubr.bf16.mxu0 0
        %7614 = vmatmul.mubr.bf16.gmra.mrb[0].mxu0 %v3538
        %v7615 = vpop.f32.mrb[0].mxu0
        %v7616 = vadd.f32 0.0, %v7615
        %v7617 = vpop.f32.mrb[0].mxu0
        %v7618 = vpop.f32.mrb[0].mxu0
        %v7619 = vadd.f32 0.0, %v7618
        %v7620 = vpop.f32.mrb[0].mxu0
        %7621 = vmatprep.mubr.bf16.mxu0 0
        %7622 = vmatmul.mubr.bf16.gmra.mrb[0].mxu0 %v3541
        %v7623 = vpop.f32.mrb[0].mxu0
        %v7624 = vadd.f32 0.0, %v7623
        %v7625 = vpop.f32.mrb[0].mxu0
        %v7626 = vpop.f32.mrb[0].mxu0
        %v7627 = vadd.f32 0.0, %v7626
        %v7628 = vpop.f32.mrb[0].mxu0
        %7629 = vmatprep.mubr.bf16.mxu0 0
        %7630 = vmatmul.mubr.bf16.gmra.mrb[0].mxu0 %v3544
        %v7631 = vpop.f32.mrb[0].mxu0
        %v7632 = vadd.f32 0.0, %v7631
        %v7633 = vpop.f32.mrb[0].mxu0
        %v7634 = vpop.f32.mrb[0].mxu0
        %v7635 = vadd.f32 0.0, %v7634
        %v7636 = vpop.f32.mrb[0].mxu0
        %7637 = vmatprep.mubr.bf16.mxu0 0
        %7638 = vmatmul.mubr.bf16.gmra.mrb[0].mxu0 %v5691
        %v7639 = vpop.f32.mrb[0].mxu0
        %v7640 = vadd.f32 0.0, %v7639
        %v7641 = vpop.f32.mrb[0].mxu0
        %v7642 = vpop.f32.mrb[0].mxu0
        %v7643 = vadd.f32 0.0, %v7642
        %v7644 = vpop.f32.mrb[0].mxu0
        %7645 = vmatprep.mubr.bf16.mxu0 0
        %7646 = vmatmul.mubr.bf16.gmra.mrb[0].mxu0 %v7407
        %v7647 = vpop.f32.mrb[0].mxu0
        %v7648 = vadd.f32 0.0, %v7647
        %v7649 = vpop.f32.mrb[0].mxu0
        %v7650 = vpop.f32.mrb[0].mxu0
        %v7651 = vadd.f32 0.0, %v7650
        %v7652 = vpop.f32.mrb[0].mxu0
        %7653 = vmatprep.mubr.bf16.mxu0 0
        %7654 = vmatmul.mubr.bf16.gmra.mrb[0].mxu0 %v3888
        %v7655 = vpop.f32.mrb[0].mxu0
        %v7656 = vadd.f32 0.0, %v7655
        %v7657 = vpop.f32.mrb[0].mxu0
        %v7658 = vpop.f32.mrb[0].mxu0
        %v7659 = vadd.f32 0.0, %v7658
        %v7660 = vpop.f32.mrb[0].mxu0
        %7661 = vmatprep.mubr.bf16.mxu0 0
        %7662 = vmatmul.mubr.bf16.gmra.mrb[0].mxu0 %v3891
        %v7663 = vpop.f32.mrb[0].mxu0
        %v7664 = vadd.f32 0.0, %v7663
        %v7665 = vpop.f32.mrb[0].mxu0
        %v7666 = vpop.f32.mrb[0].mxu0
        %v7667 = vadd.f32 0.0, %v7666
        %v7668 = vpop.f32.mrb[0].mxu0
        %7669 = vmatprep.mubr.bf16.mxu0 0
        %7670 = vmatmul.mubr.bf16.gmra.mrb[0].mxu0 %v3894
        %v7671 = vpop.f32.mrb[0].mxu0
        %v7672 = vadd.f32 0.0, %v7671
        %v7673 = vpop.f32.mrb[0].mxu0
        %v7674 = vpop.f32.mrb[0].mxu0
        %v7675 = vadd.f32 0.0, %v7674
        %v7676 = vpop.f32.mrb[0].mxu0
        %7677 = vmatprep.mubr.bf16.mxu0 0
        %7678 = vmatmul.mubr.bf16.gmra.mrb[0].mxu0 %v5863
        %v7679 = vpop.f32.mrb[0].mxu0
        %v7680 = vadd.f32 0.0, %v7679
        %v7681 = vpop.f32.mrb[0].mxu0
        %v7682 = vpop.f32.mrb[0].mxu0
        %v7683 = vadd.f32 0.0, %v7682
        %v7684 = vpop.f32.mrb[0].mxu0
        %7685 = vmatprep.mubr.bf16.mxu0 0
        %7686 = vmatmul.mubr.bf16.gmra.mrb[0].mxu0 %v7579
        %v7687 = vpop.f32.mrb[0].mxu0
        %v7688 = vadd.f32 0.0, %v7687
        %v7689 = vpop.f32.mrb[0].mxu0
        %v7690 = vpop.f32.mrb[0].mxu0
        %v7691 = vadd.f32 0.0, %v7690
        %v7692 = vpop.f32.mrb[0].mxu0
        %7693 = vdwg.mxu0
        %v7694 = vadd.f32 %v7522, %v7616
        %v7695 = vadd.f32 %v7523, %v7619
        %v7696 = vadd.f32 %v7524, %v7624
        %v7697 = vadd.f32 %v7525, %v7627
        %v7698 = vadd.f32 %v7526, %v7632
        %v7699 = vadd.f32 %v7527, %v7635
        %v7700 = vadd.f32 %v7528, %v7640
        %v7701 = vadd.f32 %v7529, %v7643
        %v7702 = vadd.f32 %v7530, %v7648
        %v7703 = vadd.f32 %v7531, %v7651
        %v7704 = vadd.f32 %v7532, %v7656
        %v7705 = vadd.f32 %v7533, %v7659
        %v7706 = vadd.f32 %v7534, %v7664
        %v7707 = vadd.f32 %v7535, %v7667
        %v7708 = vadd.f32 %v7536, %v7672
        %v7709 = vadd.f32 %v7537, %v7675
        %v7710 = vadd.f32 %v7538, %v7680
        %v7711 = vadd.f32 %v7539, %v7683
        %v7712 = vadd.f32 %v7540, %v7688
        %v7713 = vadd.f32 %v7541, %v7691
        %v7714 = vrot.slane %v7350, 5
        %v7715 = vrot.slane %v7714, 4
        %v7716 = vrot.slane %v7351, 5
        %v7717 = vsel %vm4031, %v7715, %v7716
        %v7718 = vrot.slane %v7352, 5
        %v7719 = vrot.slane %v7718, 4
        %v7720 = vrot.slane %v7353, 5
        %v7721 = vsel %vm4031, %v7719, %v7720
        %s7722 = scalar_lea.vmem %s3, 384
        %v7723 = vld [vmem:[%s7722] sm:$0xf]
        %v7724 = vld [vmem:[%s7722 + $0x4] sm:$0xf]
        %v7725 = vld [vmem:[%s7722 + $0x8] sm:$0xf]
        %v7726 = vld [vmem:[%s7722 + $0xc] sm:$0xf]
        %v7727 = vunpack.c.l.b16 %v7717
        %v7728 = vunpack.c.l.b16 %v7721
        %v7729 = vpack.c.b16 %v7727, %v6869
        %v7730 = vpack.c.b16 %v7728, %v6870
        %v7735 = vunpack.c.l.b16 %v7723
        %v7736 = vunpack.c.l.b16 %v7724
        %v7737 = vunpack.c.l.b16 %v7725
        %v7738 = vunpack.c.l.b16 %v7726
        %v7739 = vpack.c.b16 %v7736, %v7735
        %v7740 = vpack.c.b16 %v7738, %v7737
        %v7744 = vsel %vm2817, %v7729, 0
        %v7747 = vsel %vm2817, %v7730, 0
        %7749 = vmatprep.subr.bf16.mxu0 0
        %7750 = vmatpush1.bf16.msra.mxu0 %v7739
        %7751 = vmatprep.subr.bf16.mxu0 0
        %7752 = vmatpush1.bf16.msra.mxu0 %v7740
        %7753 = vmatprep.subr.bf16.mxu0 0
        %7754 = vmatpush1.bf16.msra.mxu0 0
        %7755 = vmatprep.subr.bf16.mxu0 0
        %7756 = vmatpush1.bf16.msra.mxu0 0
        %7757 = vmatprep.subr.bf16.mxu0 0
        %7758 = vmatpush1.bf16.msra.mxu0 0
        %7759 = vmatprep.subr.bf16.mxu0 0
        %7760 = vmatpush1.bf16.msra.mxu0 0
        %7761 = vmatprep.subr.bf16.mxu0 0
        %7762 = vmatpush1.bf16.msra.mxu0 0
        %7763 = vmatprep.subr.bf16.mxu0 0
        %7764 = vmatpush1.bf16.msra.mxu0 0
        %7765 = vmatprep.subr.bf16.mxu0 0
        %7766 = vmatpush1.bf16.msra.mxu0 0
        %7767 = vmatprep.subr.bf16.mxu0 0
        %7768 = vmatpush1.bf16.msra.mxu0 0
        %7769 = vmatprep.subr.bf16.mxu0 0
        %7770 = vmatpush1.bf16.msra.mxu0 0
        %7771 = vmatprep.subr.bf16.mxu0 0
        %7772 = vmatpush1.bf16.msra.mxu0 0
        %7773 = vmatprep.subr.bf16.mxu0 0
        %7774 = vmatpush1.bf16.msra.mxu0 0
        %7775 = vmatprep.subr.bf16.mxu0 0
        %7776 = vmatpush1.bf16.msra.mxu0 0
        %7777 = vmatprep.subr.bf16.mxu0 0
        %7778 = vmatpush1.bf16.msra.mxu0 0
        %7779 = vmatprep.subr.bf16.mxu0 0
        %7780 = vmatpush1.bf16.msra.mxu0 0
        %7781 = vmatprep.mubr.bf16.mxu0 0
        %7782 = vmatmul.mubr.bf16.gmra.mrb[0].mxu0 %v4166
        %v7783 = vpop.f32.mrb[0].mxu0
        %v7784 = vadd.f32 0.0, %v7783
        %v7785 = vpop.f32.mrb[0].mxu0
        %v7786 = vpop.f32.mrb[0].mxu0
        %v7787 = vadd.f32 0.0, %v7786
        %v7788 = vpop.f32.mrb[0].mxu0
        %7789 = vmatprep.mubr.bf16.mxu0 0
        %7790 = vmatmul.mubr.bf16.gmra.mrb[0].mxu0 %v4169
        %v7791 = vpop.f32.mrb[0].mxu0
        %v7792 = vadd.f32 0.0, %v7791
        %v7793 = vpop.f32.mrb[0].mxu0
        %v7794 = vpop.f32.mrb[0].mxu0
        %v7795 = vadd.f32 0.0, %v7794
        %v7796 = vpop.f32.mrb[0].mxu0
        %7797 = vmatprep.mubr.bf16.mxu0 0
        %7798 = vmatmul.mubr.bf16.gmra.mrb[0].mxu0 %v4172
        %v7799 = vpop.f32.mrb[0].mxu0
        %v7800 = vadd.f32 0.0, %v7799
        %v7801 = vpop.f32.mrb[0].mxu0
        %v7802 = vpop.f32.mrb[0].mxu0
        %v7803 = vadd.f32 0.0, %v7802
        %v7804 = vpop.f32.mrb[0].mxu0
        %7805 = vmatprep.mubr.bf16.mxu0 0
        %7806 = vmatmul.mubr.bf16.gmra.mrb[0].mxu0 %v6028
        %v7807 = vpop.f32.mrb[0].mxu0
        %v7808 = vadd.f32 0.0, %v7807
        %v7809 = vpop.f32.mrb[0].mxu0
        %v7810 = vpop.f32.mrb[0].mxu0
        %v7811 = vadd.f32 0.0, %v7810
        %v7812 = vpop.f32.mrb[0].mxu0
        %7813 = vmatprep.mubr.bf16.mxu0 0
        %7814 = vmatmul.mubr.bf16.gmra.mrb[0].mxu0 %v7744
        %v7815 = vpop.f32.mrb[0].mxu0
        %v7816 = vadd.f32 0.0, %v7815
        %v7817 = vpop.f32.mrb[0].mxu0
        %v7818 = vpop.f32.mrb[0].mxu0
        %v7819 = vadd.f32 0.0, %v7818
        %v7820 = vpop.f32.mrb[0].mxu0
        %7821 = vmatprep.mubr.bf16.mxu0 0
        %7822 = vmatmul.mubr.bf16.gmra.mrb[0].mxu0 %v4181
        %v7823 = vpop.f32.mrb[0].mxu0
        %v7824 = vadd.f32 0.0, %v7823
        %v7825 = vpop.f32.mrb[0].mxu0
        %v7826 = vpop.f32.mrb[0].mxu0
        %v7827 = vadd.f32 0.0, %v7826
        %v7828 = vpop.f32.mrb[0].mxu0
        %7829 = vmatprep.mubr.bf16.mxu0 0
        %7830 = vmatmul.mubr.bf16.gmra.mrb[0].mxu0 %v4184
        %v7831 = vpop.f32.mrb[0].mxu0
        %v7832 = vadd.f32 0.0, %v7831
        %v7833 = vpop.f32.mrb[0].mxu0
        %v7834 = vpop.f32.mrb[0].mxu0
        %v7835 = vadd.f32 0.0, %v7834
        %v7836 = vpop.f32.mrb[0].mxu0
        %7837 = vmatprep.mubr.bf16.mxu0 0
        %7838 = vmatmul.mubr.bf16.gmra.mrb[0].mxu0 %v4187
        %v7839 = vpop.f32.mrb[0].mxu0
        %v7840 = vadd.f32 0.0, %v7839
        %v7841 = vpop.f32.mrb[0].mxu0
        %v7842 = vpop.f32.mrb[0].mxu0
        %v7843 = vadd.f32 0.0, %v7842
        %v7844 = vpop.f32.mrb[0].mxu0
        %7845 = vmatprep.mubr.bf16.mxu0 0
        %7846 = vmatmul.mubr.bf16.gmra.mrb[0].mxu0 %v6031
        %v7847 = vpop.f32.mrb[0].mxu0
        %v7848 = vadd.f32 0.0, %v7847
        %v7849 = vpop.f32.mrb[0].mxu0
        %v7850 = vpop.f32.mrb[0].mxu0
        %v7851 = vadd.f32 0.0, %v7850
        %v7852 = vpop.f32.mrb[0].mxu0
        %7853 = vmatprep.mubr.bf16.mxu0 0
        %7854 = vmatmul.mubr.bf16.gmra.mrb[0].mxu0 %v7747
        %v7855 = vpop.f32.mrb[0].mxu0
        %v7856 = vadd.f32 0.0, %v7855
        %v7857 = vpop.f32.mrb[0].mxu0
        %v7858 = vpop.f32.mrb[0].mxu0
        %v7859 = vadd.f32 0.0, %v7858
        %v7860 = vpop.f32.mrb[0].mxu0
        %7861 = vdwg.mxu0
        %v7862 = vadd.f32 %v7694, %v7784
        %v7863 = vadd.f32 %v7695, %v7787
        %v7864 = vadd.f32 %v7696, %v7792
        %v7865 = vadd.f32 %v7697, %v7795
        %v7866 = vadd.f32 %v7698, %v7800
        %v7867 = vadd.f32 %v7699, %v7803
        %v7868 = vadd.f32 %v7700, %v7808
        %v7869 = vadd.f32 %v7701, %v7811
        %v7870 = vadd.f32 %v7702, %v7816
        %v7871 = vadd.f32 %v7703, %v7819
        %v7872 = vadd.f32 %v7704, %v7824
        %v7873 = vadd.f32 %v7705, %v7827
        %v7874 = vadd.f32 %v7706, %v7832
        %v7875 = vadd.f32 %v7707, %v7835
        %v7876 = vadd.f32 %v7708, %v7840
        %v7877 = vadd.f32 %v7709, %v7843
        %v7878 = vadd.f32 %v7710, %v7848
        %v7879 = vadd.f32 %v7711, %v7851
        %v7880 = vadd.f32 %v7712, %v7856
        %v7881 = vadd.f32 %v7713, %v7859
        %v7882 = vld [vmem:[%s4] sm:$0x1]
        %v7884 = vlaneseq
        %v7885 = vshrl.u32 %v7884, 7
        %v7886 = vsub.s32 0, %v7885
        %v7887 = vrot.slane %v7882, %v7886
        %v7889 = vadd.f32 %v7862, %v7887
        %v7890 = vadd.f32 %v7863, %v7887
        %v7891 = vadd.f32 %v7864, %v7887
        %v7892 = vadd.f32 %v7865, %v7887
        %v7893 = vadd.f32 %v7866, %v7887
        %v7894 = vadd.f32 %v7867, %v7887
        %v7895 = vadd.f32 %v7868, %v7887
        %v7896 = vadd.f32 %v7869, %v7887
        %v7897 = vadd.f32 %v7870, %v7887
        %v7898 = vadd.f32 %v7871, %v7887
        %v7899 = vadd.f32 %v7872, %v7887
        %v7900 = vadd.f32 %v7873, %v7887
        %v7901 = vadd.f32 %v7874, %v7887
        %v7902 = vadd.f32 %v7875, %v7887
        %v7903 = vadd.f32 %v7876, %v7887
        %v7904 = vadd.f32 %v7877, %v7887
        %v7905 = vadd.f32 %v7878, %v7887
        %v7906 = vadd.f32 %v7879, %v7887
        %v7907 = vadd.f32 %v7880, %v7887
        %v7908 = vadd.f32 %v7881, %v7887
        %v7909 = vmax.f32 %v7889, %v7899
        %v7910 = vmax.f32 %v7890, %v7900
        %v7911 = vmax.f32 %v7891, %v7901
        %v7912 = vmax.f32 %v7892, %v7902
        %v7913 = vmax.f32 %v7893, %v7903
        %v7914 = vmax.f32 %v7894, %v7904
        %v7915 = vmax.f32 %v7895, %v7905
        %v7916 = vmax.f32 %v7896, %v7906
        %v7917 = vmax.f32 %v7897, %v7907
        %v7918 = vmax.f32 %v7898, %v7908
        %v7919 = vmax.f32 %v7909, %v7910
        %v7920 = vmax.f32 %v7911, %v7912
        %v7921 = vmax.f32 %v7913, %v7914
        %v7922 = vmax.f32 %v7915, %v7916
        %v7923 = vmax.f32 %v7917, %v7918
        %v7924 = vmax.f32 %v7919, 0.0
        %v7925 = vmax.f32 %v7920, 0.0
        %v7926 = vmax.f32 %v7921, 0.0
        %v7927 = vmax.f32 %v7922, 0.0
        %v7928 = vmax.f32 %v7923, 0.0
        %v7929 = vpack.c.bf16 %v7924, %v7924
        %v7930 = vpack.c.bf16 %v7925, %v7925
        %v7931 = vpack.c.bf16 %v7926, %v7926
        %v7932 = vpack.c.bf16 %v7927, %v7927
        %v7933 = vpack.c.bf16 %v7928, %v7928
        %v7934 = vld [vmem:[%s5] sm:$0xff]
        %v7935 = vld [vmem:[%s5 + $0x8] sm:$0xff]
        %v7936 = vld [vmem:[%s5 + $0x10] sm:$0xff]
        %v7937 = vld [vmem:[%s5 + $0x18] sm:$0xff]
        %v7938 = vld [vmem:[%s5 + $0x20] sm:$0xff]
        %v7939 = vld [vmem:[%s5 + $0x28] sm:$0xff]
        %v7940 = vld [vmem:[%s5 + $0x30] sm:$0xff]
        %v7941 = vld [vmem:[%s5 + $0x38] sm:$0xff]
        %s7942 = scalar_lea.vmem %s5, 64
        %v7943 = vld [vmem:[%s7942] sm:$0xff]
        %v7944 = vld [vmem:[%s7942 + $0x8] sm:$0xff]
        %v7945 = vld [vmem:[%s7942 + $0x10] sm:$0xff]
        %v7946 = vld [vmem:[%s7942 + $0x18] sm:$0xff]
        %v7947 = vld [vmem:[%s7942 + $0x20] sm:$0xff]
        %v7948 = vld [vmem:[%s7942 + $0x28] sm:$0xff]
        %v7949 = vld [vmem:[%s7942 + $0x30] sm:$0xff]
        %v7950 = vld [vmem:[%s7942 + $0x38] sm:$0xff]
        %v7952 = vshrl.u32 %v7929, 16
        %v7962 = vunpack.c.l.b16 %v7943
        %v7963 = vunpack.c.h.b16 %v7943
        %v7964 = vunpack.c.l.b16 %v7944
        %v7965 = vunpack.c.h.b16 %v7944
        %v7966 = vunpack.c.l.b16 %v7945
        %v7967 = vunpack.c.h.b16 %v7945
        %v7968 = vunpack.c.l.b16 %v7946
        %v7969 = vunpack.c.h.b16 %v7946
        %v7970 = vunpack.c.l.b16 %v7947
        %v7971 = vunpack.c.h.b16 %v7947
        %v7972 = vunpack.c.l.b16 %v7948
        %v7973 = vunpack.c.h.b16 %v7948
        %v7974 = vunpack.c.l.b16 %v7949
        %v7975 = vunpack.c.h.b16 %v7949
        %v7976 = vunpack.c.l.b16 %v7950
        %v7977 = vunpack.c.h.b16 %v7950
        %v7978 = vpack.c.b16 %v7964, %v7962
        %v7979 = vpack.c.b16 %v7965, %v7963
        %v7980 = vpack.c.b16 %v7968, %v7966
        %v7981 = vpack.c.b16 %v7969, %v7967
        %v7982 = vpack.c.b16 %v7972, %v7970
        %v7983 = vpack.c.b16 %v7973, %v7971
        %v7984 = vpack.c.b16 %v7976, %v7974
        %v7985 = vpack.c.b16 %v7977, %v7975
        %vm7994 = vcmask 523264
        %v7996 = vsel %vm7994, %v7952, 0
        %7998 = vmatprep.subr.bf16.mxu0 %v7979
        %7999 = vmatpush1.bf16.msra.mxu0 %v7978
        %8000 = vmatprep.subr.bf16.mxu0 %v7981
        %8001 = vmatpush1.bf16.msra.mxu0 %v7980
        %8002 = vmatprep.subr.bf16.mxu0 %v7983
        %8003 = vmatpush1.bf16.msra.mxu0 %v7982
        %8004 = vmatprep.subr.bf16.mxu0 %v7985
        %8005 = vmatpush1.bf16.msra.mxu0 %v7984
        %8006 = vmatprep.subr.bf16.mxu0 0
        %8007 = vmatpush1.bf16.msra.mxu0 0
        %8008 = vmatprep.subr.bf16.mxu0 0
        %8009 = vmatpush1.bf16.msra.mxu0 0
        %8010 = vmatprep.subr.bf16.mxu0 0
        %8011 = vmatpush1.bf16.msra.mxu0 0
        %8012 = vmatprep.subr.bf16.mxu0 0
        %8013 = vmatpush1.bf16.msra.mxu0 0
        %8014 = vmatprep.subr.bf16.mxu0 0
        %8015 = vmatpush1.bf16.msra.mxu0 0
        %8016 = vmatprep.subr.bf16.mxu0 0
        %8017 = vmatpush1.bf16.msra.mxu0 0
        %8018 = vmatprep.subr.bf16.mxu0 0
        %8019 = vmatpush1.bf16.msra.mxu0 0
        %8020 = vmatprep.subr.bf16.mxu0 0
        %8021 = vmatpush1.bf16.msra.mxu0 0
        %8022 = vmatprep.subr.bf16.mxu0 0
        %8023 = vmatpush1.bf16.msra.mxu0 0
        %8024 = vmatprep.subr.bf16.mxu0 0
        %8025 = vmatpush1.bf16.msra.mxu0 0
        %8026 = vmatprep.subr.bf16.mxu0 0
        %8027 = vmatpush1.bf16.msra.mxu0 0
        %8028 = vmatprep.subr.bf16.mxu0 0
        %8029 = vmatpush1.bf16.msra.mxu0 0
        %8030 = vmatprep.mubr.bf16.mxu0 0
        %8031 = vmatmul.mubr.bf16.gmra.mrb[0].mxu0 %v7996
        %v8032 = vpop.f32.mrb[0].mxu0
        %v8033 = vadd.f32 0.0, %v8032
        %v8034 = vpop.f32.mrb[0].mxu0
        %v8035 = vadd.f32 0.0, %v8034
        %v8036 = vpop.f32.mrb[0].mxu0
        %v8037 = vpop.f32.mrb[0].mxu0
        %8038 = vdwg.mxu0
        %v8047 = vunpack.c.l.b16 %v7934
        %v8048 = vunpack.c.h.b16 %v7934
        %v8049 = vunpack.c.l.b16 %v7935
        %v8050 = vunpack.c.h.b16 %v7935
        %v8051 = vunpack.c.l.b16 %v7936
        %v8052 = vunpack.c.h.b16 %v7936
        %v8053 = vunpack.c.l.b16 %v7937
        %v8054 = vunpack.c.h.b16 %v7937
        %v8055 = vunpack.c.l.b16 %v7938
        %v8056 = vunpack.c.h.b16 %v7938
        %v8057 = vunpack.c.l.b16 %v7939
        %v8058 = vunpack.c.h.b16 %v7939
        %v8059 = vunpack.c.l.b16 %v7940
        %v8060 = vunpack.c.h.b16 %v7940
        %v8061 = vunpack.c.l.b16 %v7941
        %v8062 = vunpack.c.h.b16 %v7941
        %v8063 = vpack.c.b16 %v8049, %v8047
        %v8064 = vpack.c.b16 %v8050, %v8048
        %v8065 = vpack.c.b16 %v8053, %v8051
        %v8066 = vpack.c.b16 %v8054, %v8052
        %v8067 = vpack.c.b16 %v8057, %v8055
        %v8068 = vpack.c.b16 %v8058, %v8056
        %v8069 = vpack.c.b16 %v8061, %v8059
        %v8070 = vpack.c.b16 %v8062, %v8060
        %v8079 = vsel %vm7994, %v7929, 0
        %8081 = vmatprep.subr.bf16.mxu0 %v8064
        %8082 = vmatpush1.bf16.msra.mxu0 %v8063
        %8083 = vmatprep.subr.bf16.mxu0 %v8066
        %8084 = vmatpush1.bf16.msra.mxu0 %v8065
        %8085 = vmatprep.subr.bf16.mxu0 %v8068
        %8086 = vmatpush1.bf16.msra.mxu0 %v8067
        %8087 = vmatprep.subr.bf16.mxu0 %v8070
        %8088 = vmatpush1.bf16.msra.mxu0 %v8069
        %8089 = vmatprep.subr.bf16.mxu0 0
        %8090 = vmatpush1.bf16.msra.mxu0 0
        %8091 = vmatprep.subr.bf16.mxu0 0
        %8092 = vmatpush1.bf16.msra.mxu0 0
        %8093 = vmatprep.subr.bf16.mxu0 0
        %8094 = vmatpush1.bf16.msra.mxu0 0
        %8095 = vmatprep.subr.bf16.mxu0 0
        %8096 = vmatpush1.bf16.msra.mxu0 0
        %8097 = vmatprep.subr.bf16.mxu0 0
        %8098 = vmatpush1.bf16.msra.mxu0 0
        %8099 = vmatprep.subr.bf16.mxu0 0
        %8100 = vmatpush1.bf16.msra.mxu0 0
        %8101 = vmatprep.subr.bf16.mxu0 0
        %8102 = vmatpush1.bf16.msra.mxu0 0
        %8103 = vmatprep.subr.bf16.mxu0 0
        %8104 = vmatpush1.bf16.msra.mxu0 0
        %8105 = vmatprep.subr.bf16.mxu0 0
        %8106 = vmatpush1.bf16.msra.mxu0 0
        %8107 = vmatprep.subr.bf16.mxu0 0
        %8108 = vmatpush1.bf16.msra.mxu0 0
        %8109 = vmatprep.subr.bf16.mxu0 0
        %8110 = vmatpush1.bf16.msra.mxu0 0
        %8111 = vmatprep.subr.bf16.mxu0 0
        %8112 = vmatpush1.bf16.msra.mxu0 0
        %8113 = vmatprep.mubr.bf16.mxu0 0
        %8114 = vmatmul.mubr.bf16.gmra.mrb[0].mxu0 %v8079
        %v8115 = vpop.f32.mrb[0].mxu0
        %v8116 = vadd.f32 %v8033, %v8115
        %v8117 = vpop.f32.mrb[0].mxu0
        %v8118 = vadd.f32 %v8035, %v8117
        %v8119 = vpop.f32.mrb[0].mxu0
        %v8120 = vpop.f32.mrb[0].mxu0
        %8121 = vdwg.mxu0
        %s8122 = scalar_lea.vmem %s5, 128
        %v8123 = vld [vmem:[%s8122] sm:$0xff]
        %v8124 = vld [vmem:[%s8122 + $0x8] sm:$0xff]
        %v8125 = vld [vmem:[%s8122 + $0x10] sm:$0xff]
        %v8126 = vld [vmem:[%s8122 + $0x18] sm:$0xff]
        %v8127 = vld [vmem:[%s8122 + $0x20] sm:$0xff]
        %v8128 = vld [vmem:[%s8122 + $0x28] sm:$0xff]
        %v8129 = vld [vmem:[%s8122 + $0x30] sm:$0xff]
        %v8130 = vld [vmem:[%s8122 + $0x38] sm:$0xff]
        %v8132 = vrot.slane %v7929, 1
        %v8141 = vunpack.c.l.b16 %v8123
        %v8142 = vunpack.c.h.b16 %v8123
        %v8143 = vunpack.c.l.b16 %v8124
        %v8144 = vunpack.c.h.b16 %v8124
        %v8145 = vunpack.c.l.b16 %v8125
        %v8146 = vunpack.c.h.b16 %v8125
        %v8147 = vunpack.c.l.b16 %v8126
        %v8148 = vunpack.c.h.b16 %v8126
        %v8149 = vunpack.c.l.b16 %v8127
        %v8150 = vunpack.c.h.b16 %v8127
        %v8151 = vunpack.c.l.b16 %v8128
        %v8152 = vunpack.c.h.b16 %v8128
        %v8153 = vunpack.c.l.b16 %v8129
        %v8154 = vunpack.c.h.b16 %v8129
        %v8155 = vunpack.c.l.b16 %v8130
        %v8156 = vunpack.c.h.b16 %v8130
        %v8157 = vpack.c.b16 %v8143, %v8141
        %v8158 = vpack.c.b16 %v8144, %v8142
        %v8159 = vpack.c.b16 %v8147, %v8145
        %v8160 = vpack.c.b16 %v8148, %v8146
        %v8161 = vpack.c.b16 %v8151, %v8149
        %v8162 = vpack.c.b16 %v8152, %v8150
        %v8163 = vpack.c.b16 %v8155, %v8153
        %v8164 = vpack.c.b16 %v8156, %v8154
        %v8174 = vsel %vm7994, %v8132, 0
        %8176 = vmatprep.subr.bf16.mxu0 %v8158
        %8177 = vmatpush1.bf16.msra.mxu0 %v8157
        %8178 = vmatprep.subr.bf16.mxu0 %v8160
        %8179 = vmatpush1.bf16.msra.mxu0 %v8159
        %8180 = vmatprep.subr.bf16.mxu0 %v8162
        %8181 = vmatpush1.bf16.msra.mxu0 %v8161
        %8182 = vmatprep.subr.bf16.mxu0 %v8164
        %8183 = vmatpush1.bf16.msra.mxu0 %v8163
        %8184 = vmatprep.subr.bf16.mxu0 0
        %8185 = vmatpush1.bf16.msra.mxu0 0
        %8186 = vmatprep.subr.bf16.mxu0 0
        %8187 = vmatpush1.bf16.msra.mxu0 0
        %8188 = vmatprep.subr.bf16.mxu0 0
        %8189 = vmatpush1.bf16.msra.mxu0 0
        %8190 = vmatprep.subr.bf16.mxu0 0
        %8191 = vmatpush1.bf16.msra.mxu0 0
        %8192 = vmatprep.subr.bf16.mxu0 0
        %8193 = vmatpush1.bf16.msra.mxu0 0
        %8194 = vmatprep.subr.bf16.mxu0 0
        %8195 = vmatpush1.bf16.msra.mxu0 0
        %8196 = vmatprep.subr.bf16.mxu0 0
        %8197 = vmatpush1.bf16.msra.mxu0 0
        %8198 = vmatprep.subr.bf16.mxu0 0
        %8199 = vmatpush1.bf16.msra.mxu0 0
        %8200 = vmatprep.subr.bf16.mxu0 0
        %8201 = vmatpush1.bf16.msra.mxu0 0
        %8202 = vmatprep.subr.bf16.mxu0 0
        %8203 = vmatpush1.bf16.msra.mxu0 0
        %8204 = vmatprep.subr.bf16.mxu0 0
        %8205 = vmatpush1.bf16.msra.mxu0 0
        %8206 = vmatprep.subr.bf16.mxu0 0
        %8207 = vmatpush1.bf16.msra.mxu0 0
        %8208 = vmatprep.mubr.bf16.mxu0 0
        %8209 = vmatmul.mubr.bf16.gmra.mrb[0].mxu0 %v8174
        %v8210 = vpop.f32.mrb[0].mxu0
        %v8211 = vadd.f32 0.0, %v8210
        %v8212 = vpop.f32.mrb[0].mxu0
        %v8213 = vadd.f32 0.0, %v8212
        %v8214 = vpop.f32.mrb[0].mxu0
        %v8215 = vpop.f32.mrb[0].mxu0
        %8216 = vdwg.mxu0
        %v8217 = vadd.f32 %v8116, %v8211
        %v8218 = vadd.f32 %v8118, %v8213
        %s8219 = scalar_lea.vmem %s5, 192
        %v8220 = vld [vmem:[%s8219] sm:$0xff]
        %v8221 = vld [vmem:[%s8219 + $0x8] sm:$0xff]
        %v8222 = vld [vmem:[%s8219 + $0x10] sm:$0xff]
        %v8223 = vld [vmem:[%s8219 + $0x18] sm:$0xff]
        %v8224 = vld [vmem:[%s8219 + $0x20] sm:$0xff]
        %v8225 = vld [vmem:[%s8219 + $0x28] sm:$0xff]
        %v8226 = vld [vmem:[%s8219 + $0x30] sm:$0xff]
        %v8227 = vld [vmem:[%s8219 + $0x38] sm:$0xff]
        %v8228 = vrot.slane %v7952, 1
        %v8237 = vunpack.c.l.b16 %v8220
        %v8238 = vunpack.c.h.b16 %v8220
        %v8239 = vunpack.c.l.b16 %v8221
        %v8240 = vunpack.c.h.b16 %v8221
        %v8241 = vunpack.c.l.b16 %v8222
        %v8242 = vunpack.c.h.b16 %v8222
        %v8243 = vunpack.c.l.b16 %v8223
        %v8244 = vunpack.c.h.b16 %v8223
        %v8245 = vunpack.c.l.b16 %v8224
        %v8246 = vunpack.c.h.b16 %v8224
        %v8247 = vunpack.c.l.b16 %v8225
        %v8248 = vunpack.c.h.b16 %v8225
        %v8249 = vunpack.c.l.b16 %v8226
        %v8250 = vunpack.c.h.b16 %v8226
        %v8251 = vunpack.c.l.b16 %v8227
        %v8252 = vunpack.c.h.b16 %v8227
        %v8253 = vpack.c.b16 %v8239, %v8237
        %v8254 = vpack.c.b16 %v8240, %v8238
        %v8255 = vpack.c.b16 %v8243, %v8241
        %v8256 = vpack.c.b16 %v8244, %v8242
        %v8257 = vpack.c.b16 %v8247, %v8245
        %v8258 = vpack.c.b16 %v8248, %v8246
        %v8259 = vpack.c.b16 %v8251, %v8249
        %v8260 = vpack.c.b16 %v8252, %v8250
        %v8270 = vsel %vm7994, %v8228, 0
        %8272 = vmatprep.subr.bf16.mxu0 %v8254
        %8273 = vmatpush1.bf16.msra.mxu0 %v8253
        %8274 = vmatprep.subr.bf16.mxu0 %v8256
        %8275 = vmatpush1.bf16.msra.mxu0 %v8255
        %8276 = vmatprep.subr.bf16.mxu0 %v8258
        %8277 = vmatpush1.bf16.msra.mxu0 %v8257
        %8278 = vmatprep.subr.bf16.mxu0 %v8260
        %8279 = vmatpush1.bf16.msra.mxu0 %v8259
        %8280 = vmatprep.subr.bf16.mxu0 0
        %8281 = vmatpush1.bf16.msra.mxu0 0
        %8282 = vmatprep.subr.bf16.mxu0 0
        %8283 = vmatpush1.bf16.msra.mxu0 0
        %8284 = vmatprep.subr.bf16.mxu0 0
        %8285 = vmatpush1.bf16.msra.mxu0 0
        %8286 = vmatprep.subr.bf16.mxu0 0
        %8287 = vmatpush1.bf16.msra.mxu0 0
        %8288 = vmatprep.subr.bf16.mxu0 0
        %8289 = vmatpush1.bf16.msra.mxu0 0
        %8290 = vmatprep.subr.bf16.mxu0 0
        %8291 = vmatpush1.bf16.msra.mxu0 0
        %8292 = vmatprep.subr.bf16.mxu0 0
        %8293 = vmatpush1.bf16.msra.mxu0 0
        %8294 = vmatprep.subr.bf16.mxu0 0
        %8295 = vmatpush1.bf16.msra.mxu0 0
        %8296 = vmatprep.subr.bf16.mxu0 0
        %8297 = vmatpush1.bf16.msra.mxu0 0
        %8298 = vmatprep.subr.bf16.mxu0 0
        %8299 = vmatpush1.bf16.msra.mxu0 0
        %8300 = vmatprep.subr.bf16.mxu0 0
        %8301 = vmatpush1.bf16.msra.mxu0 0
        %8302 = vmatprep.subr.bf16.mxu0 0
        %8303 = vmatpush1.bf16.msra.mxu0 0
        %8304 = vmatprep.mubr.bf16.mxu0 0
        %8305 = vmatmul.mubr.bf16.gmra.mrb[0].mxu0 %v8270
        %v8306 = vpop.f32.mrb[0].mxu0
        %v8307 = vadd.f32 0.0, %v8306
        %v8308 = vpop.f32.mrb[0].mxu0
        %v8309 = vadd.f32 0.0, %v8308
        %v8310 = vpop.f32.mrb[0].mxu0
        %v8311 = vpop.f32.mrb[0].mxu0
        %8312 = vdwg.mxu0
        %v8313 = vadd.f32 %v8217, %v8307
        %v8314 = vadd.f32 %v8218, %v8309
        %s8315 = scalar_lea.vmem %s5, 256
        %v8316 = vld [vmem:[%s8315] sm:$0xff]
        %v8317 = vld [vmem:[%s8315 + $0x8] sm:$0xff]
        %v8318 = vld [vmem:[%s8315 + $0x10] sm:$0xff]
        %v8319 = vld [vmem:[%s8315 + $0x18] sm:$0xff]
        %v8320 = vld [vmem:[%s8315 + $0x20] sm:$0xff]
        %v8321 = vld [vmem:[%s8315 + $0x28] sm:$0xff]
        %v8322 = vld [vmem:[%s8315 + $0x30] sm:$0xff]
        %v8323 = vld [vmem:[%s8315 + $0x38] sm:$0xff]
        %v8324 = vrot.slane %v7929, 2
        %v8333 = vunpack.c.l.b16 %v8316
        %v8334 = vunpack.c.h.b16 %v8316
        %v8335 = vunpack.c.l.b16 %v8317
        %v8336 = vunpack.c.h.b16 %v8317
        %v8337 = vunpack.c.l.b16 %v8318
        %v8338 = vunpack.c.h.b16 %v8318
        %v8339 = vunpack.c.l.b16 %v8319
        %v8340 = vunpack.c.h.b16 %v8319
        %v8341 = vunpack.c.l.b16 %v8320
        %v8342 = vunpack.c.h.b16 %v8320
        %v8343 = vunpack.c.l.b16 %v8321
        %v8344 = vunpack.c.h.b16 %v8321
        %v8345 = vunpack.c.l.b16 %v8322
        %v8346 = vunpack.c.h.b16 %v8322
        %v8347 = vunpack.c.l.b16 %v8323
        %v8348 = vunpack.c.h.b16 %v8323
        %v8349 = vpack.c.b16 %v8335, %v8333
        %v8350 = vpack.c.b16 %v8336, %v8334
        %v8351 = vpack.c.b16 %v8339, %v8337
        %v8352 = vpack.c.b16 %v8340, %v8338
        %v8353 = vpack.c.b16 %v8343, %v8341
        %v8354 = vpack.c.b16 %v8344, %v8342
        %v8355 = vpack.c.b16 %v8347, %v8345
        %v8356 = vpack.c.b16 %v8348, %v8346
        %v8366 = vsel %vm7994, %v8324, 0
        %8368 = vmatprep.subr.bf16.mxu0 %v8350
        %8369 = vmatpush1.bf16.msra.mxu0 %v8349
        %8370 = vmatprep.subr.bf16.mxu0 %v8352
        %8371 = vmatpush1.bf16.msra.mxu0 %v8351
        %8372 = vmatprep.subr.bf16.mxu0 %v8354
        %8373 = vmatpush1.bf16.msra.mxu0 %v8353
        %8374 = vmatprep.subr.bf16.mxu0 %v8356
        %8375 = vmatpush1.bf16.msra.mxu0 %v8355
        %8376 = vmatprep.subr.bf16.mxu0 0
        %8377 = vmatpush1.bf16.msra.mxu0 0
        %8378 = vmatprep.subr.bf16.mxu0 0
        %8379 = vmatpush1.bf16.msra.mxu0 0
        %8380 = vmatprep.subr.bf16.mxu0 0
        %8381 = vmatpush1.bf16.msra.mxu0 0
        %8382 = vmatprep.subr.bf16.mxu0 0
        %8383 = vmatpush1.bf16.msra.mxu0 0
        %8384 = vmatprep.subr.bf16.mxu0 0
        %8385 = vmatpush1.bf16.msra.mxu0 0
        %8386 = vmatprep.subr.bf16.mxu0 0
        %8387 = vmatpush1.bf16.msra.mxu0 0
        %8388 = vmatprep.subr.bf16.mxu0 0
        %8389 = vmatpush1.bf16.msra.mxu0 0
        %8390 = vmatprep.subr.bf16.mxu0 0
        %8391 = vmatpush1.bf16.msra.mxu0 0
        %8392 = vmatprep.subr.bf16.mxu0 0
        %8393 = vmatpush1.bf16.msra.mxu0 0
        %8394 = vmatprep.subr.bf16.mxu0 0
        %8395 = vmatpush1.bf16.msra.mxu0 0
        %8396 = vmatprep.subr.bf16.mxu0 0
        %8397 = vmatpush1.bf16.msra.mxu0 0
        %8398 = vmatprep.subr.bf16.mxu0 0
        %8399 = vmatpush1.bf16.msra.mxu0 0
        %8400 = vmatprep.mubr.bf16.mxu0 0
        %8401 = vmatmul.mubr.bf16.gmra.mrb[0].mxu0 %v8366
        %v8402 = vpop.f32.mrb[0].mxu0
        %v8403 = vadd.f32 0.0, %v8402
        %v8404 = vpop.f32.mrb[0].mxu0
        %v8405 = vadd.f32 0.0, %v8404
        %v8406 = vpop.f32.mrb[0].mxu0
        %v8407 = vpop.f32.mrb[0].mxu0
        %8408 = vdwg.mxu0
        %v8409 = vadd.f32 %v8313, %v8403
        %v8410 = vadd.f32 %v8314, %v8405
        %s8411 = scalar_lea.vmem %s5, 320
        %v8412 = vld [vmem:[%s8411] sm:$0xff]
        %v8413 = vld [vmem:[%s8411 + $0x8] sm:$0xff]
        %v8414 = vld [vmem:[%s8411 + $0x10] sm:$0xff]
        %v8415 = vld [vmem:[%s8411 + $0x18] sm:$0xff]
        %v8416 = vld [vmem:[%s8411 + $0x20] sm:$0xff]
        %v8417 = vld [vmem:[%s8411 + $0x28] sm:$0xff]
        %v8418 = vld [vmem:[%s8411 + $0x30] sm:$0xff]
        %v8419 = vld [vmem:[%s8411 + $0x38] sm:$0xff]
        %v8428 = vunpack.c.l.b16 %v8412
        %v8429 = vunpack.c.h.b16 %v8412
        %v8430 = vunpack.c.l.b16 %v8413
        %v8431 = vunpack.c.h.b16 %v8413
        %v8432 = vunpack.c.l.b16 %v8414
        %v8433 = vunpack.c.h.b16 %v8414
        %v8434 = vunpack.c.l.b16 %v8415
        %v8435 = vunpack.c.h.b16 %v8415
        %v8436 = vunpack.c.l.b16 %v8416
        %v8437 = vunpack.c.h.b16 %v8416
        %v8438 = vunpack.c.l.b16 %v8417
        %v8439 = vunpack.c.h.b16 %v8417
        %v8440 = vunpack.c.l.b16 %v8418
        %v8441 = vunpack.c.h.b16 %v8418
        %v8442 = vunpack.c.l.b16 %v8419
        %v8443 = vunpack.c.h.b16 %v8419
        %v8444 = vpack.c.b16 %v8430, %v8428
        %v8445 = vpack.c.b16 %v8431, %v8429
        %v8446 = vpack.c.b16 %v8434, %v8432
        %v8447 = vpack.c.b16 %v8435, %v8433
        %v8448 = vpack.c.b16 %v8438, %v8436
        %v8449 = vpack.c.b16 %v8439, %v8437
        %v8450 = vpack.c.b16 %v8442, %v8440
        %v8451 = vpack.c.b16 %v8443, %v8441
        %v8461 = vsel %vm7994, %v7930, 0
        %8463 = vmatprep.subr.bf16.mxu0 %v8445
        %8464 = vmatpush1.bf16.msra.mxu0 %v8444
        %8465 = vmatprep.subr.bf16.mxu0 %v8447
        %8466 = vmatpush1.bf16.msra.mxu0 %v8446
        %8467 = vmatprep.subr.bf16.mxu0 %v8449
        %8468 = vmatpush1.bf16.msra.mxu0 %v8448
        %8469 = vmatprep.subr.bf16.mxu0 %v8451
        %8470 = vmatpush1.bf16.msra.mxu0 %v8450
        %8471 = vmatprep.subr.bf16.mxu0 0
        %8472 = vmatpush1.bf16.msra.mxu0 0
        %8473 = vmatprep.subr.bf16.mxu0 0
        %8474 = vmatpush1.bf16.msra.mxu0 0
        %8475 = vmatprep.subr.bf16.mxu0 0
        %8476 = vmatpush1.bf16.msra.mxu0 0
        %8477 = vmatprep.subr.bf16.mxu0 0
        %8478 = vmatpush1.bf16.msra.mxu0 0
        %8479 = vmatprep.subr.bf16.mxu0 0
        %8480 = vmatpush1.bf16.msra.mxu0 0
        %8481 = vmatprep.subr.bf16.mxu0 0
        %8482 = vmatpush1.bf16.msra.mxu0 0
        %8483 = vmatprep.subr.bf16.mxu0 0
        %8484 = vmatpush1.bf16.msra.mxu0 0
        %8485 = vmatprep.subr.bf16.mxu0 0
        %8486 = vmatpush1.bf16.msra.mxu0 0
        %8487 = vmatprep.subr.bf16.mxu0 0
        %8488 = vmatpush1.bf16.msra.mxu0 0
        %8489 = vmatprep.subr.bf16.mxu0 0
        %8490 = vmatpush1.bf16.msra.mxu0 0
        %8491 = vmatprep.subr.bf16.mxu0 0
        %8492 = vmatpush1.bf16.msra.mxu0 0
        %8493 = vmatprep.subr.bf16.mxu0 0
        %8494 = vmatpush1.bf16.msra.mxu0 0
        %8495 = vmatprep.mubr.bf16.mxu0 0
        %8496 = vmatmul.mubr.bf16.gmra.mrb[0].mxu0 %v8461
        %v8497 = vpop.f32.mrb[0].mxu0
        %v8498 = vadd.f32 0.0, %v8497
        %v8499 = vpop.f32.mrb[0].mxu0
        %v8500 = vadd.f32 0.0, %v8499
        %v8501 = vpop.f32.mrb[0].mxu0
        %v8502 = vpop.f32.mrb[0].mxu0
        %8503 = vdwg.mxu0
        %v8504 = vadd.f32 %v8409, %v8498
        %v8505 = vadd.f32 %v8410, %v8500
        %s8506 = scalar_lea.vmem %s5, 384
        %v8507 = vld [vmem:[%s8506] sm:$0xff]
        %v8508 = vld [vmem:[%s8506 + $0x8] sm:$0xff]
        %v8509 = vld [vmem:[%s8506 + $0x10] sm:$0xff]
        %v8510 = vld [vmem:[%s8506 + $0x18] sm:$0xff]
        %v8511 = vld [vmem:[%s8506 + $0x20] sm:$0xff]
        %v8512 = vld [vmem:[%s8506 + $0x28] sm:$0xff]
        %v8513 = vld [vmem:[%s8506 + $0x30] sm:$0xff]
        %v8514 = vld [vmem:[%s8506 + $0x38] sm:$0xff]
        %v8515 = vshrl.u32 %v7930, 16
        %v8525 = vunpack.c.l.b16 %v8507
        %v8526 = vunpack.c.h.b16 %v8507
        %v8527 = vunpack.c.l.b16 %v8508
        %v8528 = vunpack.c.h.b16 %v8508
        %v8529 = vunpack.c.l.b16 %v8509
        %v8530 = vunpack.c.h.b16 %v8509
        %v8531 = vunpack.c.l.b16 %v8510
        %v8532 = vunpack.c.h.b16 %v8510
        %v8533 = vunpack.c.l.b16 %v8511
        %v8534 = vunpack.c.h.b16 %v8511
        %v8535 = vunpack.c.l.b16 %v8512
        %v8536 = vunpack.c.h.b16 %v8512
        %v8537 = vunpack.c.l.b16 %v8513
        %v8538 = vunpack.c.h.b16 %v8513
        %v8539 = vunpack.c.l.b16 %v8514
        %v8540 = vunpack.c.h.b16 %v8514
        %v8541 = vpack.c.b16 %v8527, %v8525
        %v8542 = vpack.c.b16 %v8528, %v8526
        %v8543 = vpack.c.b16 %v8531, %v8529
        %v8544 = vpack.c.b16 %v8532, %v8530
        %v8545 = vpack.c.b16 %v8535, %v8533
        %v8546 = vpack.c.b16 %v8536, %v8534
        %v8547 = vpack.c.b16 %v8539, %v8537
        %v8548 = vpack.c.b16 %v8540, %v8538
        %v8558 = vsel %vm7994, %v8515, 0
        %8560 = vmatprep.subr.bf16.mxu0 %v8542
        %8561 = vmatpush1.bf16.msra.mxu0 %v8541
        %8562 = vmatprep.subr.bf16.mxu0 %v8544
        %8563 = vmatpush1.bf16.msra.mxu0 %v8543
        %8564 = vmatprep.subr.bf16.mxu0 %v8546
        %8565 = vmatpush1.bf16.msra.mxu0 %v8545
        %8566 = vmatprep.subr.bf16.mxu0 %v8548
        %8567 = vmatpush1.bf16.msra.mxu0 %v8547
        %8568 = vmatprep.subr.bf16.mxu0 0
        %8569 = vmatpush1.bf16.msra.mxu0 0
        %8570 = vmatprep.subr.bf16.mxu0 0
        %8571 = vmatpush1.bf16.msra.mxu0 0
        %8572 = vmatprep.subr.bf16.mxu0 0
        %8573 = vmatpush1.bf16.msra.mxu0 0
        %8574 = vmatprep.subr.bf16.mxu0 0
        %8575 = vmatpush1.bf16.msra.mxu0 0
        %8576 = vmatprep.subr.bf16.mxu0 0
        %8577 = vmatpush1.bf16.msra.mxu0 0
        %8578 = vmatprep.subr.bf16.mxu0 0
        %8579 = vmatpush1.bf16.msra.mxu0 0
        %8580 = vmatprep.subr.bf16.mxu0 0
        %8581 = vmatpush1.bf16.msra.mxu0 0
        %8582 = vmatprep.subr.bf16.mxu0 0
        %8583 = vmatpush1.bf16.msra.mxu0 0
        %8584 = vmatprep.subr.bf16.mxu0 0
        %8585 = vmatpush1.bf16.msra.mxu0 0
        %8586 = vmatprep.subr.bf16.mxu0 0
        %8587 = vmatpush1.bf16.msra.mxu0 0
        %8588 = vmatprep.subr.bf16.mxu0 0
        %8589 = vmatpush1.bf16.msra.mxu0 0
        %8590 = vmatprep.subr.bf16.mxu0 0
        %8591 = vmatpush1.bf16.msra.mxu0 0
        %8592 = vmatprep.mubr.bf16.mxu0 0
        %8593 = vmatmul.mubr.bf16.gmra.mrb[0].mxu0 %v8558
        %v8594 = vpop.f32.mrb[0].mxu0
        %v8595 = vadd.f32 0.0, %v8594
        %v8596 = vpop.f32.mrb[0].mxu0
        %v8597 = vadd.f32 0.0, %v8596
        %v8598 = vpop.f32.mrb[0].mxu0
        %v8599 = vpop.f32.mrb[0].mxu0
        %8600 = vdwg.mxu0
        %v8601 = vadd.f32 %v8504, %v8595
        %v8602 = vadd.f32 %v8505, %v8597
        %s8603 = scalar_lea.vmem %s5, 448
        %v8604 = vld [vmem:[%s8603] sm:$0xff]
        %v8605 = vld [vmem:[%s8603 + $0x8] sm:$0xff]
        %v8606 = vld [vmem:[%s8603 + $0x10] sm:$0xff]
        %v8607 = vld [vmem:[%s8603 + $0x18] sm:$0xff]
        %v8608 = vld [vmem:[%s8603 + $0x20] sm:$0xff]
        %v8609 = vld [vmem:[%s8603 + $0x28] sm:$0xff]
        %v8610 = vld [vmem:[%s8603 + $0x30] sm:$0xff]
        %v8611 = vld [vmem:[%s8603 + $0x38] sm:$0xff]
        %v8613 = vrot.slane %v7930, 1
        %v8622 = vunpack.c.l.b16 %v8604
        %v8623 = vunpack.c.h.b16 %v8604
        %v8624 = vunpack.c.l.b16 %v8605
        %v8625 = vunpack.c.h.b16 %v8605
        %v8626 = vunpack.c.l.b16 %v8606
        %v8627 = vunpack.c.h.b16 %v8606
        %v8628 = vunpack.c.l.b16 %v8607
        %v8629 = vunpack.c.h.b16 %v8607
        %v8630 = vunpack.c.l.b16 %v8608
        %v8631 = vunpack.c.h.b16 %v8608
        %v8632 = vunpack.c.l.b16 %v8609
        %v8633 = vunpack.c.h.b16 %v8609
        %v8634 = vunpack.c.l.b16 %v8610
        %v8635 = vunpack.c.h.b16 %v8610
        %v8636 = vunpack.c.l.b16 %v8611
        %v8637 = vunpack.c.h.b16 %v8611
        %v8638 = vpack.c.b16 %v8624, %v8622
        %v8639 = vpack.c.b16 %v8625, %v8623
        %v8640 = vpack.c.b16 %v8628, %v8626
        %v8641 = vpack.c.b16 %v8629, %v8627
        %v8642 = vpack.c.b16 %v8632, %v8630
        %v8643 = vpack.c.b16 %v8633, %v8631
        %v8644 = vpack.c.b16 %v8636, %v8634
        %v8645 = vpack.c.b16 %v8637, %v8635
        %v8655 = vsel %vm7994, %v8613, 0
        %8657 = vmatprep.subr.bf16.mxu0 %v8639
        %8658 = vmatpush1.bf16.msra.mxu0 %v8638
        %8659 = vmatprep.subr.bf16.mxu0 %v8641
        %8660 = vmatpush1.bf16.msra.mxu0 %v8640
        %8661 = vmatprep.subr.bf16.mxu0 %v8643
        %8662 = vmatpush1.bf16.msra.mxu0 %v8642
        %8663 = vmatprep.subr.bf16.mxu0 %v8645
        %8664 = vmatpush1.bf16.msra.mxu0 %v8644
        %8665 = vmatprep.subr.bf16.mxu0 0
        %8666 = vmatpush1.bf16.msra.mxu0 0
        %8667 = vmatprep.subr.bf16.mxu0 0
        %8668 = vmatpush1.bf16.msra.mxu0 0
        %8669 = vmatprep.subr.bf16.mxu0 0
        %8670 = vmatpush1.bf16.msra.mxu0 0
        %8671 = vmatprep.subr.bf16.mxu0 0
        %8672 = vmatpush1.bf16.msra.mxu0 0
        %8673 = vmatprep.subr.bf16.mxu0 0
        %8674 = vmatpush1.bf16.msra.mxu0 0
        %8675 = vmatprep.subr.bf16.mxu0 0
        %8676 = vmatpush1.bf16.msra.mxu0 0
        %8677 = vmatprep.subr.bf16.mxu0 0
        %8678 = vmatpush1.bf16.msra.mxu0 0
        %8679 = vmatprep.subr.bf16.mxu0 0
        %8680 = vmatpush1.bf16.msra.mxu0 0
        %8681 = vmatprep.subr.bf16.mxu0 0
        %8682 = vmatpush1.bf16.msra.mxu0 0
        %8683 = vmatprep.subr.bf16.mxu0 0
        %8684 = vmatpush1.bf16.msra.mxu0 0
        %8685 = vmatprep.subr.bf16.mxu0 0
        %8686 = vmatpush1.bf16.msra.mxu0 0
        %8687 = vmatprep.subr.bf16.mxu0 0
        %8688 = vmatpush1.bf16.msra.mxu0 0
        %8689 = vmatprep.mubr.bf16.mxu0 0
        %8690 = vmatmul.mubr.bf16.gmra.mrb[0].mxu0 %v8655
        %v8691 = vpop.f32.mrb[0].mxu0
        %v8692 = vadd.f32 0.0, %v8691
        %v8693 = vpop.f32.mrb[0].mxu0
        %v8694 = vadd.f32 0.0, %v8693
        %v8695 = vpop.f32.mrb[0].mxu0
        %v8696 = vpop.f32.mrb[0].mxu0
        %8697 = vdwg.mxu0
        %v8698 = vadd.f32 %v8601, %v8692
        %v8699 = vadd.f32 %v8602, %v8694
        %s8700 = scalar_lea.vmem %s5, 512
        %v8701 = vld [vmem:[%s8700] sm:$0xff]
        %v8702 = vld [vmem:[%s8700 + $0x8] sm:$0xff]
        %v8703 = vld [vmem:[%s8700 + $0x10] sm:$0xff]
        %v8704 = vld [vmem:[%s8700 + $0x18] sm:$0xff]
        %v8705 = vld [vmem:[%s8700 + $0x20] sm:$0xff]
        %v8706 = vld [vmem:[%s8700 + $0x28] sm:$0xff]
        %v8707 = vld [vmem:[%s8700 + $0x30] sm:$0xff]
        %v8708 = vld [vmem:[%s8700 + $0x38] sm:$0xff]
        %v8709 = vrot.slane %v8515, 1
        %v8718 = vunpack.c.l.b16 %v8701
        %v8719 = vunpack.c.h.b16 %v8701
        %v8720 = vunpack.c.l.b16 %v8702
        %v8721 = vunpack.c.h.b16 %v8702
        %v8722 = vunpack.c.l.b16 %v8703
        %v8723 = vunpack.c.h.b16 %v8703
        %v8724 = vunpack.c.l.b16 %v8704
        %v8725 = vunpack.c.h.b16 %v8704
        %v8726 = vunpack.c.l.b16 %v8705
        %v8727 = vunpack.c.h.b16 %v8705
        %v8728 = vunpack.c.l.b16 %v8706
        %v8729 = vunpack.c.h.b16 %v8706
        %v8730 = vunpack.c.l.b16 %v8707
        %v8731 = vunpack.c.h.b16 %v8707
        %v8732 = vunpack.c.l.b16 %v8708
        %v8733 = vunpack.c.h.b16 %v8708
        %v8734 = vpack.c.b16 %v8720, %v8718
        %v8735 = vpack.c.b16 %v8721, %v8719
        %v8736 = vpack.c.b16 %v8724, %v8722
        %v8737 = vpack.c.b16 %v8725, %v8723
        %v8738 = vpack.c.b16 %v8728, %v8726
        %v8739 = vpack.c.b16 %v8729, %v8727
        %v8740 = vpack.c.b16 %v8732, %v8730
        %v8741 = vpack.c.b16 %v8733, %v8731
        %v8751 = vsel %vm7994, %v8709, 0
        %8753 = vmatprep.subr.bf16.mxu0 %v8735
        %8754 = vmatpush1.bf16.msra.mxu0 %v8734
        %8755 = vmatprep.subr.bf16.mxu0 %v8737
        %8756 = vmatpush1.bf16.msra.mxu0 %v8736
        %8757 = vmatprep.subr.bf16.mxu0 %v8739
        %8758 = vmatpush1.bf16.msra.mxu0 %v8738
        %8759 = vmatprep.subr.bf16.mxu0 %v8741
        %8760 = vmatpush1.bf16.msra.mxu0 %v8740
        %8761 = vmatprep.subr.bf16.mxu0 0
        %8762 = vmatpush1.bf16.msra.mxu0 0
        %8763 = vmatprep.subr.bf16.mxu0 0
        %8764 = vmatpush1.bf16.msra.mxu0 0
        %8765 = vmatprep.subr.bf16.mxu0 0
        %8766 = vmatpush1.bf16.msra.mxu0 0
        %8767 = vmatprep.subr.bf16.mxu0 0
        %8768 = vmatpush1.bf16.msra.mxu0 0
        %8769 = vmatprep.subr.bf16.mxu0 0
        %8770 = vmatpush1.bf16.msra.mxu0 0
        %8771 = vmatprep.subr.bf16.mxu0 0
        %8772 = vmatpush1.bf16.msra.mxu0 0
        %8773 = vmatprep.subr.bf16.mxu0 0
        %8774 = vmatpush1.bf16.msra.mxu0 0
        %8775 = vmatprep.subr.bf16.mxu0 0
        %8776 = vmatpush1.bf16.msra.mxu0 0
        %8777 = vmatprep.subr.bf16.mxu0 0
        %8778 = vmatpush1.bf16.msra.mxu0 0
        %8779 = vmatprep.subr.bf16.mxu0 0
        %8780 = vmatpush1.bf16.msra.mxu0 0
        %8781 = vmatprep.subr.bf16.mxu0 0
        %8782 = vmatpush1.bf16.msra.mxu0 0
        %8783 = vmatprep.subr.bf16.mxu0 0
        %8784 = vmatpush1.bf16.msra.mxu0 0
        %8785 = vmatprep.mubr.bf16.mxu0 0
        %8786 = vmatmul.mubr.bf16.gmra.mrb[0].mxu0 %v8751
        %v8787 = vpop.f32.mrb[0].mxu0
        %v8788 = vadd.f32 0.0, %v8787
        %v8789 = vpop.f32.mrb[0].mxu0
        %v8790 = vadd.f32 0.0, %v8789
        %v8791 = vpop.f32.mrb[0].mxu0
        %v8792 = vpop.f32.mrb[0].mxu0
        %8793 = vdwg.mxu0
        %v8794 = vadd.f32 %v8698, %v8788
        %v8795 = vadd.f32 %v8699, %v8790
        %s8796 = scalar_lea.vmem %s5, 576
        %v8797 = vld [vmem:[%s8796] sm:$0xff]
        %v8798 = vld [vmem:[%s8796 + $0x8] sm:$0xff]
        %v8799 = vld [vmem:[%s8796 + $0x10] sm:$0xff]
        %v8800 = vld [vmem:[%s8796 + $0x18] sm:$0xff]
        %v8801 = vld [vmem:[%s8796 + $0x20] sm:$0xff]
        %v8802 = vld [vmem:[%s8796 + $0x28] sm:$0xff]
        %v8803 = vld [vmem:[%s8796 + $0x30] sm:$0xff]
        %v8804 = vld [vmem:[%s8796 + $0x38] sm:$0xff]
        %v8805 = vrot.slane %v7930, 2
        %v8814 = vunpack.c.l.b16 %v8797
        %v8815 = vunpack.c.h.b16 %v8797
        %v8816 = vunpack.c.l.b16 %v8798
        %v8817 = vunpack.c.h.b16 %v8798
        %v8818 = vunpack.c.l.b16 %v8799
        %v8819 = vunpack.c.h.b16 %v8799
        %v8820 = vunpack.c.l.b16 %v8800
        %v8821 = vunpack.c.h.b16 %v8800
        %v8822 = vunpack.c.l.b16 %v8801
        %v8823 = vunpack.c.h.b16 %v8801
        %v8824 = vunpack.c.l.b16 %v8802
        %v8825 = vunpack.c.h.b16 %v8802
        %v8826 = vunpack.c.l.b16 %v8803
        %v8827 = vunpack.c.h.b16 %v8803
        %v8828 = vunpack.c.l.b16 %v8804
        %v8829 = vunpack.c.h.b16 %v8804
        %v8830 = vpack.c.b16 %v8816, %v8814
        %v8831 = vpack.c.b16 %v8817, %v8815
        %v8832 = vpack.c.b16 %v8820, %v8818
        %v8833 = vpack.c.b16 %v8821, %v8819
        %v8834 = vpack.c.b16 %v8824, %v8822
        %v8835 = vpack.c.b16 %v8825, %v8823
        %v8836 = vpack.c.b16 %v8828, %v8826
        %v8837 = vpack.c.b16 %v8829, %v8827
        %v8847 = vsel %vm7994, %v8805, 0
        %8849 = vmatprep.subr.bf16.mxu0 %v8831
        %8850 = vmatpush1.bf16.msra.mxu0 %v8830
        %8851 = vmatprep.subr.bf16.mxu0 %v8833
        %8852 = vmatpush1.bf16.msra.mxu0 %v8832
        %8853 = vmatprep.subr.bf16.mxu0 %v8835
        %8854 = vmatpush1.bf16.msra.mxu0 %v8834
        %8855 = vmatprep.subr.bf16.mxu0 %v8837
        %8856 = vmatpush1.bf16.msra.mxu0 %v8836
        %8857 = vmatprep.subr.bf16.mxu0 0
        %8858 = vmatpush1.bf16.msra.mxu0 0
        %8859 = vmatprep.subr.bf16.mxu0 0
        %8860 = vmatpush1.bf16.msra.mxu0 0
        %8861 = vmatprep.subr.bf16.mxu0 0
        %8862 = vmatpush1.bf16.msra.mxu0 0
        %8863 = vmatprep.subr.bf16.mxu0 0
        %8864 = vmatpush1.bf16.msra.mxu0 0
        %8865 = vmatprep.subr.bf16.mxu0 0
        %8866 = vmatpush1.bf16.msra.mxu0 0
        %8867 = vmatprep.subr.bf16.mxu0 0
        %8868 = vmatpush1.bf16.msra.mxu0 0
        %8869 = vmatprep.subr.bf16.mxu0 0
        %8870 = vmatpush1.bf16.msra.mxu0 0
        %8871 = vmatprep.subr.bf16.mxu0 0
        %8872 = vmatpush1.bf16.msra.mxu0 0
        %8873 = vmatprep.subr.bf16.mxu0 0
        %8874 = vmatpush1.bf16.msra.mxu0 0
        %8875 = vmatprep.subr.bf16.mxu0 0
        %8876 = vmatpush1.bf16.msra.mxu0 0
        %8877 = vmatprep.subr.bf16.mxu0 0
        %8878 = vmatpush1.bf16.msra.mxu0 0
        %8879 = vmatprep.subr.bf16.mxu0 0
        %8880 = vmatpush1.bf16.msra.mxu0 0
        %8881 = vmatprep.mubr.bf16.mxu0 0
        %8882 = vmatmul.mubr.bf16.gmra.mrb[0].mxu0 %v8847
        %v8883 = vpop.f32.mrb[0].mxu0
        %v8884 = vadd.f32 0.0, %v8883
        %v8885 = vpop.f32.mrb[0].mxu0
        %v8886 = vadd.f32 0.0, %v8885
        %v8887 = vpop.f32.mrb[0].mxu0
        %v8888 = vpop.f32.mrb[0].mxu0
        %8889 = vdwg.mxu0
        %v8890 = vadd.f32 %v8794, %v8884
        %v8891 = vadd.f32 %v8795, %v8886
        %s8892 = scalar_lea.vmem %s5, 640
        %v8893 = vld [vmem:[%s8892] sm:$0xff]
        %v8894 = vld [vmem:[%s8892 + $0x8] sm:$0xff]
        %v8895 = vld [vmem:[%s8892 + $0x10] sm:$0xff]
        %v8896 = vld [vmem:[%s8892 + $0x18] sm:$0xff]
        %v8897 = vld [vmem:[%s8892 + $0x20] sm:$0xff]
        %v8898 = vld [vmem:[%s8892 + $0x28] sm:$0xff]
        %v8899 = vld [vmem:[%s8892 + $0x30] sm:$0xff]
        %v8900 = vld [vmem:[%s8892 + $0x38] sm:$0xff]
        %v8909 = vunpack.c.l.b16 %v8893
        %v8910 = vunpack.c.h.b16 %v8893
        %v8911 = vunpack.c.l.b16 %v8894
        %v8912 = vunpack.c.h.b16 %v8894
        %v8913 = vunpack.c.l.b16 %v8895
        %v8914 = vunpack.c.h.b16 %v8895
        %v8915 = vunpack.c.l.b16 %v8896
        %v8916 = vunpack.c.h.b16 %v8896
        %v8917 = vunpack.c.l.b16 %v8897
        %v8918 = vunpack.c.h.b16 %v8897
        %v8919 = vunpack.c.l.b16 %v8898
        %v8920 = vunpack.c.h.b16 %v8898
        %v8921 = vunpack.c.l.b16 %v8899
        %v8922 = vunpack.c.h.b16 %v8899
        %v8923 = vunpack.c.l.b16 %v8900
        %v8924 = vunpack.c.h.b16 %v8900
        %v8925 = vpack.c.b16 %v8911, %v8909
        %v8926 = vpack.c.b16 %v8912, %v8910
        %v8927 = vpack.c.b16 %v8915, %v8913
        %v8928 = vpack.c.b16 %v8916, %v8914
        %v8929 = vpack.c.b16 %v8919, %v8917
        %v8930 = vpack.c.b16 %v8920, %v8918
        %v8931 = vpack.c.b16 %v8923, %v8921
        %v8932 = vpack.c.b16 %v8924, %v8922
        %v8942 = vsel %vm7994, %v7931, 0
        %8944 = vmatprep.subr.bf16.mxu0 %v8926
        %8945 = vmatpush1.bf16.msra.mxu0 %v8925
        %8946 = vmatprep.subr.bf16.mxu0 %v8928
        %8947 = vmatpush1.bf16.msra.mxu0 %v8927
        %8948 = vmatprep.subr.bf16.mxu0 %v8930
        %8949 = vmatpush1.bf16.msra.mxu0 %v8929
        %8950 = vmatprep.subr.bf16.mxu0 %v8932
        %8951 = vmatpush1.bf16.msra.mxu0 %v8931
        %8952 = vmatprep.subr.bf16.mxu0 0
        %8953 = vmatpush1.bf16.msra.mxu0 0
        %8954 = vmatprep.subr.bf16.mxu0 0
        %8955 = vmatpush1.bf16.msra.mxu0 0
        %8956 = vmatprep.subr.bf16.mxu0 0
        %8957 = vmatpush1.bf16.msra.mxu0 0
        %8958 = vmatprep.subr.bf16.mxu0 0
        %8959 = vmatpush1.bf16.msra.mxu0 0
        %8960 = vmatprep.subr.bf16.mxu0 0
        %8961 = vmatpush1.bf16.msra.mxu0 0
        %8962 = vmatprep.subr.bf16.mxu0 0
        %8963 = vmatpush1.bf16.msra.mxu0 0
        %8964 = vmatprep.subr.bf16.mxu0 0
        %8965 = vmatpush1.bf16.msra.mxu0 0
        %8966 = vmatprep.subr.bf16.mxu0 0
        %8967 = vmatpush1.bf16.msra.mxu0 0
        %8968 = vmatprep.subr.bf16.mxu0 0
        %8969 = vmatpush1.bf16.msra.mxu0 0
        %8970 = vmatprep.subr.bf16.mxu0 0
        %8971 = vmatpush1.bf16.msra.mxu0 0
        %8972 = vmatprep.subr.bf16.mxu0 0
        %8973 = vmatpush1.bf16.msra.mxu0 0
        %8974 = vmatprep.subr.bf16.mxu0 0
        %8975 = vmatpush1.bf16.msra.mxu0 0
        %8976 = vmatprep.mubr.bf16.mxu0 0
        %8977 = vmatmul.mubr.bf16.gmra.mrb[0].mxu0 %v8942
        %v8978 = vpop.f32.mrb[0].mxu0
        %v8979 = vadd.f32 0.0, %v8978
        %v8980 = vpop.f32.mrb[0].mxu0
        %v8981 = vadd.f32 0.0, %v8980
        %v8982 = vpop.f32.mrb[0].mxu0
        %v8983 = vpop.f32.mrb[0].mxu0
        %8984 = vdwg.mxu0
        %v8985 = vadd.f32 %v8890, %v8979
        %v8986 = vadd.f32 %v8891, %v8981
        %s8987 = scalar_lea.vmem %s5, 704
        %v8988 = vld [vmem:[%s8987] sm:$0xff]
        %v8989 = vld [vmem:[%s8987 + $0x8] sm:$0xff]
        %v8990 = vld [vmem:[%s8987 + $0x10] sm:$0xff]
        %v8991 = vld [vmem:[%s8987 + $0x18] sm:$0xff]
        %v8992 = vld [vmem:[%s8987 + $0x20] sm:$0xff]
        %v8993 = vld [vmem:[%s8987 + $0x28] sm:$0xff]
        %v8994 = vld [vmem:[%s8987 + $0x30] sm:$0xff]
        %v8995 = vld [vmem:[%s8987 + $0x38] sm:$0xff]
        %v8996 = vshrl.u32 %v7931, 16
        %v9006 = vunpack.c.l.b16 %v8988
        %v9007 = vunpack.c.h.b16 %v8988
        %v9008 = vunpack.c.l.b16 %v8989
        %v9009 = vunpack.c.h.b16 %v8989
        %v9010 = vunpack.c.l.b16 %v8990
        %v9011 = vunpack.c.h.b16 %v8990
        %v9012 = vunpack.c.l.b16 %v8991
        %v9013 = vunpack.c.h.b16 %v8991
        %v9014 = vunpack.c.l.b16 %v8992
        %v9015 = vunpack.c.h.b16 %v8992
        %v9016 = vunpack.c.l.b16 %v8993
        %v9017 = vunpack.c.h.b16 %v8993
        %v9018 = vunpack.c.l.b16 %v8994
        %v9019 = vunpack.c.h.b16 %v8994
        %v9020 = vunpack.c.l.b16 %v8995
        %v9021 = vunpack.c.h.b16 %v8995
        %v9022 = vpack.c.b16 %v9008, %v9006
        %v9023 = vpack.c.b16 %v9009, %v9007
        %v9024 = vpack.c.b16 %v9012, %v9010
        %v9025 = vpack.c.b16 %v9013, %v9011
        %v9026 = vpack.c.b16 %v9016, %v9014
        %v9027 = vpack.c.b16 %v9017, %v9015
        %v9028 = vpack.c.b16 %v9020, %v9018
        %v9029 = vpack.c.b16 %v9021, %v9019
        %v9039 = vsel %vm7994, %v8996, 0
        %9041 = vmatprep.subr.bf16.mxu0 %v9023
        %9042 = vmatpush1.bf16.msra.mxu0 %v9022
        %9043 = vmatprep.subr.bf16.mxu0 %v9025
        %9044 = vmatpush1.bf16.msra.mxu0 %v9024
        %9045 = vmatprep.subr.bf16.mxu0 %v9027
        %9046 = vmatpush1.bf16.msra.mxu0 %v9026
        %9047 = vmatprep.subr.bf16.mxu0 %v9029
        %9048 = vmatpush1.bf16.msra.mxu0 %v9028
        %9049 = vmatprep.subr.bf16.mxu0 0
        %9050 = vmatpush1.bf16.msra.mxu0 0
        %9051 = vmatprep.subr.bf16.mxu0 0
        %9052 = vmatpush1.bf16.msra.mxu0 0
        %9053 = vmatprep.subr.bf16.mxu0 0
        %9054 = vmatpush1.bf16.msra.mxu0 0
        %9055 = vmatprep.subr.bf16.mxu0 0
        %9056 = vmatpush1.bf16.msra.mxu0 0
        %9057 = vmatprep.subr.bf16.mxu0 0
        %9058 = vmatpush1.bf16.msra.mxu0 0
        %9059 = vmatprep.subr.bf16.mxu0 0
        %9060 = vmatpush1.bf16.msra.mxu0 0
        %9061 = vmatprep.subr.bf16.mxu0 0
        %9062 = vmatpush1.bf16.msra.mxu0 0
        %9063 = vmatprep.subr.bf16.mxu0 0
        %9064 = vmatpush1.bf16.msra.mxu0 0
        %9065 = vmatprep.subr.bf16.mxu0 0
        %9066 = vmatpush1.bf16.msra.mxu0 0
        %9067 = vmatprep.subr.bf16.mxu0 0
        %9068 = vmatpush1.bf16.msra.mxu0 0
        %9069 = vmatprep.subr.bf16.mxu0 0
        %9070 = vmatpush1.bf16.msra.mxu0 0
        %9071 = vmatprep.subr.bf16.mxu0 0
        %9072 = vmatpush1.bf16.msra.mxu0 0
        %9073 = vmatprep.mubr.bf16.mxu0 0
        %9074 = vmatmul.mubr.bf16.gmra.mrb[0].mxu0 %v9039
        %v9075 = vpop.f32.mrb[0].mxu0
        %v9076 = vadd.f32 0.0, %v9075
        %v9077 = vpop.f32.mrb[0].mxu0
        %v9078 = vadd.f32 0.0, %v9077
        %v9079 = vpop.f32.mrb[0].mxu0
        %v9080 = vpop.f32.mrb[0].mxu0
        %9081 = vdwg.mxu0
        %v9082 = vadd.f32 %v8985, %v9076
        %v9083 = vadd.f32 %v8986, %v9078
        %s9084 = scalar_lea.vmem %s5, 768
        %v9085 = vld [vmem:[%s9084] sm:$0xff]
        %v9086 = vld [vmem:[%s9084 + $0x8] sm:$0xff]
        %v9087 = vld [vmem:[%s9084 + $0x10] sm:$0xff]
        %v9088 = vld [vmem:[%s9084 + $0x18] sm:$0xff]
        %v9089 = vld [vmem:[%s9084 + $0x20] sm:$0xff]
        %v9090 = vld [vmem:[%s9084 + $0x28] sm:$0xff]
        %v9091 = vld [vmem:[%s9084 + $0x30] sm:$0xff]
        %v9092 = vld [vmem:[%s9084 + $0x38] sm:$0xff]
        %v9094 = vrot.slane %v7931, 1
        %v9103 = vunpack.c.l.b16 %v9085
        %v9104 = vunpack.c.h.b16 %v9085
        %v9105 = vunpack.c.l.b16 %v9086
        %v9106 = vunpack.c.h.b16 %v9086
        %v9107 = vunpack.c.l.b16 %v9087
        %v9108 = vunpack.c.h.b16 %v9087
        %v9109 = vunpack.c.l.b16 %v9088
        %v9110 = vunpack.c.h.b16 %v9088
        %v9111 = vunpack.c.l.b16 %v9089
        %v9112 = vunpack.c.h.b16 %v9089
        %v9113 = vunpack.c.l.b16 %v9090
        %v9114 = vunpack.c.h.b16 %v9090
        %v9115 = vunpack.c.l.b16 %v9091
        %v9116 = vunpack.c.h.b16 %v9091
        %v9117 = vunpack.c.l.b16 %v9092
        %v9118 = vunpack.c.h.b16 %v9092
        %v9119 = vpack.c.b16 %v9105, %v9103
        %v9120 = vpack.c.b16 %v9106, %v9104
        %v9121 = vpack.c.b16 %v9109, %v9107
        %v9122 = vpack.c.b16 %v9110, %v9108
        %v9123 = vpack.c.b16 %v9113, %v9111
        %v9124 = vpack.c.b16 %v9114, %v9112
        %v9125 = vpack.c.b16 %v9117, %v9115
        %v9126 = vpack.c.b16 %v9118, %v9116
        %v9136 = vsel %vm7994, %v9094, 0
        %9138 = vmatprep.subr.bf16.mxu0 %v9120
        %9139 = vmatpush1.bf16.msra.mxu0 %v9119
        %9140 = vmatprep.subr.bf16.mxu0 %v9122
        %9141 = vmatpush1.bf16.msra.mxu0 %v9121
        %9142 = vmatprep.subr.bf16.mxu0 %v9124
        %9143 = vmatpush1.bf16.msra.mxu0 %v9123
        %9144 = vmatprep.subr.bf16.mxu0 %v9126
        %9145 = vmatpush1.bf16.msra.mxu0 %v9125
        %9146 = vmatprep.subr.bf16.mxu0 0
        %9147 = vmatpush1.bf16.msra.mxu0 0
        %9148 = vmatprep.subr.bf16.mxu0 0
        %9149 = vmatpush1.bf16.msra.mxu0 0
        %9150 = vmatprep.subr.bf16.mxu0 0
        %9151 = vmatpush1.bf16.msra.mxu0 0
        %9152 = vmatprep.subr.bf16.mxu0 0
        %9153 = vmatpush1.bf16.msra.mxu0 0
        %9154 = vmatprep.subr.bf16.mxu0 0
        %9155 = vmatpush1.bf16.msra.mxu0 0
        %9156 = vmatprep.subr.bf16.mxu0 0
        %9157 = vmatpush1.bf16.msra.mxu0 0
        %9158 = vmatprep.subr.bf16.mxu0 0
        %9159 = vmatpush1.bf16.msra.mxu0 0
        %9160 = vmatprep.subr.bf16.mxu0 0
        %9161 = vmatpush1.bf16.msra.mxu0 0
        %9162 = vmatprep.subr.bf16.mxu0 0
        %9163 = vmatpush1.bf16.msra.mxu0 0
        %9164 = vmatprep.subr.bf16.mxu0 0
        %9165 = vmatpush1.bf16.msra.mxu0 0
        %9166 = vmatprep.subr.bf16.mxu0 0
        %9167 = vmatpush1.bf16.msra.mxu0 0
        %9168 = vmatprep.subr.bf16.mxu0 0
        %9169 = vmatpush1.bf16.msra.mxu0 0
        %9170 = vmatprep.mubr.bf16.mxu0 0
        %9171 = vmatmul.mubr.bf16.gmra.mrb[0].mxu0 %v9136
        %v9172 = vpop.f32.mrb[0].mxu0
        %v9173 = vadd.f32 0.0, %v9172
        %v9174 = vpop.f32.mrb[0].mxu0
        %v9175 = vadd.f32 0.0, %v9174
        %v9176 = vpop.f32.mrb[0].mxu0
        %v9177 = vpop.f32.mrb[0].mxu0
        %9178 = vdwg.mxu0
        %v9179 = vadd.f32 %v9082, %v9173
        %v9180 = vadd.f32 %v9083, %v9175
        %s9181 = scalar_lea.vmem %s5, 832
        %v9182 = vld [vmem:[%s9181] sm:$0xff]
        %v9183 = vld [vmem:[%s9181 + $0x8] sm:$0xff]
        %v9184 = vld [vmem:[%s9181 + $0x10] sm:$0xff]
        %v9185 = vld [vmem:[%s9181 + $0x18] sm:$0xff]
        %v9186 = vld [vmem:[%s9181 + $0x20] sm:$0xff]
        %v9187 = vld [vmem:[%s9181 + $0x28] sm:$0xff]
        %v9188 = vld [vmem:[%s9181 + $0x30] sm:$0xff]
        %v9189 = vld [vmem:[%s9181 + $0x38] sm:$0xff]
        %v9190 = vrot.slane %v8996, 1
        %v9199 = vunpack.c.l.b16 %v9182
        %v9200 = vunpack.c.h.b16 %v9182
        %v9201 = vunpack.c.l.b16 %v9183
        %v9202 = vunpack.c.h.b16 %v9183
        %v9203 = vunpack.c.l.b16 %v9184
        %v9204 = vunpack.c.h.b16 %v9184
        %v9205 = vunpack.c.l.b16 %v9185
        %v9206 = vunpack.c.h.b16 %v9185
        %v9207 = vunpack.c.l.b16 %v9186
        %v9208 = vunpack.c.h.b16 %v9186
        %v9209 = vunpack.c.l.b16 %v9187
        %v9210 = vunpack.c.h.b16 %v9187
        %v9211 = vunpack.c.l.b16 %v9188
        %v9212 = vunpack.c.h.b16 %v9188
        %v9213 = vunpack.c.l.b16 %v9189
        %v9214 = vunpack.c.h.b16 %v9189
        %v9215 = vpack.c.b16 %v9201, %v9199
        %v9216 = vpack.c.b16 %v9202, %v9200
        %v9217 = vpack.c.b16 %v9205, %v9203
        %v9218 = vpack.c.b16 %v9206, %v9204
        %v9219 = vpack.c.b16 %v9209, %v9207
        %v9220 = vpack.c.b16 %v9210, %v9208
        %v9221 = vpack.c.b16 %v9213, %v9211
        %v9222 = vpack.c.b16 %v9214, %v9212
        %v9232 = vsel %vm7994, %v9190, 0
        %9234 = vmatprep.subr.bf16.mxu0 %v9216
        %9235 = vmatpush1.bf16.msra.mxu0 %v9215
        %9236 = vmatprep.subr.bf16.mxu0 %v9218
        %9237 = vmatpush1.bf16.msra.mxu0 %v9217
        %9238 = vmatprep.subr.bf16.mxu0 %v9220
        %9239 = vmatpush1.bf16.msra.mxu0 %v9219
        %9240 = vmatprep.subr.bf16.mxu0 %v9222
        %9241 = vmatpush1.bf16.msra.mxu0 %v9221
        %9242 = vmatprep.subr.bf16.mxu0 0
        %9243 = vmatpush1.bf16.msra.mxu0 0
        %9244 = vmatprep.subr.bf16.mxu0 0
        %9245 = vmatpush1.bf16.msra.mxu0 0
        %9246 = vmatprep.subr.bf16.mxu0 0
        %9247 = vmatpush1.bf16.msra.mxu0 0
        %9248 = vmatprep.subr.bf16.mxu0 0
        %9249 = vmatpush1.bf16.msra.mxu0 0
        %9250 = vmatprep.subr.bf16.mxu0 0
        %9251 = vmatpush1.bf16.msra.mxu0 0
        %9252 = vmatprep.subr.bf16.mxu0 0
        %9253 = vmatpush1.bf16.msra.mxu0 0
        %9254 = vmatprep.subr.bf16.mxu0 0
        %9255 = vmatpush1.bf16.msra.mxu0 0
        %9256 = vmatprep.subr.bf16.mxu0 0
        %9257 = vmatpush1.bf16.msra.mxu0 0
        %9258 = vmatprep.subr.bf16.mxu0 0
        %9259 = vmatpush1.bf16.msra.mxu0 0
        %9260 = vmatprep.subr.bf16.mxu0 0
        %9261 = vmatpush1.bf16.msra.mxu0 0
        %9262 = vmatprep.subr.bf16.mxu0 0
        %9263 = vmatpush1.bf16.msra.mxu0 0
        %9264 = vmatprep.subr.bf16.mxu0 0
        %9265 = vmatpush1.bf16.msra.mxu0 0
        %9266 = vmatprep.mubr.bf16.mxu0 0
        %9267 = vmatmul.mubr.bf16.gmra.mrb[0].mxu0 %v9232
        %v9268 = vpop.f32.mrb[0].mxu0
        %v9269 = vadd.f32 0.0, %v9268
        %v9270 = vpop.f32.mrb[0].mxu0
        %v9271 = vadd.f32 0.0, %v9270
        %v9272 = vpop.f32.mrb[0].mxu0
        %v9273 = vpop.f32.mrb[0].mxu0
        %9274 = vdwg.mxu0
        %v9275 = vadd.f32 %v9179, %v9269
        %v9276 = vadd.f32 %v9180, %v9271
        %s9277 = scalar_lea.vmem %s5, 896
        %v9278 = vld [vmem:[%s9277] sm:$0xff]
        %v9279 = vld [vmem:[%s9277 + $0x8] sm:$0xff]
        %v9280 = vld [vmem:[%s9277 + $0x10] sm:$0xff]
        %v9281 = vld [vmem:[%s9277 + $0x18] sm:$0xff]
        %v9282 = vld [vmem:[%s9277 + $0x20] sm:$0xff]
        %v9283 = vld [vmem:[%s9277 + $0x28] sm:$0xff]
        %v9284 = vld [vmem:[%s9277 + $0x30] sm:$0xff]
        %v9285 = vld [vmem:[%s9277 + $0x38] sm:$0xff]
        %v9286 = vrot.slane %v7931, 2
        %v9295 = vunpack.c.l.b16 %v9278
        %v9296 = vunpack.c.h.b16 %v9278
        %v9297 = vunpack.c.l.b16 %v9279
        %v9298 = vunpack.c.h.b16 %v9279
        %v9299 = vunpack.c.l.b16 %v9280
        %v9300 = vunpack.c.h.b16 %v9280
        %v9301 = vunpack.c.l.b16 %v9281
        %v9302 = vunpack.c.h.b16 %v9281
        %v9303 = vunpack.c.l.b16 %v9282
        %v9304 = vunpack.c.h.b16 %v9282
        %v9305 = vunpack.c.l.b16 %v9283
        %v9306 = vunpack.c.h.b16 %v9283
        %v9307 = vunpack.c.l.b16 %v9284
        %v9308 = vunpack.c.h.b16 %v9284
        %v9309 = vunpack.c.l.b16 %v9285
        %v9310 = vunpack.c.h.b16 %v9285
        %v9311 = vpack.c.b16 %v9297, %v9295
        %v9312 = vpack.c.b16 %v9298, %v9296
        %v9313 = vpack.c.b16 %v9301, %v9299
        %v9314 = vpack.c.b16 %v9302, %v9300
        %v9315 = vpack.c.b16 %v9305, %v9303
        %v9316 = vpack.c.b16 %v9306, %v9304
        %v9317 = vpack.c.b16 %v9309, %v9307
        %v9318 = vpack.c.b16 %v9310, %v9308
        %v9328 = vsel %vm7994, %v9286, 0
        %9330 = vmatprep.subr.bf16.mxu0 %v9312
        %9331 = vmatpush1.bf16.msra.mxu0 %v9311
        %9332 = vmatprep.subr.bf16.mxu0 %v9314
        %9333 = vmatpush1.bf16.msra.mxu0 %v9313
        %9334 = vmatprep.subr.bf16.mxu0 %v9316
        %9335 = vmatpush1.bf16.msra.mxu0 %v9315
        %9336 = vmatprep.subr.bf16.mxu0 %v9318
        %9337 = vmatpush1.bf16.msra.mxu0 %v9317
        %9338 = vmatprep.subr.bf16.mxu0 0
        %9339 = vmatpush1.bf16.msra.mxu0 0
        %9340 = vmatprep.subr.bf16.mxu0 0
        %9341 = vmatpush1.bf16.msra.mxu0 0
        %9342 = vmatprep.subr.bf16.mxu0 0
        %9343 = vmatpush1.bf16.msra.mxu0 0
        %9344 = vmatprep.subr.bf16.mxu0 0
        %9345 = vmatpush1.bf16.msra.mxu0 0
        %9346 = vmatprep.subr.bf16.mxu0 0
        %9347 = vmatpush1.bf16.msra.mxu0 0
        %9348 = vmatprep.subr.bf16.mxu0 0
        %9349 = vmatpush1.bf16.msra.mxu0 0
        %9350 = vmatprep.subr.bf16.mxu0 0
        %9351 = vmatpush1.bf16.msra.mxu0 0
        %9352 = vmatprep.subr.bf16.mxu0 0
        %9353 = vmatpush1.bf16.msra.mxu0 0
        %9354 = vmatprep.subr.bf16.mxu0 0
        %9355 = vmatpush1.bf16.msra.mxu0 0
        %9356 = vmatprep.subr.bf16.mxu0 0
        %9357 = vmatpush1.bf16.msra.mxu0 0
        %9358 = vmatprep.subr.bf16.mxu0 0
        %9359 = vmatpush1.bf16.msra.mxu0 0
        %9360 = vmatprep.subr.bf16.mxu0 0
        %9361 = vmatpush1.bf16.msra.mxu0 0
        %9362 = vmatprep.mubr.bf16.mxu0 0
        %9363 = vmatmul.mubr.bf16.gmra.mrb[0].mxu0 %v9328
        %v9364 = vpop.f32.mrb[0].mxu0
        %v9365 = vadd.f32 0.0, %v9364
        %v9366 = vpop.f32.mrb[0].mxu0
        %v9367 = vadd.f32 0.0, %v9366
        %v9368 = vpop.f32.mrb[0].mxu0
        %v9369 = vpop.f32.mrb[0].mxu0
        %9370 = vdwg.mxu0
        %v9371 = vadd.f32 %v9275, %v9365
        %v9372 = vadd.f32 %v9276, %v9367
        %s9373 = scalar_lea.vmem %s5, 960
        %v9374 = vld [vmem:[%s9373] sm:$0xff]
        %v9375 = vld [vmem:[%s9373 + $0x8] sm:$0xff]
        %v9376 = vld [vmem:[%s9373 + $0x10] sm:$0xff]
        %v9377 = vld [vmem:[%s9373 + $0x18] sm:$0xff]
        %v9378 = vld [vmem:[%s9373 + $0x20] sm:$0xff]
        %v9379 = vld [vmem:[%s9373 + $0x28] sm:$0xff]
        %v9380 = vld [vmem:[%s9373 + $0x30] sm:$0xff]
        %v9381 = vld [vmem:[%s9373 + $0x38] sm:$0xff]
        %v9390 = vunpack.c.l.b16 %v9374
        %v9391 = vunpack.c.h.b16 %v9374
        %v9392 = vunpack.c.l.b16 %v9375
        %v9393 = vunpack.c.h.b16 %v9375
        %v9394 = vunpack.c.l.b16 %v9376
        %v9395 = vunpack.c.h.b16 %v9376
        %v9396 = vunpack.c.l.b16 %v9377
        %v9397 = vunpack.c.h.b16 %v9377
        %v9398 = vunpack.c.l.b16 %v9378
        %v9399 = vunpack.c.h.b16 %v9378
        %v9400 = vunpack.c.l.b16 %v9379
        %v9401 = vunpack.c.h.b16 %v9379
        %v9402 = vunpack.c.l.b16 %v9380
        %v9403 = vunpack.c.h.b16 %v9380
        %v9404 = vunpack.c.l.b16 %v9381
        %v9405 = vunpack.c.h.b16 %v9381
        %v9406 = vpack.c.b16 %v9392, %v9390
        %v9407 = vpack.c.b16 %v9393, %v9391
        %v9408 = vpack.c.b16 %v9396, %v9394
        %v9409 = vpack.c.b16 %v9397, %v9395
        %v9410 = vpack.c.b16 %v9400, %v9398
        %v9411 = vpack.c.b16 %v9401, %v9399
        %v9412 = vpack.c.b16 %v9404, %v9402
        %v9413 = vpack.c.b16 %v9405, %v9403
        %v9423 = vsel %vm7994, %v7932, 0
        %9425 = vmatprep.subr.bf16.mxu0 %v9407
        %9426 = vmatpush1.bf16.msra.mxu0 %v9406
        %9427 = vmatprep.subr.bf16.mxu0 %v9409
        %9428 = vmatpush1.bf16.msra.mxu0 %v9408
        %9429 = vmatprep.subr.bf16.mxu0 %v9411
        %9430 = vmatpush1.bf16.msra.mxu0 %v9410
        %9431 = vmatprep.subr.bf16.mxu0 %v9413
        %9432 = vmatpush1.bf16.msra.mxu0 %v9412
        %9433 = vmatprep.subr.bf16.mxu0 0
        %9434 = vmatpush1.bf16.msra.mxu0 0
        %9435 = vmatprep.subr.bf16.mxu0 0
        %9436 = vmatpush1.bf16.msra.mxu0 0
        %9437 = vmatprep.subr.bf16.mxu0 0
        %9438 = vmatpush1.bf16.msra.mxu0 0
        %9439 = vmatprep.subr.bf16.mxu0 0
        %9440 = vmatpush1.bf16.msra.mxu0 0
        %9441 = vmatprep.subr.bf16.mxu0 0
        %9442 = vmatpush1.bf16.msra.mxu0 0
        %9443 = vmatprep.subr.bf16.mxu0 0
        %9444 = vmatpush1.bf16.msra.mxu0 0
        %9445 = vmatprep.subr.bf16.mxu0 0
        %9446 = vmatpush1.bf16.msra.mxu0 0
        %9447 = vmatprep.subr.bf16.mxu0 0
        %9448 = vmatpush1.bf16.msra.mxu0 0
        %9449 = vmatprep.subr.bf16.mxu0 0
        %9450 = vmatpush1.bf16.msra.mxu0 0
        %9451 = vmatprep.subr.bf16.mxu0 0
        %9452 = vmatpush1.bf16.msra.mxu0 0
        %9453 = vmatprep.subr.bf16.mxu0 0
        %9454 = vmatpush1.bf16.msra.mxu0 0
        %9455 = vmatprep.subr.bf16.mxu0 0
        %9456 = vmatpush1.bf16.msra.mxu0 0
        %9457 = vmatprep.mubr.bf16.mxu0 0
        %9458 = vmatmul.mubr.bf16.gmra.mrb[0].mxu0 %v9423
        %v9459 = vpop.f32.mrb[0].mxu0
        %v9460 = vadd.f32 0.0, %v9459
        %v9461 = vpop.f32.mrb[0].mxu0
        %v9462 = vadd.f32 0.0, %v9461
        %v9463 = vpop.f32.mrb[0].mxu0
        %v9464 = vpop.f32.mrb[0].mxu0
        %9465 = vdwg.mxu0
        %v9466 = vadd.f32 %v9371, %v9460
        %v9467 = vadd.f32 %v9372, %v9462
        %s9468 = scalar_lea.vmem %s5, 1024
        %v9469 = vld [vmem:[%s9468] sm:$0xff]
        %v9470 = vld [vmem:[%s9468 + $0x8] sm:$0xff]
        %v9471 = vld [vmem:[%s9468 + $0x10] sm:$0xff]
        %v9472 = vld [vmem:[%s9468 + $0x18] sm:$0xff]
        %v9473 = vld [vmem:[%s9468 + $0x20] sm:$0xff]
        %v9474 = vld [vmem:[%s9468 + $0x28] sm:$0xff]
        %v9475 = vld [vmem:[%s9468 + $0x30] sm:$0xff]
        %v9476 = vld [vmem:[%s9468 + $0x38] sm:$0xff]
        %v9477 = vshrl.u32 %v7932, 16
        %v9487 = vunpack.c.l.b16 %v9469
        %v9488 = vunpack.c.h.b16 %v9469
        %v9489 = vunpack.c.l.b16 %v9470
        %v9490 = vunpack.c.h.b16 %v9470
        %v9491 = vunpack.c.l.b16 %v9471
        %v9492 = vunpack.c.h.b16 %v9471
        %v9493 = vunpack.c.l.b16 %v9472
        %v9494 = vunpack.c.h.b16 %v9472
        %v9495 = vunpack.c.l.b16 %v9473
        %v9496 = vunpack.c.h.b16 %v9473
        %v9497 = vunpack.c.l.b16 %v9474
        %v9498 = vunpack.c.h.b16 %v9474
        %v9499 = vunpack.c.l.b16 %v9475
        %v9500 = vunpack.c.h.b16 %v9475
        %v9501 = vunpack.c.l.b16 %v9476
        %v9502 = vunpack.c.h.b16 %v9476
        %v9503 = vpack.c.b16 %v9489, %v9487
        %v9504 = vpack.c.b16 %v9490, %v9488
        %v9505 = vpack.c.b16 %v9493, %v9491
        %v9506 = vpack.c.b16 %v9494, %v9492
        %v9507 = vpack.c.b16 %v9497, %v9495
        %v9508 = vpack.c.b16 %v9498, %v9496
        %v9509 = vpack.c.b16 %v9501, %v9499
        %v9510 = vpack.c.b16 %v9502, %v9500
        %v9520 = vsel %vm7994, %v9477, 0
        %9522 = vmatprep.subr.bf16.mxu0 %v9504
        %9523 = vmatpush1.bf16.msra.mxu0 %v9503
        %9524 = vmatprep.subr.bf16.mxu0 %v9506
        %9525 = vmatpush1.bf16.msra.mxu0 %v9505
        %9526 = vmatprep.subr.bf16.mxu0 %v9508
        %9527 = vmatpush1.bf16.msra.mxu0 %v9507
        %9528 = vmatprep.subr.bf16.mxu0 %v9510
        %9529 = vmatpush1.bf16.msra.mxu0 %v9509
        %9530 = vmatprep.subr.bf16.mxu0 0
        %9531 = vmatpush1.bf16.msra.mxu0 0
        %9532 = vmatprep.subr.bf16.mxu0 0
        %9533 = vmatpush1.bf16.msra.mxu0 0
        %9534 = vmatprep.subr.bf16.mxu0 0
        %9535 = vmatpush1.bf16.msra.mxu0 0
        %9536 = vmatprep.subr.bf16.mxu0 0
        %9537 = vmatpush1.bf16.msra.mxu0 0
        %9538 = vmatprep.subr.bf16.mxu0 0
        %9539 = vmatpush1.bf16.msra.mxu0 0
        %9540 = vmatprep.subr.bf16.mxu0 0
        %9541 = vmatpush1.bf16.msra.mxu0 0
        %9542 = vmatprep.subr.bf16.mxu0 0
        %9543 = vmatpush1.bf16.msra.mxu0 0
        %9544 = vmatprep.subr.bf16.mxu0 0
        %9545 = vmatpush1.bf16.msra.mxu0 0
        %9546 = vmatprep.subr.bf16.mxu0 0
        %9547 = vmatpush1.bf16.msra.mxu0 0
        %9548 = vmatprep.subr.bf16.mxu0 0
        %9549 = vmatpush1.bf16.msra.mxu0 0
        %9550 = vmatprep.subr.bf16.mxu0 0
        %9551 = vmatpush1.bf16.msra.mxu0 0
        %9552 = vmatprep.subr.bf16.mxu0 0
        %9553 = vmatpush1.bf16.msra.mxu0 0
        %9554 = vmatprep.mubr.bf16.mxu0 0
        %9555 = vmatmul.mubr.bf16.gmra.mrb[0].mxu0 %v9520
        %v9556 = vpop.f32.mrb[0].mxu0
        %v9557 = vadd.f32 0.0, %v9556
        %v9558 = vpop.f32.mrb[0].mxu0
        %v9559 = vadd.f32 0.0, %v9558
        %v9560 = vpop.f32.mrb[0].mxu0
        %v9561 = vpop.f32.mrb[0].mxu0
        %9562 = vdwg.mxu0
        %v9563 = vadd.f32 %v9466, %v9557
        %v9564 = vadd.f32 %v9467, %v9559
        %s9565 = scalar_lea.vmem %s5, 1088
        %v9566 = vld [vmem:[%s9565] sm:$0xff]
        %v9567 = vld [vmem:[%s9565 + $0x8] sm:$0xff]
        %v9568 = vld [vmem:[%s9565 + $0x10] sm:$0xff]
        %v9569 = vld [vmem:[%s9565 + $0x18] sm:$0xff]
        %v9570 = vld [vmem:[%s9565 + $0x20] sm:$0xff]
        %v9571 = vld [vmem:[%s9565 + $0x28] sm:$0xff]
        %v9572 = vld [vmem:[%s9565 + $0x30] sm:$0xff]
        %v9573 = vld [vmem:[%s9565 + $0x38] sm:$0xff]
        %v9575 = vrot.slane %v7932, 1
        %v9584 = vunpack.c.l.b16 %v9566
        %v9585 = vunpack.c.h.b16 %v9566
        %v9586 = vunpack.c.l.b16 %v9567
        %v9587 = vunpack.c.h.b16 %v9567
        %v9588 = vunpack.c.l.b16 %v9568
        %v9589 = vunpack.c.h.b16 %v9568
        %v9590 = vunpack.c.l.b16 %v9569
        %v9591 = vunpack.c.h.b16 %v9569
        %v9592 = vunpack.c.l.b16 %v9570
        %v9593 = vunpack.c.h.b16 %v9570
        %v9594 = vunpack.c.l.b16 %v9571
        %v9595 = vunpack.c.h.b16 %v9571
        %v9596 = vunpack.c.l.b16 %v9572
        %v9597 = vunpack.c.h.b16 %v9572
        %v9598 = vunpack.c.l.b16 %v9573
        %v9599 = vunpack.c.h.b16 %v9573
        %v9600 = vpack.c.b16 %v9586, %v9584
        %v9601 = vpack.c.b16 %v9587, %v9585
        %v9602 = vpack.c.b16 %v9590, %v9588
        %v9603 = vpack.c.b16 %v9591, %v9589
        %v9604 = vpack.c.b16 %v9594, %v9592
        %v9605 = vpack.c.b16 %v9595, %v9593
        %v9606 = vpack.c.b16 %v9598, %v9596
        %v9607 = vpack.c.b16 %v9599, %v9597
        %v9617 = vsel %vm7994, %v9575, 0
        %9619 = vmatprep.subr.bf16.mxu0 %v9601
        %9620 = vmatpush1.bf16.msra.mxu0 %v9600
        %9621 = vmatprep.subr.bf16.mxu0 %v9603
        %9622 = vmatpush1.bf16.msra.mxu0 %v9602
        %9623 = vmatprep.subr.bf16.mxu0 %v9605
        %9624 = vmatpush1.bf16.msra.mxu0 %v9604
        %9625 = vmatprep.subr.bf16.mxu0 %v9607
        %9626 = vmatpush1.bf16.msra.mxu0 %v9606
        %9627 = vmatprep.subr.bf16.mxu0 0
        %9628 = vmatpush1.bf16.msra.mxu0 0
        %9629 = vmatprep.subr.bf16.mxu0 0
        %9630 = vmatpush1.bf16.msra.mxu0 0
        %9631 = vmatprep.subr.bf16.mxu0 0
        %9632 = vmatpush1.bf16.msra.mxu0 0
        %9633 = vmatprep.subr.bf16.mxu0 0
        %9634 = vmatpush1.bf16.msra.mxu0 0
        %9635 = vmatprep.subr.bf16.mxu0 0
        %9636 = vmatpush1.bf16.msra.mxu0 0
        %9637 = vmatprep.subr.bf16.mxu0 0
        %9638 = vmatpush1.bf16.msra.mxu0 0
        %9639 = vmatprep.subr.bf16.mxu0 0
        %9640 = vmatpush1.bf16.msra.mxu0 0
        %9641 = vmatprep.subr.bf16.mxu0 0
        %9642 = vmatpush1.bf16.msra.mxu0 0
        %9643 = vmatprep.subr.bf16.mxu0 0
        %9644 = vmatpush1.bf16.msra.mxu0 0
        %9645 = vmatprep.subr.bf16.mxu0 0
        %9646 = vmatpush1.bf16.msra.mxu0 0
        %9647 = vmatprep.subr.bf16.mxu0 0
        %9648 = vmatpush1.bf16.msra.mxu0 0
        %9649 = vmatprep.subr.bf16.mxu0 0
        %9650 = vmatpush1.bf16.msra.mxu0 0
        %9651 = vmatprep.mubr.bf16.mxu0 0
        %9652 = vmatmul.mubr.bf16.gmra.mrb[0].mxu0 %v9617
        %v9653 = vpop.f32.mrb[0].mxu0
        %v9654 = vadd.f32 0.0, %v9653
        %v9655 = vpop.f32.mrb[0].mxu0
        %v9656 = vadd.f32 0.0, %v9655
        %v9657 = vpop.f32.mrb[0].mxu0
        %v9658 = vpop.f32.mrb[0].mxu0
        %9659 = vdwg.mxu0
        %v9660 = vadd.f32 %v9563, %v9654
        %v9661 = vadd.f32 %v9564, %v9656
        %s9662 = scalar_lea.vmem %s5, 1152
        %v9663 = vld [vmem:[%s9662] sm:$0xff]
        %v9664 = vld [vmem:[%s9662 + $0x8] sm:$0xff]
        %v9665 = vld [vmem:[%s9662 + $0x10] sm:$0xff]
        %v9666 = vld [vmem:[%s9662 + $0x18] sm:$0xff]
        %v9667 = vld [vmem:[%s9662 + $0x20] sm:$0xff]
        %v9668 = vld [vmem:[%s9662 + $0x28] sm:$0xff]
        %v9669 = vld [vmem:[%s9662 + $0x30] sm:$0xff]
        %v9670 = vld [vmem:[%s9662 + $0x38] sm:$0xff]
        %v9671 = vrot.slane %v9477, 1
        %v9680 = vunpack.c.l.b16 %v9663
        %v9681 = vunpack.c.h.b16 %v9663
        %v9682 = vunpack.c.l.b16 %v9664
        %v9683 = vunpack.c.h.b16 %v9664
        %v9684 = vunpack.c.l.b16 %v9665
        %v9685 = vunpack.c.h.b16 %v9665
        %v9686 = vunpack.c.l.b16 %v9666
        %v9687 = vunpack.c.h.b16 %v9666
        %v9688 = vunpack.c.l.b16 %v9667
        %v9689 = vunpack.c.h.b16 %v9667
        %v9690 = vunpack.c.l.b16 %v9668
        %v9691 = vunpack.c.h.b16 %v9668
        %v9692 = vunpack.c.l.b16 %v9669
        %v9693 = vunpack.c.h.b16 %v9669
        %v9694 = vunpack.c.l.b16 %v9670
        %v9695 = vunpack.c.h.b16 %v9670
        %v9696 = vpack.c.b16 %v9682, %v9680
        %v9697 = vpack.c.b16 %v9683, %v9681
        %v9698 = vpack.c.b16 %v9686, %v9684
        %v9699 = vpack.c.b16 %v9687, %v9685
        %v9700 = vpack.c.b16 %v9690, %v9688
        %v9701 = vpack.c.b16 %v9691, %v9689
        %v9702 = vpack.c.b16 %v9694, %v9692
        %v9703 = vpack.c.b16 %v9695, %v9693
        %v9713 = vsel %vm7994, %v9671, 0
        %9715 = vmatprep.subr.bf16.mxu0 %v9697
        %9716 = vmatpush1.bf16.msra.mxu0 %v9696
        %9717 = vmatprep.subr.bf16.mxu0 %v9699
        %9718 = vmatpush1.bf16.msra.mxu0 %v9698
        %9719 = vmatprep.subr.bf16.mxu0 %v9701
        %9720 = vmatpush1.bf16.msra.mxu0 %v9700
        %9721 = vmatprep.subr.bf16.mxu0 %v9703
        %9722 = vmatpush1.bf16.msra.mxu0 %v9702
        %9723 = vmatprep.subr.bf16.mxu0 0
        %9724 = vmatpush1.bf16.msra.mxu0 0
        %9725 = vmatprep.subr.bf16.mxu0 0
        %9726 = vmatpush1.bf16.msra.mxu0 0
        %9727 = vmatprep.subr.bf16.mxu0 0
        %9728 = vmatpush1.bf16.msra.mxu0 0
        %9729 = vmatprep.subr.bf16.mxu0 0
        %9730 = vmatpush1.bf16.msra.mxu0 0
        %9731 = vmatprep.subr.bf16.mxu0 0
        %9732 = vmatpush1.bf16.msra.mxu0 0
        %9733 = vmatprep.subr.bf16.mxu0 0
        %9734 = vmatpush1.bf16.msra.mxu0 0
        %9735 = vmatprep.subr.bf16.mxu0 0
        %9736 = vmatpush1.bf16.msra.mxu0 0
        %9737 = vmatprep.subr.bf16.mxu0 0
        %9738 = vmatpush1.bf16.msra.mxu0 0
        %9739 = vmatprep.subr.bf16.mxu0 0
        %9740 = vmatpush1.bf16.msra.mxu0 0
        %9741 = vmatprep.subr.bf16.mxu0 0
        %9742 = vmatpush1.bf16.msra.mxu0 0
        %9743 = vmatprep.subr.bf16.mxu0 0
        %9744 = vmatpush1.bf16.msra.mxu0 0
        %9745 = vmatprep.subr.bf16.mxu0 0
        %9746 = vmatpush1.bf16.msra.mxu0 0
        %9747 = vmatprep.mubr.bf16.mxu0 0
        %9748 = vmatmul.mubr.bf16.gmra.mrb[0].mxu0 %v9713
        %v9749 = vpop.f32.mrb[0].mxu0
        %v9750 = vadd.f32 0.0, %v9749
        %v9751 = vpop.f32.mrb[0].mxu0
        %v9752 = vadd.f32 0.0, %v9751
        %v9753 = vpop.f32.mrb[0].mxu0
        %v9754 = vpop.f32.mrb[0].mxu0
        %9755 = vdwg.mxu0
        %v9756 = vadd.f32 %v9660, %v9750
        %v9757 = vadd.f32 %v9661, %v9752
        %s9758 = scalar_lea.vmem %s5, 1216
        %v9759 = vld [vmem:[%s9758] sm:$0xff]
        %v9760 = vld [vmem:[%s9758 + $0x8] sm:$0xff]
        %v9761 = vld [vmem:[%s9758 + $0x10] sm:$0xff]
        %v9762 = vld [vmem:[%s9758 + $0x18] sm:$0xff]
        %v9763 = vld [vmem:[%s9758 + $0x20] sm:$0xff]
        %v9764 = vld [vmem:[%s9758 + $0x28] sm:$0xff]
        %v9765 = vld [vmem:[%s9758 + $0x30] sm:$0xff]
        %v9766 = vld [vmem:[%s9758 + $0x38] sm:$0xff]
        %v9767 = vrot.slane %v7932, 2
        %v9776 = vunpack.c.l.b16 %v9759
        %v9777 = vunpack.c.h.b16 %v9759
        %v9778 = vunpack.c.l.b16 %v9760
        %v9779 = vunpack.c.h.b16 %v9760
        %v9780 = vunpack.c.l.b16 %v9761
        %v9781 = vunpack.c.h.b16 %v9761
        %v9782 = vunpack.c.l.b16 %v9762
        %v9783 = vunpack.c.h.b16 %v9762
        %v9784 = vunpack.c.l.b16 %v9763
        %v9785 = vunpack.c.h.b16 %v9763
        %v9786 = vunpack.c.l.b16 %v9764
        %v9787 = vunpack.c.h.b16 %v9764
        %v9788 = vunpack.c.l.b16 %v9765
        %v9789 = vunpack.c.h.b16 %v9765
        %v9790 = vunpack.c.l.b16 %v9766
        %v9791 = vunpack.c.h.b16 %v9766
        %v9792 = vpack.c.b16 %v9778, %v9776
        %v9793 = vpack.c.b16 %v9779, %v9777
        %v9794 = vpack.c.b16 %v9782, %v9780
        %v9795 = vpack.c.b16 %v9783, %v9781
        %v9796 = vpack.c.b16 %v9786, %v9784
        %v9797 = vpack.c.b16 %v9787, %v9785
        %v9798 = vpack.c.b16 %v9790, %v9788
        %v9799 = vpack.c.b16 %v9791, %v9789
        %v9809 = vsel %vm7994, %v9767, 0
        %9811 = vmatprep.subr.bf16.mxu0 %v9793
        %9812 = vmatpush1.bf16.msra.mxu0 %v9792
        %9813 = vmatprep.subr.bf16.mxu0 %v9795
        %9814 = vmatpush1.bf16.msra.mxu0 %v9794
        %9815 = vmatprep.subr.bf16.mxu0 %v9797
        %9816 = vmatpush1.bf16.msra.mxu0 %v9796
        %9817 = vmatprep.subr.bf16.mxu0 %v9799
        %9818 = vmatpush1.bf16.msra.mxu0 %v9798
        %9819 = vmatprep.subr.bf16.mxu0 0
        %9820 = vmatpush1.bf16.msra.mxu0 0
        %9821 = vmatprep.subr.bf16.mxu0 0
        %9822 = vmatpush1.bf16.msra.mxu0 0
        %9823 = vmatprep.subr.bf16.mxu0 0
        %9824 = vmatpush1.bf16.msra.mxu0 0
        %9825 = vmatprep.subr.bf16.mxu0 0
        %9826 = vmatpush1.bf16.msra.mxu0 0
        %9827 = vmatprep.subr.bf16.mxu0 0
        %9828 = vmatpush1.bf16.msra.mxu0 0
        %9829 = vmatprep.subr.bf16.mxu0 0
        %9830 = vmatpush1.bf16.msra.mxu0 0
        %9831 = vmatprep.subr.bf16.mxu0 0
        %9832 = vmatpush1.bf16.msra.mxu0 0
        %9833 = vmatprep.subr.bf16.mxu0 0
        %9834 = vmatpush1.bf16.msra.mxu0 0
        %9835 = vmatprep.subr.bf16.mxu0 0
        %9836 = vmatpush1.bf16.msra.mxu0 0
        %9837 = vmatprep.subr.bf16.mxu0 0
        %9838 = vmatpush1.bf16.msra.mxu0 0
        %9839 = vmatprep.subr.bf16.mxu0 0
        %9840 = vmatpush1.bf16.msra.mxu0 0
        %9841 = vmatprep.subr.bf16.mxu0 0
        %9842 = vmatpush1.bf16.msra.mxu0 0
        %9843 = vmatprep.mubr.bf16.mxu0 0
        %9844 = vmatmul.mubr.bf16.gmra.mrb[0].mxu0 %v9809
        %v9845 = vpop.f32.mrb[0].mxu0
        %v9846 = vadd.f32 0.0, %v9845
        %v9847 = vpop.f32.mrb[0].mxu0
        %v9848 = vadd.f32 0.0, %v9847
        %v9849 = vpop.f32.mrb[0].mxu0
        %v9850 = vpop.f32.mrb[0].mxu0
        %9851 = vdwg.mxu0
        %v9852 = vadd.f32 %v9756, %v9846
        %v9853 = vadd.f32 %v9757, %v9848
        %s9854 = scalar_lea.vmem %s5, 1280
        %v9855 = vld [vmem:[%s9854] sm:$0xff]
        %v9856 = vld [vmem:[%s9854 + $0x8] sm:$0xff]
        %v9857 = vld [vmem:[%s9854 + $0x10] sm:$0xff]
        %v9858 = vld [vmem:[%s9854 + $0x18] sm:$0xff]
        %v9859 = vld [vmem:[%s9854 + $0x20] sm:$0xff]
        %v9860 = vld [vmem:[%s9854 + $0x28] sm:$0xff]
        %v9861 = vld [vmem:[%s9854 + $0x30] sm:$0xff]
        %v9862 = vld [vmem:[%s9854 + $0x38] sm:$0xff]
        %v9871 = vunpack.c.l.b16 %v9855
        %v9872 = vunpack.c.h.b16 %v9855
        %v9873 = vunpack.c.l.b16 %v9856
        %v9874 = vunpack.c.h.b16 %v9856
        %v9875 = vunpack.c.l.b16 %v9857
        %v9876 = vunpack.c.h.b16 %v9857
        %v9877 = vunpack.c.l.b16 %v9858
        %v9878 = vunpack.c.h.b16 %v9858
        %v9879 = vunpack.c.l.b16 %v9859
        %v9880 = vunpack.c.h.b16 %v9859
        %v9881 = vunpack.c.l.b16 %v9860
        %v9882 = vunpack.c.h.b16 %v9860
        %v9883 = vunpack.c.l.b16 %v9861
        %v9884 = vunpack.c.h.b16 %v9861
        %v9885 = vunpack.c.l.b16 %v9862
        %v9886 = vunpack.c.h.b16 %v9862
        %v9887 = vpack.c.b16 %v9873, %v9871
        %v9888 = vpack.c.b16 %v9874, %v9872
        %v9889 = vpack.c.b16 %v9877, %v9875
        %v9890 = vpack.c.b16 %v9878, %v9876
        %v9891 = vpack.c.b16 %v9881, %v9879
        %v9892 = vpack.c.b16 %v9882, %v9880
        %v9893 = vpack.c.b16 %v9885, %v9883
        %v9894 = vpack.c.b16 %v9886, %v9884
        %v9904 = vsel %vm7994, %v7933, 0
        %9906 = vmatprep.subr.bf16.mxu0 %v9888
        %9907 = vmatpush1.bf16.msra.mxu0 %v9887
        %9908 = vmatprep.subr.bf16.mxu0 %v9890
        %9909 = vmatpush1.bf16.msra.mxu0 %v9889
        %9910 = vmatprep.subr.bf16.mxu0 %v9892
        %9911 = vmatpush1.bf16.msra.mxu0 %v9891
        %9912 = vmatprep.subr.bf16.mxu0 %v9894
        %9913 = vmatpush1.bf16.msra.mxu0 %v9893
        %9914 = vmatprep.subr.bf16.mxu0 0
        %9915 = vmatpush1.bf16.msra.mxu0 0
        %9916 = vmatprep.subr.bf16.mxu0 0
        %9917 = vmatpush1.bf16.msra.mxu0 0
        %9918 = vmatprep.subr.bf16.mxu0 0
        %9919 = vmatpush1.bf16.msra.mxu0 0
        %9920 = vmatprep.subr.bf16.mxu0 0
        %9921 = vmatpush1.bf16.msra.mxu0 0
        %9922 = vmatprep.subr.bf16.mxu0 0
        %9923 = vmatpush1.bf16.msra.mxu0 0
        %9924 = vmatprep.subr.bf16.mxu0 0
        %9925 = vmatpush1.bf16.msra.mxu0 0
        %9926 = vmatprep.subr.bf16.mxu0 0
        %9927 = vmatpush1.bf16.msra.mxu0 0
        %9928 = vmatprep.subr.bf16.mxu0 0
        %9929 = vmatpush1.bf16.msra.mxu0 0
        %9930 = vmatprep.subr.bf16.mxu0 0
        %9931 = vmatpush1.bf16.msra.mxu0 0
        %9932 = vmatprep.subr.bf16.mxu0 0
        %9933 = vmatpush1.bf16.msra.mxu0 0
        %9934 = vmatprep.subr.bf16.mxu0 0
        %9935 = vmatpush1.bf16.msra.mxu0 0
        %9936 = vmatprep.subr.bf16.mxu0 0
        %9937 = vmatpush1.bf16.msra.mxu0 0
        %9938 = vmatprep.mubr.bf16.mxu0 0
        %9939 = vmatmul.mubr.bf16.gmra.mrb[0].mxu0 %v9904
        %v9940 = vpop.f32.mrb[0].mxu0
        %v9941 = vadd.f32 0.0, %v9940
        %v9942 = vpop.f32.mrb[0].mxu0
        %v9943 = vadd.f32 0.0, %v9942
        %v9944 = vpop.f32.mrb[0].mxu0
        %v9945 = vpop.f32.mrb[0].mxu0
        %9946 = vdwg.mxu0
        %v9947 = vadd.f32 %v9852, %v9941
        %v9948 = vadd.f32 %v9853, %v9943
        %s9949 = scalar_lea.vmem %s5, 1344
        %v9950 = vld [vmem:[%s9949] sm:$0xff]
        %v9951 = vld [vmem:[%s9949 + $0x8] sm:$0xff]
        %v9952 = vld [vmem:[%s9949 + $0x10] sm:$0xff]
        %v9953 = vld [vmem:[%s9949 + $0x18] sm:$0xff]
        %v9954 = vld [vmem:[%s9949 + $0x20] sm:$0xff]
        %v9955 = vld [vmem:[%s9949 + $0x28] sm:$0xff]
        %v9956 = vld [vmem:[%s9949 + $0x30] sm:$0xff]
        %v9957 = vld [vmem:[%s9949 + $0x38] sm:$0xff]
        %v9958 = vshrl.u32 %v7933, 16
        %v9968 = vunpack.c.l.b16 %v9950
        %v9969 = vunpack.c.h.b16 %v9950
        %v9970 = vunpack.c.l.b16 %v9951
        %v9971 = vunpack.c.h.b16 %v9951
        %v9972 = vunpack.c.l.b16 %v9952
        %v9973 = vunpack.c.h.b16 %v9952
        %v9974 = vunpack.c.l.b16 %v9953
        %v9975 = vunpack.c.h.b16 %v9953
        %v9976 = vunpack.c.l.b16 %v9954
        %v9977 = vunpack.c.h.b16 %v9954
        %v9978 = vunpack.c.l.b16 %v9955
        %v9979 = vunpack.c.h.b16 %v9955
        %v9980 = vunpack.c.l.b16 %v9956
        %v9981 = vunpack.c.h.b16 %v9956
        %v9982 = vunpack.c.l.b16 %v9957
        %v9983 = vunpack.c.h.b16 %v9957
        %v9984 = vpack.c.b16 %v9970, %v9968
        %v9985 = vpack.c.b16 %v9971, %v9969
        %v9986 = vpack.c.b16 %v9974, %v9972
        %v9987 = vpack.c.b16 %v9975, %v9973
        %v9988 = vpack.c.b16 %v9978, %v9976
        %v9989 = vpack.c.b16 %v9979, %v9977
        %v9990 = vpack.c.b16 %v9982, %v9980
        %v9991 = vpack.c.b16 %v9983, %v9981
        %v10001 = vsel %vm7994, %v9958, 0
        %10003 = vmatprep.subr.bf16.mxu0 %v9985
        %10004 = vmatpush1.bf16.msra.mxu0 %v9984
        %10005 = vmatprep.subr.bf16.mxu0 %v9987
        %10006 = vmatpush1.bf16.msra.mxu0 %v9986
        %10007 = vmatprep.subr.bf16.mxu0 %v9989
        %10008 = vmatpush1.bf16.msra.mxu0 %v9988
        %10009 = vmatprep.subr.bf16.mxu0 %v9991
        %10010 = vmatpush1.bf16.msra.mxu0 %v9990
        %10011 = vmatprep.subr.bf16.mxu0 0
        %10012 = vmatpush1.bf16.msra.mxu0 0
        %10013 = vmatprep.subr.bf16.mxu0 0
        %10014 = vmatpush1.bf16.msra.mxu0 0
        %10015 = vmatprep.subr.bf16.mxu0 0
        %10016 = vmatpush1.bf16.msra.mxu0 0
        %10017 = vmatprep.subr.bf16.mxu0 0
        %10018 = vmatpush1.bf16.msra.mxu0 0
        %10019 = vmatprep.subr.bf16.mxu0 0
        %10020 = vmatpush1.bf16.msra.mxu0 0
        %10021 = vmatprep.subr.bf16.mxu0 0
        %10022 = vmatpush1.bf16.msra.mxu0 0
        %10023 = vmatprep.subr.bf16.mxu0 0
        %10024 = vmatpush1.bf16.msra.mxu0 0
        %10025 = vmatprep.subr.bf16.mxu0 0
        %10026 = vmatpush1.bf16.msra.mxu0 0
        %10027 = vmatprep.subr.bf16.mxu0 0
        %10028 = vmatpush1.bf16.msra.mxu0 0
        %10029 = vmatprep.subr.bf16.mxu0 0
        %10030 = vmatpush1.bf16.msra.mxu0 0
        %10031 = vmatprep.subr.bf16.mxu0 0
        %10032 = vmatpush1.bf16.msra.mxu0 0
        %10033 = vmatprep.subr.bf16.mxu0 0
        %10034 = vmatpush1.bf16.msra.mxu0 0
        %10035 = vmatprep.mubr.bf16.mxu0 0
        %10036 = vmatmul.mubr.bf16.gmra.mrb[0].mxu0 %v10001
        %v10037 = vpop.f32.mrb[0].mxu0
        %v10038 = vadd.f32 0.0, %v10037
        %v10039 = vpop.f32.mrb[0].mxu0
        %v10040 = vadd.f32 0.0, %v10039
        %v10041 = vpop.f32.mrb[0].mxu0
        %v10042 = vpop.f32.mrb[0].mxu0
        %10043 = vdwg.mxu0
        %v10044 = vadd.f32 %v9947, %v10038
        %v10045 = vadd.f32 %v9948, %v10040
        %s10046 = scalar_lea.vmem %s5, 1408
        %v10047 = vld [vmem:[%s10046] sm:$0xff]
        %v10048 = vld [vmem:[%s10046 + $0x8] sm:$0xff]
        %v10049 = vld [vmem:[%s10046 + $0x10] sm:$0xff]
        %v10050 = vld [vmem:[%s10046 + $0x18] sm:$0xff]
        %v10051 = vld [vmem:[%s10046 + $0x20] sm:$0xff]
        %v10052 = vld [vmem:[%s10046 + $0x28] sm:$0xff]
        %v10053 = vld [vmem:[%s10046 + $0x30] sm:$0xff]
        %v10054 = vld [vmem:[%s10046 + $0x38] sm:$0xff]
        %v10056 = vrot.slane %v7933, 1
        %v10065 = vunpack.c.l.b16 %v10047
        %v10066 = vunpack.c.h.b16 %v10047
        %v10067 = vunpack.c.l.b16 %v10048
        %v10068 = vunpack.c.h.b16 %v10048
        %v10069 = vunpack.c.l.b16 %v10049
        %v10070 = vunpack.c.h.b16 %v10049
        %v10071 = vunpack.c.l.b16 %v10050
        %v10072 = vunpack.c.h.b16 %v10050
        %v10073 = vunpack.c.l.b16 %v10051
        %v10074 = vunpack.c.h.b16 %v10051
        %v10075 = vunpack.c.l.b16 %v10052
        %v10076 = vunpack.c.h.b16 %v10052
        %v10077 = vunpack.c.l.b16 %v10053
        %v10078 = vunpack.c.h.b16 %v10053
        %v10079 = vunpack.c.l.b16 %v10054
        %v10080 = vunpack.c.h.b16 %v10054
        %v10081 = vpack.c.b16 %v10067, %v10065
        %v10082 = vpack.c.b16 %v10068, %v10066
        %v10083 = vpack.c.b16 %v10071, %v10069
        %v10084 = vpack.c.b16 %v10072, %v10070
        %v10085 = vpack.c.b16 %v10075, %v10073
        %v10086 = vpack.c.b16 %v10076, %v10074
        %v10087 = vpack.c.b16 %v10079, %v10077
        %v10088 = vpack.c.b16 %v10080, %v10078
        %v10098 = vsel %vm7994, %v10056, 0
        %10100 = vmatprep.subr.bf16.mxu0 %v10082
        %10101 = vmatpush1.bf16.msra.mxu0 %v10081
        %10102 = vmatprep.subr.bf16.mxu0 %v10084
        %10103 = vmatpush1.bf16.msra.mxu0 %v10083
        %10104 = vmatprep.subr.bf16.mxu0 %v10086
        %10105 = vmatpush1.bf16.msra.mxu0 %v10085
        %10106 = vmatprep.subr.bf16.mxu0 %v10088
        %10107 = vmatpush1.bf16.msra.mxu0 %v10087
        %10108 = vmatprep.subr.bf16.mxu0 0
        %10109 = vmatpush1.bf16.msra.mxu0 0
        %10110 = vmatprep.subr.bf16.mxu0 0
        %10111 = vmatpush1.bf16.msra.mxu0 0
        %10112 = vmatprep.subr.bf16.mxu0 0
        %10113 = vmatpush1.bf16.msra.mxu0 0
        %10114 = vmatprep.subr.bf16.mxu0 0
        %10115 = vmatpush1.bf16.msra.mxu0 0
        %10116 = vmatprep.subr.bf16.mxu0 0
        %10117 = vmatpush1.bf16.msra.mxu0 0
        %10118 = vmatprep.subr.bf16.mxu0 0
        %10119 = vmatpush1.bf16.msra.mxu0 0
        %10120 = vmatprep.subr.bf16.mxu0 0
        %10121 = vmatpush1.bf16.msra.mxu0 0
        %10122 = vmatprep.subr.bf16.mxu0 0
        %10123 = vmatpush1.bf16.msra.mxu0 0
        %10124 = vmatprep.subr.bf16.mxu0 0
        %10125 = vmatpush1.bf16.msra.mxu0 0
        %10126 = vmatprep.subr.bf16.mxu0 0
        %10127 = vmatpush1.bf16.msra.mxu0 0
        %10128 = vmatprep.subr.bf16.mxu0 0
        %10129 = vmatpush1.bf16.msra.mxu0 0
        %10130 = vmatprep.subr.bf16.mxu0 0
        %10131 = vmatpush1.bf16.msra.mxu0 0
        %10132 = vmatprep.mubr.bf16.mxu0 0
        %10133 = vmatmul.mubr.bf16.gmra.mrb[0].mxu0 %v10098
        %v10134 = vpop.f32.mrb[0].mxu0
        %v10135 = vadd.f32 0.0, %v10134
        %v10136 = vpop.f32.mrb[0].mxu0
        %v10137 = vadd.f32 0.0, %v10136
        %v10138 = vpop.f32.mrb[0].mxu0
        %v10139 = vpop.f32.mrb[0].mxu0
        %10140 = vdwg.mxu0
        %v10141 = vadd.f32 %v10044, %v10135
        %v10142 = vadd.f32 %v10045, %v10137
        %s10143 = scalar_lea.vmem %s5, 1472
        %v10144 = vld [vmem:[%s10143] sm:$0xff]
        %v10145 = vld [vmem:[%s10143 + $0x8] sm:$0xff]
        %v10146 = vld [vmem:[%s10143 + $0x10] sm:$0xff]
        %v10147 = vld [vmem:[%s10143 + $0x18] sm:$0xff]
        %v10148 = vld [vmem:[%s10143 + $0x20] sm:$0xff]
        %v10149 = vld [vmem:[%s10143 + $0x28] sm:$0xff]
        %v10150 = vld [vmem:[%s10143 + $0x30] sm:$0xff]
        %v10151 = vld [vmem:[%s10143 + $0x38] sm:$0xff]
        %v10152 = vrot.slane %v9958, 1
        %v10161 = vunpack.c.l.b16 %v10144
        %v10162 = vunpack.c.h.b16 %v10144
        %v10163 = vunpack.c.l.b16 %v10145
        %v10164 = vunpack.c.h.b16 %v10145
        %v10165 = vunpack.c.l.b16 %v10146
        %v10166 = vunpack.c.h.b16 %v10146
        %v10167 = vunpack.c.l.b16 %v10147
        %v10168 = vunpack.c.h.b16 %v10147
        %v10169 = vunpack.c.l.b16 %v10148
        %v10170 = vunpack.c.h.b16 %v10148
        %v10171 = vunpack.c.l.b16 %v10149
        %v10172 = vunpack.c.h.b16 %v10149
        %v10173 = vunpack.c.l.b16 %v10150
        %v10174 = vunpack.c.h.b16 %v10150
        %v10175 = vunpack.c.l.b16 %v10151
        %v10176 = vunpack.c.h.b16 %v10151
        %v10177 = vpack.c.b16 %v10163, %v10161
        %v10178 = vpack.c.b16 %v10164, %v10162
        %v10179 = vpack.c.b16 %v10167, %v10165
        %v10180 = vpack.c.b16 %v10168, %v10166
        %v10181 = vpack.c.b16 %v10171, %v10169
        %v10182 = vpack.c.b16 %v10172, %v10170
        %v10183 = vpack.c.b16 %v10175, %v10173
        %v10184 = vpack.c.b16 %v10176, %v10174
        %v10194 = vsel %vm7994, %v10152, 0
        %10196 = vmatprep.subr.bf16.mxu0 %v10178
        %10197 = vmatpush1.bf16.msra.mxu0 %v10177
        %10198 = vmatprep.subr.bf16.mxu0 %v10180
        %10199 = vmatpush1.bf16.msra.mxu0 %v10179
        %10200 = vmatprep.subr.bf16.mxu0 %v10182
        %10201 = vmatpush1.bf16.msra.mxu0 %v10181
        %10202 = vmatprep.subr.bf16.mxu0 %v10184
        %10203 = vmatpush1.bf16.msra.mxu0 %v10183
        %10204 = vmatprep.subr.bf16.mxu0 0
        %10205 = vmatpush1.bf16.msra.mxu0 0
        %10206 = vmatprep.subr.bf16.mxu0 0
        %10207 = vmatpush1.bf16.msra.mxu0 0
        %10208 = vmatprep.subr.bf16.mxu0 0
        %10209 = vmatpush1.bf16.msra.mxu0 0
        %10210 = vmatprep.subr.bf16.mxu0 0
        %10211 = vmatpush1.bf16.msra.mxu0 0
        %10212 = vmatprep.subr.bf16.mxu0 0
        %10213 = vmatpush1.bf16.msra.mxu0 0
        %10214 = vmatprep.subr.bf16.mxu0 0
        %10215 = vmatpush1.bf16.msra.mxu0 0
        %10216 = vmatprep.subr.bf16.mxu0 0
        %10217 = vmatpush1.bf16.msra.mxu0 0
        %10218 = vmatprep.subr.bf16.mxu0 0
        %10219 = vmatpush1.bf16.msra.mxu0 0
        %10220 = vmatprep.subr.bf16.mxu0 0
        %10221 = vmatpush1.bf16.msra.mxu0 0
        %10222 = vmatprep.subr.bf16.mxu0 0
        %10223 = vmatpush1.bf16.msra.mxu0 0
        %10224 = vmatprep.subr.bf16.mxu0 0
        %10225 = vmatpush1.bf16.msra.mxu0 0
        %10226 = vmatprep.subr.bf16.mxu0 0
        %10227 = vmatpush1.bf16.msra.mxu0 0
        %10228 = vmatprep.mubr.bf16.mxu0 0
        %10229 = vmatmul.mubr.bf16.gmra.mrb[0].mxu0 %v10194
        %v10230 = vpop.f32.mrb[0].mxu0
        %v10231 = vadd.f32 0.0, %v10230
        %v10232 = vpop.f32.mrb[0].mxu0
        %v10233 = vadd.f32 0.0, %v10232
        %v10234 = vpop.f32.mrb[0].mxu0
        %v10235 = vpop.f32.mrb[0].mxu0
        %10236 = vdwg.mxu0
        %v10237 = vadd.f32 %v10141, %v10231
        %v10238 = vadd.f32 %v10142, %v10233
        %s10239 = scalar_lea.vmem %s5, 1536
        %v10240 = vld [vmem:[%s10239] sm:$0xff]
        %v10241 = vld [vmem:[%s10239 + $0x8] sm:$0xff]
        %v10242 = vld [vmem:[%s10239 + $0x10] sm:$0xff]
        %v10243 = vld [vmem:[%s10239 + $0x18] sm:$0xff]
        %v10244 = vld [vmem:[%s10239 + $0x20] sm:$0xff]
        %v10245 = vld [vmem:[%s10239 + $0x28] sm:$0xff]
        %v10246 = vld [vmem:[%s10239 + $0x30] sm:$0xff]
        %v10247 = vld [vmem:[%s10239 + $0x38] sm:$0xff]
        %v10248 = vrot.slane %v7933, 2
        %v10257 = vunpack.c.l.b16 %v10240
        %v10258 = vunpack.c.h.b16 %v10240
        %v10259 = vunpack.c.l.b16 %v10241
        %v10260 = vunpack.c.h.b16 %v10241
        %v10261 = vunpack.c.l.b16 %v10242
        %v10262 = vunpack.c.h.b16 %v10242
        %v10263 = vunpack.c.l.b16 %v10243
        %v10264 = vunpack.c.h.b16 %v10243
        %v10265 = vunpack.c.l.b16 %v10244
        %v10266 = vunpack.c.h.b16 %v10244
        %v10267 = vunpack.c.l.b16 %v10245
        %v10268 = vunpack.c.h.b16 %v10245
        %v10269 = vunpack.c.l.b16 %v10246
        %v10270 = vunpack.c.h.b16 %v10246
        %v10271 = vunpack.c.l.b16 %v10247
        %v10272 = vunpack.c.h.b16 %v10247
        %v10273 = vpack.c.b16 %v10259, %v10257
        %v10274 = vpack.c.b16 %v10260, %v10258
        %v10275 = vpack.c.b16 %v10263, %v10261
        %v10276 = vpack.c.b16 %v10264, %v10262
        %v10277 = vpack.c.b16 %v10267, %v10265
        %v10278 = vpack.c.b16 %v10268, %v10266
        %v10279 = vpack.c.b16 %v10271, %v10269
        %v10280 = vpack.c.b16 %v10272, %v10270
        %v10290 = vsel %vm7994, %v10248, 0
        %10292 = vmatprep.subr.bf16.mxu0 %v10274
        %10293 = vmatpush1.bf16.msra.mxu0 %v10273
        %10294 = vmatprep.subr.bf16.mxu0 %v10276
        %10295 = vmatpush1.bf16.msra.mxu0 %v10275
        %10296 = vmatprep.subr.bf16.mxu0 %v10278
        %10297 = vmatpush1.bf16.msra.mxu0 %v10277
        %10298 = vmatprep.subr.bf16.mxu0 %v10280
        %10299 = vmatpush1.bf16.msra.mxu0 %v10279
        %10300 = vmatprep.subr.bf16.mxu0 0
        %10301 = vmatpush1.bf16.msra.mxu0 0
        %10302 = vmatprep.subr.bf16.mxu0 0
        %10303 = vmatpush1.bf16.msra.mxu0 0
        %10304 = vmatprep.subr.bf16.mxu0 0
        %10305 = vmatpush1.bf16.msra.mxu0 0
        %10306 = vmatprep.subr.bf16.mxu0 0
        %10307 = vmatpush1.bf16.msra.mxu0 0
        %10308 = vmatprep.subr.bf16.mxu0 0
        %10309 = vmatpush1.bf16.msra.mxu0 0
        %10310 = vmatprep.subr.bf16.mxu0 0
        %10311 = vmatpush1.bf16.msra.mxu0 0
        %10312 = vmatprep.subr.bf16.mxu0 0
        %10313 = vmatpush1.bf16.msra.mxu0 0
        %10314 = vmatprep.subr.bf16.mxu0 0
        %10315 = vmatpush1.bf16.msra.mxu0 0
        %10316 = vmatprep.subr.bf16.mxu0 0
        %10317 = vmatpush1.bf16.msra.mxu0 0
        %10318 = vmatprep.subr.bf16.mxu0 0
        %10319 = vmatpush1.bf16.msra.mxu0 0
        %10320 = vmatprep.subr.bf16.mxu0 0
        %10321 = vmatpush1.bf16.msra.mxu0 0
        %10322 = vmatprep.subr.bf16.mxu0 0
        %10323 = vmatpush1.bf16.msra.mxu0 0
        %10324 = vmatprep.mubr.bf16.mxu0 0
        %10325 = vmatmul.mubr.bf16.gmra.mrb[0].mxu0 %v10290
        %v10326 = vpop.f32.mrb[0].mxu0
        %v10327 = vadd.f32 0.0, %v10326
        %v10328 = vpop.f32.mrb[0].mxu0
        %v10329 = vadd.f32 0.0, %v10328
        %v10330 = vpop.f32.mrb[0].mxu0
        %v10331 = vpop.f32.mrb[0].mxu0
        %10332 = vdwg.mxu0
        %v10333 = vadd.f32 %v10237, %v10327
        %v10334 = vadd.f32 %v10238, %v10329
        %v10335 = vld [vmem:[%s6] sm:$0x3]
        %v10337 = vlaneseq
        %v10338 = vshrl.u32 %v10337, 7
        %v10339 = vsub.s32 0, %v10338
        %v10340 = vrot.slane %v10335, %v10339
        %v10341 = vlaneseq
        %v10342 = vshrl.u32 %v10341, 7
        %v10343 = vsub.s32 1, %v10342
        %v10344 = vrot.slane %v10335, %v10343
        %v10347 = vadd.f32 %v10333, %v10340
        %v10348 = vadd.f32 %v10334, %v10344
        %v10349 = vmax.f32 %v10347, 0.0
        %v10350 = vmax.f32 %v10348, 0.0
        %v10351 = vpack.c.bf16 %v10349, %v10349
        %v10352 = vpack.c.bf16 %v10350, %v10350
        %v10353 = vld [vmem:[%s7] sm:$0xf]
        %v10354 = vld [vmem:[%s7 + $0x4] sm:$0xf]
        %v10355 = vld [vmem:[%s7 + $0x8] sm:$0xf]
        %v10356 = vld [vmem:[%s7 + $0xc] sm:$0xf]
        %v10357 = vld [vmem:[%s7 + $0x10] sm:$0xf]
        %v10358 = vld [vmem:[%s7 + $0x14] sm:$0xf]
        %v10359 = vld [vmem:[%s7 + $0x18] sm:$0xf]
        %v10360 = vld [vmem:[%s7 + $0x1c] sm:$0xf]
        %v10361 = vld [vmem:[%s7 + $0x20] sm:$0xf]
        %v10362 = vld [vmem:[%s7 + $0x24] sm:$0xf]
        %v10363 = vld [vmem:[%s7 + $0x28] sm:$0xf]
        %v10364 = vld [vmem:[%s7 + $0x2c] sm:$0xf]
        %v10365 = vld [vmem:[%s7 + $0x30] sm:$0xf]
        %v10366 = vld [vmem:[%s7 + $0x34] sm:$0xf]
        %v10367 = vld [vmem:[%s7 + $0x38] sm:$0xf]
        %v10368 = vld [vmem:[%s7 + $0x3c] sm:$0xf]
        %v10369 = vld [vmem:[%s7 + $0x40] sm:$0xf]
        %v10370 = vld [vmem:[%s7 + $0x44] sm:$0xf]
        %v10371 = vld [vmem:[%s7 + $0x48] sm:$0xf]
        %v10372 = vld [vmem:[%s7 + $0x4c] sm:$0xf]
        %v10373 = vld [vmem:[%s7 + $0x50] sm:$0xf]
        %v10374 = vld [vmem:[%s7 + $0x54] sm:$0xf]
        %v10375 = vld [vmem:[%s7 + $0x58] sm:$0xf]
        %v10376 = vld [vmem:[%s7 + $0x5c] sm:$0xf]
        %v10377 = vld [vmem:[%s7 + $0x60] sm:$0xf]
        %v10378 = vld [vmem:[%s7 + $0x64] sm:$0xf]
        %v10379 = vld [vmem:[%s7 + $0x68] sm:$0xf]
        %v10380 = vld [vmem:[%s7 + $0x6c] sm:$0xf]
        %v10381 = vld [vmem:[%s7 + $0x70] sm:$0xf]
        %v10382 = vld [vmem:[%s7 + $0x74] sm:$0xf]
        %v10383 = vld [vmem:[%s7 + $0x78] sm:$0xf]
        %v10384 = vld [vmem:[%s7 + $0x7c] sm:$0xf]
        %v10385 = vld [vmem:[%s8] sm:$0x1]
        %v10418 = vunpack.c.l.b16 %v10353
        %v10419 = vunpack.c.l.b16 %v10354
        %v10420 = vunpack.c.l.b16 %v10355
        %v10421 = vunpack.c.l.b16 %v10356
        %v10422 = vunpack.c.l.b16 %v10357
        %v10423 = vunpack.c.l.b16 %v10358
        %v10424 = vunpack.c.l.b16 %v10359
        %v10425 = vunpack.c.l.b16 %v10360
        %v10426 = vunpack.c.l.b16 %v10361
        %v10427 = vunpack.c.l.b16 %v10362
        %v10428 = vunpack.c.l.b16 %v10363
        %v10429 = vunpack.c.l.b16 %v10364
        %v10430 = vunpack.c.l.b16 %v10365
        %v10431 = vunpack.c.l.b16 %v10366
        %v10432 = vunpack.c.l.b16 %v10367
        %v10433 = vunpack.c.l.b16 %v10368
        %v10434 = vunpack.c.l.b16 %v10369
        %v10435 = vunpack.c.l.b16 %v10370
        %v10436 = vunpack.c.l.b16 %v10371
        %v10437 = vunpack.c.l.b16 %v10372
        %v10438 = vunpack.c.l.b16 %v10373
        %v10439 = vunpack.c.l.b16 %v10374
        %v10440 = vunpack.c.l.b16 %v10375
        %v10441 = vunpack.c.l.b16 %v10376
        %v10442 = vunpack.c.l.b16 %v10377
        %v10443 = vunpack.c.l.b16 %v10378
        %v10444 = vunpack.c.l.b16 %v10379
        %v10445 = vunpack.c.l.b16 %v10380
        %v10446 = vunpack.c.l.b16 %v10381
        %v10447 = vunpack.c.l.b16 %v10382
        %v10448 = vunpack.c.l.b16 %v10383
        %v10449 = vunpack.c.l.b16 %v10384
        %v10450 = vpack.c.b16 %v10419, %v10418
        %v10451 = vpack.c.b16 %v10421, %v10420
        %v10452 = vpack.c.b16 %v10423, %v10422
        %v10453 = vpack.c.b16 %v10425, %v10424
        %v10454 = vpack.c.b16 %v10427, %v10426
        %v10455 = vpack.c.b16 %v10429, %v10428
        %v10456 = vpack.c.b16 %v10431, %v10430
        %v10457 = vpack.c.b16 %v10433, %v10432
        %v10458 = vpack.c.b16 %v10435, %v10434
        %v10459 = vpack.c.b16 %v10437, %v10436
        %v10460 = vpack.c.b16 %v10439, %v10438
        %v10461 = vpack.c.b16 %v10441, %v10440
        %v10462 = vpack.c.b16 %v10443, %v10442
        %v10463 = vpack.c.b16 %v10445, %v10444
        %v10464 = vpack.c.b16 %v10447, %v10446
        %v10465 = vpack.c.b16 %v10449, %v10448
        %10482 = vmatprep.subr.bf16.mxu0 0
        %10483 = vmatpush1.bf16.msra.mxu0 %v10450
        %10484 = vmatprep.subr.bf16.mxu0 0
        %10485 = vmatpush1.bf16.msra.mxu0 %v10451
        %10486 = vmatprep.subr.bf16.mxu0 0
        %10487 = vmatpush1.bf16.msra.mxu0 %v10452
        %10488 = vmatprep.subr.bf16.mxu0 0
        %10489 = vmatpush1.bf16.msra.mxu0 %v10453
        %10490 = vmatprep.subr.bf16.mxu0 0
        %10491 = vmatpush1.bf16.msra.mxu0 %v10454
        %10492 = vmatprep.subr.bf16.mxu0 0
        %10493 = vmatpush1.bf16.msra.mxu0 %v10455
        %10494 = vmatprep.subr.bf16.mxu0 0
        %10495 = vmatpush1.bf16.msra.mxu0 %v10456
        %10496 = vmatprep.subr.bf16.mxu0 0
        %10497 = vmatpush1.bf16.msra.mxu0 %v10457
        %10498 = vmatprep.subr.bf16.mxu0 0
        %10499 = vmatpush1.bf16.msra.mxu0 %v10458
        %10500 = vmatprep.subr.bf16.mxu0 0
        %10501 = vmatpush1.bf16.msra.mxu0 %v10459
        %10502 = vmatprep.subr.bf16.mxu0 0
        %10503 = vmatpush1.bf16.msra.mxu0 %v10460
        %10504 = vmatprep.subr.bf16.mxu0 0
        %10505 = vmatpush1.bf16.msra.mxu0 %v10461
        %10506 = vmatprep.subr.bf16.mxu0 0
        %10507 = vmatpush1.bf16.msra.mxu0 %v10462
        %10508 = vmatprep.subr.bf16.mxu0 0
        %10509 = vmatpush1.bf16.msra.mxu0 %v10463
        %10510 = vmatprep.subr.bf16.mxu0 0
        %10511 = vmatpush1.bf16.msra.mxu0 %v10464
        %10512 = vmatprep.subr.bf16.mxu0 0
        %10513 = vmatpush1.bf16.msra.mxu0 %v10465
        %10514 = vmatprep.mubr.bf16.mxu0 %v10352
        %10515 = vmatmul.mubr.bf16.gmra.mrb[0].mxu0 %v10351
        %v10516 = vpop.f32.mrb[0].mxu0
        %v10517 = vadd.f32 %v10385, %v10516
        %v10518 = vpop.f32.mrb[0].mxu0
        %v10519 = vpop.f32.mrb[0].mxu0
        %v10520 = vpop.f32.mrb[0].mxu0
        %10521 = vdwg.mxu0
        %vm10522 = vcmask 73728
        %10523 = vst.msk [vmem:[%s324] sm:$0x1] %vm10522, %v10517
        %s10524 = sand.u32 %s225, 1
        %s10525 = scalar_lea.sflag [#allocation3], %s10524
        %s10526 = sand.u32 %s225, 1
        %s10527 = scalar_lea.vmem [#allocation2], %s10526
        // Predicated region
        $region57: #{cnn_forward.1} parent=55 // pred_check
          %p10528 = pneg %p235
        $region58: #{cnn_forward.1} parent=55 // pred_check_branch
          %10530 = sbr.rel (%p10528) target = $region60
        $region59: #{cnn_forward.1} parent=55 // pred_region
          %s10532 = ssub.s32 16, 16
          %10533 = vsyncadd %s10525, %s10532
          %s10534 = smul.addr %s23, 16
          %s10535 = scalar_lea.hbm %s9, %s10534
          %s10537 = sshll.u32 %s10527, 4
          %s10538 = int_to_ptr.vmem [resolvable:$true] %s10537
          %10540 = dma.vmem_to_hbm [thread:$0]  %s10538, 16, %s10535, %s10525
        $region60: #{cnn_forward.1} parent=55 // pred_fallthru
          _
      $region56: #{cnn_forward.1} parent=5 // pred_fallthru
        _
      %p10541 = scmp.le.s32.totalorder 2, %s18
      // Predicated region
      $region61: #{cnn_forward.1} parent=5 // pred_check
        %p10542 = pneg %p10541
      $region62: #{cnn_forward.1} parent=5 // pred_check_branch
        %10544 = sbr.rel (%p10542) target = $region64
      $region63: #{cnn_forward.1} parent=5 // pred_region
        %s10545 = ssub.s32 %s18, 2
        // Predicated region
        $region65: #{cnn_forward.1} parent=63 // pred_check
          %p10546 = pneg %p241
        $region66: #{cnn_forward.1} parent=63 // pred_check_branch
          %10548 = sbr.rel (%p10546) target = $region68
        $region67: #{cnn_forward.1} parent=63 // pred_region
          %s10549 = sand.u32 %s226, 1
          %s10550 = scalar_lea.sflag [#allocation3], %s10549
          %s10551 = sand.u32 %s226, 1
          %s10552 = scalar_lea.vmem [#allocation2], %s10551
          %10553 = dma.done %s10550, 16
        $region68: #{cnn_forward.1} parent=63 // pred_fallthru
          _
      $region64: #{cnn_forward.1} parent=5 // pred_fallthru
        _
    $region6: #{cnn_forward.1} parent=1 // loop_footer
      %s22 = sadd.s32 1, %s18
    $region7: #{cnn_forward.1} parent=1 // loop_footer_branch
      %17 = sbr.rel target = $region3
    $region8: #{cnn_forward.1} parent=1 // loop_exit
      _
    %10554 = vsyncpa [#allocation3], 1
    %s10555 = scalar_lea.sflag [#allocation3], 1
    %10556 = vsyncpa %s10555, 1

</llo_original>
